<compile_context>
chip_gen: v6e
topology: v6e:2x2x1
jax: 0.10.0
libtpu: 0.0.40
codegen_flags: <defaults>
</compile_context>

<pallas_src>
import functools
import math

import jax
import jax.numpy as jnp
from jax import lax
from jax.experimental import pallas as pl
from jax.experimental.pallas import tpu as pltpu


# ----------------------------------------------------------------------------- tuning
def _detect_vmem_limit():
    # Generation-specific scoped-VMEM limit: ~85% of physical VMEM, capped at 112 MiB
    # (v5e/v6e: 128 MiB physical -> ~108 MiB; v7x: 64 MiB -> ~54 MiB).
    cap = 64 * 1024 * 1024
    try:
        info = pltpu.get_tpu_info()
        cap = int(getattr(info, 'vmem_capacity_bytes', cap)) or cap
    except Exception:
        pass
    return int(min(cap * 0.85, 112 * 1024 * 1024))


_VMEM_LIMIT = _detect_vmem_limit()


def _cparams(sem):
    return pltpu.CompilerParams(dimension_semantics=sem,
                                vmem_limit_bytes=_VMEM_LIMIT)


def _round_up(x, m):
    return ((x + m - 1) // m) * m


def _row_tile(m):
    # Large row tiles amortize grid overhead / fill the MXU M dim; always try to keep
    # >= 2 grid steps so v7x's two TensorCores both get work.  Ragged last blocks are
    # handled by Pallas (no jnp.pad / out[:m] HBM round-trip).
    if m <= 8:
        return m
    if m >= 1024:
        return 512
    return min(512, _round_up((m + 1) // 2, 8))


def _kv_tile(lk):
    # Flash-style Lk tile; single block for short sequences.
    return lk if lk <= 256 else 256


def _attn_group(bh, lq, tk, d):
    # Number of (batch*head) pairs per attention grid step, derived from the VMEM
    # budget (double-buffered f32 q/k/v/out blocks + scratch + ~3x score slab), then
    # capped at bh//2 so the "parallel" axis has >= 2 steps for megacore.
    per = 4 * (5 * lq * d + 4 * tk * d + 3 * lq * tk + 4 * lq)
    gmax = max(int((_VMEM_LIMIT * 0.6) // per), 1)
    if bh >= 2:
        gmax = max(min(gmax, bh // 2), 1)
    gmax = min(gmax, bh)
    for g in range(gmax, 0, -1):
        if bh % g == 0:
            return g
    return 1


# ----------------------------------------------------------------------------- in-kernel math
def _erf(x):
    # Abramowitz & Stegun 7.1.26, |err| < 1.5e-7 (~f32 eps).
    a1, a2, a3, a4, a5 = (0.254829592, -0.284496736, 1.421413741,
                          -1.453152027, 1.061405429)
    ax = jnp.abs(x)
    t = 1.0 / (1.0 + 0.3275911 * ax)
    poly = ((((a5 * t + a4) * t + a3) * t + a2) * t + a1) * t
    y = 1.0 - poly * jnp.exp(-ax * ax)
    return jnp.where(x >= 0, y, -y)


def _apply_activation(x, activation):
    if activation == 'gelu':                  # exact-erf GELU (PyTorch F.gelu default)
        return 0.5 * x * (1.0 + _erf(x * (1.0 / math.sqrt(2.0))))
    if activation == 'elu':
        # TODO(synk): expm1 would be marginally more accurate for small negative x.
        return jnp.where(x > 0, x, jnp.exp(x) - 1.0)
    return x


def _ln(x, g, b):
    mu = jnp.mean(x, axis=-1, keepdims=True)
    xc = x - mu
    var = jnp.mean(xc * xc, axis=-1, keepdims=True)
    return xc * lax.rsqrt(var + 1e-5) * g + b


# ----------------------------------------------------------------------------- row-tiled kernels
def _matmul_kernel(x_ref, w_ref, b_ref, o_ref, *, activation):
    acc = jnp.dot(x_ref[...].astype(jnp.bfloat16), w_ref[...],
                  preferred_element_type=jnp.float32) + b_ref[...]
    o_ref[...] = _apply_activation(acc, activation)


def _matmul_add_ln_kernel(x_ref, res_ref, w_ref, b_ref, g_ref, beta_ref, o_ref):
    # (x @ w + b) + residual, then LayerNorm -- fused epilogue (no standalone LN pass).
    h = jnp.dot(x_ref[...].astype(jnp.bfloat16), w_ref[...],
                preferred_element_type=jnp.float32) + b_ref[...] + res_ref[...]
    o_ref[...] = _ln(h, g_ref[...], beta_ref[...])


def _layernorm_kernel(x_ref, g_ref, b_ref, o_ref):
    o_ref[...] = _ln(x_ref[...], g_ref[...], b_ref[...])


def _ln_proj_kernel(x_ref, g_ref, b_ref, w_ref, pb_ref, o_ref):
    # Final decoder LayerNorm fused with the tiny c_out projection.
    y = _ln(x_ref[...], g_ref[...], b_ref[...])
    o_ref[...] = jnp.dot(y.astype(jnp.bfloat16), w_ref[...],
                         preferred_element_type=jnp.float32) + pb_ref[...]


def _row_call(kernel, rows, consts, n_out):
    m = rows[0].shape[0]
    tm = _row_tile(m)
    in_specs = ([pl.BlockSpec((tm, r.shape[1]), lambda i: (i, 0)) for r in rows]
                + [pl.BlockSpec(c.shape, lambda i: (0, 0)) for c in consts])
    return pl.pallas_call(
        kernel,
        out_shape=jax.ShapeDtypeStruct((m, n_out), jnp.float32),
        grid=(pl.cdiv(m, tm),),
        in_specs=in_specs,
        out_specs=pl.BlockSpec((tm, n_out), lambda i: (i, 0)),
        compiler_params=_cparams(("parallel",)),
    )(*rows, *consts)


def pallas_linear(x, w, b, activation=None):
    return _row_call(functools.partial(_matmul_kernel, activation=activation),
                     [x], [w, b], w.shape[1])


def pallas_linear_add_ln(x, res, w, b, g, beta):
    return _row_call(_matmul_add_ln_kernel, [x, res], [w, b, g, beta], w.shape[1])


def pallas_layernorm(x, g, b):
    return _row_call(_layernorm_kernel, [x], [g, b], x.shape[1])


def pallas_ln_proj(x, g, b, w, pb):
    return _row_call(_ln_proj_kernel, [x], [g, b, w, pb], w.shape[1])


# ----------------------------------------------------------------------------- k=3 circular convs
def _conv3_kernel(x_ref, w_ref, b_ref, o_ref):
    # TODO(synk): at large Cin a single [L, 3*Cin] x [3*Cin, Cout] dot (lane-concat of
    # the three shifted copies) would fill the 256-deep MXU slightly better.
    x = x_ref[0]                                             # [L, Cin] f32
    L = x.shape[0]
    xm1 = pltpu.roll(x, 1, axis=0).astype(jnp.bfloat16)      # x[(t-1) mod L]
    x00 = x.astype(jnp.bfloat16)                             # x[t]
    xp1 = pltpu.roll(x, L - 1, axis=0).astype(jnp.bfloat16)  # x[(t+1) mod L]
    acc = jnp.dot(xm1, w_ref[0], preferred_element_type=jnp.float32)
    acc = acc + jnp.dot(x00, w_ref[1], preferred_element_type=jnp.float32)
    acc = acc + jnp.dot(xp1, w_ref[2], preferred_element_type=jnp.float32)
    o_ref[0] = acc + b_ref[...]


def conv1d_k3_circular(x, wt, b):
    """nn.Conv1d(k=3, padding=1, padding_mode='circular'), channels-last; wt is the
    pre-transposed [3, Cin, Cout] bf16 weight."""
    B, L, Cin = x.shape
    Cout = wt.shape[2]
    return pl.pallas_call(
        _conv3_kernel,
        out_shape=jax.ShapeDtypeStruct((B, L, Cout), jnp.float32),
        grid=(B,),
        in_specs=[
            pl.BlockSpec((1, L, Cin), lambda i: (i, 0, 0)),
            pl.BlockSpec((3, Cin, Cout), lambda i: (0, 0, 0)),
            pl.BlockSpec((1, Cout), lambda i: (0, 0)),
        ],
        out_specs=pl.BlockSpec((1, L, Cout), lambda i: (i, 0, 0)),
        compiler_params=_cparams(("parallel",)),
    )(x, wt, b)


def _conv_pool_kernel(x_ref, w_ref, b_ref, o_ref, *, l_out):
    # downConv(k=3, circular) + folded BatchNorm + ELU + MaxPool1d(3, 2, 1), fully
    # fused: the pooled output never round-trips HBM at full length.
    x = x_ref[0]                                             # [L, C] f32
    L = x.shape[0]
    xm1 = pltpu.roll(x, 1, axis=0).astype(jnp.bfloat16)
    x00 = x.astype(jnp.bfloat16)
    xp1 = pltpu.roll(x, L - 1, axis=0).astype(jnp.bfloat16)
    acc = jnp.dot(xm1, w_ref[0], preferred_element_type=jnp.float32)
    acc = acc + jnp.dot(x00, w_ref[1], preferred_element_type=jnp.float32)
    acc = acc + jnp.dot(xp1, w_ref[2], preferred_element_type=jnp.float32)
    y = _apply_activation(acc + b_ref[...], 'elu')           # [L, Cout]
    # window max over {t-1, t, t+1} with -inf boundary padding
    neg = -3.0e38
    row = lax.broadcasted_iota(jnp.int32, (L, 1), 0)
    ym1 = jnp.where(row == 0, neg, pltpu.roll(y, 1, axis=0))
    yp1 = jnp.where(row == L - 1, neg, pltpu.roll(y, L - 1, axis=0))
    m_full = jnp.maximum(jnp.maximum(y, ym1), yp1)           # [L, Cout]
    # stride-2 row selection via a 0/1 matrix matmul (sel[i, 2i] = 1)
    sel = (lax.broadcasted_iota(jnp.int32, (l_out, L), 1)
           == 2 * lax.broadcasted_iota(jnp.int32, (l_out, L), 0)).astype(jnp.float32)
    o_ref[0] = jnp.dot(sel, m_full, preferred_element_type=jnp.float32)


def conv_layer(p, x):
    B, L, C = x.shape
    Cout = p['conv_wt'].shape[2]
    l_out = (L - 1) // 2 + 1
    return pl.pallas_call(
        functools.partial(_conv_pool_kernel, l_out=l_out),
        out_shape=jax.ShapeDtypeStruct((B, l_out, Cout), jnp.float32),
        grid=(B,),
        in_specs=[
            pl.BlockSpec((1, L, C), lambda i: (i, 0, 0)),
            pl.BlockSpec((3, C, Cout), lambda i: (0, 0, 0)),
            pl.BlockSpec((1, Cout), lambda i: (0, 0)),
        ],
        out_specs=pl.BlockSpec((1, l_out, Cout), lambda i: (i, 0, 0)),
        compiler_params=_cparams(("parallel",)),
    )(x, p['conv_wt'], p['conv_b'])


# ----------------------------------------------------------------------------- attention kernels
def _flash_attn_kernel(*refs, scale, masked, tk, lk, need_pad):
    if masked:
        q_ref, k_ref, v_ref, idx_ref, o_ref, m_sc, l_sc, acc_sc = refs
    else:
        q_ref, k_ref, v_ref, o_ref, m_sc, l_sc, acc_sc = refs
    j = pl.program_id(1)

    @pl.when(j == 0)
    def _init():
        m_sc[...] = jnp.full(m_sc.shape, -jnp.inf, m_sc.dtype)
        l_sc[...] = jnp.zeros(l_sc.shape, l_sc.dtype)
        acc_sc[...] = jnp.zeros(acc_sc.shape, acc_sc.dtype)

    q = q_ref[...].astype(jnp.bfloat16)
    k = k_ref[...].astype(jnp.bfloat16)
    v = v_ref[...].astype(jnp.bfloat16)

    # In-kernel causal/ProbMask + partial-KV-block masking, built from a tiny
    # (1, 1, tk) iota (no score-sized iota slab, no bias tensor in HBM).
    mask = None
    if masked:
        kpos = lax.broadcasted_iota(jnp.int32, (1, 1, tk), 2) + j * tk
        mask = kpos <= idx_ref[...]
    if need_pad:
        kpos = lax.broadcasted_iota(jnp.int32, (1, 1, tk), 2) + j * tk
        valid = kpos < lk
        mask = valid if mask is None else jnp.logical_and(mask, valid)
        rows_ok = (lax.broadcasted_iota(jnp.int32, (1, tk, 1), 1) + j * tk) < lk
        v = jnp.where(rows_ok, v, 0)

    s = jnp.einsum('gqd,gkd->gqk', q, k,
                   preferred_element_type=jnp.float32) * scale
    if mask is not None:
        s = jnp.where(mask, s, -1e30)

    # online softmax (flash) update
    m_prev = m_sc[...]
    m_new = jnp.maximum(m_prev, jnp.max(s, axis=-1, keepdims=True))
    alpha = jnp.exp(m_prev - m_new)
    p = jnp.exp(s - m_new)
    if mask is not None:
        p = jnp.where(mask, p, 0.0)
    l_sc[...] = alpha * l_sc[...] + jnp.sum(p, axis=-1, keepdims=True)
    acc_sc[...] = alpha * acc_sc[...] + jnp.einsum(
        'gqk,gkd->gqd', p.astype(jnp.bfloat16), v,
        preferred_element_type=jnp.float32)
    m_sc[...] = m_new

    @pl.when(j == pl.num_programs(1) - 1)
    def _fin():
        o_ref[...] = acc_sc[...] / l_sc[...]        # exact divide in the finalize


def pallas_attention(q, k, v, idx, scale, masked):
    """softmax(Q K^T * scale [+ in-kernel mask]) V with Lk-tiled online softmax.
    q:[BH,Lq,D], k/v:[BH,Lk,D], idx:[BH,Lq] int32 (query positions) when masked."""
    bh, lq, d = q.shape
    lk = k.shape[1]
    tk = _kv_tile(lk)
    n_kv = pl.cdiv(lk, tk)
    need_pad = (lk % tk) != 0
    g = _attn_group(bh, lq, tk, d)

    in_specs = [
        pl.BlockSpec((g, lq, d), lambda i, j: (i, 0, 0)),
        pl.BlockSpec((g, tk, d), lambda i, j: (i, j, 0)),
        pl.BlockSpec((g, tk, d), lambda i, j: (i, j, 0)),
    ]
    args = [q, k, v]
    if masked:
        in_specs.append(pl.BlockSpec((g, lq, 1), lambda i, j: (i, 0, 0)))
        args.append(idx.astype(jnp.int32).reshape(bh, lq, 1))

    # TODO(synk): output block last dim is E (< 128 lanes at head dim 64/8); a
    # lane-dense (Lq, H*E) output layout would avoid masked stores + two transposes.
    return pl.pallas_call(
        functools.partial(_flash_attn_kernel, scale=scale, masked=masked,
                          tk=tk, lk=lk, need_pad=need_pad),
        out_shape=jax.ShapeDtypeStruct((bh, lq, d), jnp.float32),
        grid=(bh // g, n_kv),
        in_specs=in_specs,
        out_specs=pl.BlockSpec((g, lq, d), lambda i, j: (i, 0, 0)),
        scratch_shapes=[pltpu.VMEM((g, lq, 1), jnp.float32),
                        pltpu.VMEM((g, lq, 1), jnp.float32),
                        pltpu.VMEM((g, lq, d), jnp.float32)],
        compiler_params=_cparams(("parallel", "arbitrary")),
    )(*args)


def _sparsity_kernel(q_ref, k_ref, m_ref, max_sc, sum_sc, *, tk, lk, need_pad):
    # Streaming ProbAttention sparsity measure M = max(QK^T) - mean(QK^T).
    j = pl.program_id(1)

    @pl.when(j == 0)
    def _init():
        max_sc[...] = jnp.full(max_sc.shape, -jnp.inf, max_sc.dtype)
        sum_sc[...] = jnp.zeros(sum_sc.shape, sum_sc.dtype)

    s = jnp.einsum('gqd,gkd->gqk', q_ref[...].astype(jnp.bfloat16),
                   k_ref[...].astype(jnp.bfloat16),
                   preferred_element_type=jnp.float32)
    if need_pad:
        kpos = lax.broadcasted_iota(jnp.int32, (1, 1, tk), 2) + j * tk
        valid = kpos < lk
        s_max = jnp.where(valid, s, -1e30)
        s_sum = jnp.where(valid, s, 0.0)
    else:
        s_max = s
        s_sum = s
    max_sc[...] = jnp.maximum(max_sc[...], jnp.max(s_max, axis=-1, keepdims=True))
    sum_sc[...] = sum_sc[...] + jnp.sum(s_sum, axis=-1, keepdims=True)

    @pl.when(j == pl.num_programs(1) - 1)
    def _fin():
        m_ref[...] = max_sc[...] - sum_sc[...] * (1.0 / lk)


def pallas_sparsity(q, k):
    bh, lq, d = q.shape
    lk = k.shape[1]
    tk = _kv_tile(lk)
    n_kv = pl.cdiv(lk, tk)
    need_pad = (lk % tk) != 0
    g = _attn_group(bh, lq, tk, d)
    out = pl.pallas_call(
        functools.partial(_sparsity_kernel, tk=tk, lk=lk, need_pad=need_pad),
        out_shape=jax.ShapeDtypeStruct((bh, lq, 1), jnp.float32),
        grid=(bh // g, n_kv),
        in_specs=[
            pl.BlockSpec((g, lq, d), lambda i, j: (i, 0, 0)),
            pl.BlockSpec((g, tk, d), lambda i, j: (i, j, 0)),
        ],
        out_specs=pl.BlockSpec((g, lq, 1), lambda i, j: (i, 0, 0)),
        scratch_shapes=[pltpu.VMEM((g, lq, 1), jnp.float32),
                        pltpu.VMEM((g, lq, 1), jnp.float32)],
        compiler_params=_cparams(("parallel", "arbitrary")),
    )(q, k)
    return out[:, :, 0]


# ----------------------------------------------------------------------------- glue ops
def linear3d(x, w, b, activation=None):
    B, L, _ = x.shape
    return pallas_linear(x.reshape(B * L, -1), w, b, activation).reshape(B, L, -1)


def sinusoid_table(n, d_model):
    pos = jnp.arange(n, dtype=jnp.float32)[:, None]
    div = jnp.exp(
        jnp.arange(0, d_model, 2, dtype=jnp.float32) * (-(math.log(10000.0) / d_model)))
    ang = pos * div
    tab = jnp.zeros((n, d_model), jnp.float32)
    tab = tab.at[:, 0::2].set(jnp.sin(ang))
    tab = tab.at[:, 1::2].set(jnp.cos(ang))
    return tab


def temporal_embedding(x_mark, d_model):
    # embed='fixed', freq='h' -> columns [month, day, weekday, hour]
    idx = x_mark.astype(jnp.int32)
    month = jnp.take(sinusoid_table(13, d_model), idx[:, :, 0], axis=0)
    day = jnp.take(sinusoid_table(32, d_model), idx[:, :, 1], axis=0)
    weekday = jnp.take(sinusoid_table(7, d_model), idx[:, :, 2], axis=0)
    hour = jnp.take(sinusoid_table(24, d_model), idx[:, :, 3], axis=0)
    return hour + weekday + day + month


def data_embedding(x, x_mark, p, d_model):
    val = conv1d_k3_circular(x, p['conv_wt'], p['conv_b'])   # TokenEmbedding
    L = x.shape[1]
    pos = sinusoid_table(L, d_model)[None]                   # PositionalEmbedding
    return val + pos + temporal_embedding(x_mark, d_model)   # dropout p=0.0 is a no-op


def full_attention(q, k, v, mask_flag):
    B, Lq, H, E = q.shape
    Lk = k.shape[1]
    Q = jnp.transpose(q, (0, 2, 1, 3)).reshape(B * H, Lq, E)
    K = jnp.transpose(k, (0, 2, 1, 3)).reshape(B * H, Lk, E)
    V = jnp.transpose(v, (0, 2, 1, 3)).reshape(B * H, Lk, E)
    idx = None
    if mask_flag:   # causal: query position = row index (masked inside the kernel)
        idx = jnp.broadcast_to(jnp.arange(Lq, dtype=jnp.int32)[None], (B * H, Lq))
    out = pallas_attention(Q, K, V, idx, 1.0 / math.sqrt(E), mask_flag)
    return out.reshape(B, H, Lq, E).transpose(0, 2, 1, 3)    # [B, Lq, H, E]


def prob_attention(q, k, v, mask_flag, factor):
    # TODO(synk): PyTorch ProbAttention samples keys with torch.randint for the
    # sparsity measure; here the measure uses all keys (deterministic).  The top-k /
    # gather / scatter glue stays in plain JAX (scalar-prefetch-driven DMA would
    # remove those HBM passes).
    B, Lq, H, D = q.shape
    Lk = k.shape[1]
    Q = jnp.transpose(q, (0, 2, 1, 3)).reshape(B * H, Lq, D)
    K = jnp.transpose(k, (0, 2, 1, 3)).reshape(B * H, Lk, D)
    V = jnp.transpose(v, (0, 2, 1, 3)).reshape(B * H, Lk, D)

    u = min(int(factor * math.ceil(math.log(Lq))), Lq)

    M = pallas_sparsity(Q, K)                                # [BH, Lq]
    _, idx = lax.top_k(M, u)                                 # [BH, u]

    Qr = jnp.take_along_axis(Q, idx[:, :, None], axis=1)     # [BH, u, D]
    out_sel = pallas_attention(Qr, K, V, idx if mask_flag else None,
                               1.0 / math.sqrt(D), mask_flag)    # [BH, u, D]

    if mask_flag:
        context = jnp.cumsum(V, axis=1)
    else:
        context = jnp.broadcast_to(jnp.mean(V, axis=1, keepdims=True), (B * H, Lq, D))
    bh = jnp.arange(B * H)[:, None]
    context = context.at[bh, idx].set(out_sel)
    return context.reshape(B, H, Lq, D).transpose(0, 2, 1, 3)    # [B, Lq, H, D]


def attention_layer(p, q_in, k_in, v_in, attn_fn, n_heads, mix, residual, ln_g, ln_b):
    """QKV projections + inner attention + output projection fused with the residual
    add and the following LayerNorm."""
    B, Lq, _ = q_in.shape
    S = k_in.shape[1]
    q = linear3d(q_in, p['wq'], p['bq']).reshape(B, Lq, n_heads, -1)
    k = linear3d(k_in, p['wk'], p['bk']).reshape(B, S, n_heads, -1)
    v = linear3d(v_in, p['wv'], p['bv']).reshape(B, S, n_heads, -1)
    out = attn_fn(q, k, v)                       # [B, Lq, H, Dv]
    if mix:
        out = jnp.transpose(out, (0, 2, 1, 3))   # intentional head/position mixing
    out = out.reshape(B * Lq, -1)
    fused = pallas_linear_add_ln(out, residual.reshape(B * Lq, -1),
                                 p['wo'], p['bo'], ln_g, ln_b)
    return fused.reshape(B, Lq, -1)


def encoder_layer(p, x, n_heads, factor):
    B, L, D = x.shape
    x1 = attention_layer(
        p['attn'], x, x, x,
        lambda q, k, v: prob_attention(q, k, v, False, factor),
        n_heads, mix=False, residual=x, ln_g=p['norm1_g'], ln_b=p['norm1_b'])
    y = linear3d(x1, p['conv1_w'], p['conv1_b'], activation='gelu')   # k=1 conv + GELU
    out = pallas_linear_add_ln(y.reshape(B * L, -1), x1.reshape(B * L, D),
                               p['conv2_w'], p['conv2_b'],
                               p['norm2_g'], p['norm2_b'])            # conv2 + add + LN
    return out.reshape(B, L, D)


def decoder_layer(p, x, cross, n_heads, factor):
    B, L, D = x.shape
    x1 = attention_layer(
        p['self_attn'], x, x, x,
        lambda q, k, v: prob_attention(q, k, v, True, factor),
        n_heads, mix=True, residual=x, ln_g=p['norm1_g'], ln_b=p['norm1_b'])
    x2 = attention_layer(
        p['cross_attn'], x1, cross, cross,
        lambda q, k, v: full_attention(q, k, v, False),
        n_heads, mix=False, residual=x1, ln_g=p['norm2_g'], ln_b=p['norm2_b'])
    y = linear3d(x2, p['conv1_w'], p['conv1_b'], activation='gelu')
    out = pallas_linear_add_ln(y.reshape(B * L, -1), x2.reshape(B * L, D),
                               p['conv2_w'], p['conv2_b'],
                               p['norm3_g'], p['norm3_b'])
    return out.reshape(B, L, D)


def informer_forward(params, x_enc, x_mark_enc, x_dec, x_mark_dec, *, cfg):
    d_model, n_heads, factor = cfg['d_model'], cfg['n_heads'], cfg['factor']

    # encoder
    x = data_embedding(x_enc, x_mark_enc, params['enc_emb'], d_model)
    for al, cl in zip(params['enc_layers'][:-1], params['enc_convs']):
        x = encoder_layer(al, x, n_heads, factor)
        x = conv_layer(cl, x)                                 # distil: conv+BN+ELU+pool
    x = encoder_layer(params['enc_layers'][-1], x, n_heads, factor)
    B, L, D = x.shape
    enc_out = pallas_layernorm(x.reshape(B * L, D),
                               params['enc_norm_g'],
                               params['enc_norm_b']).reshape(B, L, D)

    # decoder
    x = data_embedding(x_dec, x_mark_dec, params['dec_emb'], d_model)
    for dl in params['dec_layers']:
        x = decoder_layer(dl, x, enc_out, n_heads, factor)
    B, L, D = x.shape
    out = pallas_ln_proj(x.reshape(B * L, D), params['dec_norm_g'], params['dec_norm_b'],
                         params['proj_w'], params['proj_b']).reshape(B, L, -1)
    return out[:, -cfg['pred_len']:, :]


# ----------------------------------------------------------------------------- params
def init_params(key, cfg):
    """Parameters are created in "prepared" inference form: matmul weights [in, out]
    bf16, biases/LN params as (1, n) f32, k=3 conv weights transposed to
    [3, Cin, Cout] bf16, eval-mode BatchNorm folded into the distil conv."""
    d_model, d_ff = cfg['d_model'], cfg['d_ff']
    enc_in, dec_in, c_out = cfg['enc_in'], cfg['dec_in'], cfg['c_out']
    cnt = [0]

    def w(shape, scale=0.05):
        cnt[0] += 1
        return scale * jax.random.normal(jax.random.fold_in(key, cnt[0]), shape,
                                         jnp.float32)

    def lin(k_in, n_out):
        return w((k_in, n_out)).astype(jnp.bfloat16), w((n_out,)).reshape(1, n_out)

    def ln():
        return (jnp.ones((1, d_model), jnp.float32),
                jnp.zeros((1, d_model), jnp.float32))

    def emb_conv(c_in):
        cw = w((d_model, c_in, 3))                                    # torch [Cout, Cin, 3]
        return {'conv_wt': jnp.transpose(cw, (2, 1, 0)).astype(jnp.bfloat16),
                'conv_b': w((d_model,)).reshape(1, d_model)}

    def attn_params():
        wq, bq = lin(d_model, d_model)
        wk, bk = lin(d_model, d_model)
        wv, bv = lin(d_model, d_model)
        wo, bo = lin(d_model, d_model)
        return {'wq': wq, 'bq': bq, 'wk': wk, 'bk': bk,
                'wv': wv, 'bv': bv, 'wo': wo, 'bo': bo}

    def enc_layer_params():
        c1w, c1b = lin(d_model, d_ff)
        c2w, c2b = lin(d_ff, d_model)
        n1g, n1b = ln(); n2g, n2b = ln()
        return {'attn': attn_params(),
                'conv1_w': c1w, 'conv1_b': c1b, 'conv2_w': c2w, 'conv2_b': c2b,
                'norm1_g': n1g, 'norm1_b': n1b, 'norm2_g': n2g, 'norm2_b': n2b}

    def dec_layer_params():
        c1w, c1b = lin(d_model, d_ff)
        c2w, c2b = lin(d_ff, d_model)
        n1g, n1b = ln(); n2g, n2b = ln(); n3g, n3b = ln()
        return {'self_attn': attn_params(), 'cross_attn': attn_params(),
                'conv1_w': c1w, 'conv1_b': c1b, 'conv2_w': c2w, 'conv2_b': c2b,
                'norm1_g': n1g, 'norm1_b': n1b, 'norm2_g': n2g, 'norm2_b': n2b,
                'norm3_g': n3g, 'norm3_b': n3b}

    def conv_layer_params():
        # TODO(synk): train-mode BatchNorm batch statistics are not modeled.
        cw = w((d_model, d_model, 3))
        cb = w((d_model,))
        bn_g = 1.0 + w((d_model,), 0.1)
        bn_b = w((d_model,), 0.1)
        bn_mean = w((d_model,), 0.1)
        bn_var = 1.0 + jnp.abs(w((d_model,), 0.1))
        scale = bn_g / jnp.sqrt(bn_var + 1e-5)         # eval-mode BN fold (once, at init)
        wf = cw * scale[:, None, None]
        bf = cb * scale + (bn_b - bn_mean * scale)
        return {'conv_wt': jnp.transpose(wf, (2, 1, 0)).astype(jnp.bfloat16),
                'conv_b': bf.reshape(1, d_model)}

    pw, pb = lin(d_model, c_out)
    eg, eb = ln()
    dg, db = ln()
    return {
        'enc_emb': emb_conv(enc_in),
        'dec_emb': emb_conv(dec_in),
        'enc_layers': [enc_layer_params() for _ in range(cfg['e_layers'])],
        'enc_convs': [conv_layer_params() for _ in range(cfg['e_layers'] - 1)],
        'enc_norm_g': eg, 'enc_norm_b': eb,
        'dec_layers': [dec_layer_params() for _ in range(cfg['d_layers'])],
        'dec_norm_g': dg, 'dec_norm_b': db,
        'proj_w': pw, 'proj_b': pb,
    }


# ----------------------------------------------------------------------------- main
if __name__ == "__main__":
    cfg = dict(enc_in=4, dec_in=4, c_out=4, seq_len=8, label_len=4, pred_len=4,
               factor=5, d_model=32, n_heads=4, e_layers=2, d_layers=1, d_ff=32)
    B = 2
    dec_len = cfg['label_len'] + cfg['pred_len']

    key = jax.random.PRNGKey(0)
    k1, k2, k3, k4, kp = jax.random.split(key, 5)
    x_enc = jax.random.normal(k1, (B, cfg['seq_len'], cfg['enc_in']), jnp.float32)
    x_dec = jax.random.normal(k2, (B, dec_len, cfg['dec_in']), jnp.float32)

    def make_marks(k, L):
        km, kd, kw, kh = jax.random.split(k, 4)
        month = jax.random.randint(km, (B, L, 1), 0, 13)
        day = jax.random.randint(kd, (B, L, 1), 0, 32)
        weekday = jax.random.randint(kw, (B, L, 1), 0, 7)
        hour = jax.random.randint(kh, (B, L, 1), 0, 24)
        return jnp.concatenate([month, day, weekday, hour], axis=-1).astype(jnp.float32)

    x_mark_enc = make_marks(k3, cfg['seq_len'])
    x_mark_dec = make_marks(k4, dec_len)

    params = init_params(kp, cfg)

    fwd = jax.jit(lambda p, a, b, c, d: informer_forward(p, a, b, c, d, cfg=cfg))
    out = fwd(params, x_enc, x_mark_enc, x_dec, x_mark_dec)
    out = jax.block_until_ready(out)

    assert out.shape == (B, cfg['pred_len'], cfg['c_out']), out.shape
    assert bool(jnp.all(jnp.isfinite(out)))
    print("KERNEL_OK")
</pallas_src>

<mosaic_0001>
module attributes {stable_mosaic.version = 11 : i64} {
  func.func @_conv3_kernel(%arg0: i32, %arg1: memref<1x8x4xf32, #tpu.memory_space<vmem>>, %arg2: memref<3x4x32xbf16, #tpu.memory_space<vmem>>, %arg3: memref<1x32xf32, #tpu.memory_space<vmem>>, %arg4: memref<1x8x32xf32, #tpu.memory_space<vmem>>) attributes {dimension_semantics = [#tpu.dimension_semantics<parallel>], iteration_bounds = array<i64: 2>, scalar_prefetch = 0 : i64, scratch_operands = 0 : i64, tpu.core_type = #tpu.core_type<tc>, window_params = [{transform_indices = @transform_0, window_bounds = array<i64: 1, 8, 4>}, {pipeline_mode = #tpu.pipeline_mode<synchronous>, transform_indices = @transform_1, window_bounds = array<i64: 3, 4, 32>}, {pipeline_mode = #tpu.pipeline_mode<synchronous>, transform_indices = @transform_2, window_bounds = array<i64: 1, 32>}, {transform_indices = @transform_3, window_bounds = array<i64: 1, 8, 32>}]} {
    %c0 = arith.constant 0 : index
    %c0_0 = arith.constant 0 : index
    %c0_1 = arith.constant 0 : index
    %0 = vector.load %arg1[%c0, %c0_0, %c0_1] : memref<1x8x4xf32, #tpu.memory_space<vmem>>, vector<1x8x4xf32>
    %1 = vector.shape_cast %0 : vector<1x8x4xf32> to vector<8x4xf32>
    %c1_i32 = arith.constant 1 : i32
    %2 = tpu.dynamic_rotate %1 by %c1_i32 dim 0 : vector<8x4xf32>, i32 -> vector<8x4xf32>
    %3 = arith.truncf %2 : vector<8x4xf32> to vector<8x4xbf16>
    %4 = arith.truncf %1 : vector<8x4xf32> to vector<8x4xbf16>
    %c7_i32 = arith.constant 7 : i32
    %5 = tpu.dynamic_rotate %1 by %c7_i32 dim 0 : vector<8x4xf32>, i32 -> vector<8x4xf32>
    %6 = arith.truncf %5 : vector<8x4xf32> to vector<8x4xbf16>
    %c0_2 = arith.constant 0 : index
    %c0_3 = arith.constant 0 : index
    %c0_4 = arith.constant 0 : index
    %7 = vector.load %arg2[%c0_2, %c0_3, %c0_4] : memref<3x4x32xbf16, #tpu.memory_space<vmem>>, vector<1x4x32xbf16>
    %8 = vector.shape_cast %7 : vector<1x4x32xbf16> to vector<4x32xbf16>
    %cst = arith.constant dense<0.000000e+00> : vector<8x32xf32>
    %9 = tpu.matmul %3, %8, %cst {dimension_numbers = #tpu.dot_dimension_numbers<[1], [0], [0], [1], [0, 0, 1, 1], [], []>} : vector<8x4xbf16>, vector<4x32xbf16>, vector<8x32xf32> -> vector<8x32xf32>
    %c1 = arith.constant 1 : index
    %c0_5 = arith.constant 0 : index
    %c0_6 = arith.constant 0 : index
    %10 = vector.load %arg2[%c1, %c0_5, %c0_6] : memref<3x4x32xbf16, #tpu.memory_space<vmem>>, vector<1x4x32xbf16>
    %11 = vector.shape_cast %10 : vector<1x4x32xbf16> to vector<4x32xbf16>
    %cst_7 = arith.constant dense<0.000000e+00> : vector<8x32xf32>
    %12 = tpu.matmul %4, %11, %cst_7 {dimension_numbers = #tpu.dot_dimension_numbers<[1], [0], [0], [1], [0, 0, 1, 1], [], []>} : vector<8x4xbf16>, vector<4x32xbf16>, vector<8x32xf32> -> vector<8x32xf32>
    %13 = arith.addf %9, %12 : vector<8x32xf32>
    %c2 = arith.constant 2 : index
    %c0_8 = arith.constant 0 : index
    %c0_9 = arith.constant 0 : index
    %14 = vector.load %arg2[%c2, %c0_8, %c0_9] : memref<3x4x32xbf16, #tpu.memory_space<vmem>>, vector<1x4x32xbf16>
    %15 = vector.shape_cast %14 : vector<1x4x32xbf16> to vector<4x32xbf16>
    %cst_10 = arith.constant dense<0.000000e+00> : vector<8x32xf32>
    %16 = tpu.matmul %6, %15, %cst_10 {dimension_numbers = #tpu.dot_dimension_numbers<[1], [0], [0], [1], [0, 0, 1, 1], [], []>} : vector<8x4xbf16>, vector<4x32xbf16>, vector<8x32xf32> -> vector<8x32xf32>
    %17 = arith.addf %13, %16 : vector<8x32xf32>
    %c0_11 = arith.constant 0 : index
    %c0_12 = arith.constant 0 : index
    %18 = vector.load %arg3[%c0_11, %c0_12] : memref<1x32xf32, #tpu.memory_space<vmem>>, vector<1x32xf32>
    %19 = vector.broadcast %18 : vector<1x32xf32> to vector<8x32xf32>
    %20 = arith.addf %17, %19 : vector<8x32xf32>
    %c0_13 = arith.constant 0 : index
    %c0_14 = arith.constant 0 : index
    %c0_15 = arith.constant 0 : index
    %21 = vector.load %arg4[%c0_13, %c0_14, %c0_15] : memref<1x8x32xf32, #tpu.memory_space<vmem>>, vector<1x8x32xf32>
    %22 = vector.shape_cast %21 : vector<1x8x32xf32> to vector<8x32xf32>
    %23 = vector.shape_cast %20 : vector<8x32xf32> to vector<1x8x32xf32>
    tpu.vector_store %arg4[%c0_13, %c0_14, %c0_15], %23 {strides = array<i32>} : memref<1x8x32xf32, #tpu.memory_space<vmem>>, vector<1x8x32xf32>,
    return
  }
  func.func @transform_0(%arg0: i32) -> (i32, i32, i32) {
    %c0_i32 = arith.constant 0 : i32
    %c0_i32_0 = arith.constant 0 : i32
    %c0_i32_1 = arith.constant 0 : i32
    return %arg0, %c0_i32, %c0_i32_0 : i32, i32, i32
  }
  func.func @transform_1(%arg0: i32) -> (i32, i32, i32) {
    %c0_i32 = arith.constant 0 : i32
    %c0_i32_0 = arith.constant 0 : i32
    %c0_i32_1 = arith.constant 0 : i32
    %c0_i32_2 = arith.constant 0 : i32
    return %c0_i32, %c0_i32_0, %c0_i32_1 : i32, i32, i32
  }
  func.func @transform_2(%arg0: i32) -> (i32, i32) {
    %c0_i32 = arith.constant 0 : i32
    %c0_i32_0 = arith.constant 0 : i32
    %c0_i32_1 = arith.constant 0 : i32
    return %c0_i32, %c0_i32_0 : i32, i32
  }
  func.func @transform_3(%arg0: i32) -> (i32, i32, i32) {
    %c0_i32 = arith.constant 0 : i32
    %c0_i32_0 = arith.constant 0 : i32
    %c0_i32_1 = arith.constant 0 : i32
    return %arg0, %c0_i32, %c0_i32_0 : i32, i32, i32
  }
}

module attributes {stable_mosaic.version = 11 : i64} {
  func.func @_matmul_kernel(%arg0: i32, %arg1: memref<8x32xf32, #tpu.memory_space<vmem>>, %arg2: memref<32x32xbf16, #tpu.memory_space<vmem>>, %arg3: memref<1x32xf32, #tpu.memory_space<vmem>>, %arg4: memref<8x32xf32, #tpu.memory_space<vmem>>) attributes {dimension_semantics = [#tpu.dimension_semantics<parallel>], iteration_bounds = array<i64: 2>, scalar_prefetch = 0 : i64, scratch_operands = 0 : i64, tpu.core_type = #tpu.core_type<tc>, window_params = [{transform_indices = @transform_0, window_bounds = array<i64: 8, 32>}, {pipeline_mode = #tpu.pipeline_mode<synchronous>, transform_indices = @transform_1, window_bounds = array<i64: 32, 32>}, {pipeline_mode = #tpu.pipeline_mode<synchronous>, transform_indices = @transform_2, window_bounds = array<i64: 1, 32>}, {transform_indices = @transform_3, window_bounds = array<i64: 8, 32>}]} {
    %c0 = arith.constant 0 : index
    %c0_0 = arith.constant 0 : index
    %0 = vector.load %arg1[%c0, %c0_0] : memref<8x32xf32, #tpu.memory_space<vmem>>, vector<8x32xf32>
    %1 = arith.truncf %0 : vector<8x32xf32> to vector<8x32xbf16>
    %c0_1 = arith.constant 0 : index
    %c0_2 = arith.constant 0 : index
    %2 = vector.load %arg2[%c0_1, %c0_2] : memref<32x32xbf16, #tpu.memory_space<vmem>>, vector<32x32xbf16>
    %cst = arith.constant dense<0.000000e+00> : vector<8x32xf32>
    %3 = tpu.matmul %1, %2, %cst {dimension_numbers = #tpu.dot_dimension_numbers<[1], [0], [0], [1], [0, 0, 1, 1], [], []>} : vector<8x32xbf16>, vector<32x32xbf16>, vector<8x32xf32> -> vector<8x32xf32>
    %c0_3 = arith.constant 0 : index
    %c0_4 = arith.constant 0 : index
    %4 = vector.load %arg3[%c0_3, %c0_4] : memref<1x32xf32, #tpu.memory_space<vmem>>, vector<1x32xf32>
    %5 = vector.broadcast %4 : vector<1x32xf32> to vector<8x32xf32>
    %6 = arith.addf %3, %5 : vector<8x32xf32>
    %c0_5 = arith.constant 0 : index
    %c0_6 = arith.constant 0 : index
    %7 = vector.load %arg4[%c0_5, %c0_6] : memref<8x32xf32, #tpu.memory_space<vmem>>, vector<8x32xf32>
    tpu.vector_store %arg4[%c0_5, %c0_6], %6 {strides = array<i32>} : memref<8x32xf32, #tpu.memory_space<vmem>>, vector<8x32xf32>,
    return
  }
  func.func @transform_0(%arg0: i32) -> (i32, i32) {
    %c0_i32 = arith.constant 0 : i32
    %c0_i32_0 = arith.constant 0 : i32
    return %arg0, %c0_i32 : i32, i32
  }
  func.func @transform_1(%arg0: i32) -> (i32, i32) {
    %c0_i32 = arith.constant 0 : i32
    %c0_i32_0 = arith.constant 0 : i32
    %c0_i32_1 = arith.constant 0 : i32
    return %c0_i32, %c0_i32_0 : i32, i32
  }
  func.func @transform_2(%arg0: i32) -> (i32, i32) {
    %c0_i32 = arith.constant 0 : i32
    %c0_i32_0 = arith.constant 0 : i32
    %c0_i32_1 = arith.constant 0 : i32
    return %c0_i32, %c0_i32_0 : i32, i32
  }
  func.func @transform_3(%arg0: i32) -> (i32, i32) {
    %c0_i32 = arith.constant 0 : i32
    %c0_i32_0 = arith.constant 0 : i32
    return %arg0, %c0_i32 : i32, i32
  }
}

module attributes {stable_mosaic.version = 11 : i64} {
  func.func @_sparsity_kernel(%arg0: i32, %arg1: i32, %arg2: memref<4x8x8xf32, #tpu.memory_space<vmem>>, %arg3: memref<4x8x8xf32, #tpu.memory_space<vmem>>, %arg4: memref<4x8x1xf32, #tpu.memory_space<vmem>>, %arg5: memref<4x8x1xf32, #tpu.memory_space<vmem>>, %arg6: memref<4x8x1xf32, #tpu.memory_space<vmem>>) attributes {dimension_semantics = [#tpu.dimension_semantics<parallel>, #tpu.dimension_semantics<arbitrary>], iteration_bounds = array<i64: 2, 1>, scalar_prefetch = 0 : i64, scratch_operands = 2 : i64, tpu.core_type = #tpu.core_type<tc>, window_params = [{transform_indices = @transform_0, window_bounds = array<i64: 4, 8, 8>}, {transform_indices = @transform_1, window_bounds = array<i64: 4, 8, 8>}, {transform_indices = @transform_2, window_bounds = array<i64: 4, 8, 1>}]} {
    %c0_i32 = arith.constant 0 : i32
    %0 = arith.cmpi eq, %arg1, %c0_i32 : i32
    %1 = arith.extui %0 : i1 to i32
    %c0_i32_0 = arith.constant 0 : i32
    %2 = arith.cmpi ne, %1, %c0_i32_0 : i32
    scf.if %2 {
      %cst_22 = arith.constant 0xFF800000 : f32
      %21 = vector.broadcast %cst_22 : f32 to vector<4x8x1xf32>
      %c0_23 = arith.constant 0 : index
      %c0_24 = arith.constant 0 : index
      %c0_25 = arith.constant 0 : index
      %22 = vector.load %arg5[%c0_23, %c0_24, %c0_25] : memref<4x8x1xf32, #tpu.memory_space<vmem>>, vector<4x8x1xf32>
      tpu.vector_store %arg5[%c0_23, %c0_24, %c0_25], %21 {strides = array<i32>} : memref<4x8x1xf32, #tpu.memory_space<vmem>>, vector<4x8x1xf32>,
      %cst_26 = arith.constant 0.000000e+00 : f32
      %23 = vector.broadcast %cst_26 : f32 to vector<4x8x1xf32>
      %c0_27 = arith.constant 0 : index
      %c0_28 = arith.constant 0 : index
      %c0_29 = arith.constant 0 : index
      %24 = vector.load %arg6[%c0_27, %c0_28, %c0_29] : memref<4x8x1xf32, #tpu.memory_space<vmem>>, vector<4x8x1xf32>
      tpu.vector_store %arg6[%c0_27, %c0_28, %c0_29], %23 {strides = array<i32>} : memref<4x8x1xf32, #tpu.memory_space<vmem>>, vector<4x8x1xf32>,
    } else {
    }
    %c0 = arith.constant 0 : index
    %c0_1 = arith.constant 0 : index
    %c0_2 = arith.constant 0 : index
    %3 = vector.load %arg2[%c0, %c0_1, %c0_2] : memref<4x8x8xf32, #tpu.memory_space<vmem>>, vector<4x8x8xf32>
    %4 = arith.truncf %3 : vector<4x8x8xf32> to vector<4x8x8xbf16>
    %c0_3 = arith.constant 0 : index
    %c0_4 = arith.constant 0 : index
    %c0_5 = arith.constant 0 : index
    %5 = vector.load %arg3[%c0_3, %c0_4, %c0_5] : memref<4x8x8xf32, #tpu.memory_space<vmem>>, vector<4x8x8xf32>
    %6 = arith.truncf %5 : vector<4x8x8xf32> to vector<4x8x8xbf16>
    "tpu.trace_start"() <{level = 10 : i32, message = "gqd,gkd->gqk"}> : () -> ()
    %cst = arith.constant dense<0.000000e+00> : vector<4x8x8xf32>
    %7 = tpu.matmul %4, %6, %cst {dimension_numbers = #tpu.dot_dimension_numbers<[2], [2], [1], [1], [0, 0, 0, 1, 1, 1], [0], [0]>} : vector<4x8x8xbf16>, vector<4x8x8xbf16>, vector<4x8x8xf32> -> vector<4x8x8xf32>
    "tpu.trace_stop"() : () -> ()
    %c0_6 = arith.constant 0 : index
    %c0_7 = arith.constant 0 : index
    %c0_8 = arith.constant 0 : index
    %8 = vector.load %arg5[%c0_6, %c0_7, %c0_8] : memref<4x8x1xf32, #tpu.memory_space<vmem>>, vector<4x8x1xf32>
    %cst_9 = arith.constant dense<0xFF800000> : vector<4x8xf32>
    %9 = vector.multi_reduction <maximumf>, %7, %cst_9 [2] : vector<4x8x8xf32> to vector<4x8xf32>
    %10 = vector.shape_cast %9 : vector<4x8xf32> to vector<4x8x1xf32>
    %11 = arith.maximumf %8, %10 : vector<4x8x1xf32>
    %c0_10 = arith.constant 0 : index
    %c0_11 = arith.constant 0 : index
    %c0_12 = arith.constant 0 : index
    %12 = vector.load %arg5[%c0_10, %c0_11, %c0_12] : memref<4x8x1xf32, #tpu.memory_space<vmem>>, vector<4x8x1xf32>
    tpu.vector_store %arg5[%c0_10, %c0_11, %c0_12], %11 {strides = array<i32>} : memref<4x8x1xf32, #tpu.memory_space<vmem>>, vector<4x8x1xf32>,
    %c0_13 = arith.constant 0 : index
    %c0_14 = arith.constant 0 : index
    %c0_15 = arith.constant 0 : index
    %13 = vector.load %arg6[%c0_13, %c0_14, %c0_15] : memref<4x8x1xf32, #tpu.memory_space<vmem>>, vector<4x8x1xf32>
    %cst_16 = arith.constant dense<0.000000e+00> : vector<4x8xf32>
    %14 = vector.multi_reduction <add>, %7, %cst_16 [2] : vector<4x8x8xf32> to vector<4x8xf32>
    %15 = vector.shape_cast %14 : vector<4x8xf32> to vector<4x8x1xf32>
    %16 = arith.addf %13, %15 : vector<4x8x1xf32>
    %c0_17 = arith.constant 0 : index
    %c0_18 = arith.constant 0 : index
    %c0_19 = arith.constant 0 : index
    %17 = vector.load %arg6[%c0_17, %c0_18, %c0_19] : memref<4x8x1xf32, #tpu.memory_space<vmem>>, vector<4x8x1xf32>
    tpu.vector_store %arg6[%c0_17, %c0_18, %c0_19], %16 {strides = array<i32>} : memref<4x8x1xf32, #tpu.memory_space<vmem>>, vector<4x8x1xf32>,
    %c0_i32_20 = arith.constant 0 : i32
    %18 = arith.cmpi eq, %arg1, %c0_i32_20 : i32
    %19 = arith.extui %18 : i1 to i32
    %c0_i32_21 = arith.constant 0 : i32
    %20 = arith.cmpi ne, %19, %c0_i32_21 : i32
    scf.if %20 {
      %c0_22 = arith.constant 0 : index
      %c0_23 = arith.constant 0 : index
      %c0_24 = arith.constant 0 : index
      %21 = vector.load %arg5[%c0_22, %c0_23, %c0_24] : memref<4x8x1xf32, #tpu.memory_space<vmem>>, vector<4x8x1xf32>
      %c0_25 = arith.constant 0 : index
      %c0_26 = arith.constant 0 : index
      %c0_27 = arith.constant 0 : index
      %22 = vector.load %arg6[%c0_25, %c0_26, %c0_27] : memref<4x8x1xf32, #tpu.memory_space<vmem>>, vector<4x8x1xf32>
      %cst_28 = arith.constant 1.250000e-01 : f32
      %23 = vector.broadcast %cst_28 : f32 to vector<4x8x1xf32>
      %24 = arith.mulf %22, %23 : vector<4x8x1xf32>
      %25 = arith.subf %21, %24 : vector<4x8x1xf32>
      %c0_29 = arith.constant 0 : index
      %c0_30 = arith.constant 0 : index
      %c0_31 = arith.constant 0 : index
      %26 = vector.load %arg4[%c0_29, %c0_30, %c0_31] : memref<4x8x1xf32, #tpu.memory_space<vmem>>, vector<4x8x1xf32>
      tpu.vector_store %arg4[%c0_29, %c0_30, %c0_31], %25 {strides = array<i32>} : memref<4x8x1xf32, #tpu.memory_space<vmem>>, vector<4x8x1xf32>,
    } else {
    }
    return
  }
  func.func @transform_0(%arg0: i32, %arg1: i32) -> (i32, i32, i32) {
    %c0_i32 = arith.constant 0 : i32
    %c0_i32_0 = arith.constant 0 : i32
    %c0_i32_1 = arith.constant 0 : i32
    return %arg0, %c0_i32, %c0_i32_0 : i32, i32, i32
  }
  func.func @transform_1(%arg0: i32, %arg1: i32) -> (i32, i32, i32) {
    %c0_i32 = arith.constant 0 : i32
    %c0_i32_0 = arith.constant 0 : i32
    return %arg0, %arg1, %c0_i32 : i32, i32, i32
  }
  func.func @transform_2(%arg0: i32, %arg1: i32) -> (i32, i32, i32) {
    %c0_i32 = arith.constant 0 : i32
    %c0_i32_0 = arith.constant 0 : i32
    %c0_i32_1 = arith.constant 0 : i32
    return %arg0, %c0_i32, %c0_i32_0 : i32, i32, i32
  }
}

module attributes {stable_mosaic.version = 11 : i64} {
  func.func @_flash_attn_kernel(%arg0: i32, %arg1: i32, %arg2: memref<4x8x8xf32, #tpu.memory_space<vmem>>, %arg3: memref<4x8x8xf32, #tpu.memory_space<vmem>>, %arg4: memref<4x8x8xf32, #tpu.memory_space<vmem>>, %arg5: memref<4x8x8xf32, #tpu.memory_space<vmem>>, %arg6: memref<4x8x1xf32, #tpu.memory_space<vmem>>, %arg7: memref<4x8x1xf32, #tpu.memory_space<vmem>>, %arg8: memref<4x8x8xf32, #tpu.memory_space<vmem>>) attributes {dimension_semantics = [#tpu.dimension_semantics<parallel>, #tpu.dimension_semantics<arbitrary>], iteration_bounds = array<i64: 2, 1>, scalar_prefetch = 0 : i64, scratch_operands = 3 : i64, tpu.core_type = #tpu.core_type<tc>, window_params = [{transform_indices = @transform_0, window_bounds = array<i64: 4, 8, 8>}, {transform_indices = @transform_1, window_bounds = array<i64: 4, 8, 8>}, {transform_indices = @transform_2, window_bounds = array<i64: 4, 8, 8>}, {transform_indices = @transform_3, window_bounds = array<i64: 4, 8, 8>}]} {
    %c0_i32 = arith.constant 0 : i32
    %0 = arith.cmpi eq, %arg1, %c0_i32 : i32
    %1 = arith.extui %0 : i1 to i32
    %c0_i32_0 = arith.constant 0 : i32
    %2 = arith.cmpi ne, %1, %c0_i32_0 : i32
    scf.if %2 {
      %cst_33 = arith.constant 0xFF800000 : f32
      %38 = vector.broadcast %cst_33 : f32 to vector<4x8x1xf32>
      %c0_34 = arith.constant 0 : index
      %c0_35 = arith.constant 0 : index
      %c0_36 = arith.constant 0 : index
      %39 = vector.load %arg6[%c0_34, %c0_35, %c0_36] : memref<4x8x1xf32, #tpu.memory_space<vmem>>, vector<4x8x1xf32>
      tpu.vector_store %arg6[%c0_34, %c0_35, %c0_36], %38 {strides = array<i32>} : memref<4x8x1xf32, #tpu.memory_space<vmem>>, vector<4x8x1xf32>,
      %cst_37 = arith.constant 0.000000e+00 : f32
      %40 = vector.broadcast %cst_37 : f32 to vector<4x8x1xf32>
      %c0_38 = arith.constant 0 : index
      %c0_39 = arith.constant 0 : index
      %c0_40 = arith.constant 0 : index
      %41 = vector.load %arg7[%c0_38, %c0_39, %c0_40] : memref<4x8x1xf32, #tpu.memory_space<vmem>>, vector<4x8x1xf32>
      tpu.vector_store %arg7[%c0_38, %c0_39, %c0_40], %40 {strides = array<i32>} : memref<4x8x1xf32, #tpu.memory_space<vmem>>, vector<4x8x1xf32>,
      %cst_41 = arith.constant 0.000000e+00 : f32
      %42 = vector.broadcast %cst_41 : f32 to vector<4x8x8xf32>
      %c0_42 = arith.constant 0 : index
      %c0_43 = arith.constant 0 : index
      %c0_44 = arith.constant 0 : index
      %43 = vector.load %arg8[%c0_42, %c0_43, %c0_44] : memref<4x8x8xf32, #tpu.memory_space<vmem>>, vector<4x8x8xf32>
      tpu.vector_store %arg8[%c0_42, %c0_43, %c0_44], %42 {strides = array<i32>} : memref<4x8x8xf32, #tpu.memory_space<vmem>>, vector<4x8x8xf32>,
    } else {
    }
    %c0 = arith.constant 0 : index
    %c0_1 = arith.constant 0 : index
    %c0_2 = arith.constant 0 : index
    %3 = vector.load %arg2[%c0, %c0_1, %c0_2] : memref<4x8x8xf32, #tpu.memory_space<vmem>>, vector<4x8x8xf32>
    %4 = arith.truncf %3 : vector<4x8x8xf32> to vector<4x8x8xbf16>
    %c0_3 = arith.constant 0 : index
    %c0_4 = arith.constant 0 : index
    %c0_5 = arith.constant 0 : index
    %5 = vector.load %arg3[%c0_3, %c0_4, %c0_5] : memref<4x8x8xf32, #tpu.memory_space<vmem>>, vector<4x8x8xf32>
    %6 = arith.truncf %5 : vector<4x8x8xf32> to vector<4x8x8xbf16>
    %c0_6 = arith.constant 0 : index
    %c0_7 = arith.constant 0 : index
    %c0_8 = arith.constant 0 : index
    %7 = vector.load %arg4[%c0_6, %c0_7, %c0_8] : memref<4x8x8xf32, #tpu.memory_space<vmem>>, vector<4x8x8xf32>
    %8 = arith.truncf %7 : vector<4x8x8xf32> to vector<4x8x8xbf16>
    "tpu.trace_start"() <{level = 10 : i32, message = "gqd,gkd->gqk"}> : () -> ()
    %cst = arith.constant dense<0.000000e+00> : vector<4x8x8xf32>
    %9 = tpu.matmul %4, %6, %cst {dimension_numbers = #tpu.dot_dimension_numbers<[2], [2], [1], [1], [0, 0, 0, 1, 1, 1], [0], [0]>} : vector<4x8x8xbf16>, vector<4x8x8xbf16>, vector<4x8x8xf32> -> vector<4x8x8xf32>
    "tpu.trace_stop"() : () -> ()
    %cst_9 = arith.constant 0.353553385 : f32
    %10 = vector.broadcast %cst_9 : f32 to vector<4x8x8xf32>
    %11 = arith.mulf %9, %10 : vector<4x8x8xf32>
    %c0_10 = arith.constant 0 : index
    %c0_11 = arith.constant 0 : index
    %c0_12 = arith.constant 0 : index
    %12 = vector.load %arg6[%c0_10, %c0_11, %c0_12] : memref<4x8x1xf32, #tpu.memory_space<vmem>>, vector<4x8x1xf32>
    %cst_13 = arith.constant dense<0xFF800000> : vector<4x8xf32>
    %13 = vector.multi_reduction <maximumf>, %11, %cst_13 [2] : vector<4x8x8xf32> to vector<4x8xf32>
    %14 = vector.shape_cast %13 : vector<4x8xf32> to vector<4x8x1xf32>
    %15 = arith.maximumf %12, %14 : vector<4x8x1xf32>
    %16 = arith.subf %12, %15 : vector<4x8x1xf32>
    %17 = math.exp %16 : vector<4x8x1xf32>
    %18 = vector.broadcast %15 : vector<4x8x1xf32> to vector<4x8x8xf32>
    %19 = arith.subf %11, %18 : vector<4x8x8xf32>
    %20 = math.exp %19 : vector<4x8x8xf32>
    %c0_14 = arith.constant 0 : index
    %c0_15 = arith.constant 0 : index
    %c0_16 = arith.constant 0 : index
    %21 = vector.load %arg7[%c0_14, %c0_15, %c0_16] : memref<4x8x1xf32, #tpu.memory_space<vmem>>, vector<4x8x1xf32>
    %22 = arith.mulf %17, %21 : vector<4x8x1xf32>
    %cst_17 = arith.constant dense<0.000000e+00> : vector<4x8xf32>
    %23 = vector.multi_reduction <add>, %20, %cst_17 [2] : vector<4x8x8xf32> to vector<4x8xf32>
    %24 = vector.shape_cast %23 : vector<4x8xf32> to vector<4x8x1xf32>
    %25 = arith.addf %22, %24 : vector<4x8x1xf32>
    %c0_18 = arith.constant 0 : index
    %c0_19 = arith.constant 0 : index
    %c0_20 = arith.constant 0 : index
    %26 = vector.load %arg7[%c0_18, %c0_19, %c0_20] : memref<4x8x1xf32, #tpu.memory_space<vmem>>, vector<4x8x1xf32>
    tpu.vector_store %arg7[%c0_18, %c0_19, %c0_20], %25 {strides = array<i32>} : memref<4x8x1xf32, #tpu.memory_space<vmem>>, vector<4x8x1xf32>,
    %c0_21 = arith.constant 0 : index
    %c0_22 = arith.constant 0 : index
    %c0_23 = arith.constant 0 : index
    %27 = vector.load %arg8[%c0_21, %c0_22, %c0_23] : memref<4x8x8xf32, #tpu.memory_space<vmem>>, vector<4x8x8xf32>
    %28 = vector.broadcast %17 : vector<4x8x1xf32> to vector<4x8x8xf32>
    %29 = arith.mulf %28, %27 : vector<4x8x8xf32>
    %30 = arith.truncf %20 : vector<4x8x8xf32> to vector<4x8x8xbf16>
    "tpu.trace_start"() <{level = 10 : i32, message = "gqk,gkd->gqd"}> : () -> ()
    %cst_24 = arith.constant dense<0.000000e+00> : vector<4x8x8xf32>
    %31 = tpu.matmul %30, %8, %cst_24 {dimension_numbers = #tpu.dot_dimension_numbers<[2], [1], [1], [2], [0, 0, 0, 1, 1, 2], [0], [0]>} : vector<4x8x8xbf16>, vector<4x8x8xbf16>, vector<4x8x8xf32> -> vector<4x8x8xf32>
    "tpu.trace_stop"() : () -> ()
    %32 = arith.addf %29, %31 : vector<4x8x8xf32>
    %c0_25 = arith.constant 0 : index
    %c0_26 = arith.constant 0 : index
    %c0_27 = arith.constant 0 : index
    %33 = vector.load %arg8[%c0_25, %c0_26, %c0_27] : memref<4x8x8xf32, #tpu.memory_space<vmem>>, vector<4x8x8xf32>
    tpu.vector_store %arg8[%c0_25, %c0_26, %c0_27], %32 {strides = array<i32>} : memref<4x8x8xf32, #tpu.memory_space<vmem>>, vector<4x8x8xf32>,
    %c0_28 = arith.constant 0 : index
    %c0_29 = arith.constant 0 : index
    %c0_30 = arith.constant 0 : index
    %34 = vector.load %arg6[%c0_28, %c0_29, %c0_30] : memref<4x8x1xf32, #tpu.memory_space<vmem>>, vector<4x8x1xf32>
    tpu.vector_store %arg6[%c0_28, %c0_29, %c0_30], %15 {strides = array<i32>} : memref<4x8x1xf32, #tpu.memory_space<vmem>>, vector<4x8x1xf32>,
    %c0_i32_31 = arith.constant 0 : i32
    %35 = arith.cmpi eq, %arg1, %c0_i32_31 : i32
    %36 = arith.extui %35 : i1 to i32
    %c0_i32_32 = arith.constant 0 : i32
    %37 = arith.cmpi ne, %36, %c0_i32_32 : i32
    scf.if %37 {
      %c0_33 = arith.constant 0 : index
      %c0_34 = arith.constant 0 : index
      %c0_35 = arith.constant 0 : index
      %38 = vector.load %arg8[%c0_33, %c0_34, %c0_35] : memref<4x8x8xf32, #tpu.memory_space<vmem>>, vector<4x8x8xf32>
      %c0_36 = arith.constant 0 : index
      %c0_37 = arith.constant 0 : index
      %c0_38 = arith.constant 0 : index
      %39 = vector.load %arg7[%c0_36, %c0_37, %c0_38] : memref<4x8x1xf32, #tpu.memory_space<vmem>>, vector<4x8x1xf32>
      %40 = vector.broadcast %39 : vector<4x8x1xf32> to vector<4x8x8xf32>
      %41 = arith.divf %38, %40 : vector<4x8x8xf32>
      %c0_39 = arith.constant 0 : index
      %c0_40 = arith.constant 0 : index
      %c0_41 = arith.constant 0 : index
      %42 = vector.load %arg5[%c0_39, %c0_40, %c0_41] : memref<4x8x8xf32, #tpu.memory_space<vmem>>, vector<4x8x8xf32>
      tpu.vector_store %arg5[%c0_39, %c0_40, %c0_41], %41 {strides = array<i32>} : memref<4x8x8xf32, #tpu.memory_space<vmem>>, vector<4x8x8xf32>,
    } else {
    }
    return
  }
  func.func @transform_0(%arg0: i32, %arg1: i32) -> (i32, i32, i32) {
    %c0_i32 = arith.constant 0 : i32
    %c0_i32_0 = arith.constant 0 : i32
    %c0_i32_1 = arith.constant 0 : i32
    return %arg0, %c0_i32, %c0_i32_0 : i32, i32, i32
  }
  func.func @transform_1(%arg0: i32, %arg1: i32) -> (i32, i32, i32) {
    %c0_i32 = arith.constant 0 : i32
    %c0_i32_0 = arith.constant 0 : i32
    return %arg0, %arg1, %c0_i32 : i32, i32, i32
  }
  func.func @transform_2(%arg0: i32, %arg1: i32) -> (i32, i32, i32) {
    %c0_i32 = arith.constant 0 : i32
    %c0_i32_0 = arith.constant 0 : i32
    return %arg0, %arg1, %c0_i32 : i32, i32, i32
  }
  func.func @transform_3(%arg0: i32, %arg1: i32) -> (i32, i32, i32) {
    %c0_i32 = arith.constant 0 : i32
    %c0_i32_0 = arith.constant 0 : i32
    %c0_i32_1 = arith.constant 0 : i32
    return %arg0, %c0_i32, %c0_i32_0 : i32, i32, i32
  }
}

module attributes {stable_mosaic.version = 11 : i64} {
  func.func @_matmul_add_ln_kernel(%arg0: i32, %arg1: memref<8x32xf32, #tpu.memory_space<vmem>>, %arg2: memref<8x32xf32, #tpu.memory_space<vmem>>, %arg3: memref<32x32xbf16, #tpu.memory_space<vmem>>, %arg4: memref<1x32xf32, #tpu.memory_space<vmem>>, %arg5: memref<1x32xf32, #tpu.memory_space<vmem>>, %arg6: memref<1x32xf32, #tpu.memory_space<vmem>>, %arg7: memref<8x32xf32, #tpu.memory_space<vmem>>) attributes {dimension_semantics = [#tpu.dimension_semantics<parallel>], iteration_bounds = array<i64: 2>, scalar_prefetch = 0 : i64, scratch_operands = 0 : i64, tpu.core_type = #tpu.core_type<tc>, window_params = [{transform_indices = @transform_0, window_bounds = array<i64: 8, 32>}, {transform_indices = @transform_1, window_bounds = array<i64: 8, 32>}, {pipeline_mode = #tpu.pipeline_mode<synchronous>, transform_indices = @transform_2, window_bounds = array<i64: 32, 32>}, {pipeline_mode = #tpu.pipeline_mode<synchronous>, transform_indices = @transform_3, window_bounds = array<i64: 1, 32>}, {pipeline_mode = #tpu.pipeline_mode<synchronous>, transform_indices = @transform_4, window_bounds = array<i64: 1, 32>}, {pipeline_mode = #tpu.pipeline_mode<synchronous>, transform_indices = @transform_5, window_bounds = array<i64: 1, 32>}, {transform_indices = @transform_6, window_bounds = array<i64: 8, 32>}]} {
    %c0 = arith.constant 0 : index
    %c0_0 = arith.constant 0 : index
    %0 = vector.load %arg1[%c0, %c0_0] : memref<8x32xf32, #tpu.memory_space<vmem>>, vector<8x32xf32>
    %1 = arith.truncf %0 : vector<8x32xf32> to vector<8x32xbf16>
    %c0_1 = arith.constant 0 : index
    %c0_2 = arith.constant 0 : index
    %2 = vector.load %arg3[%c0_1, %c0_2] : memref<32x32xbf16, #tpu.memory_space<vmem>>, vector<32x32xbf16>
    %cst = arith.constant dense<0.000000e+00> : vector<8x32xf32>
    %3 = tpu.matmul %1, %2, %cst {dimension_numbers = #tpu.dot_dimension_numbers<[1], [0], [0], [1], [0, 0, 1, 1], [], []>} : vector<8x32xbf16>, vector<32x32xbf16>, vector<8x32xf32> -> vector<8x32xf32>
    %c0_3 = arith.constant 0 : index
    %c0_4 = arith.constant 0 : index
    %4 = vector.load %arg4[%c0_3, %c0_4] : memref<1x32xf32, #tpu.memory_space<vmem>>, vector<1x32xf32>
    %5 = vector.broadcast %4 : vector<1x32xf32> to vector<8x32xf32>
    %6 = arith.addf %3, %5 : vector<8x32xf32>
    %c0_5 = arith.constant 0 : index
    %c0_6 = arith.constant 0 : index
    %7 = vector.load %arg2[%c0_5, %c0_6] : memref<8x32xf32, #tpu.memory_space<vmem>>, vector<8x32xf32>
    %8 = arith.addf %6, %7 : vector<8x32xf32>
    %c0_7 = arith.constant 0 : index
    %c0_8 = arith.constant 0 : index
    %9 = vector.load %arg5[%c0_7, %c0_8] : memref<1x32xf32, #tpu.memory_space<vmem>>, vector<1x32xf32>
    %c0_9 = arith.constant 0 : index
    %c0_10 = arith.constant 0 : index
    %10 = vector.load %arg6[%c0_9, %c0_10] : memref<1x32xf32, #tpu.memory_space<vmem>>, vector<1x32xf32>
    %cst_11 = arith.constant dense<0.000000e+00> : vector<8xf32>
    %11 = vector.multi_reduction <add>, %8, %cst_11 [1] : vector<8x32xf32> to vector<8xf32>
    %12 = vector.shape_cast %11 : vector<8xf32> to vector<8x1xf32>
    %cst_12 = arith.constant 3.200000e+01 : f32
    %13 = vector.broadcast %cst_12 : f32 to vector<8x1xf32>
    %14 = arith.divf %12, %13 : vector<8x1xf32>
    %15 = vector.broadcast %14 : vector<8x1xf32> to vector<8x32xf32>
    %16 = arith.subf %8, %15 : vector<8x32xf32>
    %17 = arith.mulf %16, %16 : vector<8x32xf32>
    %cst_13 = arith.constant dense<0.000000e+00> : vector<8xf32>
    %18 = vector.multi_reduction <add>, %17, %cst_13 [1] : vector<8x32xf32> to vector<8xf32>
    %19 = vector.shape_cast %18 : vector<8xf32> to vector<8x1xf32>
    %cst_14 = arith.constant 3.200000e+01 : f32
    %20 = vector.broadcast %cst_14 : f32 to vector<8x1xf32>
    %21 = arith.divf %19, %20 : vector<8x1xf32>
    %cst_15 = arith.constant 9.99999974E-6 : f32
    %22 = vector.broadcast %cst_15 : f32 to vector<8x1xf32>
    %23 = arith.addf %21, %22 : vector<8x1xf32>
    %24 = math.rsqrt %23 : vector<8x1xf32>
    %25 = vector.broadcast %24 : vector<8x1xf32> to vector<8x32xf32>
    %26 = arith.mulf %16, %25 : vector<8x32xf32>
    %27 = vector.broadcast %9 : vector<1x32xf32> to vector<8x32xf32>
    %28 = arith.mulf %26, %27 : vector<8x32xf32>
    %29 = vector.broadcast %10 : vector<1x32xf32> to vector<8x32xf32>
    %30 = arith.addf %28, %29 : vector<8x32xf32>
    %c0_16 = arith.constant 0 : index
    %c0_17 = arith.constant 0 : index
    %31 = vector.load %arg7[%c0_16, %c0_17] : memref<8x32xf32, #tpu.memory_space<vmem>>, vector<8x32xf32>
    tpu.vector_store %arg7[%c0_16, %c0_17], %30 {strides = array<i32>} : memref<8x32xf32, #tpu.memory_space<vmem>>, vector<8x32xf32>,
    return
  }
  func.func @transform_0(%arg0: i32) -> (i32, i32) {
    %c0_i32 = arith.constant 0 : i32
    %c0_i32_0 = arith.constant 0 : i32
    return %arg0, %c0_i32 : i32, i32
  }
  func.func @transform_1(%arg0: i32) -> (i32, i32) {
    %c0_i32 = arith.constant 0 : i32
    %c0_i32_0 = arith.constant 0 : i32
    return %arg0, %c0_i32 : i32, i32
  }
  func.func @transform_2(%arg0: i32) -> (i32, i32) {
    %c0_i32 = arith.constant 0 : i32
    %c0_i32_0 = arith.constant 0 : i32
    %c0_i32_1 = arith.constant 0 : i32
    return %c0_i32, %c0_i32_0 : i32, i32
  }
  func.func @transform_3(%arg0: i32) -> (i32, i32) {
    %c0_i32 = arith.constant 0 : i32
    %c0_i32_0 = arith.constant 0 : i32
    %c0_i32_1 = arith.constant 0 : i32
    return %c0_i32, %c0_i32_0 : i32, i32
  }
  func.func @transform_4(%arg0: i32) -> (i32, i32) {
    %c0_i32 = arith.constant 0 : i32
    %c0_i32_0 = arith.constant 0 : i32
    %c0_i32_1 = arith.constant 0 : i32
    return %c0_i32, %c0_i32_0 : i32, i32
  }
  func.func @transform_5(%arg0: i32) -> (i32, i32) {
    %c0_i32 = arith.constant 0 : i32
    %c0_i32_0 = arith.constant 0 : i32
    %c0_i32_1 = arith.constant 0 : i32
    return %c0_i32, %c0_i32_0 : i32, i32
  }
  func.func @transform_6(%arg0: i32) -> (i32, i32) {
    %c0_i32 = arith.constant 0 : i32
    %c0_i32_0 = arith.constant 0 : i32
    return %arg0, %c0_i32 : i32, i32
  }
}

module attributes {stable_mosaic.version = 11 : i64} {
  func.func @_matmul_kernel(%arg0: i32, %arg1: memref<8x32xf32, #tpu.memory_space<vmem>>, %arg2: memref<32x32xbf16, #tpu.memory_space<vmem>>, %arg3: memref<1x32xf32, #tpu.memory_space<vmem>>, %arg4: memref<8x32xf32, #tpu.memory_space<vmem>>) attributes {dimension_semantics = [#tpu.dimension_semantics<parallel>], iteration_bounds = array<i64: 2>, scalar_prefetch = 0 : i64, scratch_operands = 0 : i64, tpu.core_type = #tpu.core_type<tc>, window_params = [{transform_indices = @transform_0, window_bounds = array<i64: 8, 32>}, {pipeline_mode = #tpu.pipeline_mode<synchronous>, transform_indices = @transform_1, window_bounds = array<i64: 32, 32>}, {pipeline_mode = #tpu.pipeline_mode<synchronous>, transform_indices = @transform_2, window_bounds = array<i64: 1, 32>}, {transform_indices = @transform_3, window_bounds = array<i64: 8, 32>}]} {
    %c0 = arith.constant 0 : index
    %c0_0 = arith.constant 0 : index
    %0 = vector.load %arg1[%c0, %c0_0] : memref<8x32xf32, #tpu.memory_space<vmem>>, vector<8x32xf32>
    %1 = arith.truncf %0 : vector<8x32xf32> to vector<8x32xbf16>
    %c0_1 = arith.constant 0 : index
    %c0_2 = arith.constant 0 : index
    %2 = vector.load %arg2[%c0_1, %c0_2] : memref<32x32xbf16, #tpu.memory_space<vmem>>, vector<32x32xbf16>
    %cst = arith.constant dense<0.000000e+00> : vector<8x32xf32>
    %3 = tpu.matmul %1, %2, %cst {dimension_numbers = #tpu.dot_dimension_numbers<[1], [0], [0], [1], [0, 0, 1, 1], [], []>} : vector<8x32xbf16>, vector<32x32xbf16>, vector<8x32xf32> -> vector<8x32xf32>
    %c0_3 = arith.constant 0 : index
    %c0_4 = arith.constant 0 : index
    %4 = vector.load %arg3[%c0_3, %c0_4] : memref<1x32xf32, #tpu.memory_space<vmem>>, vector<1x32xf32>
    %5 = vector.broadcast %4 : vector<1x32xf32> to vector<8x32xf32>
    %6 = arith.addf %3, %5 : vector<8x32xf32>
    %cst_5 = arith.constant 5.000000e-01 : f32
    %7 = vector.broadcast %cst_5 : f32 to vector<8x32xf32>
    %8 = arith.mulf %7, %6 : vector<8x32xf32>
    %cst_6 = arith.constant 0.707106769 : f32
    %9 = vector.broadcast %cst_6 : f32 to vector<8x32xf32>
    %10 = arith.mulf %6, %9 : vector<8x32xf32>
    %11 = math.absf %10 : vector<8x32xf32>
    %cst_7 = arith.constant 0.327591091 : f32
    %12 = vector.broadcast %cst_7 : f32 to vector<8x32xf32>
    %13 = arith.mulf %12, %11 : vector<8x32xf32>
    %cst_8 = arith.constant 1.000000e+00 : f32
    %14 = vector.broadcast %cst_8 : f32 to vector<8x32xf32>
    %15 = arith.addf %14, %13 : vector<8x32xf32>
    %cst_9 = arith.constant 1.000000e+00 : f32
    %16 = vector.broadcast %cst_9 : f32 to vector<8x32xf32>
    %17 = arith.divf %16, %15 : vector<8x32xf32>
    %cst_10 = arith.constant 1.06140542 : f32
    %18 = vector.broadcast %cst_10 : f32 to vector<8x32xf32>
    %19 = arith.mulf %18, %17 : vector<8x32xf32>
    %cst_11 = arith.constant -1.45315206 : f32
    %20 = vector.broadcast %cst_11 : f32 to vector<8x32xf32>
    %21 = arith.addf %19, %20 : vector<8x32xf32>
    %22 = arith.mulf %21, %17 : vector<8x32xf32>
    %cst_12 = arith.constant 1.42141378 : f32
    %23 = vector.broadcast %cst_12 : f32 to vector<8x32xf32>
    %24 = arith.addf %22, %23 : vector<8x32xf32>
    %25 = arith.mulf %24, %17 : vector<8x32xf32>
    %cst_13 = arith.constant -0.284496725 : f32
    %26 = vector.broadcast %cst_13 : f32 to vector<8x32xf32>
    %27 = arith.addf %25, %26 : vector<8x32xf32>
    %28 = arith.mulf %27, %17 : vector<8x32xf32>
    %cst_14 = arith.constant 0.254829586 : f32
    %29 = vector.broadcast %cst_14 : f32 to vector<8x32xf32>
    %30 = arith.addf %28, %29 : vector<8x32xf32>
    %31 = arith.mulf %30, %17 : vector<8x32xf32>
    %cst_15 = arith.constant 0.000000e+00 : f32
    %32 = vector.broadcast %cst_15 : f32 to vector<8x32xf32>
    %33 = arith.subf %32, %11 : vector<8x32xf32>
    %34 = arith.mulf %33, %11 : vector<8x32xf32>
    %35 = math.exp %34 : vector<8x32xf32>
    %36 = arith.mulf %31, %35 : vector<8x32xf32>
    %cst_16 = arith.constant 1.000000e+00 : f32
    %37 = vector.broadcast %cst_16 : f32 to vector<8x32xf32>
    %38 = arith.subf %37, %36 : vector<8x32xf32>
    %cst_17 = arith.constant 0.000000e+00 : f32
    %39 = vector.broadcast %cst_17 : f32 to vector<8x32xf32>
    %40 = arith.cmpf oge, %10, %39 : vector<8x32xf32>
    %cst_18 = arith.constant 0.000000e+00 : f32
    %41 = vector.broadcast %cst_18 : f32 to vector<8x32xf32>
    %42 = arith.subf %41, %38 : vector<8x32xf32>
    %43 = arith.select %40, %38, %42 : vector<8x32xi1>, vector<8x32xf32>
    %cst_19 = arith.constant 1.000000e+00 : f32
    %44 = vector.broadcast %cst_19 : f32 to vector<8x32xf32>
    %45 = arith.addf %44, %43 : vector<8x32xf32>
    %46 = arith.mulf %8, %45 : vector<8x32xf32>
    %c0_20 = arith.constant 0 : index
    %c0_21 = arith.constant 0 : index
    %47 = vector.load %arg4[%c0_20, %c0_21] : memref<8x32xf32, #tpu.memory_space<vmem>>, vector<8x32xf32>
    tpu.vector_store %arg4[%c0_20, %c0_21], %46 {strides = array<i32>} : memref<8x32xf32, #tpu.memory_space<vmem>>, vector<8x32xf32>,
    return
  }
  func.func @transform_0(%arg0: i32) -> (i32, i32) {
    %c0_i32 = arith.constant 0 : i32
    %c0_i32_0 = arith.constant 0 : i32
    return %arg0, %c0_i32 : i32, i32
  }
  func.func @transform_1(%arg0: i32) -> (i32, i32) {
    %c0_i32 = arith.constant 0 : i32
    %c0_i32_0 = arith.constant 0 : i32
    %c0_i32_1 = arith.constant 0 : i32
    return %c0_i32, %c0_i32_0 : i32, i32
  }
  func.func @transform_2(%arg0: i32) -> (i32, i32) {
    %c0_i32 = arith.constant 0 : i32
    %c0_i32_0 = arith.constant 0 : i32
    %c0_i32_1 = arith.constant 0 : i32
    return %c0_i32, %c0_i32_0 : i32, i32
  }
  func.func @transform_3(%arg0: i32) -> (i32, i32) {
    %c0_i32 = arith.constant 0 : i32
    %c0_i32_0 = arith.constant 0 : i32
    return %arg0, %c0_i32 : i32, i32
  }
}

module attributes {stable_mosaic.version = 11 : i64} {
  func.func @_matmul_kernel(%arg0: i32, %arg1: memref<8x32xf32, #tpu.memory_space<vmem>>, %arg2: memref<32x32xbf16, #tpu.memory_space<vmem>>, %arg3: memref<1x32xf32, #tpu.memory_space<vmem>>, %arg4: memref<8x32xf32, #tpu.memory_space<vmem>>) attributes {dimension_semantics = [#tpu.dimension_semantics<parallel>], iteration_bounds = array<i64: 1>, scalar_prefetch = 0 : i64, scratch_operands = 0 : i64, tpu.core_type = #tpu.core_type<tc>, window_params = [{transform_indices = @transform_0, window_bounds = array<i64: 8, 32>}, {pipeline_mode = #tpu.pipeline_mode<synchronous>, transform_indices = @transform_1, window_bounds = array<i64: 32, 32>}, {pipeline_mode = #tpu.pipeline_mode<synchronous>, transform_indices = @transform_2, window_bounds = array<i64: 1, 32>}, {transform_indices = @transform_3, window_bounds = array<i64: 8, 32>}]} {
    %c0 = arith.constant 0 : index
    %c0_0 = arith.constant 0 : index
    %0 = vector.load %arg1[%c0, %c0_0] : memref<8x32xf32, #tpu.memory_space<vmem>>, vector<8x32xf32>
    %1 = arith.truncf %0 : vector<8x32xf32> to vector<8x32xbf16>
    %c0_1 = arith.constant 0 : index
    %c0_2 = arith.constant 0 : index
    %2 = vector.load %arg2[%c0_1, %c0_2] : memref<32x32xbf16, #tpu.memory_space<vmem>>, vector<32x32xbf16>
    %cst = arith.constant dense<0.000000e+00> : vector<8x32xf32>
    %3 = tpu.matmul %1, %2, %cst {dimension_numbers = #tpu.dot_dimension_numbers<[1], [0], [0], [1], [0, 0, 1, 1], [], []>} : vector<8x32xbf16>, vector<32x32xbf16>, vector<8x32xf32> -> vector<8x32xf32>
    %c0_3 = arith.constant 0 : index
    %c0_4 = arith.constant 0 : index
    %4 = vector.load %arg3[%c0_3, %c0_4] : memref<1x32xf32, #tpu.memory_space<vmem>>, vector<1x32xf32>
    %5 = vector.broadcast %4 : vector<1x32xf32> to vector<8x32xf32>
    %6 = arith.addf %3, %5 : vector<8x32xf32>
    %c0_5 = arith.constant 0 : index
    %c0_6 = arith.constant 0 : index
    %7 = vector.load %arg4[%c0_5, %c0_6] : memref<8x32xf32, #tpu.memory_space<vmem>>, vector<8x32xf32>
    tpu.vector_store %arg4[%c0_5, %c0_6], %6 {strides = array<i32>} : memref<8x32xf32, #tpu.memory_space<vmem>>, vector<8x32xf32>,
    return
  }
  func.func @transform_0(%arg0: i32) -> (i32, i32) {
    %c0_i32 = arith.constant 0 : i32
    %c0_i32_0 = arith.constant 0 : i32
    return %arg0, %c0_i32 : i32, i32
  }
  func.func @transform_1(%arg0: i32) -> (i32, i32) {
    %c0_i32 = arith.constant 0 : i32
    %c0_i32_0 = arith.constant 0 : i32
    %c0_i32_1 = arith.constant 0 : i32
    return %c0_i32, %c0_i32_0 : i32, i32
  }
  func.func @transform_2(%arg0: i32) -> (i32, i32) {
    %c0_i32 = arith.constant 0 : i32
    %c0_i32_0 = arith.constant 0 : i32
    %c0_i32_1 = arith.constant 0 : i32
    return %c0_i32, %c0_i32_0 : i32, i32
  }
  func.func @transform_3(%arg0: i32) -> (i32, i32) {
    %c0_i32 = arith.constant 0 : i32
    %c0_i32_0 = arith.constant 0 : i32
    return %arg0, %c0_i32 : i32, i32
  }
}

module attributes {stable_mosaic.version = 11 : i64} {
  func.func @_conv_pool_kernel(%arg0: i32, %arg1: memref<1x8x32xf32, #tpu.memory_space<vmem>>, %arg2: memref<3x32x32xbf16, #tpu.memory_space<vmem>>, %arg3: memref<1x32xf32, #tpu.memory_space<vmem>>, %arg4: memref<1x4x32xf32, #tpu.memory_space<vmem>>) attributes {dimension_semantics = [#tpu.dimension_semantics<parallel>], iteration_bounds = array<i64: 2>, scalar_prefetch = 0 : i64, scratch_operands = 0 : i64, tpu.core_type = #tpu.core_type<tc>, window_params = [{transform_indices = @transform_0, window_bounds = array<i64: 1, 8, 32>}, {pipeline_mode = #tpu.pipeline_mode<synchronous>, transform_indices = @transform_1, window_bounds = array<i64: 3, 32, 32>}, {pipeline_mode = #tpu.pipeline_mode<synchronous>, transform_indices = @transform_2, window_bounds = array<i64: 1, 32>}, {transform_indices = @transform_3, window_bounds = array<i64: 1, 4, 32>}]} {
    %c0 = arith.constant 0 : index
    %c0_0 = arith.constant 0 : index
    %c0_1 = arith.constant 0 : index
    %0 = vector.load %arg1[%c0, %c0_0, %c0_1] : memref<1x8x32xf32, #tpu.memory_space<vmem>>, vector<1x8x32xf32>
    %1 = vector.shape_cast %0 : vector<1x8x32xf32> to vector<8x32xf32>
    %c1_i32 = arith.constant 1 : i32
    %2 = tpu.dynamic_rotate %1 by %c1_i32 dim 0 : vector<8x32xf32>, i32 -> vector<8x32xf32>
    %3 = arith.truncf %2 : vector<8x32xf32> to vector<8x32xbf16>
    %4 = arith.truncf %1 : vector<8x32xf32> to vector<8x32xbf16>
    %c7_i32 = arith.constant 7 : i32
    %5 = tpu.dynamic_rotate %1 by %c7_i32 dim 0 : vector<8x32xf32>, i32 -> vector<8x32xf32>
    %6 = arith.truncf %5 : vector<8x32xf32> to vector<8x32xbf16>
    %c0_2 = arith.constant 0 : index
    %c0_3 = arith.constant 0 : index
    %c0_4 = arith.constant 0 : index
    %7 = vector.load %arg2[%c0_2, %c0_3, %c0_4] : memref<3x32x32xbf16, #tpu.memory_space<vmem>>, vector<1x32x32xbf16>
    %8 = vector.shape_cast %7 : vector<1x32x32xbf16> to vector<32x32xbf16>
    %cst = arith.constant dense<0.000000e+00> : vector<8x32xf32>
    %9 = tpu.matmul %3, %8, %cst {dimension_numbers = #tpu.dot_dimension_numbers<[1], [0], [0], [1], [0, 0, 1, 1], [], []>} : vector<8x32xbf16>, vector<32x32xbf16>, vector<8x32xf32> -> vector<8x32xf32>
    %c1 = arith.constant 1 : index
    %c0_5 = arith.constant 0 : index
    %c0_6 = arith.constant 0 : index
    %10 = vector.load %arg2[%c1, %c0_5, %c0_6] : memref<3x32x32xbf16, #tpu.memory_space<vmem>>, vector<1x32x32xbf16>
    %11 = vector.shape_cast %10 : vector<1x32x32xbf16> to vector<32x32xbf16>
    %cst_7 = arith.constant dense<0.000000e+00> : vector<8x32xf32>
    %12 = tpu.matmul %4, %11, %cst_7 {dimension_numbers = #tpu.dot_dimension_numbers<[1], [0], [0], [1], [0, 0, 1, 1], [], []>} : vector<8x32xbf16>, vector<32x32xbf16>, vector<8x32xf32> -> vector<8x32xf32>
    %13 = arith.addf %9, %12 : vector<8x32xf32>
    %c2 = arith.constant 2 : index
    %c0_8 = arith.constant 0 : index
    %c0_9 = arith.constant 0 : index
    %14 = vector.load %arg2[%c2, %c0_8, %c0_9] : memref<3x32x32xbf16, #tpu.memory_space<vmem>>, vector<1x32x32xbf16>
    %15 = vector.shape_cast %14 : vector<1x32x32xbf16> to vector<32x32xbf16>
    %cst_10 = arith.constant dense<0.000000e+00> : vector<8x32xf32>
    %16 = tpu.matmul %6, %15, %cst_10 {dimension_numbers = #tpu.dot_dimension_numbers<[1], [0], [0], [1], [0, 0, 1, 1], [], []>} : vector<8x32xbf16>, vector<32x32xbf16>, vector<8x32xf32> -> vector<8x32xf32>
    %17 = arith.addf %13, %16 : vector<8x32xf32>
    %c0_11 = arith.constant 0 : index
    %c0_12 = arith.constant 0 : index
    %18 = vector.load %arg3[%c0_11, %c0_12] : memref<1x32xf32, #tpu.memory_space<vmem>>, vector<1x32xf32>
    %19 = vector.broadcast %18 : vector<1x32xf32> to vector<8x32xf32>
    %20 = arith.addf %17, %19 : vector<8x32xf32>
    %cst_13 = arith.constant 0.000000e+00 : f32
    %21 = vector.broadcast %cst_13 : f32 to vector<8x32xf32>
    %22 = arith.cmpf ogt, %20, %21 : vector<8x32xf32>
    %23 = math.exp %20 : vector<8x32xf32>
    %cst_14 = arith.constant 1.000000e+00 : f32
    %24 = vector.broadcast %cst_14 : f32 to vector<8x32xf32>
    %25 = arith.subf %23, %24 : vector<8x32xf32>
    %26 = arith.select %22, %20, %25 : vector<8x32xi1>, vector<8x32xf32>
    %27 = tpu.iota {dimensions = array<i32: 0>} : vector<8x1xi32>
    %c0_i32 = arith.constant 0 : i32
    %28 = vector.broadcast %c0_i32 : i32 to vector<8x1xi32>
    %29 = arith.cmpi eq, %27, %28 : vector<8x1xi32>
    %c1_i32_15 = arith.constant 1 : i32
    %30 = tpu.dynamic_rotate %26 by %c1_i32_15 dim 0 : vector<8x32xf32>, i32 -> vector<8x32xf32>
    %cst_16 = arith.constant -3.000000e+38 : f32
    %31 = vector.shape_cast %29 : vector<8x1xi1> to vector<8x1xi1>
    %32 = vector.broadcast %31 : vector<8x1xi1> to vector<8x32xi1>
    %33 = vector.broadcast %cst_16 : f32 to vector<8x32xf32>
    %34 = arith.select %32, %33, %30 : vector<8x32xi1>, vector<8x32xf32>
    %c7_i32_17 = arith.constant 7 : i32
    %35 = vector.broadcast %c7_i32_17 : i32 to vector<8x1xi32>
    %36 = arith.cmpi eq, %27, %35 : vector<8x1xi32>
    %c7_i32_18 = arith.constant 7 : i32
    %37 = tpu.dynamic_rotate %26 by %c7_i32_18 dim 0 : vector<8x32xf32>, i32 -> vector<8x32xf32>
    %cst_19 = arith.constant -3.000000e+38 : f32
    %38 = vector.shape_cast %36 : vector<8x1xi1> to vector<8x1xi1>
    %39 = vector.broadcast %38 : vector<8x1xi1> to vector<8x32xi1>
    %40 = vector.broadcast %cst_19 : f32 to vector<8x32xf32>
    %41 = arith.select %39, %40, %37 : vector<8x32xi1>, vector<8x32xf32>
    %42 = arith.maximumf %26, %34 : vector<8x32xf32>
    %43 = arith.maximumf %42, %41 : vector<8x32xf32>
    %44 = tpu.iota {dimensions = array<i32: 1>} : vector<4x8xi32>
    %45 = tpu.iota {dimensions = array<i32: 0>} : vector<4x8xi32>
    %c2_i32 = arith.constant 2 : i32
    %46 = vector.broadcast %c2_i32 : i32 to vector<4x8xi32>
    %47 = arith.muli %46, %45 : vector<4x8xi32>
    %48 = arith.cmpi eq, %44, %47 : vector<4x8xi32>
    %49 = arith.extui %48 : vector<4x8xi1> to vector<4x8xi32>
    %50 = arith.sitofp %49 : vector<4x8xi32> to vector<4x8xf32>
    %cst_20 = arith.constant dense<0.000000e+00> : vector<4x32xf32>
    %51 = tpu.matmul %50, %43, %cst_20 {dimension_numbers = #tpu.dot_dimension_numbers<[1], [0], [0], [1], [0, 0, 1, 1], [], []>} : vector<4x8xf32>, vector<8x32xf32>, vector<4x32xf32> -> vector<4x32xf32>
    %c0_21 = arith.constant 0 : index
    %c0_22 = arith.constant 0 : index
    %c0_23 = arith.constant 0 : index
    %52 = vector.load %arg4[%c0_21, %c0_22, %c0_23] : memref<1x4x32xf32, #tpu.memory_space<vmem>>, vector<1x4x32xf32>
    %53 = vector.shape_cast %52 : vector<1x4x32xf32> to vector<4x32xf32>
    %54 = vector.shape_cast %51 : vector<4x32xf32> to vector<1x4x32xf32>
    tpu.vector_store %arg4[%c0_21, %c0_22, %c0_23], %54 {strides = array<i32>} : memref<1x4x32xf32, #tpu.memory_space<vmem>>, vector<1x4x32xf32>,
    return
  }
  func.func @transform_0(%arg0: i32) -> (i32, i32, i32) {
    %c0_i32 = arith.constant 0 : i32
    %c0_i32_0 = arith.constant 0 : i32
    %c0_i32_1 = arith.constant 0 : i32
    return %arg0, %c0_i32, %c0_i32_0 : i32, i32, i32
  }
  func.func @transform_1(%arg0: i32) -> (i32, i32, i32) {
    %c0_i32 = arith.constant 0 : i32
    %c0_i32_0 = arith.constant 0 : i32
    %c0_i32_1 = arith.constant 0 : i32
    %c0_i32_2 = arith.constant 0 : i32
    return %c0_i32, %c0_i32_0, %c0_i32_1 : i32, i32, i32
  }
  func.func @transform_2(%arg0: i32) -> (i32, i32) {
    %c0_i32 = arith.constant 0 : i32
    %c0_i32_0 = arith.constant 0 : i32
    %c0_i32_1 = arith.constant 0 : i32
    return %c0_i32, %c0_i32_0 : i32, i32
  }
  func.func @transform_3(%arg0: i32) -> (i32, i32, i32) {
    %c0_i32 = arith.constant 0 : i32
    %c0_i32_0 = arith.constant 0 : i32
    %c0_i32_1 = arith.constant 0 : i32
    return %arg0, %c0_i32, %c0_i32_0 : i32, i32, i32
  }
}

module attributes {stable_mosaic.version = 11 : i64} {
  func.func @_sparsity_kernel(%arg0: i32, %arg1: i32, %arg2: memref<4x4x8xf32, #tpu.memory_space<vmem>>, %arg3: memref<4x4x8xf32, #tpu.memory_space<vmem>>, %arg4: memref<4x4x1xf32, #tpu.memory_space<vmem>>, %arg5: memref<4x4x1xf32, #tpu.memory_space<vmem>>, %arg6: memref<4x4x1xf32, #tpu.memory_space<vmem>>) attributes {dimension_semantics = [#tpu.dimension_semantics<parallel>, #tpu.dimension_semantics<arbitrary>], iteration_bounds = array<i64: 2, 1>, scalar_prefetch = 0 : i64, scratch_operands = 2 : i64, tpu.core_type = #tpu.core_type<tc>, window_params = [{transform_indices = @transform_0, window_bounds = array<i64: 4, 4, 8>}, {transform_indices = @transform_1, window_bounds = array<i64: 4, 4, 8>}, {transform_indices = @transform_2, window_bounds = array<i64: 4, 4, 1>}]} {
    %c0_i32 = arith.constant 0 : i32
    %0 = arith.cmpi eq, %arg1, %c0_i32 : i32
    %1 = arith.extui %0 : i1 to i32
    %c0_i32_0 = arith.constant 0 : i32
    %2 = arith.cmpi ne, %1, %c0_i32_0 : i32
    scf.if %2 {
      %cst_22 = arith.constant 0xFF800000 : f32
      %21 = vector.broadcast %cst_22 : f32 to vector<4x4x1xf32>
      %c0_23 = arith.constant 0 : index
      %c0_24 = arith.constant 0 : index
      %c0_25 = arith.constant 0 : index
      %22 = vector.load %arg5[%c0_23, %c0_24, %c0_25] : memref<4x4x1xf32, #tpu.memory_space<vmem>>, vector<4x4x1xf32>
      tpu.vector_store %arg5[%c0_23, %c0_24, %c0_25], %21 {strides = array<i32>} : memref<4x4x1xf32, #tpu.memory_space<vmem>>, vector<4x4x1xf32>,
      %cst_26 = arith.constant 0.000000e+00 : f32
      %23 = vector.broadcast %cst_26 : f32 to vector<4x4x1xf32>
      %c0_27 = arith.constant 0 : index
      %c0_28 = arith.constant 0 : index
      %c0_29 = arith.constant 0 : index
      %24 = vector.load %arg6[%c0_27, %c0_28, %c0_29] : memref<4x4x1xf32, #tpu.memory_space<vmem>>, vector<4x4x1xf32>
      tpu.vector_store %arg6[%c0_27, %c0_28, %c0_29], %23 {strides = array<i32>} : memref<4x4x1xf32, #tpu.memory_space<vmem>>, vector<4x4x1xf32>,
    } else {
    }
    %c0 = arith.constant 0 : index
    %c0_1 = arith.constant 0 : index
    %c0_2 = arith.constant 0 : index
    %3 = vector.load %arg2[%c0, %c0_1, %c0_2] : memref<4x4x8xf32, #tpu.memory_space<vmem>>, vector<4x4x8xf32>
    %4 = arith.truncf %3 : vector<4x4x8xf32> to vector<4x4x8xbf16>
    %c0_3 = arith.constant 0 : index
    %c0_4 = arith.constant 0 : index
    %c0_5 = arith.constant 0 : index
    %5 = vector.load %arg3[%c0_3, %c0_4, %c0_5] : memref<4x4x8xf32, #tpu.memory_space<vmem>>, vector<4x4x8xf32>
    %6 = arith.truncf %5 : vector<4x4x8xf32> to vector<4x4x8xbf16>
    "tpu.trace_start"() <{level = 10 : i32, message = "gqd,gkd->gqk"}> : () -> ()
    %cst = arith.constant dense<0.000000e+00> : vector<4x4x4xf32>
    %7 = tpu.matmul %4, %6, %cst {dimension_numbers = #tpu.dot_dimension_numbers<[2], [2], [1], [1], [0, 0, 0, 1, 1, 1], [0], [0]>} : vector<4x4x8xbf16>, vector<4x4x8xbf16>, vector<4x4x4xf32> -> vector<4x4x4xf32>
    "tpu.trace_stop"() : () -> ()
    %c0_6 = arith.constant 0 : index
    %c0_7 = arith.constant 0 : index
    %c0_8 = arith.constant 0 : index
    %8 = vector.load %arg5[%c0_6, %c0_7, %c0_8] : memref<4x4x1xf32, #tpu.memory_space<vmem>>, vector<4x4x1xf32>
    %cst_9 = arith.constant dense<0xFF800000> : vector<4x4xf32>
    %9 = vector.multi_reduction <maximumf>, %7, %cst_9 [2] : vector<4x4x4xf32> to vector<4x4xf32>
    %10 = vector.shape_cast %9 : vector<4x4xf32> to vector<4x4x1xf32>
    %11 = arith.maximumf %8, %10 : vector<4x4x1xf32>
    %c0_10 = arith.constant 0 : index
    %c0_11 = arith.constant 0 : index
    %c0_12 = arith.constant 0 : index
    %12 = vector.load %arg5[%c0_10, %c0_11, %c0_12] : memref<4x4x1xf32, #tpu.memory_space<vmem>>, vector<4x4x1xf32>
    tpu.vector_store %arg5[%c0_10, %c0_11, %c0_12], %11 {strides = array<i32>} : memref<4x4x1xf32, #tpu.memory_space<vmem>>, vector<4x4x1xf32>,
    %c0_13 = arith.constant 0 : index
    %c0_14 = arith.constant 0 : index
    %c0_15 = arith.constant 0 : index
    %13 = vector.load %arg6[%c0_13, %c0_14, %c0_15] : memref<4x4x1xf32, #tpu.memory_space<vmem>>, vector<4x4x1xf32>
    %cst_16 = arith.constant dense<0.000000e+00> : vector<4x4xf32>
    %14 = vector.multi_reduction <add>, %7, %cst_16 [2] : vector<4x4x4xf32> to vector<4x4xf32>
    %15 = vector.shape_cast %14 : vector<4x4xf32> to vector<4x4x1xf32>
    %16 = arith.addf %13, %15 : vector<4x4x1xf32>
    %c0_17 = arith.constant 0 : index
    %c0_18 = arith.constant 0 : index
    %c0_19 = arith.constant 0 : index
    %17 = vector.load %arg6[%c0_17, %c0_18, %c0_19] : memref<4x4x1xf32, #tpu.memory_space<vmem>>, vector<4x4x1xf32>
    tpu.vector_store %arg6[%c0_17, %c0_18, %c0_19], %16 {strides = array<i32>} : memref<4x4x1xf32, #tpu.memory_space<vmem>>, vector<4x4x1xf32>,
    %c0_i32_20 = arith.constant 0 : i32
    %18 = arith.cmpi eq, %arg1, %c0_i32_20 : i32
    %19 = arith.extui %18 : i1 to i32
    %c0_i32_21 = arith.constant 0 : i32
    %20 = arith.cmpi ne, %19, %c0_i32_21 : i32
    scf.if %20 {
      %c0_22 = arith.constant 0 : index
      %c0_23 = arith.constant 0 : index
      %c0_24 = arith.constant 0 : index
      %21 = vector.load %arg5[%c0_22, %c0_23, %c0_24] : memref<4x4x1xf32, #tpu.memory_space<vmem>>, vector<4x4x1xf32>
      %c0_25 = arith.constant 0 : index
      %c0_26 = arith.constant 0 : index
      %c0_27 = arith.constant 0 : index
      %22 = vector.load %arg6[%c0_25, %c0_26, %c0_27] : memref<4x4x1xf32, #tpu.memory_space<vmem>>, vector<4x4x1xf32>
      %cst_28 = arith.constant 2.500000e-01 : f32
      %23 = vector.broadcast %cst_28 : f32 to vector<4x4x1xf32>
      %24 = arith.mulf %22, %23 : vector<4x4x1xf32>
      %25 = arith.subf %21, %24 : vector<4x4x1xf32>
      %c0_29 = arith.constant 0 : index
      %c0_30 = arith.constant 0 : index
      %c0_31 = arith.constant 0 : index
      %26 = vector.load %arg4[%c0_29, %c0_30, %c0_31] : memref<4x4x1xf32, #tpu.memory_space<vmem>>, vector<4x4x1xf32>
      tpu.vector_store %arg4[%c0_29, %c0_30, %c0_31], %25 {strides = array<i32>} : memref<4x4x1xf32, #tpu.memory_space<vmem>>, vector<4x4x1xf32>,
    } else {
    }
    return
  }
  func.func @transform_0(%arg0: i32, %arg1: i32) -> (i32, i32, i32) {
    %c0_i32 = arith.constant 0 : i32
    %c0_i32_0 = arith.constant 0 : i32
    %c0_i32_1 = arith.constant 0 : i32
    return %arg0, %c0_i32, %c0_i32_0 : i32, i32, i32
  }
  func.func @transform_1(%arg0: i32, %arg1: i32) -> (i32, i32, i32) {
    %c0_i32 = arith.constant 0 : i32
    %c0_i32_0 = arith.constant 0 : i32
    return %arg0, %arg1, %c0_i32 : i32, i32, i32
  }
  func.func @transform_2(%arg0: i32, %arg1: i32) -> (i32, i32, i32) {
    %c0_i32 = arith.constant 0 : i32
    %c0_i32_0 = arith.constant 0 : i32
    %c0_i32_1 = arith.constant 0 : i32
    return %arg0, %c0_i32, %c0_i32_0 : i32, i32, i32
  }
}

module attributes {stable_mosaic.version = 11 : i64} {
  func.func @_flash_attn_kernel(%arg0: i32, %arg1: i32, %arg2: memref<4x4x8xf32, #tpu.memory_space<vmem>>, %arg3: memref<4x4x8xf32, #tpu.memory_space<vmem>>, %arg4: memref<4x4x8xf32, #tpu.memory_space<vmem>>, %arg5: memref<4x4x8xf32, #tpu.memory_space<vmem>>, %arg6: memref<4x4x1xf32, #tpu.memory_space<vmem>>, %arg7: memref<4x4x1xf32, #tpu.memory_space<vmem>>, %arg8: memref<4x4x8xf32, #tpu.memory_space<vmem>>) attributes {dimension_semantics = [#tpu.dimension_semantics<parallel>, #tpu.dimension_semantics<arbitrary>], iteration_bounds = array<i64: 2, 1>, scalar_prefetch = 0 : i64, scratch_operands = 3 : i64, tpu.core_type = #tpu.core_type<tc>, window_params = [{transform_indices = @transform_0, window_bounds = array<i64: 4, 4, 8>}, {transform_indices = @transform_1, window_bounds = array<i64: 4, 4, 8>}, {transform_indices = @transform_2, window_bounds = array<i64: 4, 4, 8>}, {transform_indices = @transform_3, window_bounds = array<i64: 4, 4, 8>}]} {
    %c0_i32 = arith.constant 0 : i32
    %0 = arith.cmpi eq, %arg1, %c0_i32 : i32
    %1 = arith.extui %0 : i1 to i32
    %c0_i32_0 = arith.constant 0 : i32
    %2 = arith.cmpi ne, %1, %c0_i32_0 : i32
    scf.if %2 {
      %cst_33 = arith.constant 0xFF800000 : f32
      %38 = vector.broadcast %cst_33 : f32 to vector<4x4x1xf32>
      %c0_34 = arith.constant 0 : index
      %c0_35 = arith.constant 0 : index
      %c0_36 = arith.constant 0 : index
      %39 = vector.load %arg6[%c0_34, %c0_35, %c0_36] : memref<4x4x1xf32, #tpu.memory_space<vmem>>, vector<4x4x1xf32>
      tpu.vector_store %arg6[%c0_34, %c0_35, %c0_36], %38 {strides = array<i32>} : memref<4x4x1xf32, #tpu.memory_space<vmem>>, vector<4x4x1xf32>,
      %cst_37 = arith.constant 0.000000e+00 : f32
      %40 = vector.broadcast %cst_37 : f32 to vector<4x4x1xf32>
      %c0_38 = arith.constant 0 : index
      %c0_39 = arith.constant 0 : index
      %c0_40 = arith.constant 0 : index
      %41 = vector.load %arg7[%c0_38, %c0_39, %c0_40] : memref<4x4x1xf32, #tpu.memory_space<vmem>>, vector<4x4x1xf32>
      tpu.vector_store %arg7[%c0_38, %c0_39, %c0_40], %40 {strides = array<i32>} : memref<4x4x1xf32, #tpu.memory_space<vmem>>, vector<4x4x1xf32>,
      %cst_41 = arith.constant 0.000000e+00 : f32
      %42 = vector.broadcast %cst_41 : f32 to vector<4x4x8xf32>
      %c0_42 = arith.constant 0 : index
      %c0_43 = arith.constant 0 : index
      %c0_44 = arith.constant 0 : index
      %43 = vector.load %arg8[%c0_42, %c0_43, %c0_44] : memref<4x4x8xf32, #tpu.memory_space<vmem>>, vector<4x4x8xf32>
      tpu.vector_store %arg8[%c0_42, %c0_43, %c0_44], %42 {strides = array<i32>} : memref<4x4x8xf32, #tpu.memory_space<vmem>>, vector<4x4x8xf32>,
    } else {
    }
    %c0 = arith.constant 0 : index
    %c0_1 = arith.constant 0 : index
    %c0_2 = arith.constant 0 : index
    %3 = vector.load %arg2[%c0, %c0_1, %c0_2] : memref<4x4x8xf32, #tpu.memory_space<vmem>>, vector<4x4x8xf32>
    %4 = arith.truncf %3 : vector<4x4x8xf32> to vector<4x4x8xbf16>
    %c0_3 = arith.constant 0 : index
    %c0_4 = arith.constant 0 : index
    %c0_5 = arith.constant 0 : index
    %5 = vector.load %arg3[%c0_3, %c0_4, %c0_5] : memref<4x4x8xf32, #tpu.memory_space<vmem>>, vector<4x4x8xf32>
    %6 = arith.truncf %5 : vector<4x4x8xf32> to vector<4x4x8xbf16>
    %c0_6 = arith.constant 0 : index
    %c0_7 = arith.constant 0 : index
    %c0_8 = arith.constant 0 : index
    %7 = vector.load %arg4[%c0_6, %c0_7, %c0_8] : memref<4x4x8xf32, #tpu.memory_space<vmem>>, vector<4x4x8xf32>
    %8 = arith.truncf %7 : vector<4x4x8xf32> to vector<4x4x8xbf16>
    "tpu.trace_start"() <{level = 10 : i32, message = "gqd,gkd->gqk"}> : () -> ()
    %cst = arith.constant dense<0.000000e+00> : vector<4x4x4xf32>
    %9 = tpu.matmul %4, %6, %cst {dimension_numbers = #tpu.dot_dimension_numbers<[2], [2], [1], [1], [0, 0, 0, 1, 1, 1], [0], [0]>} : vector<4x4x8xbf16>, vector<4x4x8xbf16>, vector<4x4x4xf32> -> vector<4x4x4xf32>
    "tpu.trace_stop"() : () -> ()
    %cst_9 = arith.constant 0.353553385 : f32
    %10 = vector.broadcast %cst_9 : f32 to vector<4x4x4xf32>
    %11 = arith.mulf %9, %10 : vector<4x4x4xf32>
    %c0_10 = arith.constant 0 : index
    %c0_11 = arith.constant 0 : index
    %c0_12 = arith.constant 0 : index
    %12 = vector.load %arg6[%c0_10, %c0_11, %c0_12] : memref<4x4x1xf32, #tpu.memory_space<vmem>>, vector<4x4x1xf32>
    %cst_13 = arith.constant dense<0xFF800000> : vector<4x4xf32>
    %13 = vector.multi_reduction <maximumf>, %11, %cst_13 [2] : vector<4x4x4xf32> to vector<4x4xf32>
    %14 = vector.shape_cast %13 : vector<4x4xf32> to vector<4x4x1xf32>
    %15 = arith.maximumf %12, %14 : vector<4x4x1xf32>
    %16 = arith.subf %12, %15 : vector<4x4x1xf32>
    %17 = math.exp %16 : vector<4x4x1xf32>
    %18 = vector.broadcast %15 : vector<4x4x1xf32> to vector<4x4x4xf32>
    %19 = arith.subf %11, %18 : vector<4x4x4xf32>
    %20 = math.exp %19 : vector<4x4x4xf32>
    %c0_14 = arith.constant 0 : index
    %c0_15 = arith.constant 0 : index
    %c0_16 = arith.constant 0 : index
    %21 = vector.load %arg7[%c0_14, %c0_15, %c0_16] : memref<4x4x1xf32, #tpu.memory_space<vmem>>, vector<4x4x1xf32>
    %22 = arith.mulf %17, %21 : vector<4x4x1xf32>
    %cst_17 = arith.constant dense<0.000000e+00> : vector<4x4xf32>
    %23 = vector.multi_reduction <add>, %20, %cst_17 [2] : vector<4x4x4xf32> to vector<4x4xf32>
    %24 = vector.shape_cast %23 : vector<4x4xf32> to vector<4x4x1xf32>
    %25 = arith.addf %22, %24 : vector<4x4x1xf32>
    %c0_18 = arith.constant 0 : index
    %c0_19 = arith.constant 0 : index
    %c0_20 = arith.constant 0 : index
    %26 = vector.load %arg7[%c0_18, %c0_19, %c0_20] : memref<4x4x1xf32, #tpu.memory_space<vmem>>, vector<4x4x1xf32>
    tpu.vector_store %arg7[%c0_18, %c0_19, %c0_20], %25 {strides = array<i32>} : memref<4x4x1xf32, #tpu.memory_space<vmem>>, vector<4x4x1xf32>,
    %c0_21 = arith.constant 0 : index
    %c0_22 = arith.constant 0 : index
    %c0_23 = arith.constant 0 : index
    %27 = vector.load %arg8[%c0_21, %c0_22, %c0_23] : memref<4x4x8xf32, #tpu.memory_space<vmem>>, vector<4x4x8xf32>
    %28 = vector.broadcast %17 : vector<4x4x1xf32> to vector<4x4x8xf32>
    %29 = arith.mulf %28, %27 : vector<4x4x8xf32>
    %30 = arith.truncf %20 : vector<4x4x4xf32> to vector<4x4x4xbf16>
    "tpu.trace_start"() <{level = 10 : i32, message = "gqk,gkd->gqd"}> : () -> ()
    %cst_24 = arith.constant dense<0.000000e+00> : vector<4x4x8xf32>
    %31 = tpu.matmul %30, %8, %cst_24 {dimension_numbers = #tpu.dot_dimension_numbers<[2], [1], [1], [2], [0, 0, 0, 1, 1, 2], [0], [0]>} : vector<4x4x4xbf16>, vector<4x4x8xbf16>, vector<4x4x8xf32> -> vector<4x4x8xf32>
    "tpu.trace_stop"() : () -> ()
    %32 = arith.addf %29, %31 : vector<4x4x8xf32>
    %c0_25 = arith.constant 0 : index
    %c0_26 = arith.constant 0 : index
    %c0_27 = arith.constant 0 : index
    %33 = vector.load %arg8[%c0_25, %c0_26, %c0_27] : memref<4x4x8xf32, #tpu.memory_space<vmem>>, vector<4x4x8xf32>
    tpu.vector_store %arg8[%c0_25, %c0_26, %c0_27], %32 {strides = array<i32>} : memref<4x4x8xf32, #tpu.memory_space<vmem>>, vector<4x4x8xf32>,
    %c0_28 = arith.constant 0 : index
    %c0_29 = arith.constant 0 : index
    %c0_30 = arith.constant 0 : index
    %34 = vector.load %arg6[%c0_28, %c0_29, %c0_30] : memref<4x4x1xf32, #tpu.memory_space<vmem>>, vector<4x4x1xf32>
    tpu.vector_store %arg6[%c0_28, %c0_29, %c0_30], %15 {strides = array<i32>} : memref<4x4x1xf32, #tpu.memory_space<vmem>>, vector<4x4x1xf32>,
    %c0_i32_31 = arith.constant 0 : i32
    %35 = arith.cmpi eq, %arg1, %c0_i32_31 : i32
    %36 = arith.extui %35 : i1 to i32
    %c0_i32_32 = arith.constant 0 : i32
    %37 = arith.cmpi ne, %36, %c0_i32_32 : i32
    scf.if %37 {
      %c0_33 = arith.constant 0 : index
      %c0_34 = arith.constant 0 : index
      %c0_35 = arith.constant 0 : index
      %38 = vector.load %arg8[%c0_33, %c0_34, %c0_35] : memref<4x4x8xf32, #tpu.memory_space<vmem>>, vector<4x4x8xf32>
      %c0_36 = arith.constant 0 : index
      %c0_37 = arith.constant 0 : index
      %c0_38 = arith.constant 0 : index
      %39 = vector.load %arg7[%c0_36, %c0_37, %c0_38] : memref<4x4x1xf32, #tpu.memory_space<vmem>>, vector<4x4x1xf32>
      %40 = vector.broadcast %39 : vector<4x4x1xf32> to vector<4x4x8xf32>
      %41 = arith.divf %38, %40 : vector<4x4x8xf32>
      %c0_39 = arith.constant 0 : index
      %c0_40 = arith.constant 0 : index
      %c0_41 = arith.constant 0 : index
      %42 = vector.load %arg5[%c0_39, %c0_40, %c0_41] : memref<4x4x8xf32, #tpu.memory_space<vmem>>, vector<4x4x8xf32>
      tpu.vector_store %arg5[%c0_39, %c0_40, %c0_41], %41 {strides = array<i32>} : memref<4x4x8xf32, #tpu.memory_space<vmem>>, vector<4x4x8xf32>,
    } else {
    }
    return
  }
  func.func @transform_0(%arg0: i32, %arg1: i32) -> (i32, i32, i32) {
    %c0_i32 = arith.constant 0 : i32
    %c0_i32_0 = arith.constant 0 : i32
    %c0_i32_1 = arith.constant 0 : i32
    return %arg0, %c0_i32, %c0_i32_0 : i32, i32, i32
  }
  func.func @transform_1(%arg0: i32, %arg1: i32) -> (i32, i32, i32) {
    %c0_i32 = arith.constant 0 : i32
    %c0_i32_0 = arith.constant 0 : i32
    return %arg0, %arg1, %c0_i32 : i32, i32, i32
  }
  func.func @transform_2(%arg0: i32, %arg1: i32) -> (i32, i32, i32) {
    %c0_i32 = arith.constant 0 : i32
    %c0_i32_0 = arith.constant 0 : i32
    return %arg0, %arg1, %c0_i32 : i32, i32, i32
  }
  func.func @transform_3(%arg0: i32, %arg1: i32) -> (i32, i32, i32) {
    %c0_i32 = arith.constant 0 : i32
    %c0_i32_0 = arith.constant 0 : i32
    %c0_i32_1 = arith.constant 0 : i32
    return %arg0, %c0_i32, %c0_i32_0 : i32, i32, i32
  }
}

module attributes {stable_mosaic.version = 11 : i64} {
  func.func @_matmul_add_ln_kernel(%arg0: i32, %arg1: memref<8x32xf32, #tpu.memory_space<vmem>>, %arg2: memref<8x32xf32, #tpu.memory_space<vmem>>, %arg3: memref<32x32xbf16, #tpu.memory_space<vmem>>, %arg4: memref<1x32xf32, #tpu.memory_space<vmem>>, %arg5: memref<1x32xf32, #tpu.memory_space<vmem>>, %arg6: memref<1x32xf32, #tpu.memory_space<vmem>>, %arg7: memref<8x32xf32, #tpu.memory_space<vmem>>) attributes {dimension_semantics = [#tpu.dimension_semantics<parallel>], iteration_bounds = array<i64: 1>, scalar_prefetch = 0 : i64, scratch_operands = 0 : i64, tpu.core_type = #tpu.core_type<tc>, window_params = [{transform_indices = @transform_0, window_bounds = array<i64: 8, 32>}, {transform_indices = @transform_1, window_bounds = array<i64: 8, 32>}, {pipeline_mode = #tpu.pipeline_mode<synchronous>, transform_indices = @transform_2, window_bounds = array<i64: 32, 32>}, {pipeline_mode = #tpu.pipeline_mode<synchronous>, transform_indices = @transform_3, window_bounds = array<i64: 1, 32>}, {pipeline_mode = #tpu.pipeline_mode<synchronous>, transform_indices = @transform_4, window_bounds = array<i64: 1, 32>}, {pipeline_mode = #tpu.pipeline_mode<synchronous>, transform_indices = @transform_5, window_bounds = array<i64: 1, 32>}, {transform_indices = @transform_6, window_bounds = array<i64: 8, 32>}]} {
    %c0 = arith.constant 0 : index
    %c0_0 = arith.constant 0 : index
    %0 = vector.load %arg1[%c0, %c0_0] : memref<8x32xf32, #tpu.memory_space<vmem>>, vector<8x32xf32>
    %1 = arith.truncf %0 : vector<8x32xf32> to vector<8x32xbf16>
    %c0_1 = arith.constant 0 : index
    %c0_2 = arith.constant 0 : index
    %2 = vector.load %arg3[%c0_1, %c0_2] : memref<32x32xbf16, #tpu.memory_space<vmem>>, vector<32x32xbf16>
    %cst = arith.constant dense<0.000000e+00> : vector<8x32xf32>
    %3 = tpu.matmul %1, %2, %cst {dimension_numbers = #tpu.dot_dimension_numbers<[1], [0], [0], [1], [0, 0, 1, 1], [], []>} : vector<8x32xbf16>, vector<32x32xbf16>, vector<8x32xf32> -> vector<8x32xf32>
    %c0_3 = arith.constant 0 : index
    %c0_4 = arith.constant 0 : index
    %4 = vector.load %arg4[%c0_3, %c0_4] : memref<1x32xf32, #tpu.memory_space<vmem>>, vector<1x32xf32>
    %5 = vector.broadcast %4 : vector<1x32xf32> to vector<8x32xf32>
    %6 = arith.addf %3, %5 : vector<8x32xf32>
    %c0_5 = arith.constant 0 : index
    %c0_6 = arith.constant 0 : index
    %7 = vector.load %arg2[%c0_5, %c0_6] : memref<8x32xf32, #tpu.memory_space<vmem>>, vector<8x32xf32>
    %8 = arith.addf %6, %7 : vector<8x32xf32>
    %c0_7 = arith.constant 0 : index
    %c0_8 = arith.constant 0 : index
    %9 = vector.load %arg5[%c0_7, %c0_8] : memref<1x32xf32, #tpu.memory_space<vmem>>, vector<1x32xf32>
    %c0_9 = arith.constant 0 : index
    %c0_10 = arith.constant 0 : index
    %10 = vector.load %arg6[%c0_9, %c0_10] : memref<1x32xf32, #tpu.memory_space<vmem>>, vector<1x32xf32>
    %cst_11 = arith.constant dense<0.000000e+00> : vector<8xf32>
    %11 = vector.multi_reduction <add>, %8, %cst_11 [1] : vector<8x32xf32> to vector<8xf32>
    %12 = vector.shape_cast %11 : vector<8xf32> to vector<8x1xf32>
    %cst_12 = arith.constant 3.200000e+01 : f32
    %13 = vector.broadcast %cst_12 : f32 to vector<8x1xf32>
    %14 = arith.divf %12, %13 : vector<8x1xf32>
    %15 = vector.broadcast %14 : vector<8x1xf32> to vector<8x32xf32>
    %16 = arith.subf %8, %15 : vector<8x32xf32>
    %17 = arith.mulf %16, %16 : vector<8x32xf32>
    %cst_13 = arith.constant dense<0.000000e+00> : vector<8xf32>
    %18 = vector.multi_reduction <add>, %17, %cst_13 [1] : vector<8x32xf32> to vector<8xf32>
    %19 = vector.shape_cast %18 : vector<8xf32> to vector<8x1xf32>
    %cst_14 = arith.constant 3.200000e+01 : f32
    %20 = vector.broadcast %cst_14 : f32 to vector<8x1xf32>
    %21 = arith.divf %19, %20 : vector<8x1xf32>
    %cst_15 = arith.constant 9.99999974E-6 : f32
    %22 = vector.broadcast %cst_15 : f32 to vector<8x1xf32>
    %23 = arith.addf %21, %22 : vector<8x1xf32>
    %24 = math.rsqrt %23 : vector<8x1xf32>
    %25 = vector.broadcast %24 : vector<8x1xf32> to vector<8x32xf32>
    %26 = arith.mulf %16, %25 : vector<8x32xf32>
    %27 = vector.broadcast %9 : vector<1x32xf32> to vector<8x32xf32>
    %28 = arith.mulf %26, %27 : vector<8x32xf32>
    %29 = vector.broadcast %10 : vector<1x32xf32> to vector<8x32xf32>
    %30 = arith.addf %28, %29 : vector<8x32xf32>
    %c0_16 = arith.constant 0 : index
    %c0_17 = arith.constant 0 : index
    %31 = vector.load %arg7[%c0_16, %c0_17] : memref<8x32xf32, #tpu.memory_space<vmem>>, vector<8x32xf32>
    tpu.vector_store %arg7[%c0_16, %c0_17], %30 {strides = array<i32>} : memref<8x32xf32, #tpu.memory_space<vmem>>, vector<8x32xf32>,
    return
  }
  func.func @transform_0(%arg0: i32) -> (i32, i32) {
    %c0_i32 = arith.constant 0 : i32
    %c0_i32_0 = arith.constant 0 : i32
    return %arg0, %c0_i32 : i32, i32
  }
  func.func @transform_1(%arg0: i32) -> (i32, i32) {
    %c0_i32 = arith.constant 0 : i32
    %c0_i32_0 = arith.constant 0 : i32
    return %arg0, %c0_i32 : i32, i32
  }
  func.func @transform_2(%arg0: i32) -> (i32, i32) {
    %c0_i32 = arith.constant 0 : i32
    %c0_i32_0 = arith.constant 0 : i32
    %c0_i32_1 = arith.constant 0 : i32
    return %c0_i32, %c0_i32_0 : i32, i32
  }
  func.func @transform_3(%arg0: i32) -> (i32, i32) {
    %c0_i32 = arith.constant 0 : i32
    %c0_i32_0 = arith.constant 0 : i32
    %c0_i32_1 = arith.constant 0 : i32
    return %c0_i32, %c0_i32_0 : i32, i32
  }
  func.func @transform_4(%arg0: i32) -> (i32, i32) {
    %c0_i32 = arith.constant 0 : i32
    %c0_i32_0 = arith.constant 0 : i32
    %c0_i32_1 = arith.constant 0 : i32
    return %c0_i32, %c0_i32_0 : i32, i32
  }
  func.func @transform_5(%arg0: i32) -> (i32, i32) {
    %c0_i32 = arith.constant 0 : i32
    %c0_i32_0 = arith.constant 0 : i32
    %c0_i32_1 = arith.constant 0 : i32
    return %c0_i32, %c0_i32_0 : i32, i32
  }
  func.func @transform_6(%arg0: i32) -> (i32, i32) {
    %c0_i32 = arith.constant 0 : i32
    %c0_i32_0 = arith.constant 0 : i32
    return %arg0, %c0_i32 : i32, i32
  }
}

module attributes {stable_mosaic.version = 11 : i64} {
  func.func @_matmul_kernel(%arg0: i32, %arg1: memref<8x32xf32, #tpu.memory_space<vmem>>, %arg2: memref<32x32xbf16, #tpu.memory_space<vmem>>, %arg3: memref<1x32xf32, #tpu.memory_space<vmem>>, %arg4: memref<8x32xf32, #tpu.memory_space<vmem>>) attributes {dimension_semantics = [#tpu.dimension_semantics<parallel>], iteration_bounds = array<i64: 1>, scalar_prefetch = 0 : i64, scratch_operands = 0 : i64, tpu.core_type = #tpu.core_type<tc>, window_params = [{transform_indices = @transform_0, window_bounds = array<i64: 8, 32>}, {pipeline_mode = #tpu.pipeline_mode<synchronous>, transform_indices = @transform_1, window_bounds = array<i64: 32, 32>}, {pipeline_mode = #tpu.pipeline_mode<synchronous>, transform_indices = @transform_2, window_bounds = array<i64: 1, 32>}, {transform_indices = @transform_3, window_bounds = array<i64: 8, 32>}]} {
    %c0 = arith.constant 0 : index
    %c0_0 = arith.constant 0 : index
    %0 = vector.load %arg1[%c0, %c0_0] : memref<8x32xf32, #tpu.memory_space<vmem>>, vector<8x32xf32>
    %1 = arith.truncf %0 : vector<8x32xf32> to vector<8x32xbf16>
    %c0_1 = arith.constant 0 : index
    %c0_2 = arith.constant 0 : index
    %2 = vector.load %arg2[%c0_1, %c0_2] : memref<32x32xbf16, #tpu.memory_space<vmem>>, vector<32x32xbf16>
    %cst = arith.constant dense<0.000000e+00> : vector<8x32xf32>
    %3 = tpu.matmul %1, %2, %cst {dimension_numbers = #tpu.dot_dimension_numbers<[1], [0], [0], [1], [0, 0, 1, 1], [], []>} : vector<8x32xbf16>, vector<32x32xbf16>, vector<8x32xf32> -> vector<8x32xf32>
    %c0_3 = arith.constant 0 : index
    %c0_4 = arith.constant 0 : index
    %4 = vector.load %arg3[%c0_3, %c0_4] : memref<1x32xf32, #tpu.memory_space<vmem>>, vector<1x32xf32>
    %5 = vector.broadcast %4 : vector<1x32xf32> to vector<8x32xf32>
    %6 = arith.addf %3, %5 : vector<8x32xf32>
    %cst_5 = arith.constant 5.000000e-01 : f32
    %7 = vector.broadcast %cst_5 : f32 to vector<8x32xf32>
    %8 = arith.mulf %7, %6 : vector<8x32xf32>
    %cst_6 = arith.constant 0.707106769 : f32
    %9 = vector.broadcast %cst_6 : f32 to vector<8x32xf32>
    %10 = arith.mulf %6, %9 : vector<8x32xf32>
    %11 = math.absf %10 : vector<8x32xf32>
    %cst_7 = arith.constant 0.327591091 : f32
    %12 = vector.broadcast %cst_7 : f32 to vector<8x32xf32>
    %13 = arith.mulf %12, %11 : vector<8x32xf32>
    %cst_8 = arith.constant 1.000000e+00 : f32
    %14 = vector.broadcast %cst_8 : f32 to vector<8x32xf32>
    %15 = arith.addf %14, %13 : vector<8x32xf32>
    %cst_9 = arith.constant 1.000000e+00 : f32
    %16 = vector.broadcast %cst_9 : f32 to vector<8x32xf32>
    %17 = arith.divf %16, %15 : vector<8x32xf32>
    %cst_10 = arith.constant 1.06140542 : f32
    %18 = vector.broadcast %cst_10 : f32 to vector<8x32xf32>
    %19 = arith.mulf %18, %17 : vector<8x32xf32>
    %cst_11 = arith.constant -1.45315206 : f32
    %20 = vector.broadcast %cst_11 : f32 to vector<8x32xf32>
    %21 = arith.addf %19, %20 : vector<8x32xf32>
    %22 = arith.mulf %21, %17 : vector<8x32xf32>
    %cst_12 = arith.constant 1.42141378 : f32
    %23 = vector.broadcast %cst_12 : f32 to vector<8x32xf32>
    %24 = arith.addf %22, %23 : vector<8x32xf32>
    %25 = arith.mulf %24, %17 : vector<8x32xf32>
    %cst_13 = arith.constant -0.284496725 : f32
    %26 = vector.broadcast %cst_13 : f32 to vector<8x32xf32>
    %27 = arith.addf %25, %26 : vector<8x32xf32>
    %28 = arith.mulf %27, %17 : vector<8x32xf32>
    %cst_14 = arith.constant 0.254829586 : f32
    %29 = vector.broadcast %cst_14 : f32 to vector<8x32xf32>
    %30 = arith.addf %28, %29 : vector<8x32xf32>
    %31 = arith.mulf %30, %17 : vector<8x32xf32>
    %cst_15 = arith.constant 0.000000e+00 : f32
    %32 = vector.broadcast %cst_15 : f32 to vector<8x32xf32>
    %33 = arith.subf %32, %11 : vector<8x32xf32>
    %34 = arith.mulf %33, %11 : vector<8x32xf32>
    %35 = math.exp %34 : vector<8x32xf32>
    %36 = arith.mulf %31, %35 : vector<8x32xf32>
    %cst_16 = arith.constant 1.000000e+00 : f32
    %37 = vector.broadcast %cst_16 : f32 to vector<8x32xf32>
    %38 = arith.subf %37, %36 : vector<8x32xf32>
    %cst_17 = arith.constant 0.000000e+00 : f32
    %39 = vector.broadcast %cst_17 : f32 to vector<8x32xf32>
    %40 = arith.cmpf oge, %10, %39 : vector<8x32xf32>
    %cst_18 = arith.constant 0.000000e+00 : f32
    %41 = vector.broadcast %cst_18 : f32 to vector<8x32xf32>
    %42 = arith.subf %41, %38 : vector<8x32xf32>
    %43 = arith.select %40, %38, %42 : vector<8x32xi1>, vector<8x32xf32>
    %cst_19 = arith.constant 1.000000e+00 : f32
    %44 = vector.broadcast %cst_19 : f32 to vector<8x32xf32>
    %45 = arith.addf %44, %43 : vector<8x32xf32>
    %46 = arith.mulf %8, %45 : vector<8x32xf32>
    %c0_20 = arith.constant 0 : index
    %c0_21 = arith.constant 0 : index
    %47 = vector.load %arg4[%c0_20, %c0_21] : memref<8x32xf32, #tpu.memory_space<vmem>>, vector<8x32xf32>
    tpu.vector_store %arg4[%c0_20, %c0_21], %46 {strides = array<i32>} : memref<8x32xf32, #tpu.memory_space<vmem>>, vector<8x32xf32>,
    return
  }
  func.func @transform_0(%arg0: i32) -> (i32, i32) {
    %c0_i32 = arith.constant 0 : i32
    %c0_i32_0 = arith.constant 0 : i32
    return %arg0, %c0_i32 : i32, i32
  }
  func.func @transform_1(%arg0: i32) -> (i32, i32) {
    %c0_i32 = arith.constant 0 : i32
    %c0_i32_0 = arith.constant 0 : i32
    %c0_i32_1 = arith.constant 0 : i32
    return %c0_i32, %c0_i32_0 : i32, i32
  }
  func.func @transform_2(%arg0: i32) -> (i32, i32) {
    %c0_i32 = arith.constant 0 : i32
    %c0_i32_0 = arith.constant 0 : i32
    %c0_i32_1 = arith.constant 0 : i32
    return %c0_i32, %c0_i32_0 : i32, i32
  }
  func.func @transform_3(%arg0: i32) -> (i32, i32) {
    %c0_i32 = arith.constant 0 : i32
    %c0_i32_0 = arith.constant 0 : i32
    return %arg0, %c0_i32 : i32, i32
  }
}

module attributes {stable_mosaic.version = 11 : i64} {
  func.func @_layernorm_kernel(%arg0: i32, %arg1: memref<8x32xf32, #tpu.memory_space<vmem>>, %arg2: memref<1x32xf32, #tpu.memory_space<vmem>>, %arg3: memref<1x32xf32, #tpu.memory_space<vmem>>, %arg4: memref<8x32xf32, #tpu.memory_space<vmem>>) attributes {dimension_semantics = [#tpu.dimension_semantics<parallel>], iteration_bounds = array<i64: 1>, scalar_prefetch = 0 : i64, scratch_operands = 0 : i64, tpu.core_type = #tpu.core_type<tc>, window_params = [{transform_indices = @transform_0, window_bounds = array<i64: 8, 32>}, {pipeline_mode = #tpu.pipeline_mode<synchronous>, transform_indices = @transform_1, window_bounds = array<i64: 1, 32>}, {pipeline_mode = #tpu.pipeline_mode<synchronous>, transform_indices = @transform_2, window_bounds = array<i64: 1, 32>}, {transform_indices = @transform_3, window_bounds = array<i64: 8, 32>}]} {
    %c0 = arith.constant 0 : index
    %c0_0 = arith.constant 0 : index
    %0 = vector.load %arg1[%c0, %c0_0] : memref<8x32xf32, #tpu.memory_space<vmem>>, vector<8x32xf32>
    %c0_1 = arith.constant 0 : index
    %c0_2 = arith.constant 0 : index
    %1 = vector.load %arg2[%c0_1, %c0_2] : memref<1x32xf32, #tpu.memory_space<vmem>>, vector<1x32xf32>
    %c0_3 = arith.constant 0 : index
    %c0_4 = arith.constant 0 : index
    %2 = vector.load %arg3[%c0_3, %c0_4] : memref<1x32xf32, #tpu.memory_space<vmem>>, vector<1x32xf32>
    %cst = arith.constant dense<0.000000e+00> : vector<8xf32>
    %3 = vector.multi_reduction <add>, %0, %cst [1] : vector<8x32xf32> to vector<8xf32>
    %4 = vector.shape_cast %3 : vector<8xf32> to vector<8x1xf32>
    %cst_5 = arith.constant 3.200000e+01 : f32
    %5 = vector.broadcast %cst_5 : f32 to vector<8x1xf32>
    %6 = arith.divf %4, %5 : vector<8x1xf32>
    %7 = vector.broadcast %6 : vector<8x1xf32> to vector<8x32xf32>
    %8 = arith.subf %0, %7 : vector<8x32xf32>
    %9 = arith.mulf %8, %8 : vector<8x32xf32>
    %cst_6 = arith.constant dense<0.000000e+00> : vector<8xf32>
    %10 = vector.multi_reduction <add>, %9, %cst_6 [1] : vector<8x32xf32> to vector<8xf32>
    %11 = vector.shape_cast %10 : vector<8xf32> to vector<8x1xf32>
    %cst_7 = arith.constant 3.200000e+01 : f32
    %12 = vector.broadcast %cst_7 : f32 to vector<8x1xf32>
    %13 = arith.divf %11, %12 : vector<8x1xf32>
    %cst_8 = arith.constant 9.99999974E-6 : f32
    %14 = vector.broadcast %cst_8 : f32 to vector<8x1xf32>
    %15 = arith.addf %13, %14 : vector<8x1xf32>
    %16 = math.rsqrt %15 : vector<8x1xf32>
    %17 = vector.broadcast %16 : vector<8x1xf32> to vector<8x32xf32>
    %18 = arith.mulf %8, %17 : vector<8x32xf32>
    %19 = vector.broadcast %1 : vector<1x32xf32> to vector<8x32xf32>
    %20 = arith.mulf %18, %19 : vector<8x32xf32>
    %21 = vector.broadcast %2 : vector<1x32xf32> to vector<8x32xf32>
    %22 = arith.addf %20, %21 : vector<8x32xf32>
    %c0_9 = arith.constant 0 : index
    %c0_10 = arith.constant 0 : index
    %23 = vector.load %arg4[%c0_9, %c0_10] : memref<8x32xf32, #tpu.memory_space<vmem>>, vector<8x32xf32>
    tpu.vector_store %arg4[%c0_9, %c0_10], %22 {strides = array<i32>} : memref<8x32xf32, #tpu.memory_space<vmem>>, vector<8x32xf32>,
    return
  }
  func.func @transform_0(%arg0: i32) -> (i32, i32) {
    %c0_i32 = arith.constant 0 : i32
    %c0_i32_0 = arith.constant 0 : i32
    return %arg0, %c0_i32 : i32, i32
  }
  func.func @transform_1(%arg0: i32) -> (i32, i32) {
    %c0_i32 = arith.constant 0 : i32
    %c0_i32_0 = arith.constant 0 : i32
    %c0_i32_1 = arith.constant 0 : i32
    return %c0_i32, %c0_i32_0 : i32, i32
  }
  func.func @transform_2(%arg0: i32) -> (i32, i32) {
    %c0_i32 = arith.constant 0 : i32
    %c0_i32_0 = arith.constant 0 : i32
    %c0_i32_1 = arith.constant 0 : i32
    return %c0_i32, %c0_i32_0 : i32, i32
  }
  func.func @transform_3(%arg0: i32) -> (i32, i32) {
    %c0_i32 = arith.constant 0 : i32
    %c0_i32_0 = arith.constant 0 : i32
    return %arg0, %c0_i32 : i32, i32
  }
}

module attributes {stable_mosaic.version = 11 : i64} {
  func.func @_flash_attn_kernel(%arg0: i32, %arg1: i32, %arg2: memref<4x8x8xf32, #tpu.memory_space<vmem>>, %arg3: memref<4x8x8xf32, #tpu.memory_space<vmem>>, %arg4: memref<4x8x8xf32, #tpu.memory_space<vmem>>, %arg5: memref<4x8x1xi32, #tpu.memory_space<vmem>>, %arg6: memref<4x8x8xf32, #tpu.memory_space<vmem>>, %arg7: memref<4x8x1xf32, #tpu.memory_space<vmem>>, %arg8: memref<4x8x1xf32, #tpu.memory_space<vmem>>, %arg9: memref<4x8x8xf32, #tpu.memory_space<vmem>>) attributes {dimension_semantics = [#tpu.dimension_semantics<parallel>, #tpu.dimension_semantics<arbitrary>], iteration_bounds = array<i64: 2, 1>, scalar_prefetch = 0 : i64, scratch_operands = 3 : i64, tpu.core_type = #tpu.core_type<tc>, window_params = [{transform_indices = @transform_0, window_bounds = array<i64: 4, 8, 8>}, {transform_indices = @transform_1, window_bounds = array<i64: 4, 8, 8>}, {transform_indices = @transform_2, window_bounds = array<i64: 4, 8, 8>}, {transform_indices = @transform_3, window_bounds = array<i64: 4, 8, 1>}, {transform_indices = @transform_4, window_bounds = array<i64: 4, 8, 8>}]} {
    %c0_i32 = arith.constant 0 : i32
    %0 = arith.cmpi eq, %arg1, %c0_i32 : i32
    %1 = arith.extui %0 : i1 to i32
    %c0_i32_0 = arith.constant 0 : i32
    %2 = arith.cmpi ne, %1, %c0_i32_0 : i32
    scf.if %2 {
      %cst_38 = arith.constant 0xFF800000 : f32
      %50 = vector.broadcast %cst_38 : f32 to vector<4x8x1xf32>
      %c0_39 = arith.constant 0 : index
      %c0_40 = arith.constant 0 : index
      %c0_41 = arith.constant 0 : index
      %51 = vector.load %arg7[%c0_39, %c0_40, %c0_41] : memref<4x8x1xf32, #tpu.memory_space<vmem>>, vector<4x8x1xf32>
      tpu.vector_store %arg7[%c0_39, %c0_40, %c0_41], %50 {strides = array<i32>} : memref<4x8x1xf32, #tpu.memory_space<vmem>>, vector<4x8x1xf32>,
      %cst_42 = arith.constant 0.000000e+00 : f32
      %52 = vector.broadcast %cst_42 : f32 to vector<4x8x1xf32>
      %c0_43 = arith.constant 0 : index
      %c0_44 = arith.constant 0 : index
      %c0_45 = arith.constant 0 : index
      %53 = vector.load %arg8[%c0_43, %c0_44, %c0_45] : memref<4x8x1xf32, #tpu.memory_space<vmem>>, vector<4x8x1xf32>
      tpu.vector_store %arg8[%c0_43, %c0_44, %c0_45], %52 {strides = array<i32>} : memref<4x8x1xf32, #tpu.memory_space<vmem>>, vector<4x8x1xf32>,
      %cst_46 = arith.constant 0.000000e+00 : f32
      %54 = vector.broadcast %cst_46 : f32 to vector<4x8x8xf32>
      %c0_47 = arith.constant 0 : index
      %c0_48 = arith.constant 0 : index
      %c0_49 = arith.constant 0 : index
      %55 = vector.load %arg9[%c0_47, %c0_48, %c0_49] : memref<4x8x8xf32, #tpu.memory_space<vmem>>, vector<4x8x8xf32>
      tpu.vector_store %arg9[%c0_47, %c0_48, %c0_49], %54 {strides = array<i32>} : memref<4x8x8xf32, #tpu.memory_space<vmem>>, vector<4x8x8xf32>,
    } else {
    }
    %c0 = arith.constant 0 : index
    %c0_1 = arith.constant 0 : index
    %c0_2 = arith.constant 0 : index
    %3 = vector.load %arg2[%c0, %c0_1, %c0_2] : memref<4x8x8xf32, #tpu.memory_space<vmem>>, vector<4x8x8xf32>
    %4 = arith.truncf %3 : vector<4x8x8xf32> to vector<4x8x8xbf16>
    %c0_3 = arith.constant 0 : index
    %c0_4 = arith.constant 0 : index
    %c0_5 = arith.constant 0 : index
    %5 = vector.load %arg3[%c0_3, %c0_4, %c0_5] : memref<4x8x8xf32, #tpu.memory_space<vmem>>, vector<4x8x8xf32>
    %6 = arith.truncf %5 : vector<4x8x8xf32> to vector<4x8x8xbf16>
    %c0_6 = arith.constant 0 : index
    %c0_7 = arith.constant 0 : index
    %c0_8 = arith.constant 0 : index
    %7 = vector.load %arg4[%c0_6, %c0_7, %c0_8] : memref<4x8x8xf32, #tpu.memory_space<vmem>>, vector<4x8x8xf32>
    %8 = arith.truncf %7 : vector<4x8x8xf32> to vector<4x8x8xbf16>
    %9 = tpu.iota {dimensions = array<i32: 2>} : vector<1x1x8xi32>
    %c8_i32 = arith.constant 8 : i32
    %10 = arith.muli %arg1, %c8_i32 : i32
    %11 = vector.broadcast %10 : i32 to vector<1x1x8xi32>
    %12 = arith.addi %9, %11 : vector<1x1x8xi32>
    %c0_9 = arith.constant 0 : index
    %c0_10 = arith.constant 0 : index
    %c0_11 = arith.constant 0 : index
    %13 = vector.load %arg5[%c0_9, %c0_10, %c0_11] : memref<4x8x1xi32, #tpu.memory_space<vmem>>, vector<4x8x1xi32>
    %14 = vector.broadcast %12 : vector<1x1x8xi32> to vector<4x8x8xi32>
    %15 = vector.broadcast %13 : vector<4x8x1xi32> to vector<4x8x8xi32>
    %16 = arith.cmpi sle, %14, %15 : vector<4x8x8xi32>
    "tpu.trace_start"() <{level = 10 : i32, message = "gqd,gkd->gqk"}> : () -> ()
    %cst = arith.constant dense<0.000000e+00> : vector<4x8x8xf32>
    %17 = tpu.matmul %4, %6, %cst {dimension_numbers = #tpu.dot_dimension_numbers<[2], [2], [1], [1], [0, 0, 0, 1, 1, 1], [0], [0]>} : vector<4x8x8xbf16>, vector<4x8x8xbf16>, vector<4x8x8xf32> -> vector<4x8x8xf32>
    "tpu.trace_stop"() : () -> ()
    %cst_12 = arith.constant 0.353553385 : f32
    %18 = vector.broadcast %cst_12 : f32 to vector<4x8x8xf32>
    %19 = arith.mulf %17, %18 : vector<4x8x8xf32>
    %cst_13 = arith.constant -1.000000e+30 : f32
    %20 = vector.broadcast %cst_13 : f32 to vector<4x8x8xf32>
    %21 = arith.select %16, %19, %20 : vector<4x8x8xi1>, vector<4x8x8xf32>
    %c0_14 = arith.constant 0 : index
    %c0_15 = arith.constant 0 : index
    %c0_16 = arith.constant 0 : index
    %22 = vector.load %arg7[%c0_14, %c0_15, %c0_16] : memref<4x8x1xf32, #tpu.memory_space<vmem>>, vector<4x8x1xf32>
    %cst_17 = arith.constant dense<0xFF800000> : vector<4x8xf32>
    %23 = vector.multi_reduction <maximumf>, %21, %cst_17 [2] : vector<4x8x8xf32> to vector<4x8xf32>
    %24 = vector.shape_cast %23 : vector<4x8xf32> to vector<4x8x1xf32>
    %25 = arith.maximumf %22, %24 : vector<4x8x1xf32>
    %26 = arith.subf %22, %25 : vector<4x8x1xf32>
    %27 = math.exp %26 : vector<4x8x1xf32>
    %28 = vector.broadcast %25 : vector<4x8x1xf32> to vector<4x8x8xf32>
    %29 = arith.subf %21, %28 : vector<4x8x8xf32>
    %30 = math.exp %29 : vector<4x8x8xf32>
    %cst_18 = arith.constant 0.000000e+00 : f32
    %31 = vector.broadcast %cst_18 : f32 to vector<4x8x8xf32>
    %32 = arith.select %16, %30, %31 : vector<4x8x8xi1>, vector<4x8x8xf32>
    %c0_19 = arith.constant 0 : index
    %c0_20 = arith.constant 0 : index
    %c0_21 = arith.constant 0 : index
    %33 = vector.load %arg8[%c0_19, %c0_20, %c0_21] : memref<4x8x1xf32, #tpu.memory_space<vmem>>, vector<4x8x1xf32>
    %34 = arith.mulf %27, %33 : vector<4x8x1xf32>
    %cst_22 = arith.constant dense<0.000000e+00> : vector<4x8xf32>
    %35 = vector.multi_reduction <add>, %32, %cst_22 [2] : vector<4x8x8xf32> to vector<4x8xf32>
    %36 = vector.shape_cast %35 : vector<4x8xf32> to vector<4x8x1xf32>
    %37 = arith.addf %34, %36 : vector<4x8x1xf32>
    %c0_23 = arith.constant 0 : index
    %c0_24 = arith.constant 0 : index
    %c0_25 = arith.constant 0 : index
    %38 = vector.load %arg8[%c0_23, %c0_24, %c0_25] : memref<4x8x1xf32, #tpu.memory_space<vmem>>, vector<4x8x1xf32>
    tpu.vector_store %arg8[%c0_23, %c0_24, %c0_25], %37 {strides = array<i32>} : memref<4x8x1xf32, #tpu.memory_space<vmem>>, vector<4x8x1xf32>,
    %c0_26 = arith.constant 0 : index
    %c0_27 = arith.constant 0 : index
    %c0_28 = arith.constant 0 : index
    %39 = vector.load %arg9[%c0_26, %c0_27, %c0_28] : memref<4x8x8xf32, #tpu.memory_space<vmem>>, vector<4x8x8xf32>
    %40 = vector.broadcast %27 : vector<4x8x1xf32> to vector<4x8x8xf32>
    %41 = arith.mulf %40, %39 : vector<4x8x8xf32>
    %42 = arith.truncf %32 : vector<4x8x8xf32> to vector<4x8x8xbf16>
    "tpu.trace_start"() <{level = 10 : i32, message = "gqk,gkd->gqd"}> : () -> ()
    %cst_29 = arith.constant dense<0.000000e+00> : vector<4x8x8xf32>
    %43 = tpu.matmul %42, %8, %cst_29 {dimension_numbers = #tpu.dot_dimension_numbers<[2], [1], [1], [2], [0, 0, 0, 1, 1, 2], [0], [0]>} : vector<4x8x8xbf16>, vector<4x8x8xbf16>, vector<4x8x8xf32> -> vector<4x8x8xf32>
    "tpu.trace_stop"() : () -> ()
    %44 = arith.addf %41, %43 : vector<4x8x8xf32>
    %c0_30 = arith.constant 0 : index
    %c0_31 = arith.constant 0 : index
    %c0_32 = arith.constant 0 : index
    %45 = vector.load %arg9[%c0_30, %c0_31, %c0_32] : memref<4x8x8xf32, #tpu.memory_space<vmem>>, vector<4x8x8xf32>
    tpu.vector_store %arg9[%c0_30, %c0_31, %c0_32], %44 {strides = array<i32>} : memref<4x8x8xf32, #tpu.memory_space<vmem>>, vector<4x8x8xf32>,
    %c0_33 = arith.constant 0 : index
    %c0_34 = arith.constant 0 : index
    %c0_35 = arith.constant 0 : index
    %46 = vector.load %arg7[%c0_33, %c0_34, %c0_35] : memref<4x8x1xf32, #tpu.memory_space<vmem>>, vector<4x8x1xf32>
    tpu.vector_store %arg7[%c0_33, %c0_34, %c0_35], %25 {strides = array<i32>} : memref<4x8x1xf32, #tpu.memory_space<vmem>>, vector<4x8x1xf32>,
    %c0_i32_36 = arith.constant 0 : i32
    %47 = arith.cmpi eq, %arg1, %c0_i32_36 : i32
    %48 = arith.extui %47 : i1 to i32
    %c0_i32_37 = arith.constant 0 : i32
    %49 = arith.cmpi ne, %48, %c0_i32_37 : i32
    scf.if %49 {
      %c0_38 = arith.constant 0 : index
      %c0_39 = arith.constant 0 : index
      %c0_40 = arith.constant 0 : index
      %50 = vector.load %arg9[%c0_38, %c0_39, %c0_40] : memref<4x8x8xf32, #tpu.memory_space<vmem>>, vector<4x8x8xf32>
      %c0_41 = arith.constant 0 : index
      %c0_42 = arith.constant 0 : index
      %c0_43 = arith.constant 0 : index
      %51 = vector.load %arg8[%c0_41, %c0_42, %c0_43] : memref<4x8x1xf32, #tpu.memory_space<vmem>>, vector<4x8x1xf32>
      %52 = vector.broadcast %51 : vector<4x8x1xf32> to vector<4x8x8xf32>
      %53 = arith.divf %50, %52 : vector<4x8x8xf32>
      %c0_44 = arith.constant 0 : index
      %c0_45 = arith.constant 0 : index
      %c0_46 = arith.constant 0 : index
      %54 = vector.load %arg6[%c0_44, %c0_45, %c0_46] : memref<4x8x8xf32, #tpu.memory_space<vmem>>, vector<4x8x8xf32>
      tpu.vector_store %arg6[%c0_44, %c0_45, %c0_46], %53 {strides = array<i32>} : memref<4x8x8xf32, #tpu.memory_space<vmem>>, vector<4x8x8xf32>,
    } else {
    }
    return
  }
  func.func @transform_0(%arg0: i32, %arg1: i32) -> (i32, i32, i32) {
    %c0_i32 = arith.constant 0 : i32
    %c0_i32_0 = arith.constant 0 : i32
    %c0_i32_1 = arith.constant 0 : i32
    return %arg0, %c0_i32, %c0_i32_0 : i32, i32, i32
  }
  func.func @transform_1(%arg0: i32, %arg1: i32) -> (i32, i32, i32) {
    %c0_i32 = arith.constant 0 : i32
    %c0_i32_0 = arith.constant 0 : i32
    return %arg0, %arg1, %c0_i32 : i32, i32, i32
  }
  func.func @transform_2(%arg0: i32, %arg1: i32) -> (i32, i32, i32) {
    %c0_i32 = arith.constant 0 : i32
    %c0_i32_0 = arith.constant 0 : i32
    return %arg0, %arg1, %c0_i32 : i32, i32, i32
  }
  func.func @transform_3(%arg0: i32, %arg1: i32) -> (i32, i32, i32) {
    %c0_i32 = arith.constant 0 : i32
    %c0_i32_0 = arith.constant 0 : i32
    %c0_i32_1 = arith.constant 0 : i32
    return %arg0, %c0_i32, %c0_i32_0 : i32, i32, i32
  }
  func.func @transform_4(%arg0: i32, %arg1: i32) -> (i32, i32, i32) {
    %c0_i32 = arith.constant 0 : i32
    %c0_i32_0 = arith.constant 0 : i32
    %c0_i32_1 = arith.constant 0 : i32
    return %arg0, %c0_i32, %c0_i32_0 : i32, i32, i32
  }
}

module attributes {stable_mosaic.version = 11 : i64} {
  func.func @_flash_attn_kernel(%arg0: i32, %arg1: i32, %arg2: memref<4x8x8xf32, #tpu.memory_space<vmem>>, %arg3: memref<4x4x8xf32, #tpu.memory_space<vmem>>, %arg4: memref<4x4x8xf32, #tpu.memory_space<vmem>>, %arg5: memref<4x8x8xf32, #tpu.memory_space<vmem>>, %arg6: memref<4x8x1xf32, #tpu.memory_space<vmem>>, %arg7: memref<4x8x1xf32, #tpu.memory_space<vmem>>, %arg8: memref<4x8x8xf32, #tpu.memory_space<vmem>>) attributes {dimension_semantics = [#tpu.dimension_semantics<parallel>, #tpu.dimension_semantics<arbitrary>], iteration_bounds = array<i64: 2, 1>, scalar_prefetch = 0 : i64, scratch_operands = 3 : i64, tpu.core_type = #tpu.core_type<tc>, window_params = [{transform_indices = @transform_0, window_bounds = array<i64: 4, 8, 8>}, {transform_indices = @transform_1, window_bounds = array<i64: 4, 4, 8>}, {transform_indices = @transform_2, window_bounds = array<i64: 4, 4, 8>}, {transform_indices = @transform_3, window_bounds = array<i64: 4, 8, 8>}]} {
    %c0_i32 = arith.constant 0 : i32
    %0 = arith.cmpi eq, %arg1, %c0_i32 : i32
    %1 = arith.extui %0 : i1 to i32
    %c0_i32_0 = arith.constant 0 : i32
    %2 = arith.cmpi ne, %1, %c0_i32_0 : i32
    scf.if %2 {
      %cst_33 = arith.constant 0xFF800000 : f32
      %38 = vector.broadcast %cst_33 : f32 to vector<4x8x1xf32>
      %c0_34 = arith.constant 0 : index
      %c0_35 = arith.constant 0 : index
      %c0_36 = arith.constant 0 : index
      %39 = vector.load %arg6[%c0_34, %c0_35, %c0_36] : memref<4x8x1xf32, #tpu.memory_space<vmem>>, vector<4x8x1xf32>
      tpu.vector_store %arg6[%c0_34, %c0_35, %c0_36], %38 {strides = array<i32>} : memref<4x8x1xf32, #tpu.memory_space<vmem>>, vector<4x8x1xf32>,
      %cst_37 = arith.constant 0.000000e+00 : f32
      %40 = vector.broadcast %cst_37 : f32 to vector<4x8x1xf32>
      %c0_38 = arith.constant 0 : index
      %c0_39 = arith.constant 0 : index
      %c0_40 = arith.constant 0 : index
      %41 = vector.load %arg7[%c0_38, %c0_39, %c0_40] : memref<4x8x1xf32, #tpu.memory_space<vmem>>, vector<4x8x1xf32>
      tpu.vector_store %arg7[%c0_38, %c0_39, %c0_40], %40 {strides = array<i32>} : memref<4x8x1xf32, #tpu.memory_space<vmem>>, vector<4x8x1xf32>,
      %cst_41 = arith.constant 0.000000e+00 : f32
      %42 = vector.broadcast %cst_41 : f32 to vector<4x8x8xf32>
      %c0_42 = arith.constant 0 : index
      %c0_43 = arith.constant 0 : index
      %c0_44 = arith.constant 0 : index
      %43 = vector.load %arg8[%c0_42, %c0_43, %c0_44] : memref<4x8x8xf32, #tpu.memory_space<vmem>>, vector<4x8x8xf32>
      tpu.vector_store %arg8[%c0_42, %c0_43, %c0_44], %42 {strides = array<i32>} : memref<4x8x8xf32, #tpu.memory_space<vmem>>, vector<4x8x8xf32>,
    } else {
    }
    %c0 = arith.constant 0 : index
    %c0_1 = arith.constant 0 : index
    %c0_2 = arith.constant 0 : index
    %3 = vector.load %arg2[%c0, %c0_1, %c0_2] : memref<4x8x8xf32, #tpu.memory_space<vmem>>, vector<4x8x8xf32>
    %4 = arith.truncf %3 : vector<4x8x8xf32> to vector<4x8x8xbf16>
    %c0_3 = arith.constant 0 : index
    %c0_4 = arith.constant 0 : index
    %c0_5 = arith.constant 0 : index
    %5 = vector.load %arg3[%c0_3, %c0_4, %c0_5] : memref<4x4x8xf32, #tpu.memory_space<vmem>>, vector<4x4x8xf32>
    %6 = arith.truncf %5 : vector<4x4x8xf32> to vector<4x4x8xbf16>
    %c0_6 = arith.constant 0 : index
    %c0_7 = arith.constant 0 : index
    %c0_8 = arith.constant 0 : index
    %7 = vector.load %arg4[%c0_6, %c0_7, %c0_8] : memref<4x4x8xf32, #tpu.memory_space<vmem>>, vector<4x4x8xf32>
    %8 = arith.truncf %7 : vector<4x4x8xf32> to vector<4x4x8xbf16>
    "tpu.trace_start"() <{level = 10 : i32, message = "gqd,gkd->gqk"}> : () -> ()
    %cst = arith.constant dense<0.000000e+00> : vector<4x8x4xf32>
    %9 = tpu.matmul %4, %6, %cst {dimension_numbers = #tpu.dot_dimension_numbers<[2], [2], [1], [1], [0, 0, 0, 1, 1, 1], [0], [0]>} : vector<4x8x8xbf16>, vector<4x4x8xbf16>, vector<4x8x4xf32> -> vector<4x8x4xf32>
    "tpu.trace_stop"() : () -> ()
    %cst_9 = arith.constant 0.353553385 : f32
    %10 = vector.broadcast %cst_9 : f32 to vector<4x8x4xf32>
    %11 = arith.mulf %9, %10 : vector<4x8x4xf32>
    %c0_10 = arith.constant 0 : index
    %c0_11 = arith.constant 0 : index
    %c0_12 = arith.constant 0 : index
    %12 = vector.load %arg6[%c0_10, %c0_11, %c0_12] : memref<4x8x1xf32, #tpu.memory_space<vmem>>, vector<4x8x1xf32>
    %cst_13 = arith.constant dense<0xFF800000> : vector<4x8xf32>
    %13 = vector.multi_reduction <maximumf>, %11, %cst_13 [2] : vector<4x8x4xf32> to vector<4x8xf32>
    %14 = vector.shape_cast %13 : vector<4x8xf32> to vector<4x8x1xf32>
    %15 = arith.maximumf %12, %14 : vector<4x8x1xf32>
    %16 = arith.subf %12, %15 : vector<4x8x1xf32>
    %17 = math.exp %16 : vector<4x8x1xf32>
    %18 = vector.broadcast %15 : vector<4x8x1xf32> to vector<4x8x4xf32>
    %19 = arith.subf %11, %18 : vector<4x8x4xf32>
    %20 = math.exp %19 : vector<4x8x4xf32>
    %c0_14 = arith.constant 0 : index
    %c0_15 = arith.constant 0 : index
    %c0_16 = arith.constant 0 : index
    %21 = vector.load %arg7[%c0_14, %c0_15, %c0_16] : memref<4x8x1xf32, #tpu.memory_space<vmem>>, vector<4x8x1xf32>
    %22 = arith.mulf %17, %21 : vector<4x8x1xf32>
    %cst_17 = arith.constant dense<0.000000e+00> : vector<4x8xf32>
    %23 = vector.multi_reduction <add>, %20, %cst_17 [2] : vector<4x8x4xf32> to vector<4x8xf32>
    %24 = vector.shape_cast %23 : vector<4x8xf32> to vector<4x8x1xf32>
    %25 = arith.addf %22, %24 : vector<4x8x1xf32>
    %c0_18 = arith.constant 0 : index
    %c0_19 = arith.constant 0 : index
    %c0_20 = arith.constant 0 : index
    %26 = vector.load %arg7[%c0_18, %c0_19, %c0_20] : memref<4x8x1xf32, #tpu.memory_space<vmem>>, vector<4x8x1xf32>
    tpu.vector_store %arg7[%c0_18, %c0_19, %c0_20], %25 {strides = array<i32>} : memref<4x8x1xf32, #tpu.memory_space<vmem>>, vector<4x8x1xf32>,
    %c0_21 = arith.constant 0 : index
    %c0_22 = arith.constant 0 : index
    %c0_23 = arith.constant 0 : index
    %27 = vector.load %arg8[%c0_21, %c0_22, %c0_23] : memref<4x8x8xf32, #tpu.memory_space<vmem>>, vector<4x8x8xf32>
    %28 = vector.broadcast %17 : vector<4x8x1xf32> to vector<4x8x8xf32>
    %29 = arith.mulf %28, %27 : vector<4x8x8xf32>
    %30 = arith.truncf %20 : vector<4x8x4xf32> to vector<4x8x4xbf16>
    "tpu.trace_start"() <{level = 10 : i32, message = "gqk,gkd->gqd"}> : () -> ()
    %cst_24 = arith.constant dense<0.000000e+00> : vector<4x8x8xf32>
    %31 = tpu.matmul %30, %8, %cst_24 {dimension_numbers = #tpu.dot_dimension_numbers<[2], [1], [1], [2], [0, 0, 0, 1, 1, 2], [0], [0]>} : vector<4x8x4xbf16>, vector<4x4x8xbf16>, vector<4x8x8xf32> -> vector<4x8x8xf32>
    "tpu.trace_stop"() : () -> ()
    %32 = arith.addf %29, %31 : vector<4x8x8xf32>
    %c0_25 = arith.constant 0 : index
    %c0_26 = arith.constant 0 : index
    %c0_27 = arith.constant 0 : index
    %33 = vector.load %arg8[%c0_25, %c0_26, %c0_27] : memref<4x8x8xf32, #tpu.memory_space<vmem>>, vector<4x8x8xf32>
    tpu.vector_store %arg8[%c0_25, %c0_26, %c0_27], %32 {strides = array<i32>} : memref<4x8x8xf32, #tpu.memory_space<vmem>>, vector<4x8x8xf32>,
    %c0_28 = arith.constant 0 : index
    %c0_29 = arith.constant 0 : index
    %c0_30 = arith.constant 0 : index
    %34 = vector.load %arg6[%c0_28, %c0_29, %c0_30] : memref<4x8x1xf32, #tpu.memory_space<vmem>>, vector<4x8x1xf32>
    tpu.vector_store %arg6[%c0_28, %c0_29, %c0_30], %15 {strides = array<i32>} : memref<4x8x1xf32, #tpu.memory_space<vmem>>, vector<4x8x1xf32>,
    %c0_i32_31 = arith.constant 0 : i32
    %35 = arith.cmpi eq, %arg1, %c0_i32_31 : i32
    %36 = arith.extui %35 : i1 to i32
    %c0_i32_32 = arith.constant 0 : i32
    %37 = arith.cmpi ne, %36, %c0_i32_32 : i32
    scf.if %37 {
      %c0_33 = arith.constant 0 : index
      %c0_34 = arith.constant 0 : index
      %c0_35 = arith.constant 0 : index
      %38 = vector.load %arg8[%c0_33, %c0_34, %c0_35] : memref<4x8x8xf32, #tpu.memory_space<vmem>>, vector<4x8x8xf32>
      %c0_36 = arith.constant 0 : index
      %c0_37 = arith.constant 0 : index
      %c0_38 = arith.constant 0 : index
      %39 = vector.load %arg7[%c0_36, %c0_37, %c0_38] : memref<4x8x1xf32, #tpu.memory_space<vmem>>, vector<4x8x1xf32>
      %40 = vector.broadcast %39 : vector<4x8x1xf32> to vector<4x8x8xf32>
      %41 = arith.divf %38, %40 : vector<4x8x8xf32>
      %c0_39 = arith.constant 0 : index
      %c0_40 = arith.constant 0 : index
      %c0_41 = arith.constant 0 : index
      %42 = vector.load %arg5[%c0_39, %c0_40, %c0_41] : memref<4x8x8xf32, #tpu.memory_space<vmem>>, vector<4x8x8xf32>
      tpu.vector_store %arg5[%c0_39, %c0_40, %c0_41], %41 {strides = array<i32>} : memref<4x8x8xf32, #tpu.memory_space<vmem>>, vector<4x8x8xf32>,
    } else {
    }
    return
  }
  func.func @transform_0(%arg0: i32, %arg1: i32) -> (i32, i32, i32) {
    %c0_i32 = arith.constant 0 : i32
    %c0_i32_0 = arith.constant 0 : i32
    %c0_i32_1 = arith.constant 0 : i32
    return %arg0, %c0_i32, %c0_i32_0 : i32, i32, i32
  }
  func.func @transform_1(%arg0: i32, %arg1: i32) -> (i32, i32, i32) {
    %c0_i32 = arith.constant 0 : i32
    %c0_i32_0 = arith.constant 0 : i32
    return %arg0, %arg1, %c0_i32 : i32, i32, i32
  }
  func.func @transform_2(%arg0: i32, %arg1: i32) -> (i32, i32, i32) {
    %c0_i32 = arith.constant 0 : i32
    %c0_i32_0 = arith.constant 0 : i32
    return %arg0, %arg1, %c0_i32 : i32, i32, i32
  }
  func.func @transform_3(%arg0: i32, %arg1: i32) -> (i32, i32, i32) {
    %c0_i32 = arith.constant 0 : i32
    %c0_i32_0 = arith.constant 0 : i32
    %c0_i32_1 = arith.constant 0 : i32
    return %arg0, %c0_i32, %c0_i32_0 : i32, i32, i32
  }
}

module attributes {stable_mosaic.version = 11 : i64} {
  func.func @_ln_proj_kernel(%arg0: i32, %arg1: memref<8x32xf32, #tpu.memory_space<vmem>>, %arg2: memref<1x32xf32, #tpu.memory_space<vmem>>, %arg3: memref<1x32xf32, #tpu.memory_space<vmem>>, %arg4: memref<32x4xbf16, #tpu.memory_space<vmem>>, %arg5: memref<1x4xf32, #tpu.memory_space<vmem>>, %arg6: memref<8x4xf32, #tpu.memory_space<vmem>>) attributes {dimension_semantics = [#tpu.dimension_semantics<parallel>], iteration_bounds = array<i64: 2>, scalar_prefetch = 0 : i64, scratch_operands = 0 : i64, tpu.core_type = #tpu.core_type<tc>, window_params = [{transform_indices = @transform_0, window_bounds = array<i64: 8, 32>}, {pipeline_mode = #tpu.pipeline_mode<synchronous>, transform_indices = @transform_1, window_bounds = array<i64: 1, 32>}, {pipeline_mode = #tpu.pipeline_mode<synchronous>, transform_indices = @transform_2, window_bounds = array<i64: 1, 32>}, {pipeline_mode = #tpu.pipeline_mode<synchronous>, transform_indices = @transform_3, window_bounds = array<i64: 32, 4>}, {pipeline_mode = #tpu.pipeline_mode<synchronous>, transform_indices = @transform_4, window_bounds = array<i64: 1, 4>}, {transform_indices = @transform_5, window_bounds = array<i64: 8, 4>}]} {
    %c0 = arith.constant 0 : index
    %c0_0 = arith.constant 0 : index
    %0 = vector.load %arg1[%c0, %c0_0] : memref<8x32xf32, #tpu.memory_space<vmem>>, vector<8x32xf32>
    %c0_1 = arith.constant 0 : index
    %c0_2 = arith.constant 0 : index
    %1 = vector.load %arg2[%c0_1, %c0_2] : memref<1x32xf32, #tpu.memory_space<vmem>>, vector<1x32xf32>
    %c0_3 = arith.constant 0 : index
    %c0_4 = arith.constant 0 : index
    %2 = vector.load %arg3[%c0_3, %c0_4] : memref<1x32xf32, #tpu.memory_space<vmem>>, vector<1x32xf32>
    %cst = arith.constant dense<0.000000e+00> : vector<8xf32>
    %3 = vector.multi_reduction <add>, %0, %cst [1] : vector<8x32xf32> to vector<8xf32>
    %4 = vector.shape_cast %3 : vector<8xf32> to vector<8x1xf32>
    %cst_5 = arith.constant 3.200000e+01 : f32
    %5 = vector.broadcast %cst_5 : f32 to vector<8x1xf32>
    %6 = arith.divf %4, %5 : vector<8x1xf32>
    %7 = vector.broadcast %6 : vector<8x1xf32> to vector<8x32xf32>
    %8 = arith.subf %0, %7 : vector<8x32xf32>
    %9 = arith.mulf %8, %8 : vector<8x32xf32>
    %cst_6 = arith.constant dense<0.000000e+00> : vector<8xf32>
    %10 = vector.multi_reduction <add>, %9, %cst_6 [1] : vector<8x32xf32> to vector<8xf32>
    %11 = vector.shape_cast %10 : vector<8xf32> to vector<8x1xf32>
    %cst_7 = arith.constant 3.200000e+01 : f32
    %12 = vector.broadcast %cst_7 : f32 to vector<8x1xf32>
    %13 = arith.divf %11, %12 : vector<8x1xf32>
    %cst_8 = arith.constant 9.99999974E-6 : f32
    %14 = vector.broadcast %cst_8 : f32 to vector<8x1xf32>
    %15 = arith.addf %13, %14 : vector<8x1xf32>
    %16 = math.rsqrt %15 : vector<8x1xf32>
    %17 = vector.broadcast %16 : vector<8x1xf32> to vector<8x32xf32>
    %18 = arith.mulf %8, %17 : vector<8x32xf32>
    %19 = vector.broadcast %1 : vector<1x32xf32> to vector<8x32xf32>
    %20 = arith.mulf %18, %19 : vector<8x32xf32>
    %21 = vector.broadcast %2 : vector<1x32xf32> to vector<8x32xf32>
    %22 = arith.addf %20, %21 : vector<8x32xf32>
    %23 = arith.truncf %22 : vector<8x32xf32> to vector<8x32xbf16>
    %c0_9 = arith.constant 0 : index
    %c0_10 = arith.constant 0 : index
    %24 = vector.load %arg4[%c0_9, %c0_10] : memref<32x4xbf16, #tpu.memory_space<vmem>>, vector<32x4xbf16>
    %cst_11 = arith.constant dense<0.000000e+00> : vector<8x4xf32>
    %25 = tpu.matmul %23, %24, %cst_11 {dimension_numbers = #tpu.dot_dimension_numbers<[1], [0], [0], [1], [0, 0, 1, 1], [], []>} : vector<8x32xbf16>, vector<32x4xbf16>, vector<8x4xf32> -> vector<8x4xf32>
    %c0_12 = arith.constant 0 : index
    %c0_13 = arith.constant 0 : index
    %26 = vector.load %arg5[%c0_12, %c0_13] : memref<1x4xf32, #tpu.memory_space<vmem>>, vector<1x4xf32>
    %27 = vector.broadcast %26 : vector<1x4xf32> to vector<8x4xf32>
    %28 = arith.addf %25, %27 : vector<8x4xf32>
    %c0_14 = arith.constant 0 : index
    %c0_15 = arith.constant 0 : index
    %29 = vector.load %arg6[%c0_14, %c0_15] : memref<8x4xf32, #tpu.memory_space<vmem>>, vector<8x4xf32>
    tpu.vector_store %arg6[%c0_14, %c0_15], %28 {strides = array<i32>} : memref<8x4xf32, #tpu.memory_space<vmem>>, vector<8x4xf32>,
    return
  }
  func.func @transform_0(%arg0: i32) -> (i32, i32) {
    %c0_i32 = arith.constant 0 : i32
    %c0_i32_0 = arith.constant 0 : i32
    return %arg0, %c0_i32 : i32, i32
  }
  func.func @transform_1(%arg0: i32) -> (i32, i32) {
    %c0_i32 = arith.constant 0 : i32
    %c0_i32_0 = arith.constant 0 : i32
    %c0_i32_1 = arith.constant 0 : i32
    return %c0_i32, %c0_i32_0 : i32, i32
  }
  func.func @transform_2(%arg0: i32) -> (i32, i32) {
    %c0_i32 = arith.constant 0 : i32
    %c0_i32_0 = arith.constant 0 : i32
    %c0_i32_1 = arith.constant 0 : i32
    return %c0_i32, %c0_i32_0 : i32, i32
  }
  func.func @transform_3(%arg0: i32) -> (i32, i32) {
    %c0_i32 = arith.constant 0 : i32
    %c0_i32_0 = arith.constant 0 : i32
    %c0_i32_1 = arith.constant 0 : i32
    return %c0_i32, %c0_i32_0 : i32, i32
  }
  func.func @transform_4(%arg0: i32) -> (i32, i32) {
    %c0_i32 = arith.constant 0 : i32
    %c0_i32_0 = arith.constant 0 : i32
    %c0_i32_1 = arith.constant 0 : i32
    return %c0_i32, %c0_i32_0 : i32, i32
  }
  func.func @transform_5(%arg0: i32) -> (i32, i32) {
    %c0_i32 = arith.constant 0 : i32
    %c0_i32_0 = arith.constant 0 : i32
    return %arg0, %c0_i32 : i32, i32
  }
}

</mosaic_0001>

<llo_original>
// kernel: _lambda_.34
$region0: #{_lambda_.34}
  #allocation0 [shape = 'u32[]', space=smem, size = 0x4, offset = 0x4, fixed_abs, tag = 'smem constant byte address 0x4 - core index']
  #allocation1 [shape = 'u32[144,128]{1,0:T(1,128)}', space=vmem, size = 0x12000, scoped, tag = 'internal scratch']
  %s0 = inlined_call_operand.vmem [shape: f32[2,8,4], index: 0, kind: input, shape index: {}]
  %s1 = inlined_call_operand.vmem [shape: bf16[3,4,32], index: 1, kind: input, shape index: {}]
  %s2 = inlined_call_operand.vmem [shape: f32[1,32], index: 2, kind: input, shape index: {}]
  %s3 = inlined_call_operand.vmem [shape: f32[2,8,32], index: 3, kind: output, shape index: {}]
  %s4 = sld [smem:[#allocation0]]
  $region45: #{_lambda_.34} parent=0
    _
  %s6 = ssub.s32 1, %s4
  %s7 = scalar_select 0, %s6, %s4
  loop: start=0, step=1, limit=4
  $region2: #{_lambda_.34} parent=0 // loop_pre_header
    _
  $region3: #{_lambda_.34} parent=0 // loop_header
    %s9 = sphi 0, %s13
    %p10 = scmp.ge.s32.totalorder %s9, 4
    %s19 = sphi 0, %s21
    %s22 = sphi 0, %s19
    %s23 = sphi 0, %s22
    %s39 = sphi 0, %s23
    %s43 = sphi 0, %s43
    %s45 = sphi 0, %s43
    %s46 = sphi 0, %s45
    %s60 = sphi 0, %s46
    %s64 = sphi 0, %s64
    %s66 = sphi 0, %s64
    %s67 = sphi 0, %s66
    %s81 = sphi 0, %s67
    %s87 = sphi 0, %s89
    %s90 = sphi 0, %s87
    %s91 = sphi 0, %s90
    %s107 = sphi 0, %s91
  $region4: #{_lambda_.34} parent=0 // loop_header_branch
    %12 = sbr.rel (%p10) target = $region8
  $region5: #{_lambda_.34} parent=0 // loop_body
    %s14 = ssub.s32 %s9, 1
    %s15 = ssub.s32 %s9, 2
    %s16 = sadd.s32 %s9, 1
    %s17 = ssub.s32 %s9, %s16
    %p18 = scmp.eq.s32.totalorder %s17, 0
    %s20 = sadd.s32 %s19, 1
    %s21 = scalar_select %p18, %s19, %s20
    %p24 = pneg %p18
    %p25 = scmp.eq.s32.totalorder %s9, 1
    %p26 = por %p24, %p25
    %p27 = scmp.ne.s32.totalorder %s19, %s22
    %p28 = scmp.eq.s32.totalorder %s9, 0
    %p29 = por %p27, %p28
    %p30 = scmp.ne.s32.totalorder %s19, %s22
    %p31 = scmp.eq.s32.totalorder %s14, 1
    %p32 = por %p30, %p31
    %p33 = scmp.ne.s32.totalorder %s22, %s23
    %p34 = scmp.eq.s32.totalorder %s14, 0
    %p35 = por %p33, %p34
    %p36 = scmp.ne.s32.totalorder %s22, %s23
    %p37 = scmp.eq.s32.totalorder %s15, 1
    %p38 = por %p36, %p37
    %p40 = scmp.ne.s32.totalorder %s23, %s39
    %p41 = scmp.eq.s32.totalorder %s15, 0
    %p42 = por %p40, %p41
    %s44 = sadd.s32 %s43, 1
    %p47 = scmp.eq.s32.totalorder %s9, 1
    %p48 = scmp.ne.s32.totalorder %s43, %s45
    %p49 = scmp.eq.s32.totalorder %s9, 0
    %p50 = por %p48, %p49
    %p51 = scmp.ne.s32.totalorder %s43, %s45
    %p52 = scmp.eq.s32.totalorder %s14, 1
    %p53 = por %p51, %p52
    %p54 = scmp.ne.s32.totalorder %s45, %s46
    %p55 = scmp.eq.s32.totalorder %s14, 0
    %p56 = por %p54, %p55
    %p57 = scmp.ne.s32.totalorder %s45, %s46
    %p58 = scmp.eq.s32.totalorder %s15, 1
    %p59 = por %p57, %p58
    %p61 = scmp.ne.s32.totalorder %s46, %s60
    %p62 = scmp.eq.s32.totalorder %s15, 0
    %p63 = por %p61, %p62
    %s65 = sadd.s32 %s64, 1
    %p68 = scmp.eq.s32.totalorder %s9, 1
    %p69 = scmp.ne.s32.totalorder %s64, %s66
    %p70 = scmp.eq.s32.totalorder %s9, 0
    %p71 = por %p69, %p70
    %p72 = scmp.ne.s32.totalorder %s64, %s66
    %p73 = scmp.eq.s32.totalorder %s14, 1
    %p74 = por %p72, %p73
    %p75 = scmp.ne.s32.totalorder %s66, %s67
    %p76 = scmp.eq.s32.totalorder %s14, 0
    %p77 = por %p75, %p76
    %p78 = scmp.ne.s32.totalorder %s66, %s67
    %p79 = scmp.eq.s32.totalorder %s15, 1
    %p80 = por %p78, %p79
    %p82 = scmp.ne.s32.totalorder %s67, %s81
    %p83 = scmp.eq.s32.totalorder %s15, 0
    %p84 = por %p82, %p83
    %s85 = ssub.s32 %s9, %s16
    %p86 = scmp.eq.s32.totalorder %s85, 0
    %s88 = sadd.s32 %s87, 1
    %s89 = scalar_select %p86, %s87, %s88
    %p92 = pneg %p86
    %p93 = scmp.eq.s32.totalorder %s9, 1
    %p94 = por %p92, %p93
    %p95 = scmp.ne.s32.totalorder %s87, %s90
    %p96 = scmp.eq.s32.totalorder %s9, 0
    %p97 = por %p95, %p96
    %p98 = scmp.ne.s32.totalorder %s87, %s90
    %p99 = scmp.eq.s32.totalorder %s14, 1
    %p100 = por %p98, %p99
    %p101 = scmp.ne.s32.totalorder %s90, %s91
    %p102 = scmp.eq.s32.totalorder %s14, 0
    %p103 = por %p101, %p102
    %p104 = scmp.ne.s32.totalorder %s90, %s91
    %p105 = scmp.eq.s32.totalorder %s15, 1
    %p106 = por %p104, %p105
    %p108 = scmp.ne.s32.totalorder %s91, %s107
    %p109 = scmp.eq.s32.totalorder %s15, 0
    %p110 = por %p108, %p109
    %p111 = scmp.le.s32.totalorder 1, %s9
    %p112 = scmp.lt.s32.totalorder %s9, 3
    %p113 = pnand %p111, %p112
    %p114 = pneg %p113
    // Predicated region
    $region9: #{_lambda_.34} parent=5 // pred_check
      _
    $region10: #{_lambda_.34} parent=5 // pred_check_branch
      %116 = sbr.rel (%p113) target = $region12
    $region11: #{_lambda_.34} parent=5 // pred_region
      %s117 = ssub.s32 %s9, 1
      // Predicated region
      $region13: #{_lambda_.34} parent=11 // pred_check
        %p118 = pneg %p56
      $region14: #{_lambda_.34} parent=11 // pred_check_branch
        %120 = sbr.rel (%p118) target = $region16
      $region15: #{_lambda_.34} parent=11 // pred_region
        _
      $region16: #{_lambda_.34} parent=11 // pred_fallthru
        _
      // Predicated region
      $region17: #{_lambda_.34} parent=11 // pred_check
        %p121 = pneg %p77
      $region18: #{_lambda_.34} parent=11 // pred_check_branch
        %123 = sbr.rel (%p121) target = $region20
      $region19: #{_lambda_.34} parent=11 // pred_region
        _
      $region20: #{_lambda_.34} parent=11 // pred_fallthru
        _
    $region12: #{_lambda_.34} parent=5 // pred_fallthru
      _
    %p124 = scmp.lt.s32.totalorder %s9, 2
    // Predicated region
    $region21: #{_lambda_.34} parent=5 // pred_check
      %p125 = pneg %p124
    $region22: #{_lambda_.34} parent=5 // pred_check_branch
      %127 = sbr.rel (%p125) target = $region24
    $region23: #{_lambda_.34} parent=5 // pred_region
      // Predicated region
      $region25: #{_lambda_.34} parent=23 // pred_check
        %p128 = pneg %p29
      $region26: #{_lambda_.34} parent=23 // pred_check_branch
        %130 = sbr.rel (%p128) target = $region28
      $region27: #{_lambda_.34} parent=23 // pred_region
        %p131 = scmp.lt.s32.totalorder %s9, 1
        %s132 = scalar_select %p131, %s9, 1
        %s133 = smul.addr %s132, 8
        %s134 = scalar_lea.vmem %s0, %s133
      $region28: #{_lambda_.34} parent=23 // pred_fallthru
        _
    $region24: #{_lambda_.34} parent=5 // pred_fallthru
      _
    %p135 = scmp.le.s32.totalorder 1, %s9
    %p136 = scmp.lt.s32.totalorder %s9, 3
    %p137 = pnand %p135, %p136
    %p138 = pneg %p137
    // Predicated region
    $region29: #{_lambda_.34} parent=5 // pred_check
      _
    $region30: #{_lambda_.34} parent=5 // pred_check_branch
      %140 = sbr.rel (%p137) target = $region32
    $region31: #{_lambda_.34} parent=5 // pred_region
      %s141 = ssub.s32 %s9, 1
      %p142 = scmp.lt.s32.totalorder %s14, 1
      %s143 = scalar_select %p142, %s14, 1
      %s144 = smul.addr %s143, 8
      %s145 = scalar_lea.vmem %s0, %s144
      %p146 = pneg %p35
      %p147 = pneg %p32
      %p148 = pneg %p56
      %p149 = pneg %p53
      %p150 = pneg %p77
      %p151 = pneg %p74
      %p152 = pneg %p103
      %p153 = pneg %p100
      %p154 = scmp.lt.s32.totalorder %s14, 1
      %s155 = scalar_select %p154, %s14, 1
      %s156 = smul.addr %s155, 8
      %s157 = scalar_lea.vmem %s3, %s156
      %p158 = scmp.lt.s32.totalorder %s14, 1
      %s159 = scalar_select %p158, %s14, 1
      %s160 = smul.addr %s159, 8
      %s161 = scalar_lea.vmem %s0, %s160
      %p162 = scmp.lt.s32.totalorder %s14, 1
      %s163 = scalar_select %p162, %s14, 1
      %s164 = smul.addr %s163, 8
      %s165 = scalar_lea.vmem %s3, %s164
      %v167 = vld [vmem:[%s161] sm:$0xff]
      %v168 = vrot.slane %v167, 7
      %v169 = vpack.c.bf16 %v168, %v168
      %v170 = vpack.c.bf16 %v167, %v167
      %v171 = vrot.slane %v167, 1
      %v172 = vpack.c.bf16 %v171, %v171
      %v173 = vld [vmem:[%s1] sm:$0x3]
      %s174 = scalar_lea.vmem %s1, 2
      %v175 = vld [vmem:[%s174] sm:$0x3]
      %vm176 = vcmask 31744
      %v178 = vsel %vm176, %v170, 0
      %vm180 = vcmask 1041408
      %v182 = vsel %vm180, %v175, 0
      %184 = vmatprep.subr.bf16.mxu0 0
      %185 = vmatpush1.bf16.msra.mxu0 0
      %186 = vmatprep.subr.bf16.mxu0 0
      %187 = vmatpush1.bf16.msra.mxu0 0
      %188 = vmatprep.subr.bf16.mxu0 0
      %189 = vmatpush1.bf16.msra.mxu0 0
      %190 = vmatprep.subr.bf16.mxu0 0
      %191 = vmatpush1.bf16.msra.mxu0 0
      %192 = vmatprep.subr.bf16.mxu0 0
      %193 = vmatpush1.bf16.msra.mxu0 0
      %194 = vmatprep.subr.bf16.mxu0 0
      %195 = vmatpush1.bf16.msra.mxu0 0
      %196 = vmatprep.subr.bf16.mxu0 0
      %197 = vmatpush1.bf16.msra.mxu0 0
      %198 = vmatprep.subr.bf16.mxu0 0
      %199 = vmatpush1.bf16.msra.mxu0 %v182
      %200 = vmatprep.subr.bf16.mxu0 0
      %201 = vmatpush2.bf16.msra.mxu0 0
      %202 = vmatprep.subr.bf16.mxu0 0
      %203 = vmatpush2.bf16.msra.mxu0 0
      %204 = vmatprep.subr.bf16.mxu0 0
      %205 = vmatpush2.bf16.msra.mxu0 0
      %206 = vmatprep.subr.bf16.mxu0 0
      %207 = vmatpush2.bf16.msra.mxu0 0
      %208 = vmatprep.subr.bf16.mxu0 0
      %209 = vmatpush2.bf16.msra.mxu0 0
      %210 = vmatprep.subr.bf16.mxu0 0
      %211 = vmatpush2.bf16.msra.mxu0 0
      %212 = vmatprep.subr.bf16.mxu0 0
      %213 = vmatpush2.bf16.msra.mxu0 0
      %214 = vmatprep.subr.bf16.mxu0 0
      %215 = vmatpush2.bf16.msra.mxu0 0
      %216 = vmatprep.mubr.bf16.mxu0 0
      %217 = vmatmul.mubr.bf16.gmra.mxu0 %v178
      %v218 = vpop.f32.mrf.mxu0
      %v219 = vadd.f32 0.0, %v218
      %v220 = vpop.f32.mrf.mxu0
      %v221 = vpop.f32.mrf.mxu0
      %v222 = vpop.f32.mrf.mxu0
      %223 = vdwg.mxu0
      %v225 = vsel %vm176, %v169, 0
      %v228 = vsel %vm180, %v173, 0
      %230 = vmatprep.subr.bf16.mxu0 0
      %231 = vmatpush1.bf16.msra.mxu0 0
      %232 = vmatprep.subr.bf16.mxu0 0
      %233 = vmatpush1.bf16.msra.mxu0 0
      %234 = vmatprep.subr.bf16.mxu0 0
      %235 = vmatpush1.bf16.msra.mxu0 0
      %236 = vmatprep.subr.bf16.mxu0 0
      %237 = vmatpush1.bf16.msra.mxu0 0
      %238 = vmatprep.subr.bf16.mxu0 0
      %239 = vmatpush1.bf16.msra.mxu0 0
      %240 = vmatprep.subr.bf16.mxu0 0
      %241 = vmatpush1.bf16.msra.mxu0 0
      %242 = vmatprep.subr.bf16.mxu0 0
      %243 = vmatpush1.bf16.msra.mxu0 0
      %244 = vmatprep.subr.bf16.mxu0 0
      %245 = vmatpush1.bf16.msra.mxu0 %v228
      %246 = vmatprep.subr.bf16.mxu0 0
      %247 = vmatpush2.bf16.msra.mxu0 0
      %248 = vmatprep.subr.bf16.mxu0 0
      %249 = vmatpush2.bf16.msra.mxu0 0
      %250 = vmatprep.subr.bf16.mxu0 0
      %251 = vmatpush2.bf16.msra.mxu0 0
      %252 = vmatprep.subr.bf16.mxu0 0
      %253 = vmatpush2.bf16.msra.mxu0 0
      %254 = vmatprep.subr.bf16.mxu0 0
      %255 = vmatpush2.bf16.msra.mxu0 0
      %256 = vmatprep.subr.bf16.mxu0 0
      %257 = vmatpush2.bf16.msra.mxu0 0
      %258 = vmatprep.subr.bf16.mxu0 0
      %259 = vmatpush2.bf16.msra.mxu0 0
      %260 = vmatprep.subr.bf16.mxu0 0
      %261 = vmatpush2.bf16.msra.mxu0 0
      %262 = vmatprep.mubr.bf16.mxu0 0
      %263 = vmatmul.mubr.bf16.gmra.mxu0 %v225
      %v264 = vpop.f32.mrf.mxu0
      %v265 = vadd.f32 %v219, %v264
      %v266 = vpop.f32.mrf.mxu0
      %v267 = vpop.f32.mrf.mxu0
      %v268 = vpop.f32.mrf.mxu0
      %269 = vdwg.mxu0
      %s270 = scalar_lea.vmem %s1, 4
      %v271 = vld [vmem:[%s270] sm:$0x3]
      %v273 = vsel %vm176, %v172, 0
      %v276 = vsel %vm180, %v271, 0
      %278 = vmatprep.subr.bf16.mxu0 0
      %279 = vmatpush1.bf16.msra.mxu0 0
      %280 = vmatprep.subr.bf16.mxu0 0
      %281 = vmatpush1.bf16.msra.mxu0 0
      %282 = vmatprep.subr.bf16.mxu0 0
      %283 = vmatpush1.bf16.msra.mxu0 0
      %284 = vmatprep.subr.bf16.mxu0 0
      %285 = vmatpush1.bf16.msra.mxu0 0
      %286 = vmatprep.subr.bf16.mxu0 0
      %287 = vmatpush1.bf16.msra.mxu0 0
      %288 = vmatprep.subr.bf16.mxu0 0
      %289 = vmatpush1.bf16.msra.mxu0 0
      %290 = vmatprep.subr.bf16.mxu0 0
      %291 = vmatpush1.bf16.msra.mxu0 0
      %292 = vmatprep.subr.bf16.mxu0 0
      %293 = vmatpush1.bf16.msra.mxu0 %v276
      %294 = vmatprep.subr.bf16.mxu0 0
      %295 = vmatpush2.bf16.msra.mxu0 0
      %296 = vmatprep.subr.bf16.mxu0 0
      %297 = vmatpush2.bf16.msra.mxu0 0
      %298 = vmatprep.subr.bf16.mxu0 0
      %299 = vmatpush2.bf16.msra.mxu0 0
      %300 = vmatprep.subr.bf16.mxu0 0
      %301 = vmatpush2.bf16.msra.mxu0 0
      %302 = vmatprep.subr.bf16.mxu0 0
      %303 = vmatpush2.bf16.msra.mxu0 0
      %304 = vmatprep.subr.bf16.mxu0 0
      %305 = vmatpush2.bf16.msra.mxu0 0
      %306 = vmatprep.subr.bf16.mxu0 0
      %307 = vmatpush2.bf16.msra.mxu0 0
      %308 = vmatprep.subr.bf16.mxu0 0
      %309 = vmatpush2.bf16.msra.mxu0 0
      %310 = vmatprep.mubr.bf16.mxu0 0
      %311 = vmatmul.mubr.bf16.gmra.mxu0 %v273
      %v312 = vpop.f32.mrf.mxu0
      %v313 = vadd.f32 0.0, %v312
      %v314 = vpop.f32.mrf.mxu0
      %v315 = vpop.f32.mrf.mxu0
      %v316 = vpop.f32.mrf.mxu0
      %317 = vdwg.mxu0
      %v318 = vadd.f32 %v265, %v313
      %v319 = vld [vmem:[%s2] sm:$0x1]
      %v321 = vlaneseq
      %v322 = vshrl.u32 %v321, 7
      %v323 = vsub.s32 0, %v322
      %v324 = vrot.slane %v319, %v323
      %v326 = vadd.f32 %v318, %v324
      %vm327 = vcmask 261120
      %328 = vst.msk [vmem:[%s165] sm:$0xff] %vm327, %v326
      %p329 = scmp.lt.s32.totalorder %s14, 1
      %s330 = scalar_select %p329, %s14, 1
      %s331 = smul.addr %s330, 8
      %s332 = scalar_lea.vmem %s3, %s331
      // Predicated region
      $region33: #{_lambda_.34} parent=31 // pred_check
        %p333 = pneg %p100
      $region34: #{_lambda_.34} parent=31 // pred_check_branch
        %335 = sbr.rel (%p333) target = $region36
      $region35: #{_lambda_.34} parent=31 // pred_region
        _
      $region36: #{_lambda_.34} parent=31 // pred_fallthru
        _
    $region32: #{_lambda_.34} parent=5 // pred_fallthru
      _
    %p336 = scmp.le.s32.totalorder 2, %s9
    // Predicated region
    $region37: #{_lambda_.34} parent=5 // pred_check
      %p337 = pneg %p336
    $region38: #{_lambda_.34} parent=5 // pred_check_branch
      %339 = sbr.rel (%p337) target = $region40
    $region39: #{_lambda_.34} parent=5 // pred_region
      %s340 = ssub.s32 %s9, 2
      // Predicated region
      $region41: #{_lambda_.34} parent=39 // pred_check
        %p341 = pneg %p106
      $region42: #{_lambda_.34} parent=39 // pred_check_branch
        %343 = sbr.rel (%p341) target = $region44
      $region43: #{_lambda_.34} parent=39 // pred_region
        %p344 = scmp.lt.s32.totalorder %s15, 1
        %s345 = scalar_select %p344, %s15, 1
        %s346 = smul.addr %s345, 8
        %s347 = scalar_lea.vmem %s3, %s346
      $region44: #{_lambda_.34} parent=39 // pred_fallthru
        _
    $region40: #{_lambda_.34} parent=5 // pred_fallthru
      _
  $region6: #{_lambda_.34} parent=0 // loop_footer
    %s13 = sadd.s32 1, %s9
  $region7: #{_lambda_.34} parent=0 // loop_footer_branch
    %8 = sbr.rel target = $region3
  $region8: #{_lambda_.34} parent=0 // loop_exit
    _

// kernel: _lambda_.35
$region0: #{_lambda_.35}
  #allocation0 [shape = 'u32[]', space=smem, size = 0x4, offset = 0x4, fixed_abs, tag = 'smem constant byte address 0x4 - core index']
  #allocation1 [shape = 'u32[144,128]{1,0:T(1,128)}', space=vmem, size = 0x12000, scoped, tag = 'internal scratch']
  %s0 = inlined_call_operand.vmem [shape: f32[16,32], index: 0, kind: input, shape index: {}]
  %s1 = inlined_call_operand.vmem [shape: bf16[32,32], index: 1, kind: input, shape index: {}]
  %s2 = inlined_call_operand.vmem [shape: f32[1,32], index: 2, kind: input, shape index: {}]
  %s3 = inlined_call_operand.vmem [shape: f32[16,32], index: 3, kind: output, shape index: {}]
  %s4 = sld [smem:[#allocation0]]
  $region45: #{_lambda_.35} parent=0
    _
  %s6 = ssub.s32 1, %s4
  %s7 = scalar_select 0, %s6, %s4
  loop: start=0, step=1, limit=4
  $region2: #{_lambda_.35} parent=0 // loop_pre_header
    _
  $region3: #{_lambda_.35} parent=0 // loop_header
    %s9 = sphi 0, %s13
    %p10 = scmp.ge.s32.totalorder %s9, 4
    %s19 = sphi 0, %s21
    %s22 = sphi 0, %s19
    %s23 = sphi 0, %s22
    %s39 = sphi 0, %s23
    %s43 = sphi 0, %s43
    %s45 = sphi 0, %s43
    %s46 = sphi 0, %s45
    %s60 = sphi 0, %s46
    %s64 = sphi 0, %s64
    %s66 = sphi 0, %s64
    %s67 = sphi 0, %s66
    %s81 = sphi 0, %s67
    %s87 = sphi 0, %s89
    %s90 = sphi 0, %s87
    %s91 = sphi 0, %s90
    %s107 = sphi 0, %s91
  $region4: #{_lambda_.35} parent=0 // loop_header_branch
    %12 = sbr.rel (%p10) target = $region8
  $region5: #{_lambda_.35} parent=0 // loop_body
    %s14 = ssub.s32 %s9, 1
    %s15 = ssub.s32 %s9, 2
    %s16 = sadd.s32 %s9, 1
    %s17 = ssub.s32 %s9, %s16
    %p18 = scmp.eq.s32.totalorder %s17, 0
    %s20 = sadd.s32 %s19, 1
    %s21 = scalar_select %p18, %s19, %s20
    %p24 = pneg %p18
    %p25 = scmp.eq.s32.totalorder %s9, 1
    %p26 = por %p24, %p25
    %p27 = scmp.ne.s32.totalorder %s19, %s22
    %p28 = scmp.eq.s32.totalorder %s9, 0
    %p29 = por %p27, %p28
    %p30 = scmp.ne.s32.totalorder %s19, %s22
    %p31 = scmp.eq.s32.totalorder %s14, 1
    %p32 = por %p30, %p31
    %p33 = scmp.ne.s32.totalorder %s22, %s23
    %p34 = scmp.eq.s32.totalorder %s14, 0
    %p35 = por %p33, %p34
    %p36 = scmp.ne.s32.totalorder %s22, %s23
    %p37 = scmp.eq.s32.totalorder %s15, 1
    %p38 = por %p36, %p37
    %p40 = scmp.ne.s32.totalorder %s23, %s39
    %p41 = scmp.eq.s32.totalorder %s15, 0
    %p42 = por %p40, %p41
    %s44 = sadd.s32 %s43, 1
    %p47 = scmp.eq.s32.totalorder %s9, 1
    %p48 = scmp.ne.s32.totalorder %s43, %s45
    %p49 = scmp.eq.s32.totalorder %s9, 0
    %p50 = por %p48, %p49
    %p51 = scmp.ne.s32.totalorder %s43, %s45
    %p52 = scmp.eq.s32.totalorder %s14, 1
    %p53 = por %p51, %p52
    %p54 = scmp.ne.s32.totalorder %s45, %s46
    %p55 = scmp.eq.s32.totalorder %s14, 0
    %p56 = por %p54, %p55
    %p57 = scmp.ne.s32.totalorder %s45, %s46
    %p58 = scmp.eq.s32.totalorder %s15, 1
    %p59 = por %p57, %p58
    %p61 = scmp.ne.s32.totalorder %s46, %s60
    %p62 = scmp.eq.s32.totalorder %s15, 0
    %p63 = por %p61, %p62
    %s65 = sadd.s32 %s64, 1
    %p68 = scmp.eq.s32.totalorder %s9, 1
    %p69 = scmp.ne.s32.totalorder %s64, %s66
    %p70 = scmp.eq.s32.totalorder %s9, 0
    %p71 = por %p69, %p70
    %p72 = scmp.ne.s32.totalorder %s64, %s66
    %p73 = scmp.eq.s32.totalorder %s14, 1
    %p74 = por %p72, %p73
    %p75 = scmp.ne.s32.totalorder %s66, %s67
    %p76 = scmp.eq.s32.totalorder %s14, 0
    %p77 = por %p75, %p76
    %p78 = scmp.ne.s32.totalorder %s66, %s67
    %p79 = scmp.eq.s32.totalorder %s15, 1
    %p80 = por %p78, %p79
    %p82 = scmp.ne.s32.totalorder %s67, %s81
    %p83 = scmp.eq.s32.totalorder %s15, 0
    %p84 = por %p82, %p83
    %s85 = ssub.s32 %s9, %s16
    %p86 = scmp.eq.s32.totalorder %s85, 0
    %s88 = sadd.s32 %s87, 1
    %s89 = scalar_select %p86, %s87, %s88
    %p92 = pneg %p86
    %p93 = scmp.eq.s32.totalorder %s9, 1
    %p94 = por %p92, %p93
    %p95 = scmp.ne.s32.totalorder %s87, %s90
    %p96 = scmp.eq.s32.totalorder %s9, 0
    %p97 = por %p95, %p96
    %p98 = scmp.ne.s32.totalorder %s87, %s90
    %p99 = scmp.eq.s32.totalorder %s14, 1
    %p100 = por %p98, %p99
    %p101 = scmp.ne.s32.totalorder %s90, %s91
    %p102 = scmp.eq.s32.totalorder %s14, 0
    %p103 = por %p101, %p102
    %p104 = scmp.ne.s32.totalorder %s90, %s91
    %p105 = scmp.eq.s32.totalorder %s15, 1
    %p106 = por %p104, %p105
    %p108 = scmp.ne.s32.totalorder %s91, %s107
    %p109 = scmp.eq.s32.totalorder %s15, 0
    %p110 = por %p108, %p109
    %p111 = scmp.le.s32.totalorder 1, %s9
    %p112 = scmp.lt.s32.totalorder %s9, 3
    %p113 = pnand %p111, %p112
    %p114 = pneg %p113
    // Predicated region
    $region9: #{_lambda_.35} parent=5 // pred_check
      _
    $region10: #{_lambda_.35} parent=5 // pred_check_branch
      %116 = sbr.rel (%p113) target = $region12
    $region11: #{_lambda_.35} parent=5 // pred_region
      %s117 = ssub.s32 %s9, 1
      // Predicated region
      $region13: #{_lambda_.35} parent=11 // pred_check
        %p118 = pneg %p56
      $region14: #{_lambda_.35} parent=11 // pred_check_branch
        %120 = sbr.rel (%p118) target = $region16
      $region15: #{_lambda_.35} parent=11 // pred_region
        _
      $region16: #{_lambda_.35} parent=11 // pred_fallthru
        _
      // Predicated region
      $region17: #{_lambda_.35} parent=11 // pred_check
        %p121 = pneg %p77
      $region18: #{_lambda_.35} parent=11 // pred_check_branch
        %123 = sbr.rel (%p121) target = $region20
      $region19: #{_lambda_.35} parent=11 // pred_region
        _
      $region20: #{_lambda_.35} parent=11 // pred_fallthru
        _
    $region12: #{_lambda_.35} parent=5 // pred_fallthru
      _
    %p124 = scmp.lt.s32.totalorder %s9, 2
    // Predicated region
    $region21: #{_lambda_.35} parent=5 // pred_check
      %p125 = pneg %p124
    $region22: #{_lambda_.35} parent=5 // pred_check_branch
      %127 = sbr.rel (%p125) target = $region24
    $region23: #{_lambda_.35} parent=5 // pred_region
      // Predicated region
      $region25: #{_lambda_.35} parent=23 // pred_check
        %p128 = pneg %p29
      $region26: #{_lambda_.35} parent=23 // pred_check_branch
        %130 = sbr.rel (%p128) target = $region28
      $region27: #{_lambda_.35} parent=23 // pred_region
        %p131 = scmp.lt.s32.totalorder %s9, 1
        %s132 = scalar_select %p131, %s9, 1
        %s133 = smul.addr %s132, 8
        %s134 = scalar_lea.vmem %s0, %s133
      $region28: #{_lambda_.35} parent=23 // pred_fallthru
        _
    $region24: #{_lambda_.35} parent=5 // pred_fallthru
      _
    %p135 = scmp.le.s32.totalorder 1, %s9
    %p136 = scmp.lt.s32.totalorder %s9, 3
    %p137 = pnand %p135, %p136
    %p138 = pneg %p137
    // Predicated region
    $region29: #{_lambda_.35} parent=5 // pred_check
      _
    $region30: #{_lambda_.35} parent=5 // pred_check_branch
      %140 = sbr.rel (%p137) target = $region32
    $region31: #{_lambda_.35} parent=5 // pred_region
      %s141 = ssub.s32 %s9, 1
      %p142 = scmp.lt.s32.totalorder %s14, 1
      %s143 = scalar_select %p142, %s14, 1
      %s144 = smul.addr %s143, 8
      %s145 = scalar_lea.vmem %s0, %s144
      %p146 = pneg %p35
      %p147 = pneg %p32
      %p148 = pneg %p56
      %p149 = pneg %p53
      %p150 = pneg %p77
      %p151 = pneg %p74
      %p152 = pneg %p103
      %p153 = pneg %p100
      %p154 = scmp.lt.s32.totalorder %s14, 1
      %s155 = scalar_select %p154, %s14, 1
      %s156 = smul.addr %s155, 8
      %s157 = scalar_lea.vmem %s3, %s156
      %p158 = scmp.lt.s32.totalorder %s14, 1
      %s159 = scalar_select %p158, %s14, 1
      %s160 = smul.addr %s159, 8
      %s161 = scalar_lea.vmem %s0, %s160
      %p162 = scmp.lt.s32.totalorder %s14, 1
      %s163 = scalar_select %p162, %s14, 1
      %s164 = smul.addr %s163, 8
      %s165 = scalar_lea.vmem %s3, %s164
      %v167 = vld [vmem:[%s161] sm:$0xff]
      %v168 = vpack.c.bf16 %v167, %v167
      %v169 = vld [vmem:[%s1] sm:$0xf]
      %v170 = vld [vmem:[%s1 + $0x4] sm:$0xf]
      %v171 = vld [vmem:[%s1 + $0x8] sm:$0xf]
      %v172 = vld [vmem:[%s1 + $0xc] sm:$0xf]
      %v173 = vld [vmem:[%s2] sm:$0x1]
      %v175 = vlaneseq
      %v176 = vshrl.u32 %v175, 7
      %v177 = vsub.s32 0, %v176
      %v178 = vrot.slane %v173, %v177
      %v184 = vunpack.c.l.b16 %v169
      %v185 = vunpack.c.l.b16 %v170
      %v186 = vunpack.c.l.b16 %v171
      %v187 = vunpack.c.l.b16 %v172
      %v188 = vpack.c.b16 %v185, %v184
      %v189 = vpack.c.b16 %v187, %v186
      %vm192 = vcmask 261120
      %v194 = vsel %vm192, %v168, 0
      %196 = vmatprep.subr.bf16.mxu0 0
      %197 = vmatpush1.bf16.msra.mxu0 0
      %198 = vmatprep.subr.bf16.mxu0 0
      %199 = vmatpush1.bf16.msra.mxu0 0
      %200 = vmatprep.subr.bf16.mxu0 0
      %201 = vmatpush1.bf16.msra.mxu0 0
      %202 = vmatprep.subr.bf16.mxu0 0
      %203 = vmatpush1.bf16.msra.mxu0 0
      %204 = vmatprep.subr.bf16.mxu0 0
      %205 = vmatpush1.bf16.msra.mxu0 0
      %206 = vmatprep.subr.bf16.mxu0 0
      %207 = vmatpush1.bf16.msra.mxu0 0
      %208 = vmatprep.subr.bf16.mxu0 0
      %209 = vmatpush1.bf16.msra.mxu0 %v189
      %210 = vmatprep.subr.bf16.mxu0 0
      %211 = vmatpush1.bf16.msra.mxu0 %v188
      %212 = vmatprep.subr.bf16.mxu0 0
      %213 = vmatpush2.bf16.msra.mxu0 0
      %214 = vmatprep.subr.bf16.mxu0 0
      %215 = vmatpush2.bf16.msra.mxu0 0
      %216 = vmatprep.subr.bf16.mxu0 0
      %217 = vmatpush2.bf16.msra.mxu0 0
      %218 = vmatprep.subr.bf16.mxu0 0
      %219 = vmatpush2.bf16.msra.mxu0 0
      %220 = vmatprep.subr.bf16.mxu0 0
      %221 = vmatpush2.bf16.msra.mxu0 0
      %222 = vmatprep.subr.bf16.mxu0 0
      %223 = vmatpush2.bf16.msra.mxu0 0
      %224 = vmatprep.subr.bf16.mxu0 0
      %225 = vmatpush2.bf16.msra.mxu0 0
      %226 = vmatprep.subr.bf16.mxu0 0
      %227 = vmatpush2.bf16.msra.mxu0 0
      %228 = vmatprep.mubr.bf16.mxu0 0
      %229 = vmatmul.mubr.bf16.gmra.mxu0 %v194
      %v230 = vpop.f32.mrf.mxu0
      %v231 = vadd.f32 %v178, %v230
      %v232 = vpop.f32.mrf.mxu0
      %v233 = vpop.f32.mrf.mxu0
      %v234 = vpop.f32.mrf.mxu0
      %235 = vdwg.mxu0
      %236 = vst.msk [vmem:[%s165] sm:$0xff] %vm192, %v231
      %p237 = scmp.lt.s32.totalorder %s14, 1
      %s238 = scalar_select %p237, %s14, 1
      %s239 = smul.addr %s238, 8
      %s240 = scalar_lea.vmem %s3, %s239
      // Predicated region
      $region33: #{_lambda_.35} parent=31 // pred_check
        %p241 = pneg %p100
      $region34: #{_lambda_.35} parent=31 // pred_check_branch
        %243 = sbr.rel (%p241) target = $region36
      $region35: #{_lambda_.35} parent=31 // pred_region
        _
      $region36: #{_lambda_.35} parent=31 // pred_fallthru
        _
    $region32: #{_lambda_.35} parent=5 // pred_fallthru
      _
    %p244 = scmp.le.s32.totalorder 2, %s9
    // Predicated region
    $region37: #{_lambda_.35} parent=5 // pred_check
      %p245 = pneg %p244
    $region38: #{_lambda_.35} parent=5 // pred_check_branch
      %247 = sbr.rel (%p245) target = $region40
    $region39: #{_lambda_.35} parent=5 // pred_region
      %s248 = ssub.s32 %s9, 2
      // Predicated region
      $region41: #{_lambda_.35} parent=39 // pred_check
        %p249 = pneg %p106
      $region42: #{_lambda_.35} parent=39 // pred_check_branch
        %251 = sbr.rel (%p249) target = $region44
      $region43: #{_lambda_.35} parent=39 // pred_region
        %p252 = scmp.lt.s32.totalorder %s15, 1
        %s253 = scalar_select %p252, %s15, 1
        %s254 = smul.addr %s253, 8
        %s255 = scalar_lea.vmem %s3, %s254
      $region44: #{_lambda_.35} parent=39 // pred_fallthru
        _
    $region40: #{_lambda_.35} parent=5 // pred_fallthru
      _
  $region6: #{_lambda_.35} parent=0 // loop_footer
    %s13 = sadd.s32 1, %s9
  $region7: #{_lambda_.35} parent=0 // loop_footer_branch
    %8 = sbr.rel target = $region3
  $region8: #{_lambda_.35} parent=0 // loop_exit
    _

// kernel: _lambda_.38
$region0: #{_lambda_.38}
  #allocation0 [shape = 'u32[]', space=smem, size = 0x4, offset = 0x4, fixed_abs, tag = 'smem constant byte address 0x4 - core index']
  #allocation1 [shape = 'u32[144,128]{1,0:T(1,128)}', space=vmem, size = 0x12000, scoped, tag = 'internal scratch']
  #allocation2 [shape = 'f32[4,8,1]{2,1,0:T(8,128)}', space=vmem, size = 0x4000, scoped, tag = 'scratch operand']
  #allocation3 [shape = 'f32[4,8,1]{2,1,0:T(8,128)}', space=vmem, size = 0x4000, scoped, tag = 'scratch operand']
  %s0 = inlined_call_operand.vmem [shape: f32[8,8,8], index: 0, kind: input, shape index: {}]
  %s1 = inlined_call_operand.vmem [shape: f32[8,8,8], index: 1, kind: input, shape index: {}]
  %s2 = inlined_call_operand.vmem [shape: f32[8,8,1], index: 2, kind: output, shape index: {}]
  %s3 = sld [smem:[#allocation0]]
  $region49: #{_lambda_.38} parent=0
    _
  %s5 = ssub.s32 1, %s3
  %s6 = scalar_select 0, %s5, %s3
  loop: start=0, step=1, limit=4
  $region2: #{_lambda_.38} parent=0 // loop_pre_header
    _
  $region3: #{_lambda_.38} parent=0 // loop_header
    %s8 = sphi 0, %s12
    %p9 = scmp.ge.s32.totalorder %s8, 4
    %s15 = sphi 0, %s27
    %s16 = sphi 0, %s23
    %s17 = sphi 0, %s15
    %s18 = sphi 0, %s16
    %s19 = sphi 0, %s17
    %s20 = sphi 0, %s18
    %s30 = sphi 0, %s32
    %s33 = sphi 0, %s30
    %s34 = sphi 0, %s33
    %s50 = sphi 0, %s34
    %s58 = sphi 0, %s60
    %s61 = sphi 0, %s58
    %s62 = sphi 0, %s61
    %s78 = sphi 0, %s62
    %s84 = sphi 0, %s86
    %s87 = sphi 0, %s84
    %s88 = sphi 0, %s87
    %s104 = sphi 0, %s88
  $region4: #{_lambda_.38} parent=0 // loop_header_branch
    %11 = sbr.rel (%p9) target = $region8
  $region5: #{_lambda_.38} parent=0 // loop_body
    %s13 = ssub.s32 %s8, 1
    %s14 = ssub.s32 %s8, 2
    %s21 = sadd.s32 1, %s16
    %p22 = scmp.ge.s32.totalorder %s21, 1
    %s23 = scalar_select %p22, 0, %s21
    %s24 = sadd.s32 1, %s15
    %s25 = scalar_select %p22, %s24, %s15
    %p26 = scmp.ge.s32.totalorder %s25, 2
    %s27 = scalar_select %p26, 0, %s25
    %s28 = ssub.s32 %s15, %s27
    %p29 = scmp.eq.s32.totalorder %s28, 0
    %s31 = sadd.s32 %s30, 1
    %s32 = scalar_select %p29, %s30, %s31
    %p35 = pneg %p29
    %p36 = scmp.eq.s32.totalorder %s8, 1
    %p37 = por %p35, %p36
    %p38 = scmp.ne.s32.totalorder %s30, %s33
    %p39 = scmp.eq.s32.totalorder %s8, 0
    %p40 = por %p38, %p39
    %p41 = scmp.ne.s32.totalorder %s30, %s33
    %p42 = scmp.eq.s32.totalorder %s13, 1
    %p43 = por %p41, %p42
    %p44 = scmp.ne.s32.totalorder %s33, %s34
    %p45 = scmp.eq.s32.totalorder %s13, 0
    %p46 = por %p44, %p45
    %p47 = scmp.ne.s32.totalorder %s33, %s34
    %p48 = scmp.eq.s32.totalorder %s14, 1
    %p49 = por %p47, %p48
    %p51 = scmp.ne.s32.totalorder %s34, %s50
    %p52 = scmp.eq.s32.totalorder %s14, 0
    %p53 = por %p51, %p52
    %s54 = ssub.s32 %s15, %s27
    %s55 = ssub.s32 %s16, %s23
    %s56 = sor.u32 %s54, %s55
    %p57 = scmp.eq.s32.totalorder %s56, 0
    %s59 = sadd.s32 %s58, 1
    %s60 = scalar_select %p57, %s58, %s59
    %p63 = pneg %p57
    %p64 = scmp.eq.s32.totalorder %s8, 1
    %p65 = por %p63, %p64
    %p66 = scmp.ne.s32.totalorder %s58, %s61
    %p67 = scmp.eq.s32.totalorder %s8, 0
    %p68 = por %p66, %p67
    %p69 = scmp.ne.s32.totalorder %s58, %s61
    %p70 = scmp.eq.s32.totalorder %s13, 1
    %p71 = por %p69, %p70
    %p72 = scmp.ne.s32.totalorder %s61, %s62
    %p73 = scmp.eq.s32.totalorder %s13, 0
    %p74 = por %p72, %p73
    %p75 = scmp.ne.s32.totalorder %s61, %s62
    %p76 = scmp.eq.s32.totalorder %s14, 1
    %p77 = por %p75, %p76
    %p79 = scmp.ne.s32.totalorder %s62, %s78
    %p80 = scmp.eq.s32.totalorder %s14, 0
    %p81 = por %p79, %p80
    %s82 = ssub.s32 %s15, %s27
    %p83 = scmp.eq.s32.totalorder %s82, 0
    %s85 = sadd.s32 %s84, 1
    %s86 = scalar_select %p83, %s84, %s85
    %p89 = pneg %p83
    %p90 = scmp.eq.s32.totalorder %s8, 1
    %p91 = por %p89, %p90
    %p92 = scmp.ne.s32.totalorder %s84, %s87
    %p93 = scmp.eq.s32.totalorder %s8, 0
    %p94 = por %p92, %p93
    %p95 = scmp.ne.s32.totalorder %s84, %s87
    %p96 = scmp.eq.s32.totalorder %s13, 1
    %p97 = por %p95, %p96
    %p98 = scmp.ne.s32.totalorder %s87, %s88
    %p99 = scmp.eq.s32.totalorder %s13, 0
    %p100 = por %p98, %p99
    %p101 = scmp.ne.s32.totalorder %s87, %s88
    %p102 = scmp.eq.s32.totalorder %s14, 1
    %p103 = por %p101, %p102
    %p105 = scmp.ne.s32.totalorder %s88, %s104
    %p106 = scmp.eq.s32.totalorder %s14, 0
    %p107 = por %p105, %p106
    %p108 = scmp.le.s32.totalorder 1, %s8
    %p109 = scmp.lt.s32.totalorder %s8, 3
    %p110 = pnand %p108, %p109
    %p111 = pneg %p110
    // Predicated region
    $region9: #{_lambda_.38} parent=5 // pred_check
      _
    $region10: #{_lambda_.38} parent=5 // pred_check_branch
      %113 = sbr.rel (%p110) target = $region12
    $region11: #{_lambda_.38} parent=5 // pred_region
      %s114 = ssub.s32 %s8, 1
    $region12: #{_lambda_.38} parent=5 // pred_fallthru
      _
    %p115 = scmp.lt.s32.totalorder %s8, 2
    // Predicated region
    $region13: #{_lambda_.38} parent=5 // pred_check
      %p116 = pneg %p115
    $region14: #{_lambda_.38} parent=5 // pred_check_branch
      %118 = sbr.rel (%p116) target = $region16
    $region15: #{_lambda_.38} parent=5 // pred_region
      // Predicated region
      $region17: #{_lambda_.38} parent=15 // pred_check
        %p119 = pneg %p40
      $region18: #{_lambda_.38} parent=15 // pred_check_branch
        %121 = sbr.rel (%p119) target = $region20
      $region19: #{_lambda_.38} parent=15 // pred_region
        %s122 = smul.u32 4, %s15
        %p123 = scmp.lt.s32.totalorder %s122, 7
        %s124 = scalar_select %p123, %s122, 7
        %s125 = smul.addr %s124, 8
        %s126 = scalar_lea.vmem %s0, %s125
        %s127 = smul.u32 4, %s15
      $region20: #{_lambda_.38} parent=15 // pred_fallthru
        _
      // Predicated region
      $region21: #{_lambda_.38} parent=15 // pred_check
        %p128 = pneg %p68
      $region22: #{_lambda_.38} parent=15 // pred_check_branch
        %130 = sbr.rel (%p128) target = $region24
      $region23: #{_lambda_.38} parent=15 // pred_region
        %s131 = smul.u32 4, %s15
        %p132 = scmp.lt.s32.totalorder %s131, 7
        %s133 = scalar_select %p132, %s131, 7
        %p134 = scmp.lt.s32.totalorder %s16, 0
        %s135 = scalar_select %p134, %s16, 0
        %s136 = sadd.s32 %s135, %s133
        %s137 = smul.addr %s136, 8
        %s138 = scalar_lea.vmem %s1, %s137
        %s139 = smul.u32 4, %s15
      $region24: #{_lambda_.38} parent=15 // pred_fallthru
        _
    $region16: #{_lambda_.38} parent=5 // pred_fallthru
      _
    %p140 = scmp.le.s32.totalorder 1, %s8
    %p141 = scmp.lt.s32.totalorder %s8, 3
    %p142 = pnand %p140, %p141
    %p143 = pneg %p142
    // Predicated region
    $region25: #{_lambda_.38} parent=5 // pred_check
      _
    $region26: #{_lambda_.38} parent=5 // pred_check_branch
      %145 = sbr.rel (%p142) target = $region28
    $region27: #{_lambda_.38} parent=5 // pred_region
      %s146 = ssub.s32 %s8, 1
      %s147 = smul.u32 4, %s17
      %p148 = scmp.lt.s32.totalorder %s147, 7
      %s149 = scalar_select %p148, %s147, 7
      %s150 = smul.addr %s149, 8
      %s151 = scalar_lea.vmem %s0, %s150
      %p152 = pneg %p46
      %p153 = pneg %p43
      %s154 = smul.u32 4, %s17
      %p155 = scmp.lt.s32.totalorder %s154, 7
      %s156 = scalar_select %p155, %s154, 7
      %p157 = scmp.lt.s32.totalorder %s18, 0
      %s158 = scalar_select %p157, %s18, 0
      %s159 = sadd.s32 %s158, %s156
      %s160 = smul.addr %s159, 8
      %s161 = scalar_lea.vmem %s1, %s160
      %p162 = pneg %p74
      %p163 = pneg %p71
      %p164 = pneg %p100
      %p165 = pneg %p97
      %s166 = smul.u32 4, %s17
      %p167 = scmp.lt.s32.totalorder %s166, 7
      %s168 = scalar_select %p167, %s166, 7
      %s169 = smul.addr %s168, 8
      %s170 = scalar_lea.vmem %s2, %s169
      %s171 = smul.u32 4, %s17
      %p172 = scmp.lt.s32.totalorder %s171, 7
      %s173 = scalar_select %p172, %s171, 7
      %s174 = smul.addr %s173, 8
      %s175 = scalar_lea.vmem %s0, %s174
      %s176 = smul.u32 4, %s17
      %s177 = smul.u32 4, %s17
      %p178 = scmp.lt.s32.totalorder %s177, 7
      %s179 = scalar_select %p178, %s177, 7
      %p180 = scmp.lt.s32.totalorder %s18, 0
      %s181 = scalar_select %p180, %s18, 0
      %s182 = sadd.s32 %s181, %s179
      %s183 = smul.addr %s182, 8
      %s184 = scalar_lea.vmem %s1, %s183
      %s185 = smul.u32 4, %s17
      %s186 = smul.u32 4, %s17
      %p187 = scmp.lt.s32.totalorder %s186, 7
      %s188 = scalar_select %p187, %s186, 7
      %s189 = smul.addr %s188, 8
      %s190 = scalar_lea.vmem %s2, %s189
      %s191 = smul.u32 4, %s17
      %p193 = scmp.eq.s32.totalorder %s18, 0
      // Predicated region
      $region29: #{_lambda_.38} parent=27 // pred_check
        %p194 = pneg %p193
      $region30: #{_lambda_.38} parent=27 // pred_check_branch
        %196 = sbr.rel (%p194) target = $region32
      $region31: #{_lambda_.38} parent=27 // pred_region
        %vm197 = vcmask 7168
        %198 = vst.msk [vmem:[#allocation2] sm:$0xff] %vm197, -inf
        %199 = vst.msk [vmem:[#allocation2 + $0x8] sm:$0xff] %vm197, -inf
        %200 = vst.msk [vmem:[#allocation2 + $0x10] sm:$0xff] %vm197, -inf
        %201 = vst.msk [vmem:[#allocation2 + $0x18] sm:$0xff] %vm197, -inf
        %202 = vst.msk [vmem:[#allocation3] sm:$0xff] %vm197, 0.0
        %203 = vst.msk [vmem:[#allocation3 + $0x8] sm:$0xff] %vm197, 0.0
        %204 = vst.msk [vmem:[#allocation3 + $0x10] sm:$0xff] %vm197, 0.0
        %205 = vst.msk [vmem:[#allocation3 + $0x18] sm:$0xff] %vm197, 0.0
      $region32: #{_lambda_.38} parent=27 // pred_fallthru
        _
      %v206 = vld [vmem:[%s175] sm:$0xff]
      %v207 = vld [vmem:[%s175 + $0x8] sm:$0xff]
      %v208 = vld [vmem:[%s175 + $0x10] sm:$0xff]
      %v209 = vld [vmem:[%s175 + $0x18] sm:$0xff]
      %v210 = vpack.c.bf16 %v206, %v206
      %v211 = vpack.c.bf16 %v207, %v207
      %v212 = vpack.c.bf16 %v208, %v208
      %v213 = vpack.c.bf16 %v209, %v209
      %v214 = vld [vmem:[%s184] sm:$0xff]
      %v215 = vld [vmem:[%s184 + $0x8] sm:$0xff]
      %v216 = vld [vmem:[%s184 + $0x10] sm:$0xff]
      %v217 = vld [vmem:[%s184 + $0x18] sm:$0xff]
      %v218 = vpack.c.bf16 %v214, %v214
      %v219 = vpack.c.bf16 %v215, %v215
      %v220 = vpack.c.bf16 %v216, %v216
      %v221 = vpack.c.bf16 %v217, %v217
      %vm222 = vcmask 64512
      %v224 = vsel %vm222, %v210, 0
      %v227 = vsel %vm222, %v218, 0
      %229 = vmatprep.subr.bf16.mxu0 0
      %230 = vmatpush1.bf16.xpose.msra.mxu0 0
      %231 = vmatprep.subr.bf16.mxu0 0
      %232 = vmatpush1.bf16.xpose.msra.mxu0 0
      %233 = vmatprep.subr.bf16.mxu0 0
      %234 = vmatpush1.bf16.xpose.msra.mxu0 0
      %235 = vmatprep.subr.bf16.mxu0 0
      %236 = vmatpush1.bf16.xpose.msra.mxu0 0
      %237 = vmatprep.subr.bf16.mxu0 0
      %238 = vmatpush1.bf16.xpose.msra.mxu0 0
      %239 = vmatprep.subr.bf16.mxu0 0
      %240 = vmatpush1.bf16.xpose.msra.mxu0 0
      %241 = vmatprep.subr.bf16.mxu0 0
      %242 = vmatpush1.bf16.xpose.msra.mxu0 0
      %243 = vmatprep.subr.bf16.mxu0 0
      %244 = vmatpush1.bf16.xpose.msra.mxu0 %v227
      %245 = vmatprep.subr.bf16.mxu0 0
      %246 = vmatpush2.bf16.xpose.msra.mxu0 0
      %247 = vmatprep.subr.bf16.mxu0 0
      %248 = vmatpush2.bf16.xpose.msra.mxu0 0
      %249 = vmatprep.subr.bf16.mxu0 0
      %250 = vmatpush2.bf16.xpose.msra.mxu0 0
      %251 = vmatprep.subr.bf16.mxu0 0
      %252 = vmatpush2.bf16.xpose.msra.mxu0 0
      %253 = vmatprep.subr.bf16.mxu0 0
      %254 = vmatpush2.bf16.xpose.msra.mxu0 0
      %255 = vmatprep.subr.bf16.mxu0 0
      %256 = vmatpush2.bf16.xpose.msra.mxu0 0
      %257 = vmatprep.subr.bf16.mxu0 0
      %258 = vmatpush2.bf16.xpose.msra.mxu0 0
      %259 = vmatprep.subr.bf16.mxu0 0
      %260 = vmatpush2.bf16.xpose.msra.mxu0 0
      %261 = vmatprep.mubr.bf16.mxu0 0
      %262 = vmatmul.mubr.bf16.gmra.mxu0 %v224
      %v263 = vpop.f32.mrf.mxu0
      %v264 = vadd.f32 0.0, %v263
      %v265 = vpop.f32.mrf.mxu0
      %v266 = vpop.f32.mrf.mxu0
      %v267 = vpop.f32.mrf.mxu0
      %268 = vdwg.mxu0
      %v270 = vsel %vm222, %v211, 0
      %v273 = vsel %vm222, %v219, 0
      %275 = vmatprep.subr.bf16.mxu0 0
      %276 = vmatpush1.bf16.xpose.msra.mxu0 0
      %277 = vmatprep.subr.bf16.mxu0 0
      %278 = vmatpush1.bf16.xpose.msra.mxu0 0
      %279 = vmatprep.subr.bf16.mxu0 0
      %280 = vmatpush1.bf16.xpose.msra.mxu0 0
      %281 = vmatprep.subr.bf16.mxu0 0
      %282 = vmatpush1.bf16.xpose.msra.mxu0 0
      %283 = vmatprep.subr.bf16.mxu0 0
      %284 = vmatpush1.bf16.xpose.msra.mxu0 0
      %285 = vmatprep.subr.bf16.mxu0 0
      %286 = vmatpush1.bf16.xpose.msra.mxu0 0
      %287 = vmatprep.subr.bf16.mxu0 0
      %288 = vmatpush1.bf16.xpose.msra.mxu0 0
      %289 = vmatprep.subr.bf16.mxu0 0
      %290 = vmatpush1.bf16.xpose.msra.mxu0 %v273
      %291 = vmatprep.subr.bf16.mxu0 0
      %292 = vmatpush2.bf16.xpose.msra.mxu0 0
      %293 = vmatprep.subr.bf16.mxu0 0
      %294 = vmatpush2.bf16.xpose.msra.mxu0 0
      %295 = vmatprep.subr.bf16.mxu0 0
      %296 = vmatpush2.bf16.xpose.msra.mxu0 0
      %297 = vmatprep.subr.bf16.mxu0 0
      %298 = vmatpush2.bf16.xpose.msra.mxu0 0
      %299 = vmatprep.subr.bf16.mxu0 0
      %300 = vmatpush2.bf16.xpose.msra.mxu0 0
      %301 = vmatprep.subr.bf16.mxu0 0
      %302 = vmatpush2.bf16.xpose.msra.mxu0 0
      %303 = vmatprep.subr.bf16.mxu0 0
      %304 = vmatpush2.bf16.xpose.msra.mxu0 0
      %305 = vmatprep.subr.bf16.mxu0 0
      %306 = vmatpush2.bf16.xpose.msra.mxu0 0
      %307 = vmatprep.mubr.bf16.mxu0 0
      %308 = vmatmul.mubr.bf16.gmra.mxu0 %v270
      %v309 = vpop.f32.mrf.mxu0
      %v310 = vadd.f32 0.0, %v309
      %v311 = vpop.f32.mrf.mxu0
      %v312 = vpop.f32.mrf.mxu0
      %v313 = vpop.f32.mrf.mxu0
      %314 = vdwg.mxu0
      %v316 = vsel %vm222, %v212, 0
      %v319 = vsel %vm222, %v220, 0
      %321 = vmatprep.subr.bf16.mxu0 0
      %322 = vmatpush1.bf16.xpose.msra.mxu0 0
      %323 = vmatprep.subr.bf16.mxu0 0
      %324 = vmatpush1.bf16.xpose.msra.mxu0 0
      %325 = vmatprep.subr.bf16.mxu0 0
      %326 = vmatpush1.bf16.xpose.msra.mxu0 0
      %327 = vmatprep.subr.bf16.mxu0 0
      %328 = vmatpush1.bf16.xpose.msra.mxu0 0
      %329 = vmatprep.subr.bf16.mxu0 0
      %330 = vmatpush1.bf16.xpose.msra.mxu0 0
      %331 = vmatprep.subr.bf16.mxu0 0
      %332 = vmatpush1.bf16.xpose.msra.mxu0 0
      %333 = vmatprep.subr.bf16.mxu0 0
      %334 = vmatpush1.bf16.xpose.msra.mxu0 0
      %335 = vmatprep.subr.bf16.mxu0 0
      %336 = vmatpush1.bf16.xpose.msra.mxu0 %v319
      %337 = vmatprep.subr.bf16.mxu0 0
      %338 = vmatpush2.bf16.xpose.msra.mxu0 0
      %339 = vmatprep.subr.bf16.mxu0 0
      %340 = vmatpush2.bf16.xpose.msra.mxu0 0
      %341 = vmatprep.subr.bf16.mxu0 0
      %342 = vmatpush2.bf16.xpose.msra.mxu0 0
      %343 = vmatprep.subr.bf16.mxu0 0
      %344 = vmatpush2.bf16.xpose.msra.mxu0 0
      %345 = vmatprep.subr.bf16.mxu0 0
      %346 = vmatpush2.bf16.xpose.msra.mxu0 0
      %347 = vmatprep.subr.bf16.mxu0 0
      %348 = vmatpush2.bf16.xpose.msra.mxu0 0
      %349 = vmatprep.subr.bf16.mxu0 0
      %350 = vmatpush2.bf16.xpose.msra.mxu0 0
      %351 = vmatprep.subr.bf16.mxu0 0
      %352 = vmatpush2.bf16.xpose.msra.mxu0 0
      %353 = vmatprep.mubr.bf16.mxu0 0
      %354 = vmatmul.mubr.bf16.gmra.mxu0 %v316
      %v355 = vpop.f32.mrf.mxu0
      %v356 = vadd.f32 0.0, %v355
      %v357 = vpop.f32.mrf.mxu0
      %v358 = vpop.f32.mrf.mxu0
      %v359 = vpop.f32.mrf.mxu0
      %360 = vdwg.mxu0
      %v362 = vsel %vm222, %v213, 0
      %v365 = vsel %vm222, %v221, 0
      %367 = vmatprep.subr.bf16.mxu0 0
      %368 = vmatpush1.bf16.xpose.msra.mxu0 0
      %369 = vmatprep.subr.bf16.mxu0 0
      %370 = vmatpush1.bf16.xpose.msra.mxu0 0
      %371 = vmatprep.subr.bf16.mxu0 0
      %372 = vmatpush1.bf16.xpose.msra.mxu0 0
      %373 = vmatprep.subr.bf16.mxu0 0
      %374 = vmatpush1.bf16.xpose.msra.mxu0 0
      %375 = vmatprep.subr.bf16.mxu0 0
      %376 = vmatpush1.bf16.xpose.msra.mxu0 0
      %377 = vmatprep.subr.bf16.mxu0 0
      %378 = vmatpush1.bf16.xpose.msra.mxu0 0
      %379 = vmatprep.subr.bf16.mxu0 0
      %380 = vmatpush1.bf16.xpose.msra.mxu0 0
      %381 = vmatprep.subr.bf16.mxu0 0
      %382 = vmatpush1.bf16.xpose.msra.mxu0 %v365
      %383 = vmatprep.subr.bf16.mxu0 0
      %384 = vmatpush2.bf16.xpose.msra.mxu0 0
      %385 = vmatprep.subr.bf16.mxu0 0
      %386 = vmatpush2.bf16.xpose.msra.mxu0 0
      %387 = vmatprep.subr.bf16.mxu0 0
      %388 = vmatpush2.bf16.xpose.msra.mxu0 0
      %389 = vmatprep.subr.bf16.mxu0 0
      %390 = vmatpush2.bf16.xpose.msra.mxu0 0
      %391 = vmatprep.subr.bf16.mxu0 0
      %392 = vmatpush2.bf16.xpose.msra.mxu0 0
      %393 = vmatprep.subr.bf16.mxu0 0
      %394 = vmatpush2.bf16.xpose.msra.mxu0 0
      %395 = vmatprep.subr.bf16.mxu0 0
      %396 = vmatpush2.bf16.xpose.msra.mxu0 0
      %397 = vmatprep.subr.bf16.mxu0 0
      %398 = vmatpush2.bf16.xpose.msra.mxu0 0
      %399 = vmatprep.mubr.bf16.mxu0 0
      %400 = vmatmul.mubr.bf16.gmra.mxu0 %v362
      %v401 = vpop.f32.mrf.mxu0
      %v402 = vadd.f32 0.0, %v401
      %v403 = vpop.f32.mrf.mxu0
      %v404 = vpop.f32.mrf.mxu0
      %v405 = vpop.f32.mrf.mxu0
      %406 = vdwg.mxu0
      %v407 = vld [vmem:[#allocation2] sm:$0xff]
      %v408 = vld [vmem:[#allocation2 + $0x8] sm:$0xff]
      %v409 = vld [vmem:[#allocation2 + $0x10] sm:$0xff]
      %v410 = vld [vmem:[#allocation2 + $0x18] sm:$0xff]
      %v411 = vsel %vm222, %v264, -inf
      %412 = vmax.xlane.f32.xlu0 %v411
      %v413 = vpop.xlane.xlu0 %412
      %v414 = vsel %vm222, %v310, -inf
      %415 = vmax.xlane.f32.xlu0 %v414
      %v416 = vpop.xlane.xlu0 %415
      %v417 = vsel %vm222, %v356, -inf
      %418 = vmax.xlane.f32.xlu0 %v417
      %v419 = vpop.xlane.xlu0 %418
      %v420 = vsel %vm222, %v402, -inf
      %421 = vmax.xlane.f32.xlu0 %v420
      %v422 = vpop.xlane.xlu0 %421
      %v423 = vmax.f32 %v407, %v413
      %v424 = vmax.f32 %v408, %v416
      %v425 = vmax.f32 %v409, %v419
      %v426 = vmax.f32 %v410, %v422
      %vm427 = vcmask 7168
      %428 = vst.msk [vmem:[#allocation2] sm:$0xff] %vm427, %v423
      %429 = vst.msk [vmem:[#allocation2 + $0x8] sm:$0xff] %vm427, %v424
      %430 = vst.msk [vmem:[#allocation2 + $0x10] sm:$0xff] %vm427, %v425
      %431 = vst.msk [vmem:[#allocation2 + $0x18] sm:$0xff] %vm427, %v426
      %v432 = vld [vmem:[#allocation3] sm:$0xff]
      %v433 = vld [vmem:[#allocation3 + $0x8] sm:$0xff]
      %v434 = vld [vmem:[#allocation3 + $0x10] sm:$0xff]
      %v435 = vld [vmem:[#allocation3 + $0x18] sm:$0xff]
      %v436 = vsel %vm222, %v264, 0.0
      %437 = vadd.xlane.f32.xlu0 %v436
      %v438 = vpop.xlane.xlu0 %437
      %v439 = vsel %vm222, %v310, 0.0
      %440 = vadd.xlane.f32.xlu0 %v439
      %v441 = vpop.xlane.xlu0 %440
      %v442 = vsel %vm222, %v356, 0.0
      %443 = vadd.xlane.f32.xlu0 %v442
      %v444 = vpop.xlane.xlu0 %443
      %v445 = vsel %vm222, %v402, 0.0
      %446 = vadd.xlane.f32.xlu0 %v445
      %v447 = vpop.xlane.xlu0 %446
      %v448 = vadd.f32 %v432, %v438
      %v449 = vadd.f32 %v433, %v441
      %v450 = vadd.f32 %v434, %v444
      %v451 = vadd.f32 %v435, %v447
      %452 = vst.msk [vmem:[#allocation3] sm:$0xff] %vm427, %v448
      %453 = vst.msk [vmem:[#allocation3 + $0x8] sm:$0xff] %vm427, %v449
      %454 = vst.msk [vmem:[#allocation3 + $0x10] sm:$0xff] %vm427, %v450
      %455 = vst.msk [vmem:[#allocation3 + $0x18] sm:$0xff] %vm427, %v451
      // Predicated region
      $region33: #{_lambda_.38} parent=27 // pred_check
        %p456 = pneg %p193
      $region34: #{_lambda_.38} parent=27 // pred_check_branch
        %458 = sbr.rel (%p456) target = $region36
      $region35: #{_lambda_.38} parent=27 // pred_region
        %v459 = vld [vmem:[#allocation2] sm:$0xff]
        %v460 = vld [vmem:[#allocation2 + $0x8] sm:$0xff]
        %v461 = vld [vmem:[#allocation2 + $0x10] sm:$0xff]
        %v462 = vld [vmem:[#allocation2 + $0x18] sm:$0xff]
        %v463 = vld [vmem:[#allocation3] sm:$0xff]
        %v464 = vld [vmem:[#allocation3 + $0x8] sm:$0xff]
        %v465 = vld [vmem:[#allocation3 + $0x10] sm:$0xff]
        %v466 = vld [vmem:[#allocation3 + $0x18] sm:$0xff]
        %v467 = vmul.f32 %v463, 0.125
        %v468 = vmul.f32 %v464, 0.125
        %v469 = vmul.f32 %v465, 0.125
        %v470 = vmul.f32 %v466, 0.125
        %v471 = vsub.f32 %v459, %v467
        %v472 = vsub.f32 %v460, %v468
        %v473 = vsub.f32 %v461, %v469
        %v474 = vsub.f32 %v462, %v470
        %475 = vst.msk [vmem:[%s190] sm:$0xff] %vm427, %v471
        %476 = vst.msk [vmem:[%s190 + $0x8] sm:$0xff] %vm427, %v472
        %477 = vst.msk [vmem:[%s190 + $0x10] sm:$0xff] %vm427, %v473
        %478 = vst.msk [vmem:[%s190 + $0x18] sm:$0xff] %vm427, %v474
      $region36: #{_lambda_.38} parent=27 // pred_fallthru
        _
      %s479 = smul.u32 4, %s17
      %p480 = scmp.lt.s32.totalorder %s479, 7
      %s481 = scalar_select %p480, %s479, 7
      %s482 = smul.addr %s481, 8
      %s483 = scalar_lea.vmem %s2, %s482
      // Predicated region
      $region37: #{_lambda_.38} parent=27 // pred_check
        %p484 = pneg %p97
      $region38: #{_lambda_.38} parent=27 // pred_check_branch
        %486 = sbr.rel (%p484) target = $region40
      $region39: #{_lambda_.38} parent=27 // pred_region
        %s487 = smul.u32 4, %s17
      $region40: #{_lambda_.38} parent=27 // pred_fallthru
        _
    $region28: #{_lambda_.38} parent=5 // pred_fallthru
      _
    %p488 = scmp.le.s32.totalorder 2, %s8
    // Predicated region
    $region41: #{_lambda_.38} parent=5 // pred_check
      %p489 = pneg %p488
    $region42: #{_lambda_.38} parent=5 // pred_check_branch
      %491 = sbr.rel (%p489) target = $region44
    $region43: #{_lambda_.38} parent=5 // pred_region
      %s492 = ssub.s32 %s8, 2
      // Predicated region
      $region45: #{_lambda_.38} parent=43 // pred_check
        %p493 = pneg %p103
      $region46: #{_lambda_.38} parent=43 // pred_check_branch
        %495 = sbr.rel (%p493) target = $region48
      $region47: #{_lambda_.38} parent=43 // pred_region
        %s496 = smul.u32 4, %s19
        %p497 = scmp.lt.s32.totalorder %s496, 7
        %s498 = scalar_select %p497, %s496, 7
        %s499 = smul.addr %s498, 8
        %s500 = scalar_lea.vmem %s2, %s499
      $region48: #{_lambda_.38} parent=43 // pred_fallthru
        _
    $region44: #{_lambda_.38} parent=5 // pred_fallthru
      _
  $region6: #{_lambda_.38} parent=0 // loop_footer
    %s12 = sadd.s32 1, %s8
  $region7: #{_lambda_.38} parent=0 // loop_footer_branch
    %7 = sbr.rel target = $region3
  $region8: #{_lambda_.38} parent=0 // loop_exit
    _

// kernel: _lambda_.39
$region0: #{_lambda_.39}
  #allocation0 [shape = 'u32[]', space=smem, size = 0x4, offset = 0x4, fixed_abs, tag = 'smem constant byte address 0x4 - core index']
  #allocation1 [shape = 'u32[144,128]{1,0:T(1,128)}', space=vmem, size = 0x12000, scoped, tag = 'internal scratch']
  #allocation2 [shape = 'f32[4,8,1]{2,1,0:T(8,128)}', space=vmem, size = 0x4000, scoped, tag = 'scratch operand']
  #allocation3 [shape = 'f32[4,8,1]{2,1,0:T(8,128)}', space=vmem, size = 0x4000, scoped, tag = 'scratch operand']
  #allocation4 [shape = 'f32[4,8,8]{2,1,0:T(8,128)}', space=vmem, size = 0x4000, scoped, tag = 'scratch operand']
  %s0 = inlined_call_operand.vmem [shape: f32[8,8,8], index: 0, kind: input, shape index: {}]
  %s1 = inlined_call_operand.vmem [shape: f32[8,8,8], index: 1, kind: input, shape index: {}]
  %s2 = inlined_call_operand.vmem [shape: f32[8,8,8], index: 2, kind: input, shape index: {}]
  %s3 = inlined_call_operand.vmem [shape: f32[8,8,8], index: 3, kind: output, shape index: {}]
  %s4 = sld [smem:[#allocation0]]
  $region53: #{_lambda_.39} parent=0
    _
  %s6 = ssub.s32 1, %s4
  %s7 = scalar_select 0, %s6, %s4
  loop: start=0, step=1, limit=4
  $region2: #{_lambda_.39} parent=0 // loop_pre_header
    _
  $region3: #{_lambda_.39} parent=0 // loop_header
    %s9 = sphi 0, %s13
    %p10 = scmp.ge.s32.totalorder %s9, 4
    %s16 = sphi 0, %s28
    %s17 = sphi 0, %s24
    %s18 = sphi 0, %s16
    %s19 = sphi 0, %s17
    %s20 = sphi 0, %s18
    %s21 = sphi 0, %s19
    %s31 = sphi 0, %s33
    %s34 = sphi 0, %s31
    %s35 = sphi 0, %s34
    %s51 = sphi 0, %s35
    %s59 = sphi 0, %s61
    %s62 = sphi 0, %s59
    %s63 = sphi 0, %s62
    %s79 = sphi 0, %s63
    %s87 = sphi 0, %s89
    %s90 = sphi 0, %s87
    %s91 = sphi 0, %s90
    %s107 = sphi 0, %s91
    %s113 = sphi 0, %s115
    %s116 = sphi 0, %s113
    %s117 = sphi 0, %s116
    %s133 = sphi 0, %s117
  $region4: #{_lambda_.39} parent=0 // loop_header_branch
    %12 = sbr.rel (%p10) target = $region8
  $region5: #{_lambda_.39} parent=0 // loop_body
    %s14 = ssub.s32 %s9, 1
    %s15 = ssub.s32 %s9, 2
    %s22 = sadd.s32 1, %s17
    %p23 = scmp.ge.s32.totalorder %s22, 1
    %s24 = scalar_select %p23, 0, %s22
    %s25 = sadd.s32 1, %s16
    %s26 = scalar_select %p23, %s25, %s16
    %p27 = scmp.ge.s32.totalorder %s26, 2
    %s28 = scalar_select %p27, 0, %s26
    %s29 = ssub.s32 %s16, %s28
    %p30 = scmp.eq.s32.totalorder %s29, 0
    %s32 = sadd.s32 %s31, 1
    %s33 = scalar_select %p30, %s31, %s32
    %p36 = pneg %p30
    %p37 = scmp.eq.s32.totalorder %s9, 1
    %p38 = por %p36, %p37
    %p39 = scmp.ne.s32.totalorder %s31, %s34
    %p40 = scmp.eq.s32.totalorder %s9, 0
    %p41 = por %p39, %p40
    %p42 = scmp.ne.s32.totalorder %s31, %s34
    %p43 = scmp.eq.s32.totalorder %s14, 1
    %p44 = por %p42, %p43
    %p45 = scmp.ne.s32.totalorder %s34, %s35
    %p46 = scmp.eq.s32.totalorder %s14, 0
    %p47 = por %p45, %p46
    %p48 = scmp.ne.s32.totalorder %s34, %s35
    %p49 = scmp.eq.s32.totalorder %s15, 1
    %p50 = por %p48, %p49
    %p52 = scmp.ne.s32.totalorder %s35, %s51
    %p53 = scmp.eq.s32.totalorder %s15, 0
    %p54 = por %p52, %p53
    %s55 = ssub.s32 %s16, %s28
    %s56 = ssub.s32 %s17, %s24
    %s57 = sor.u32 %s55, %s56
    %p58 = scmp.eq.s32.totalorder %s57, 0
    %s60 = sadd.s32 %s59, 1
    %s61 = scalar_select %p58, %s59, %s60
    %p64 = pneg %p58
    %p65 = scmp.eq.s32.totalorder %s9, 1
    %p66 = por %p64, %p65
    %p67 = scmp.ne.s32.totalorder %s59, %s62
    %p68 = scmp.eq.s32.totalorder %s9, 0
    %p69 = por %p67, %p68
    %p70 = scmp.ne.s32.totalorder %s59, %s62
    %p71 = scmp.eq.s32.totalorder %s14, 1
    %p72 = por %p70, %p71
    %p73 = scmp.ne.s32.totalorder %s62, %s63
    %p74 = scmp.eq.s32.totalorder %s14, 0
    %p75 = por %p73, %p74
    %p76 = scmp.ne.s32.totalorder %s62, %s63
    %p77 = scmp.eq.s32.totalorder %s15, 1
    %p78 = por %p76, %p77
    %p80 = scmp.ne.s32.totalorder %s63, %s79
    %p81 = scmp.eq.s32.totalorder %s15, 0
    %p82 = por %p80, %p81
    %s83 = ssub.s32 %s16, %s28
    %s84 = ssub.s32 %s17, %s24
    %s85 = sor.u32 %s83, %s84
    %p86 = scmp.eq.s32.totalorder %s85, 0
    %s88 = sadd.s32 %s87, 1
    %s89 = scalar_select %p86, %s87, %s88
    %p92 = pneg %p86
    %p93 = scmp.eq.s32.totalorder %s9, 1
    %p94 = por %p92, %p93
    %p95 = scmp.ne.s32.totalorder %s87, %s90
    %p96 = scmp.eq.s32.totalorder %s9, 0
    %p97 = por %p95, %p96
    %p98 = scmp.ne.s32.totalorder %s87, %s90
    %p99 = scmp.eq.s32.totalorder %s14, 1
    %p100 = por %p98, %p99
    %p101 = scmp.ne.s32.totalorder %s90, %s91
    %p102 = scmp.eq.s32.totalorder %s14, 0
    %p103 = por %p101, %p102
    %p104 = scmp.ne.s32.totalorder %s90, %s91
    %p105 = scmp.eq.s32.totalorder %s15, 1
    %p106 = por %p104, %p105
    %p108 = scmp.ne.s32.totalorder %s91, %s107
    %p109 = scmp.eq.s32.totalorder %s15, 0
    %p110 = por %p108, %p109
    %s111 = ssub.s32 %s16, %s28
    %p112 = scmp.eq.s32.totalorder %s111, 0
    %s114 = sadd.s32 %s113, 1
    %s115 = scalar_select %p112, %s113, %s114
    %p118 = pneg %p112
    %p119 = scmp.eq.s32.totalorder %s9, 1
    %p120 = por %p118, %p119
    %p121 = scmp.ne.s32.totalorder %s113, %s116
    %p122 = scmp.eq.s32.totalorder %s9, 0
    %p123 = por %p121, %p122
    %p124 = scmp.ne.s32.totalorder %s113, %s116
    %p125 = scmp.eq.s32.totalorder %s14, 1
    %p126 = por %p124, %p125
    %p127 = scmp.ne.s32.totalorder %s116, %s117
    %p128 = scmp.eq.s32.totalorder %s14, 0
    %p129 = por %p127, %p128
    %p130 = scmp.ne.s32.totalorder %s116, %s117
    %p131 = scmp.eq.s32.totalorder %s15, 1
    %p132 = por %p130, %p131
    %p134 = scmp.ne.s32.totalorder %s117, %s133
    %p135 = scmp.eq.s32.totalorder %s15, 0
    %p136 = por %p134, %p135
    %p137 = scmp.le.s32.totalorder 1, %s9
    %p138 = scmp.lt.s32.totalorder %s9, 3
    %p139 = pnand %p137, %p138
    %p140 = pneg %p139
    // Predicated region
    $region9: #{_lambda_.39} parent=5 // pred_check
      _
    $region10: #{_lambda_.39} parent=5 // pred_check_branch
      %142 = sbr.rel (%p139) target = $region12
    $region11: #{_lambda_.39} parent=5 // pred_region
      %s143 = ssub.s32 %s9, 1
    $region12: #{_lambda_.39} parent=5 // pred_fallthru
      _
    %p144 = scmp.lt.s32.totalorder %s9, 2
    // Predicated region
    $region13: #{_lambda_.39} parent=5 // pred_check
      %p145 = pneg %p144
    $region14: #{_lambda_.39} parent=5 // pred_check_branch
      %147 = sbr.rel (%p145) target = $region16
    $region15: #{_lambda_.39} parent=5 // pred_region
      // Predicated region
      $region17: #{_lambda_.39} parent=15 // pred_check
        %p148 = pneg %p41
      $region18: #{_lambda_.39} parent=15 // pred_check_branch
        %150 = sbr.rel (%p148) target = $region20
      $region19: #{_lambda_.39} parent=15 // pred_region
        %s151 = smul.u32 4, %s16
        %p152 = scmp.lt.s32.totalorder %s151, 7
        %s153 = scalar_select %p152, %s151, 7
        %s154 = smul.addr %s153, 8
        %s155 = scalar_lea.vmem %s0, %s154
        %s156 = smul.u32 4, %s16
      $region20: #{_lambda_.39} parent=15 // pred_fallthru
        _
      // Predicated region
      $region21: #{_lambda_.39} parent=15 // pred_check
        %p157 = pneg %p69
      $region22: #{_lambda_.39} parent=15 // pred_check_branch
        %159 = sbr.rel (%p157) target = $region24
      $region23: #{_lambda_.39} parent=15 // pred_region
        %s160 = smul.u32 4, %s16
        %p161 = scmp.lt.s32.totalorder %s160, 7
        %s162 = scalar_select %p161, %s160, 7
        %p163 = scmp.lt.s32.totalorder %s17, 0
        %s164 = scalar_select %p163, %s17, 0
        %s165 = sadd.s32 %s164, %s162
        %s166 = smul.addr %s165, 8
        %s167 = scalar_lea.vmem %s1, %s166
        %s168 = smul.u32 4, %s16
      $region24: #{_lambda_.39} parent=15 // pred_fallthru
        _
      // Predicated region
      $region25: #{_lambda_.39} parent=15 // pred_check
        %p169 = pneg %p97
      $region26: #{_lambda_.39} parent=15 // pred_check_branch
        %171 = sbr.rel (%p169) target = $region28
      $region27: #{_lambda_.39} parent=15 // pred_region
        %s172 = smul.u32 4, %s16
        %p173 = scmp.lt.s32.totalorder %s172, 7
        %s174 = scalar_select %p173, %s172, 7
        %p175 = scmp.lt.s32.totalorder %s17, 0
        %s176 = scalar_select %p175, %s17, 0
        %s177 = sadd.s32 %s176, %s174
        %s178 = smul.addr %s177, 8
        %s179 = scalar_lea.vmem %s2, %s178
        %s180 = smul.u32 4, %s16
      $region28: #{_lambda_.39} parent=15 // pred_fallthru
        _
    $region16: #{_lambda_.39} parent=5 // pred_fallthru
      _
    %p181 = scmp.le.s32.totalorder 1, %s9
    %p182 = scmp.lt.s32.totalorder %s9, 3
    %p183 = pnand %p181, %p182
    %p184 = pneg %p183
    // Predicated region
    $region29: #{_lambda_.39} parent=5 // pred_check
      _
    $region30: #{_lambda_.39} parent=5 // pred_check_branch
      %186 = sbr.rel (%p183) target = $region32
    $region31: #{_lambda_.39} parent=5 // pred_region
      %s187 = ssub.s32 %s9, 1
      %s188 = smul.u32 4, %s18
      %p189 = scmp.lt.s32.totalorder %s188, 7
      %s190 = scalar_select %p189, %s188, 7
      %s191 = smul.addr %s190, 8
      %s192 = scalar_lea.vmem %s0, %s191
      %p193 = pneg %p47
      %p194 = pneg %p44
      %s195 = smul.u32 4, %s18
      %p196 = scmp.lt.s32.totalorder %s195, 7
      %s197 = scalar_select %p196, %s195, 7
      %p198 = scmp.lt.s32.totalorder %s19, 0
      %s199 = scalar_select %p198, %s19, 0
      %s200 = sadd.s32 %s199, %s197
      %s201 = smul.addr %s200, 8
      %s202 = scalar_lea.vmem %s1, %s201
      %p203 = pneg %p75
      %p204 = pneg %p72
      %s205 = smul.u32 4, %s18
      %p206 = scmp.lt.s32.totalorder %s205, 7
      %s207 = scalar_select %p206, %s205, 7
      %p208 = scmp.lt.s32.totalorder %s19, 0
      %s209 = scalar_select %p208, %s19, 0
      %s210 = sadd.s32 %s209, %s207
      %s211 = smul.addr %s210, 8
      %s212 = scalar_lea.vmem %s2, %s211
      %p213 = pneg %p103
      %p214 = pneg %p100
      %p215 = pneg %p129
      %p216 = pneg %p126
      %s217 = smul.u32 4, %s18
      %p218 = scmp.lt.s32.totalorder %s217, 7
      %s219 = scalar_select %p218, %s217, 7
      %s220 = smul.addr %s219, 8
      %s221 = scalar_lea.vmem %s3, %s220
      %s222 = smul.u32 4, %s18
      %p223 = scmp.lt.s32.totalorder %s222, 7
      %s224 = scalar_select %p223, %s222, 7
      %s225 = smul.addr %s224, 8
      %s226 = scalar_lea.vmem %s0, %s225
      %s227 = smul.u32 4, %s18
      %s228 = smul.u32 4, %s18
      %p229 = scmp.lt.s32.totalorder %s228, 7
      %s230 = scalar_select %p229, %s228, 7
      %p231 = scmp.lt.s32.totalorder %s19, 0
      %s232 = scalar_select %p231, %s19, 0
      %s233 = sadd.s32 %s232, %s230
      %s234 = smul.addr %s233, 8
      %s235 = scalar_lea.vmem %s1, %s234
      %s236 = smul.u32 4, %s18
      %s237 = smul.u32 4, %s18
      %p238 = scmp.lt.s32.totalorder %s237, 7
      %s239 = scalar_select %p238, %s237, 7
      %p240 = scmp.lt.s32.totalorder %s19, 0
      %s241 = scalar_select %p240, %s19, 0
      %s242 = sadd.s32 %s241, %s239
      %s243 = smul.addr %s242, 8
      %s244 = scalar_lea.vmem %s2, %s243
      %s245 = smul.u32 4, %s18
      %s246 = smul.u32 4, %s18
      %p247 = scmp.lt.s32.totalorder %s246, 7
      %s248 = scalar_select %p247, %s246, 7
      %s249 = smul.addr %s248, 8
      %s250 = scalar_lea.vmem %s3, %s249
      %s251 = smul.u32 4, %s18
      %p253 = scmp.eq.s32.totalorder %s19, 0
      // Predicated region
      $region33: #{_lambda_.39} parent=31 // pred_check
        %p254 = pneg %p253
      $region34: #{_lambda_.39} parent=31 // pred_check_branch
        %256 = sbr.rel (%p254) target = $region36
      $region35: #{_lambda_.39} parent=31 // pred_region
        %vm257 = vcmask 7168
        %258 = vst.msk [vmem:[#allocation2] sm:$0xff] %vm257, -inf
        %259 = vst.msk [vmem:[#allocation2 + $0x8] sm:$0xff] %vm257, -inf
        %260 = vst.msk [vmem:[#allocation2 + $0x10] sm:$0xff] %vm257, -inf
        %261 = vst.msk [vmem:[#allocation2 + $0x18] sm:$0xff] %vm257, -inf
        %262 = vst.msk [vmem:[#allocation3] sm:$0xff] %vm257, 0.0
        %263 = vst.msk [vmem:[#allocation3 + $0x8] sm:$0xff] %vm257, 0.0
        %264 = vst.msk [vmem:[#allocation3 + $0x10] sm:$0xff] %vm257, 0.0
        %265 = vst.msk [vmem:[#allocation3 + $0x18] sm:$0xff] %vm257, 0.0
        %vm266 = vcmask 64512
        %267 = vst.msk [vmem:[#allocation4] sm:$0xff] %vm266, 0.0
        %268 = vst.msk [vmem:[#allocation4 + $0x8] sm:$0xff] %vm266, 0.0
        %269 = vst.msk [vmem:[#allocation4 + $0x10] sm:$0xff] %vm266, 0.0
        %270 = vst.msk [vmem:[#allocation4 + $0x18] sm:$0xff] %vm266, 0.0
      $region36: #{_lambda_.39} parent=31 // pred_fallthru
        _
      %v271 = vld [vmem:[%s226] sm:$0xff]
      %v272 = vld [vmem:[%s226 + $0x8] sm:$0xff]
      %v273 = vld [vmem:[%s226 + $0x10] sm:$0xff]
      %v274 = vld [vmem:[%s226 + $0x18] sm:$0xff]
      %v275 = vpack.c.bf16 %v271, %v271
      %v276 = vpack.c.bf16 %v272, %v272
      %v277 = vpack.c.bf16 %v273, %v273
      %v278 = vpack.c.bf16 %v274, %v274
      %v279 = vld [vmem:[%s235] sm:$0xff]
      %v280 = vld [vmem:[%s235 + $0x8] sm:$0xff]
      %v281 = vld [vmem:[%s235 + $0x10] sm:$0xff]
      %v282 = vld [vmem:[%s235 + $0x18] sm:$0xff]
      %v283 = vpack.c.bf16 %v279, %v279
      %v284 = vpack.c.bf16 %v280, %v280
      %v285 = vpack.c.bf16 %v281, %v281
      %v286 = vpack.c.bf16 %v282, %v282
      %v287 = vld [vmem:[%s244] sm:$0xff]
      %v288 = vld [vmem:[%s244 + $0x8] sm:$0xff]
      %v289 = vld [vmem:[%s244 + $0x10] sm:$0xff]
      %v290 = vld [vmem:[%s244 + $0x18] sm:$0xff]
      %v291 = vpack.c.bf16 %v287, %v287
      %v292 = vpack.c.bf16 %v288, %v288
      %v293 = vpack.c.bf16 %v289, %v289
      %v294 = vpack.c.bf16 %v290, %v290
      %vm295 = vcmask 64512
      %v297 = vsel %vm295, %v275, 0
      %v300 = vsel %vm295, %v283, 0
      %302 = vmatprep.subr.bf16.mxu0 0
      %303 = vmatpush1.bf16.xpose.msra.mxu0 0
      %304 = vmatprep.subr.bf16.mxu0 0
      %305 = vmatpush1.bf16.xpose.msra.mxu0 0
      %306 = vmatprep.subr.bf16.mxu0 0
      %307 = vmatpush1.bf16.xpose.msra.mxu0 0
      %308 = vmatprep.subr.bf16.mxu0 0
      %309 = vmatpush1.bf16.xpose.msra.mxu0 0
      %310 = vmatprep.subr.bf16.mxu0 0
      %311 = vmatpush1.bf16.xpose.msra.mxu0 0
      %312 = vmatprep.subr.bf16.mxu0 0
      %313 = vmatpush1.bf16.xpose.msra.mxu0 0
      %314 = vmatprep.subr.bf16.mxu0 0
      %315 = vmatpush1.bf16.xpose.msra.mxu0 0
      %316 = vmatprep.subr.bf16.mxu0 0
      %317 = vmatpush1.bf16.xpose.msra.mxu0 %v300
      %318 = vmatprep.subr.bf16.mxu0 0
      %319 = vmatpush2.bf16.xpose.msra.mxu0 0
      %320 = vmatprep.subr.bf16.mxu0 0
      %321 = vmatpush2.bf16.xpose.msra.mxu0 0
      %322 = vmatprep.subr.bf16.mxu0 0
      %323 = vmatpush2.bf16.xpose.msra.mxu0 0
      %324 = vmatprep.subr.bf16.mxu0 0
      %325 = vmatpush2.bf16.xpose.msra.mxu0 0
      %326 = vmatprep.subr.bf16.mxu0 0
      %327 = vmatpush2.bf16.xpose.msra.mxu0 0
      %328 = vmatprep.subr.bf16.mxu0 0
      %329 = vmatpush2.bf16.xpose.msra.mxu0 0
      %330 = vmatprep.subr.bf16.mxu0 0
      %331 = vmatpush2.bf16.xpose.msra.mxu0 0
      %332 = vmatprep.subr.bf16.mxu0 0
      %333 = vmatpush2.bf16.xpose.msra.mxu0 0
      %334 = vmatprep.mubr.bf16.mxu0 0
      %335 = vmatmul.mubr.bf16.gmra.mxu0 %v297
      %v336 = vpop.f32.mrf.mxu0
      %v337 = vadd.f32 0.0, %v336
      %v338 = vpop.f32.mrf.mxu0
      %v339 = vpop.f32.mrf.mxu0
      %v340 = vpop.f32.mrf.mxu0
      %341 = vdwg.mxu0
      %v343 = vsel %vm295, %v276, 0
      %v346 = vsel %vm295, %v284, 0
      %348 = vmatprep.subr.bf16.mxu0 0
      %349 = vmatpush1.bf16.xpose.msra.mxu0 0
      %350 = vmatprep.subr.bf16.mxu0 0
      %351 = vmatpush1.bf16.xpose.msra.mxu0 0
      %352 = vmatprep.subr.bf16.mxu0 0
      %353 = vmatpush1.bf16.xpose.msra.mxu0 0
      %354 = vmatprep.subr.bf16.mxu0 0
      %355 = vmatpush1.bf16.xpose.msra.mxu0 0
      %356 = vmatprep.subr.bf16.mxu0 0
      %357 = vmatpush1.bf16.xpose.msra.mxu0 0
      %358 = vmatprep.subr.bf16.mxu0 0
      %359 = vmatpush1.bf16.xpose.msra.mxu0 0
      %360 = vmatprep.subr.bf16.mxu0 0
      %361 = vmatpush1.bf16.xpose.msra.mxu0 0
      %362 = vmatprep.subr.bf16.mxu0 0
      %363 = vmatpush1.bf16.xpose.msra.mxu0 %v346
      %364 = vmatprep.subr.bf16.mxu0 0
      %365 = vmatpush2.bf16.xpose.msra.mxu0 0
      %366 = vmatprep.subr.bf16.mxu0 0
      %367 = vmatpush2.bf16.xpose.msra.mxu0 0
      %368 = vmatprep.subr.bf16.mxu0 0
      %369 = vmatpush2.bf16.xpose.msra.mxu0 0
      %370 = vmatprep.subr.bf16.mxu0 0
      %371 = vmatpush2.bf16.xpose.msra.mxu0 0
      %372 = vmatprep.subr.bf16.mxu0 0
      %373 = vmatpush2.bf16.xpose.msra.mxu0 0
      %374 = vmatprep.subr.bf16.mxu0 0
      %375 = vmatpush2.bf16.xpose.msra.mxu0 0
      %376 = vmatprep.subr.bf16.mxu0 0
      %377 = vmatpush2.bf16.xpose.msra.mxu0 0
      %378 = vmatprep.subr.bf16.mxu0 0
      %379 = vmatpush2.bf16.xpose.msra.mxu0 0
      %380 = vmatprep.mubr.bf16.mxu0 0
      %381 = vmatmul.mubr.bf16.gmra.mxu0 %v343
      %v382 = vpop.f32.mrf.mxu0
      %v383 = vadd.f32 0.0, %v382
      %v384 = vpop.f32.mrf.mxu0
      %v385 = vpop.f32.mrf.mxu0
      %v386 = vpop.f32.mrf.mxu0
      %387 = vdwg.mxu0
      %v389 = vsel %vm295, %v277, 0
      %v392 = vsel %vm295, %v285, 0
      %394 = vmatprep.subr.bf16.mxu0 0
      %395 = vmatpush1.bf16.xpose.msra.mxu0 0
      %396 = vmatprep.subr.bf16.mxu0 0
      %397 = vmatpush1.bf16.xpose.msra.mxu0 0
      %398 = vmatprep.subr.bf16.mxu0 0
      %399 = vmatpush1.bf16.xpose.msra.mxu0 0
      %400 = vmatprep.subr.bf16.mxu0 0
      %401 = vmatpush1.bf16.xpose.msra.mxu0 0
      %402 = vmatprep.subr.bf16.mxu0 0
      %403 = vmatpush1.bf16.xpose.msra.mxu0 0
      %404 = vmatprep.subr.bf16.mxu0 0
      %405 = vmatpush1.bf16.xpose.msra.mxu0 0
      %406 = vmatprep.subr.bf16.mxu0 0
      %407 = vmatpush1.bf16.xpose.msra.mxu0 0
      %408 = vmatprep.subr.bf16.mxu0 0
      %409 = vmatpush1.bf16.xpose.msra.mxu0 %v392
      %410 = vmatprep.subr.bf16.mxu0 0
      %411 = vmatpush2.bf16.xpose.msra.mxu0 0
      %412 = vmatprep.subr.bf16.mxu0 0
      %413 = vmatpush2.bf16.xpose.msra.mxu0 0
      %414 = vmatprep.subr.bf16.mxu0 0
      %415 = vmatpush2.bf16.xpose.msra.mxu0 0
      %416 = vmatprep.subr.bf16.mxu0 0
      %417 = vmatpush2.bf16.xpose.msra.mxu0 0
      %418 = vmatprep.subr.bf16.mxu0 0
      %419 = vmatpush2.bf16.xpose.msra.mxu0 0
      %420 = vmatprep.subr.bf16.mxu0 0
      %421 = vmatpush2.bf16.xpose.msra.mxu0 0
      %422 = vmatprep.subr.bf16.mxu0 0
      %423 = vmatpush2.bf16.xpose.msra.mxu0 0
      %424 = vmatprep.subr.bf16.mxu0 0
      %425 = vmatpush2.bf16.xpose.msra.mxu0 0
      %426 = vmatprep.mubr.bf16.mxu0 0
      %427 = vmatmul.mubr.bf16.gmra.mxu0 %v389
      %v428 = vpop.f32.mrf.mxu0
      %v429 = vadd.f32 0.0, %v428
      %v430 = vpop.f32.mrf.mxu0
      %v431 = vpop.f32.mrf.mxu0
      %v432 = vpop.f32.mrf.mxu0
      %433 = vdwg.mxu0
      %v435 = vsel %vm295, %v278, 0
      %v438 = vsel %vm295, %v286, 0
      %440 = vmatprep.subr.bf16.mxu0 0
      %441 = vmatpush1.bf16.xpose.msra.mxu0 0
      %442 = vmatprep.subr.bf16.mxu0 0
      %443 = vmatpush1.bf16.xpose.msra.mxu0 0
      %444 = vmatprep.subr.bf16.mxu0 0
      %445 = vmatpush1.bf16.xpose.msra.mxu0 0
      %446 = vmatprep.subr.bf16.mxu0 0
      %447 = vmatpush1.bf16.xpose.msra.mxu0 0
      %448 = vmatprep.subr.bf16.mxu0 0
      %449 = vmatpush1.bf16.xpose.msra.mxu0 0
      %450 = vmatprep.subr.bf16.mxu0 0
      %451 = vmatpush1.bf16.xpose.msra.mxu0 0
      %452 = vmatprep.subr.bf16.mxu0 0
      %453 = vmatpush1.bf16.xpose.msra.mxu0 0
      %454 = vmatprep.subr.bf16.mxu0 0
      %455 = vmatpush1.bf16.xpose.msra.mxu0 %v438
      %456 = vmatprep.subr.bf16.mxu0 0
      %457 = vmatpush2.bf16.xpose.msra.mxu0 0
      %458 = vmatprep.subr.bf16.mxu0 0
      %459 = vmatpush2.bf16.xpose.msra.mxu0 0
      %460 = vmatprep.subr.bf16.mxu0 0
      %461 = vmatpush2.bf16.xpose.msra.mxu0 0
      %462 = vmatprep.subr.bf16.mxu0 0
      %463 = vmatpush2.bf16.xpose.msra.mxu0 0
      %464 = vmatprep.subr.bf16.mxu0 0
      %465 = vmatpush2.bf16.xpose.msra.mxu0 0
      %466 = vmatprep.subr.bf16.mxu0 0
      %467 = vmatpush2.bf16.xpose.msra.mxu0 0
      %468 = vmatprep.subr.bf16.mxu0 0
      %469 = vmatpush2.bf16.xpose.msra.mxu0 0
      %470 = vmatprep.subr.bf16.mxu0 0
      %471 = vmatpush2.bf16.xpose.msra.mxu0 0
      %472 = vmatprep.mubr.bf16.mxu0 0
      %473 = vmatmul.mubr.bf16.gmra.mxu0 %v435
      %v474 = vpop.f32.mrf.mxu0
      %v475 = vadd.f32 0.0, %v474
      %v476 = vpop.f32.mrf.mxu0
      %v477 = vpop.f32.mrf.mxu0
      %v478 = vpop.f32.mrf.mxu0
      %479 = vdwg.mxu0
      %v480 = vmul.f32 %v337, 0.35355338
      %v481 = vmul.f32 %v383, 0.35355338
      %v482 = vmul.f32 %v429, 0.35355338
      %v483 = vmul.f32 %v475, 0.35355338
      %v484 = vld [vmem:[#allocation2] sm:$0xff]
      %v485 = vld [vmem:[#allocation2 + $0x8] sm:$0xff]
      %v486 = vld [vmem:[#allocation2 + $0x10] sm:$0xff]
      %v487 = vld [vmem:[#allocation2 + $0x18] sm:$0xff]
      %v488 = vsel %vm295, %v480, -inf
      %489 = vmax.xlane.f32.xlu0 %v488
      %v490 = vpop.xlane.xlu0 %489
      %v491 = vsel %vm295, %v481, -inf
      %492 = vmax.xlane.f32.xlu0 %v491
      %v493 = vpop.xlane.xlu0 %492
      %v494 = vsel %vm295, %v482, -inf
      %495 = vmax.xlane.f32.xlu0 %v494
      %v496 = vpop.xlane.xlu0 %495
      %v497 = vsel %vm295, %v483, -inf
      %498 = vmax.xlane.f32.xlu0 %v497
      %v499 = vpop.xlane.xlu0 %498
      %v500 = vmax.f32 %v484, %v490
      %v501 = vmax.f32 %v485, %v493
      %v502 = vmax.f32 %v486, %v496
      %v503 = vmax.f32 %v487, %v499
      %v504 = vsub.f32 %v484, %v500
      %v505 = vsub.f32 %v485, %v501
      %v506 = vsub.f32 %v486, %v502
      %v507 = vsub.f32 %v487, %v503
      %v508 = vmul.f32 %v504, 1.442695
      %v509 = vpow.pop %v508
      %v510 = vmul.f32 %v505, 1.442695
      %v511 = vpow.pop %v510
      %v512 = vmul.f32 %v506, 1.442695
      %v513 = vpow.pop %v512
      %v514 = vmul.f32 %v507, 1.442695
      %v515 = vpow.pop %v514
      %517 = vset.pattern.permute.xlu0 0
      %518 = vperm.xlu0 %517, %v500
      %v519 = vpop.permute.xlu0 %518
      %522 = vset.pattern.permute.xlu0 0
      %523 = vperm.xlu0 %522, %v501
      %v524 = vpop.permute.xlu0 %523
      %527 = vset.pattern.permute.xlu0 0
      %528 = vperm.xlu0 %527, %v502
      %v529 = vpop.permute.xlu0 %528
      %532 = vset.pattern.permute.xlu0 0
      %533 = vperm.xlu0 %532, %v503
      %v534 = vpop.permute.xlu0 %533
      %v536 = vsub.f32 %v480, %v519
      %v537 = vsub.f32 %v481, %v524
      %v538 = vsub.f32 %v482, %v529
      %v539 = vsub.f32 %v483, %v534
      %v540 = vmul.f32 %v536, 1.442695
      %v541 = vpow.pop %v540
      %v542 = vmul.f32 %v537, 1.442695
      %v543 = vpow.pop %v542
      %v544 = vmul.f32 %v538, 1.442695
      %v545 = vpow.pop %v544
      %v546 = vmul.f32 %v539, 1.442695
      %v547 = vpow.pop %v546
      %v548 = vld [vmem:[#allocation3] sm:$0xff]
      %v549 = vld [vmem:[#allocation3 + $0x8] sm:$0xff]
      %v550 = vld [vmem:[#allocation3 + $0x10] sm:$0xff]
      %v551 = vld [vmem:[#allocation3 + $0x18] sm:$0xff]
      %v552 = vmul.f32 %v509, %v548
      %v553 = vmul.f32 %v511, %v549
      %v554 = vmul.f32 %v513, %v550
      %v555 = vmul.f32 %v515, %v551
      %v556 = vsel %vm295, %v541, 0.0
      %557 = vadd.xlane.f32.xlu0 %v556
      %v558 = vpop.xlane.xlu0 %557
      %v559 = vsel %vm295, %v543, 0.0
      %560 = vadd.xlane.f32.xlu0 %v559
      %v561 = vpop.xlane.xlu0 %560
      %v562 = vsel %vm295, %v545, 0.0
      %563 = vadd.xlane.f32.xlu0 %v562
      %v564 = vpop.xlane.xlu0 %563
      %v565 = vsel %vm295, %v547, 0.0
      %566 = vadd.xlane.f32.xlu0 %v565
      %v567 = vpop.xlane.xlu0 %566
      %v568 = vadd.f32 %v552, %v558
      %v569 = vadd.f32 %v553, %v561
      %v570 = vadd.f32 %v554, %v564
      %v571 = vadd.f32 %v555, %v567
      %vm572 = vcmask 7168
      %573 = vst.msk [vmem:[#allocation3] sm:$0xff] %vm572, %v568
      %574 = vst.msk [vmem:[#allocation3 + $0x8] sm:$0xff] %vm572, %v569
      %575 = vst.msk [vmem:[#allocation3 + $0x10] sm:$0xff] %vm572, %v570
      %576 = vst.msk [vmem:[#allocation3 + $0x18] sm:$0xff] %vm572, %v571
      %v577 = vld [vmem:[#allocation4] sm:$0xff]
      %v578 = vld [vmem:[#allocation4 + $0x8] sm:$0xff]
      %v579 = vld [vmem:[#allocation4 + $0x10] sm:$0xff]
      %v580 = vld [vmem:[#allocation4 + $0x18] sm:$0xff]
      %582 = vset.pattern.permute.xlu0 0
      %583 = vperm.xlu0 %582, %v509
      %v584 = vpop.permute.xlu0 %583
      %587 = vset.pattern.permute.xlu0 0
      %588 = vperm.xlu0 %587, %v511
      %v589 = vpop.permute.xlu0 %588
      %592 = vset.pattern.permute.xlu0 0
      %593 = vperm.xlu0 %592, %v513
      %v594 = vpop.permute.xlu0 %593
      %597 = vset.pattern.permute.xlu0 0
      %598 = vperm.xlu0 %597, %v515
      %v599 = vpop.permute.xlu0 %598
      %v601 = vmul.f32 %v584, %v577
      %v602 = vmul.f32 %v589, %v578
      %v603 = vmul.f32 %v594, %v579
      %v604 = vmul.f32 %v599, %v580
      %v605 = vpack.c.bf16 %v541, %v541
      %v606 = vpack.c.bf16 %v543, %v543
      %v607 = vpack.c.bf16 %v545, %v545
      %v608 = vpack.c.bf16 %v547, %v547
      %v610 = vsel %vm295, %v605, 0
      %vm612 = vcmask 1043456
      %v614 = vsel %vm612, %v291, 0
      %616 = vmatprep.subr.bf16.mxu0 0
      %617 = vmatpush1.bf16.msra.mxu0 0
      %618 = vmatprep.subr.bf16.mxu0 0
      %619 = vmatpush1.bf16.msra.mxu0 0
      %620 = vmatprep.subr.bf16.mxu0 0
      %621 = vmatpush1.bf16.msra.mxu0 0
      %622 = vmatprep.subr.bf16.mxu0 0
      %623 = vmatpush1.bf16.msra.mxu0 0
      %624 = vmatprep.subr.bf16.mxu0 0
      %625 = vmatpush1.bf16.msra.mxu0 0
      %626 = vmatprep.subr.bf16.mxu0 0
      %627 = vmatpush1.bf16.msra.mxu0 0
      %628 = vmatprep.subr.bf16.mxu0 0
      %629 = vmatpush1.bf16.msra.mxu0 0
      %630 = vmatprep.subr.bf16.mxu0 0
      %631 = vmatpush1.bf16.msra.mxu0 %v614
      %632 = vmatprep.subr.bf16.mxu0 0
      %633 = vmatpush2.bf16.msra.mxu0 0
      %634 = vmatprep.subr.bf16.mxu0 0
      %635 = vmatpush2.bf16.msra.mxu0 0
      %636 = vmatprep.subr.bf16.mxu0 0
      %637 = vmatpush2.bf16.msra.mxu0 0
      %638 = vmatprep.subr.bf16.mxu0 0
      %639 = vmatpush2.bf16.msra.mxu0 0
      %640 = vmatprep.subr.bf16.mxu0 0
      %641 = vmatpush2.bf16.msra.mxu0 0
      %642 = vmatprep.subr.bf16.mxu0 0
      %643 = vmatpush2.bf16.msra.mxu0 0
      %644 = vmatprep.subr.bf16.mxu0 0
      %645 = vmatpush2.bf16.msra.mxu0 0
      %646 = vmatprep.subr.bf16.mxu0 0
      %647 = vmatpush2.bf16.msra.mxu0 0
      %648 = vmatprep.mubr.bf16.mxu0 0
      %649 = vmatmul.mubr.bf16.gmra.mxu0 %v610
      %v650 = vpop.f32.mrf.mxu0
      %v651 = vadd.f32 0.0, %v650
      %v652 = vpop.f32.mrf.mxu0
      %v653 = vpop.f32.mrf.mxu0
      %v654 = vpop.f32.mrf.mxu0
      %655 = vdwg.mxu0
      %v657 = vsel %vm295, %v606, 0
      %v660 = vsel %vm612, %v292, 0
      %662 = vmatprep.subr.bf16.mxu0 0
      %663 = vmatpush1.bf16.msra.mxu0 0
      %664 = vmatprep.subr.bf16.mxu0 0
      %665 = vmatpush1.bf16.msra.mxu0 0
      %666 = vmatprep.subr.bf16.mxu0 0
      %667 = vmatpush1.bf16.msra.mxu0 0
      %668 = vmatprep.subr.bf16.mxu0 0
      %669 = vmatpush1.bf16.msra.mxu0 0
      %670 = vmatprep.subr.bf16.mxu0 0
      %671 = vmatpush1.bf16.msra.mxu0 0
      %672 = vmatprep.subr.bf16.mxu0 0
      %673 = vmatpush1.bf16.msra.mxu0 0
      %674 = vmatprep.subr.bf16.mxu0 0
      %675 = vmatpush1.bf16.msra.mxu0 0
      %676 = vmatprep.subr.bf16.mxu0 0
      %677 = vmatpush1.bf16.msra.mxu0 %v660
      %678 = vmatprep.subr.bf16.mxu0 0
      %679 = vmatpush2.bf16.msra.mxu0 0
      %680 = vmatprep.subr.bf16.mxu0 0
      %681 = vmatpush2.bf16.msra.mxu0 0
      %682 = vmatprep.subr.bf16.mxu0 0
      %683 = vmatpush2.bf16.msra.mxu0 0
      %684 = vmatprep.subr.bf16.mxu0 0
      %685 = vmatpush2.bf16.msra.mxu0 0
      %686 = vmatprep.subr.bf16.mxu0 0
      %687 = vmatpush2.bf16.msra.mxu0 0
      %688 = vmatprep.subr.bf16.mxu0 0
      %689 = vmatpush2.bf16.msra.mxu0 0
      %690 = vmatprep.subr.bf16.mxu0 0
      %691 = vmatpush2.bf16.msra.mxu0 0
      %692 = vmatprep.subr.bf16.mxu0 0
      %693 = vmatpush2.bf16.msra.mxu0 0
      %694 = vmatprep.mubr.bf16.mxu0 0
      %695 = vmatmul.mubr.bf16.gmra.mxu0 %v657
      %v696 = vpop.f32.mrf.mxu0
      %v697 = vadd.f32 0.0, %v696
      %v698 = vpop.f32.mrf.mxu0
      %v699 = vpop.f32.mrf.mxu0
      %v700 = vpop.f32.mrf.mxu0
      %701 = vdwg.mxu0
      %v703 = vsel %vm295, %v607, 0
      %v706 = vsel %vm612, %v293, 0
      %708 = vmatprep.subr.bf16.mxu0 0
      %709 = vmatpush1.bf16.msra.mxu0 0
      %710 = vmatprep.subr.bf16.mxu0 0
      %711 = vmatpush1.bf16.msra.mxu0 0
      %712 = vmatprep.subr.bf16.mxu0 0
      %713 = vmatpush1.bf16.msra.mxu0 0
      %714 = vmatprep.subr.bf16.mxu0 0
      %715 = vmatpush1.bf16.msra.mxu0 0
      %716 = vmatprep.subr.bf16.mxu0 0
      %717 = vmatpush1.bf16.msra.mxu0 0
      %718 = vmatprep.subr.bf16.mxu0 0
      %719 = vmatpush1.bf16.msra.mxu0 0
      %720 = vmatprep.subr.bf16.mxu0 0
      %721 = vmatpush1.bf16.msra.mxu0 0
      %722 = vmatprep.subr.bf16.mxu0 0
      %723 = vmatpush1.bf16.msra.mxu0 %v706
      %724 = vmatprep.subr.bf16.mxu0 0
      %725 = vmatpush2.bf16.msra.mxu0 0
      %726 = vmatprep.subr.bf16.mxu0 0
      %727 = vmatpush2.bf16.msra.mxu0 0
      %728 = vmatprep.subr.bf16.mxu0 0
      %729 = vmatpush2.bf16.msra.mxu0 0
      %730 = vmatprep.subr.bf16.mxu0 0
      %731 = vmatpush2.bf16.msra.mxu0 0
      %732 = vmatprep.subr.bf16.mxu0 0
      %733 = vmatpush2.bf16.msra.mxu0 0
      %734 = vmatprep.subr.bf16.mxu0 0
      %735 = vmatpush2.bf16.msra.mxu0 0
      %736 = vmatprep.subr.bf16.mxu0 0
      %737 = vmatpush2.bf16.msra.mxu0 0
      %738 = vmatprep.subr.bf16.mxu0 0
      %739 = vmatpush2.bf16.msra.mxu0 0
      %740 = vmatprep.mubr.bf16.mxu0 0
      %741 = vmatmul.mubr.bf16.gmra.mxu0 %v703
      %v742 = vpop.f32.mrf.mxu0
      %v743 = vadd.f32 0.0, %v742
      %v744 = vpop.f32.mrf.mxu0
      %v745 = vpop.f32.mrf.mxu0
      %v746 = vpop.f32.mrf.mxu0
      %747 = vdwg.mxu0
      %v749 = vsel %vm295, %v608, 0
      %v752 = vsel %vm612, %v294, 0
      %754 = vmatprep.subr.bf16.mxu0 0
      %755 = vmatpush1.bf16.msra.mxu0 0
      %756 = vmatprep.subr.bf16.mxu0 0
      %757 = vmatpush1.bf16.msra.mxu0 0
      %758 = vmatprep.subr.bf16.mxu0 0
      %759 = vmatpush1.bf16.msra.mxu0 0
      %760 = vmatprep.subr.bf16.mxu0 0
      %761 = vmatpush1.bf16.msra.mxu0 0
      %762 = vmatprep.subr.bf16.mxu0 0
      %763 = vmatpush1.bf16.msra.mxu0 0
      %764 = vmatprep.subr.bf16.mxu0 0
      %765 = vmatpush1.bf16.msra.mxu0 0
      %766 = vmatprep.subr.bf16.mxu0 0
      %767 = vmatpush1.bf16.msra.mxu0 0
      %768 = vmatprep.subr.bf16.mxu0 0
      %769 = vmatpush1.bf16.msra.mxu0 %v752
      %770 = vmatprep.subr.bf16.mxu0 0
      %771 = vmatpush2.bf16.msra.mxu0 0
      %772 = vmatprep.subr.bf16.mxu0 0
      %773 = vmatpush2.bf16.msra.mxu0 0
      %774 = vmatprep.subr.bf16.mxu0 0
      %775 = vmatpush2.bf16.msra.mxu0 0
      %776 = vmatprep.subr.bf16.mxu0 0
      %777 = vmatpush2.bf16.msra.mxu0 0
      %778 = vmatprep.subr.bf16.mxu0 0
      %779 = vmatpush2.bf16.msra.mxu0 0
      %780 = vmatprep.subr.bf16.mxu0 0
      %781 = vmatpush2.bf16.msra.mxu0 0
      %782 = vmatprep.subr.bf16.mxu0 0
      %783 = vmatpush2.bf16.msra.mxu0 0
      %784 = vmatprep.subr.bf16.mxu0 0
      %785 = vmatpush2.bf16.msra.mxu0 0
      %786 = vmatprep.mubr.bf16.mxu0 0
      %787 = vmatmul.mubr.bf16.gmra.mxu0 %v749
      %v788 = vpop.f32.mrf.mxu0
      %v789 = vadd.f32 0.0, %v788
      %v790 = vpop.f32.mrf.mxu0
      %v791 = vpop.f32.mrf.mxu0
      %v792 = vpop.f32.mrf.mxu0
      %793 = vdwg.mxu0
      %v794 = vadd.f32 %v601, %v651
      %v795 = vadd.f32 %v602, %v697
      %v796 = vadd.f32 %v603, %v743
      %v797 = vadd.f32 %v604, %v789
      %798 = vst.msk [vmem:[#allocation4] sm:$0xff] %vm295, %v794
      %799 = vst.msk [vmem:[#allocation4 + $0x8] sm:$0xff] %vm295, %v795
      %800 = vst.msk [vmem:[#allocation4 + $0x10] sm:$0xff] %vm295, %v796
      %801 = vst.msk [vmem:[#allocation4 + $0x18] sm:$0xff] %vm295, %v797
      %802 = vst.msk [vmem:[#allocation2] sm:$0xff] %vm572, %v500
      %803 = vst.msk [vmem:[#allocation2 + $0x8] sm:$0xff] %vm572, %v501
      %804 = vst.msk [vmem:[#allocation2 + $0x10] sm:$0xff] %vm572, %v502
      %805 = vst.msk [vmem:[#allocation2 + $0x18] sm:$0xff] %vm572, %v503
      // Predicated region
      $region37: #{_lambda_.39} parent=31 // pred_check
        %p806 = pneg %p253
      $region38: #{_lambda_.39} parent=31 // pred_check_branch
        %808 = sbr.rel (%p806) target = $region40
      $region39: #{_lambda_.39} parent=31 // pred_region
        %v809 = vld [vmem:[#allocation4] sm:$0xff]
        %v810 = vld [vmem:[#allocation4 + $0x8] sm:$0xff]
        %v811 = vld [vmem:[#allocation4 + $0x10] sm:$0xff]
        %v812 = vld [vmem:[#allocation4 + $0x18] sm:$0xff]
        %v813 = vld [vmem:[#allocation3] sm:$0xff]
        %v814 = vld [vmem:[#allocation3 + $0x8] sm:$0xff]
        %v815 = vld [vmem:[#allocation3 + $0x10] sm:$0xff]
        %v816 = vld [vmem:[#allocation3 + $0x18] sm:$0xff]
        %818 = vset.pattern.permute.xlu0 0
        %819 = vperm.xlu0 %818, %v813
        %v820 = vpop.permute.xlu0 %819
        %823 = vset.pattern.permute.xlu0 0
        %824 = vperm.xlu0 %823, %v814
        %v825 = vpop.permute.xlu0 %824
        %828 = vset.pattern.permute.xlu0 0
        %829 = vperm.xlu0 %828, %v815
        %v830 = vpop.permute.xlu0 %829
        %833 = vset.pattern.permute.xlu0 0
        %834 = vperm.xlu0 %833, %v816
        %v835 = vpop.permute.xlu0 %834
        %v837 = vrcp.pop %v820
        %v838 = vmul.f32 %v809, %v837
        %v839 = vrcp.pop %v825
        %v840 = vmul.f32 %v810, %v839
        %v841 = vrcp.pop %v830
        %v842 = vmul.f32 %v811, %v841
        %v843 = vrcp.pop %v835
        %v844 = vmul.f32 %v812, %v843
        %845 = vst.msk [vmem:[%s250] sm:$0xff] %vm295, %v838
        %846 = vst.msk [vmem:[%s250 + $0x8] sm:$0xff] %vm295, %v840
        %847 = vst.msk [vmem:[%s250 + $0x10] sm:$0xff] %vm295, %v842
        %848 = vst.msk [vmem:[%s250 + $0x18] sm:$0xff] %vm295, %v844
      $region40: #{_lambda_.39} parent=31 // pred_fallthru
        _
      %s849 = smul.u32 4, %s18
      %p850 = scmp.lt.s32.totalorder %s849, 7
      %s851 = scalar_select %p850, %s849, 7
      %s852 = smul.addr %s851, 8
      %s853 = scalar_lea.vmem %s3, %s852
      // Predicated region
      $region41: #{_lambda_.39} parent=31 // pred_check
        %p854 = pneg %p126
      $region42: #{_lambda_.39} parent=31 // pred_check_branch
        %856 = sbr.rel (%p854) target = $region44
      $region43: #{_lambda_.39} parent=31 // pred_region
        %s857 = smul.u32 4, %s18
      $region44: #{_lambda_.39} parent=31 // pred_fallthru
        _
    $region32: #{_lambda_.39} parent=5 // pred_fallthru
      _
    %p858 = scmp.le.s32.totalorder 2, %s9
    // Predicated region
    $region45: #{_lambda_.39} parent=5 // pred_check
      %p859 = pneg %p858
    $region46: #{_lambda_.39} parent=5 // pred_check_branch
      %861 = sbr.rel (%p859) target = $region48
    $region47: #{_lambda_.39} parent=5 // pred_region
      %s862 = ssub.s32 %s9, 2
      // Predicated region
      $region49: #{_lambda_.39} parent=47 // pred_check
        %p863 = pneg %p132
      $region50: #{_lambda_.39} parent=47 // pred_check_branch
        %865 = sbr.rel (%p863) target = $region52
      $region51: #{_lambda_.39} parent=47 // pred_region
        %s866 = smul.u32 4, %s20
        %p867 = scmp.lt.s32.totalorder %s866, 7
        %s868 = scalar_select %p867, %s866, 7
        %s869 = smul.addr %s868, 8
        %s870 = scalar_lea.vmem %s3, %s869
      $region52: #{_lambda_.39} parent=47 // pred_fallthru
        _
    $region48: #{_lambda_.39} parent=5 // pred_fallthru
      _
  $region6: #{_lambda_.39} parent=0 // loop_footer
    %s13 = sadd.s32 1, %s9
  $region7: #{_lambda_.39} parent=0 // loop_footer_branch
    %8 = sbr.rel target = $region3
  $region8: #{_lambda_.39} parent=0 // loop_exit
    _

// kernel: _lambda_.40
$region0: #{_lambda_.40}
  #allocation0 [shape = 'u32[]', space=smem, size = 0x4, offset = 0x4, fixed_abs, tag = 'smem constant byte address 0x4 - core index']
  #allocation1 [shape = 'u32[144,128]{1,0:T(1,128)}', space=vmem, size = 0x12000, scoped, tag = 'internal scratch']
  %s0 = inlined_call_operand.vmem [shape: f32[16,32], index: 0, kind: input, shape index: {}]
  %s1 = inlined_call_operand.vmem [shape: f32[16,32], index: 1, kind: input, shape index: {}]
  %s2 = inlined_call_operand.vmem [shape: bf16[32,32], index: 2, kind: input, shape index: {}]
  %s3 = inlined_call_operand.vmem [shape: f32[1,32], index: 3, kind: input, shape index: {}]
  %s4 = inlined_call_operand.vmem [shape: f32[1,32], index: 4, kind: input, shape index: {}]
  %s5 = inlined_call_operand.vmem [shape: f32[1,32], index: 5, kind: input, shape index: {}]
  %s6 = inlined_call_operand.vmem [shape: f32[16,32], index: 6, kind: output, shape index: {}]
  %s7 = sld [smem:[#allocation0]]
  $region57: #{_lambda_.40} parent=0
    _
  %s9 = ssub.s32 1, %s7
  %s10 = scalar_select 0, %s9, %s7
  loop: start=0, step=1, limit=4
  $region2: #{_lambda_.40} parent=0 // loop_pre_header
    _
  $region3: #{_lambda_.40} parent=0 // loop_header
    %s12 = sphi 0, %s16
    %p13 = scmp.ge.s32.totalorder %s12, 4
    %s22 = sphi 0, %s24
    %s25 = sphi 0, %s22
    %s26 = sphi 0, %s25
    %s42 = sphi 0, %s26
    %s48 = sphi 0, %s50
    %s51 = sphi 0, %s48
    %s52 = sphi 0, %s51
    %s68 = sphi 0, %s52
    %s72 = sphi 0, %s72
    %s74 = sphi 0, %s72
    %s75 = sphi 0, %s74
    %s89 = sphi 0, %s75
    %s93 = sphi 0, %s93
    %s95 = sphi 0, %s93
    %s96 = sphi 0, %s95
    %s110 = sphi 0, %s96
    %s114 = sphi 0, %s114
    %s116 = sphi 0, %s114
    %s117 = sphi 0, %s116
    %s131 = sphi 0, %s117
    %s135 = sphi 0, %s135
    %s137 = sphi 0, %s135
    %s138 = sphi 0, %s137
    %s152 = sphi 0, %s138
    %s158 = sphi 0, %s160
    %s161 = sphi 0, %s158
    %s162 = sphi 0, %s161
    %s178 = sphi 0, %s162
  $region4: #{_lambda_.40} parent=0 // loop_header_branch
    %15 = sbr.rel (%p13) target = $region8
  $region5: #{_lambda_.40} parent=0 // loop_body
    %s17 = ssub.s32 %s12, 1
    %s18 = ssub.s32 %s12, 2
    %s19 = sadd.s32 %s12, 1
    %s20 = ssub.s32 %s12, %s19
    %p21 = scmp.eq.s32.totalorder %s20, 0
    %s23 = sadd.s32 %s22, 1
    %s24 = scalar_select %p21, %s22, %s23
    %p27 = pneg %p21
    %p28 = scmp.eq.s32.totalorder %s12, 1
    %p29 = por %p27, %p28
    %p30 = scmp.ne.s32.totalorder %s22, %s25
    %p31 = scmp.eq.s32.totalorder %s12, 0
    %p32 = por %p30, %p31
    %p33 = scmp.ne.s32.totalorder %s22, %s25
    %p34 = scmp.eq.s32.totalorder %s17, 1
    %p35 = por %p33, %p34
    %p36 = scmp.ne.s32.totalorder %s25, %s26
    %p37 = scmp.eq.s32.totalorder %s17, 0
    %p38 = por %p36, %p37
    %p39 = scmp.ne.s32.totalorder %s25, %s26
    %p40 = scmp.eq.s32.totalorder %s18, 1
    %p41 = por %p39, %p40
    %p43 = scmp.ne.s32.totalorder %s26, %s42
    %p44 = scmp.eq.s32.totalorder %s18, 0
    %p45 = por %p43, %p44
    %s46 = ssub.s32 %s12, %s19
    %p47 = scmp.eq.s32.totalorder %s46, 0
    %s49 = sadd.s32 %s48, 1
    %s50 = scalar_select %p47, %s48, %s49
    %p53 = pneg %p47
    %p54 = scmp.eq.s32.totalorder %s12, 1
    %p55 = por %p53, %p54
    %p56 = scmp.ne.s32.totalorder %s48, %s51
    %p57 = scmp.eq.s32.totalorder %s12, 0
    %p58 = por %p56, %p57
    %p59 = scmp.ne.s32.totalorder %s48, %s51
    %p60 = scmp.eq.s32.totalorder %s17, 1
    %p61 = por %p59, %p60
    %p62 = scmp.ne.s32.totalorder %s51, %s52
    %p63 = scmp.eq.s32.totalorder %s17, 0
    %p64 = por %p62, %p63
    %p65 = scmp.ne.s32.totalorder %s51, %s52
    %p66 = scmp.eq.s32.totalorder %s18, 1
    %p67 = por %p65, %p66
    %p69 = scmp.ne.s32.totalorder %s52, %s68
    %p70 = scmp.eq.s32.totalorder %s18, 0
    %p71 = por %p69, %p70
    %s73 = sadd.s32 %s72, 1
    %p76 = scmp.eq.s32.totalorder %s12, 1
    %p77 = scmp.ne.s32.totalorder %s72, %s74
    %p78 = scmp.eq.s32.totalorder %s12, 0
    %p79 = por %p77, %p78
    %p80 = scmp.ne.s32.totalorder %s72, %s74
    %p81 = scmp.eq.s32.totalorder %s17, 1
    %p82 = por %p80, %p81
    %p83 = scmp.ne.s32.totalorder %s74, %s75
    %p84 = scmp.eq.s32.totalorder %s17, 0
    %p85 = por %p83, %p84
    %p86 = scmp.ne.s32.totalorder %s74, %s75
    %p87 = scmp.eq.s32.totalorder %s18, 1
    %p88 = por %p86, %p87
    %p90 = scmp.ne.s32.totalorder %s75, %s89
    %p91 = scmp.eq.s32.totalorder %s18, 0
    %p92 = por %p90, %p91
    %s94 = sadd.s32 %s93, 1
    %p97 = scmp.eq.s32.totalorder %s12, 1
    %p98 = scmp.ne.s32.totalorder %s93, %s95
    %p99 = scmp.eq.s32.totalorder %s12, 0
    %p100 = por %p98, %p99
    %p101 = scmp.ne.s32.totalorder %s93, %s95
    %p102 = scmp.eq.s32.totalorder %s17, 1
    %p103 = por %p101, %p102
    %p104 = scmp.ne.s32.totalorder %s95, %s96
    %p105 = scmp.eq.s32.totalorder %s17, 0
    %p106 = por %p104, %p105
    %p107 = scmp.ne.s32.totalorder %s95, %s96
    %p108 = scmp.eq.s32.totalorder %s18, 1
    %p109 = por %p107, %p108
    %p111 = scmp.ne.s32.totalorder %s96, %s110
    %p112 = scmp.eq.s32.totalorder %s18, 0
    %p113 = por %p111, %p112
    %s115 = sadd.s32 %s114, 1
    %p118 = scmp.eq.s32.totalorder %s12, 1
    %p119 = scmp.ne.s32.totalorder %s114, %s116
    %p120 = scmp.eq.s32.totalorder %s12, 0
    %p121 = por %p119, %p120
    %p122 = scmp.ne.s32.totalorder %s114, %s116
    %p123 = scmp.eq.s32.totalorder %s17, 1
    %p124 = por %p122, %p123
    %p125 = scmp.ne.s32.totalorder %s116, %s117
    %p126 = scmp.eq.s32.totalorder %s17, 0
    %p127 = por %p125, %p126
    %p128 = scmp.ne.s32.totalorder %s116, %s117
    %p129 = scmp.eq.s32.totalorder %s18, 1
    %p130 = por %p128, %p129
    %p132 = scmp.ne.s32.totalorder %s117, %s131
    %p133 = scmp.eq.s32.totalorder %s18, 0
    %p134 = por %p132, %p133
    %s136 = sadd.s32 %s135, 1
    %p139 = scmp.eq.s32.totalorder %s12, 1
    %p140 = scmp.ne.s32.totalorder %s135, %s137
    %p141 = scmp.eq.s32.totalorder %s12, 0
    %p142 = por %p140, %p141
    %p143 = scmp.ne.s32.totalorder %s135, %s137
    %p144 = scmp.eq.s32.totalorder %s17, 1
    %p145 = por %p143, %p144
    %p146 = scmp.ne.s32.totalorder %s137, %s138
    %p147 = scmp.eq.s32.totalorder %s17, 0
    %p148 = por %p146, %p147
    %p149 = scmp.ne.s32.totalorder %s137, %s138
    %p150 = scmp.eq.s32.totalorder %s18, 1
    %p151 = por %p149, %p150
    %p153 = scmp.ne.s32.totalorder %s138, %s152
    %p154 = scmp.eq.s32.totalorder %s18, 0
    %p155 = por %p153, %p154
    %s156 = ssub.s32 %s12, %s19
    %p157 = scmp.eq.s32.totalorder %s156, 0
    %s159 = sadd.s32 %s158, 1
    %s160 = scalar_select %p157, %s158, %s159
    %p163 = pneg %p157
    %p164 = scmp.eq.s32.totalorder %s12, 1
    %p165 = por %p163, %p164
    %p166 = scmp.ne.s32.totalorder %s158, %s161
    %p167 = scmp.eq.s32.totalorder %s12, 0
    %p168 = por %p166, %p167
    %p169 = scmp.ne.s32.totalorder %s158, %s161
    %p170 = scmp.eq.s32.totalorder %s17, 1
    %p171 = por %p169, %p170
    %p172 = scmp.ne.s32.totalorder %s161, %s162
    %p173 = scmp.eq.s32.totalorder %s17, 0
    %p174 = por %p172, %p173
    %p175 = scmp.ne.s32.totalorder %s161, %s162
    %p176 = scmp.eq.s32.totalorder %s18, 1
    %p177 = por %p175, %p176
    %p179 = scmp.ne.s32.totalorder %s162, %s178
    %p180 = scmp.eq.s32.totalorder %s18, 0
    %p181 = por %p179, %p180
    %p182 = scmp.le.s32.totalorder 1, %s12
    %p183 = scmp.lt.s32.totalorder %s12, 3
    %p184 = pnand %p182, %p183
    %p185 = pneg %p184
    // Predicated region
    $region9: #{_lambda_.40} parent=5 // pred_check
      _
    $region10: #{_lambda_.40} parent=5 // pred_check_branch
      %187 = sbr.rel (%p184) target = $region12
    $region11: #{_lambda_.40} parent=5 // pred_region
      %s188 = ssub.s32 %s12, 1
      // Predicated region
      $region13: #{_lambda_.40} parent=11 // pred_check
        %p189 = pneg %p85
      $region14: #{_lambda_.40} parent=11 // pred_check_branch
        %191 = sbr.rel (%p189) target = $region16
      $region15: #{_lambda_.40} parent=11 // pred_region
        _
      $region16: #{_lambda_.40} parent=11 // pred_fallthru
        _
      // Predicated region
      $region17: #{_lambda_.40} parent=11 // pred_check
        %p192 = pneg %p106
      $region18: #{_lambda_.40} parent=11 // pred_check_branch
        %194 = sbr.rel (%p192) target = $region20
      $region19: #{_lambda_.40} parent=11 // pred_region
        _
      $region20: #{_lambda_.40} parent=11 // pred_fallthru
        _
      // Predicated region
      $region21: #{_lambda_.40} parent=11 // pred_check
        %p195 = pneg %p127
      $region22: #{_lambda_.40} parent=11 // pred_check_branch
        %197 = sbr.rel (%p195) target = $region24
      $region23: #{_lambda_.40} parent=11 // pred_region
        _
      $region24: #{_lambda_.40} parent=11 // pred_fallthru
        _
      // Predicated region
      $region25: #{_lambda_.40} parent=11 // pred_check
        %p198 = pneg %p148
      $region26: #{_lambda_.40} parent=11 // pred_check_branch
        %200 = sbr.rel (%p198) target = $region28
      $region27: #{_lambda_.40} parent=11 // pred_region
        _
      $region28: #{_lambda_.40} parent=11 // pred_fallthru
        _
    $region12: #{_lambda_.40} parent=5 // pred_fallthru
      _
    %p201 = scmp.lt.s32.totalorder %s12, 2
    // Predicated region
    $region29: #{_lambda_.40} parent=5 // pred_check
      %p202 = pneg %p201
    $region30: #{_lambda_.40} parent=5 // pred_check_branch
      %204 = sbr.rel (%p202) target = $region32
    $region31: #{_lambda_.40} parent=5 // pred_region
      // Predicated region
      $region33: #{_lambda_.40} parent=31 // pred_check
        %p205 = pneg %p32
      $region34: #{_lambda_.40} parent=31 // pred_check_branch
        %207 = sbr.rel (%p205) target = $region36
      $region35: #{_lambda_.40} parent=31 // pred_region
        %p208 = scmp.lt.s32.totalorder %s12, 1
        %s209 = scalar_select %p208, %s12, 1
        %s210 = smul.addr %s209, 8
        %s211 = scalar_lea.vmem %s0, %s210
      $region36: #{_lambda_.40} parent=31 // pred_fallthru
        _
      // Predicated region
      $region37: #{_lambda_.40} parent=31 // pred_check
        %p212 = pneg %p58
      $region38: #{_lambda_.40} parent=31 // pred_check_branch
        %214 = sbr.rel (%p212) target = $region40
      $region39: #{_lambda_.40} parent=31 // pred_region
        %p215 = scmp.lt.s32.totalorder %s12, 1
        %s216 = scalar_select %p215, %s12, 1
        %s217 = smul.addr %s216, 8
        %s218 = scalar_lea.vmem %s1, %s217
      $region40: #{_lambda_.40} parent=31 // pred_fallthru
        _
    $region32: #{_lambda_.40} parent=5 // pred_fallthru
      _
    %p219 = scmp.le.s32.totalorder 1, %s12
    %p220 = scmp.lt.s32.totalorder %s12, 3
    %p221 = pnand %p219, %p220
    %p222 = pneg %p221
    // Predicated region
    $region41: #{_lambda_.40} parent=5 // pred_check
      _
    $region42: #{_lambda_.40} parent=5 // pred_check_branch
      %224 = sbr.rel (%p221) target = $region44
    $region43: #{_lambda_.40} parent=5 // pred_region
      %s225 = ssub.s32 %s12, 1
      %p226 = scmp.lt.s32.totalorder %s17, 1
      %s227 = scalar_select %p226, %s17, 1
      %s228 = smul.addr %s227, 8
      %s229 = scalar_lea.vmem %s0, %s228
      %p230 = pneg %p38
      %p231 = pneg %p35
      %p232 = scmp.lt.s32.totalorder %s17, 1
      %s233 = scalar_select %p232, %s17, 1
      %s234 = smul.addr %s233, 8
      %s235 = scalar_lea.vmem %s1, %s234
      %p236 = pneg %p64
      %p237 = pneg %p61
      %p238 = pneg %p85
      %p239 = pneg %p82
      %p240 = pneg %p106
      %p241 = pneg %p103
      %p242 = pneg %p127
      %p243 = pneg %p124
      %p244 = pneg %p148
      %p245 = pneg %p145
      %p246 = pneg %p174
      %p247 = pneg %p171
      %p248 = scmp.lt.s32.totalorder %s17, 1
      %s249 = scalar_select %p248, %s17, 1
      %s250 = smul.addr %s249, 8
      %s251 = scalar_lea.vmem %s6, %s250
      %p252 = scmp.lt.s32.totalorder %s17, 1
      %s253 = scalar_select %p252, %s17, 1
      %s254 = smul.addr %s253, 8
      %s255 = scalar_lea.vmem %s0, %s254
      %p256 = scmp.lt.s32.totalorder %s17, 1
      %s257 = scalar_select %p256, %s17, 1
      %s258 = smul.addr %s257, 8
      %s259 = scalar_lea.vmem %s1, %s258
      %p260 = scmp.lt.s32.totalorder %s17, 1
      %s261 = scalar_select %p260, %s17, 1
      %s262 = smul.addr %s261, 8
      %s263 = scalar_lea.vmem %s6, %s262
      %v265 = vld [vmem:[%s255] sm:$0xff]
      %v266 = vpack.c.bf16 %v265, %v265
      %v267 = vld [vmem:[%s2] sm:$0xf]
      %v268 = vld [vmem:[%s2 + $0x4] sm:$0xf]
      %v269 = vld [vmem:[%s2 + $0x8] sm:$0xf]
      %v270 = vld [vmem:[%s2 + $0xc] sm:$0xf]
      %v271 = vld [vmem:[%s3] sm:$0x1]
      %v273 = vlaneseq
      %v274 = vshrl.u32 %v273, 7
      %v275 = vsub.s32 0, %v274
      %v276 = vrot.slane %v271, %v275
      %v282 = vunpack.c.l.b16 %v267
      %v283 = vunpack.c.l.b16 %v268
      %v284 = vunpack.c.l.b16 %v269
      %v285 = vunpack.c.l.b16 %v270
      %v286 = vpack.c.b16 %v283, %v282
      %v287 = vpack.c.b16 %v285, %v284
      %vm290 = vcmask 261120
      %v292 = vsel %vm290, %v266, 0
      %294 = vmatprep.subr.bf16.mxu0 0
      %295 = vmatpush1.bf16.msra.mxu0 0
      %296 = vmatprep.subr.bf16.mxu0 0
      %297 = vmatpush1.bf16.msra.mxu0 0
      %298 = vmatprep.subr.bf16.mxu0 0
      %299 = vmatpush1.bf16.msra.mxu0 0
      %300 = vmatprep.subr.bf16.mxu0 0
      %301 = vmatpush1.bf16.msra.mxu0 0
      %302 = vmatprep.subr.bf16.mxu0 0
      %303 = vmatpush1.bf16.msra.mxu0 0
      %304 = vmatprep.subr.bf16.mxu0 0
      %305 = vmatpush1.bf16.msra.mxu0 0
      %306 = vmatprep.subr.bf16.mxu0 0
      %307 = vmatpush1.bf16.msra.mxu0 %v287
      %308 = vmatprep.subr.bf16.mxu0 0
      %309 = vmatpush1.bf16.msra.mxu0 %v286
      %310 = vmatprep.subr.bf16.mxu0 0
      %311 = vmatpush2.bf16.msra.mxu0 0
      %312 = vmatprep.subr.bf16.mxu0 0
      %313 = vmatpush2.bf16.msra.mxu0 0
      %314 = vmatprep.subr.bf16.mxu0 0
      %315 = vmatpush2.bf16.msra.mxu0 0
      %316 = vmatprep.subr.bf16.mxu0 0
      %317 = vmatpush2.bf16.msra.mxu0 0
      %318 = vmatprep.subr.bf16.mxu0 0
      %319 = vmatpush2.bf16.msra.mxu0 0
      %320 = vmatprep.subr.bf16.mxu0 0
      %321 = vmatpush2.bf16.msra.mxu0 0
      %322 = vmatprep.subr.bf16.mxu0 0
      %323 = vmatpush2.bf16.msra.mxu0 0
      %324 = vmatprep.subr.bf16.mxu0 0
      %325 = vmatpush2.bf16.msra.mxu0 0
      %326 = vmatprep.mubr.bf16.mxu0 0
      %327 = vmatmul.mubr.bf16.gmra.mxu0 %v292
      %v328 = vpop.f32.mrf.mxu0
      %v329 = vadd.f32 %v276, %v328
      %v330 = vpop.f32.mrf.mxu0
      %v331 = vpop.f32.mrf.mxu0
      %v332 = vpop.f32.mrf.mxu0
      %333 = vdwg.mxu0
      %v334 = vld [vmem:[%s259] sm:$0xff]
      %v335 = vadd.f32 %v329, %v334
      %v336 = vld [vmem:[%s4] sm:$0x1]
      %v337 = vld [vmem:[%s5] sm:$0x1]
      %v338 = vsel %vm290, %v335, 0.0
      %339 = vadd.xlane.f32.xlu0 %v338
      %v340 = vpop.xlane.xlu0 %339
      %v341 = vrcp.pop 32.0
      %v342 = vmul.f32 %v340, %v341
      %v343 = vsub.f32 %v335, %v342
      %v344 = vmul.f32 %v343, %v343
      %v345 = vsel %vm290, %v344, 0.0
      %346 = vadd.xlane.f32.xlu0 %v345
      %v347 = vpop.xlane.xlu0 %346
      %v348 = vmul.f32 %v347, %v341
      %v349 = vadd.f32 %v348, 1e-05
      %v350 = vrsqrt.pop %v349
      %v351 = vmul.f32 %v343, %v350
      %v353 = vlaneseq
      %v354 = vshrl.u32 %v353, 7
      %v355 = vsub.s32 0, %v354
      %v356 = vrot.slane %v336, %v355
      %v358 = vmul.f32 %v351, %v356
      %v360 = vlaneseq
      %v361 = vshrl.u32 %v360, 7
      %v362 = vsub.s32 0, %v361
      %v363 = vrot.slane %v337, %v362
      %v365 = vadd.f32 %v358, %v363
      %366 = vst.msk [vmem:[%s263] sm:$0xff] %vm290, %v365
      %p367 = scmp.lt.s32.totalorder %s17, 1
      %s368 = scalar_select %p367, %s17, 1
      %s369 = smul.addr %s368, 8
      %s370 = scalar_lea.vmem %s6, %s369
      // Predicated region
      $region45: #{_lambda_.40} parent=43 // pred_check
        %p371 = pneg %p171
      $region46: #{_lambda_.40} parent=43 // pred_check_branch
        %373 = sbr.rel (%p371) target = $region48
      $region47: #{_lambda_.40} parent=43 // pred_region
        _
      $region48: #{_lambda_.40} parent=43 // pred_fallthru
        _
    $region44: #{_lambda_.40} parent=5 // pred_fallthru
      _
    %p374 = scmp.le.s32.totalorder 2, %s12
    // Predicated region
    $region49: #{_lambda_.40} parent=5 // pred_check
      %p375 = pneg %p374
    $region50: #{_lambda_.40} parent=5 // pred_check_branch
      %377 = sbr.rel (%p375) target = $region52
    $region51: #{_lambda_.40} parent=5 // pred_region
      %s378 = ssub.s32 %s12, 2
      // Predicated region
      $region53: #{_lambda_.40} parent=51 // pred_check
        %p379 = pneg %p177
      $region54: #{_lambda_.40} parent=51 // pred_check_branch
        %381 = sbr.rel (%p379) target = $region56
      $region55: #{_lambda_.40} parent=51 // pred_region
        %p382 = scmp.lt.s32.totalorder %s18, 1
        %s383 = scalar_select %p382, %s18, 1
        %s384 = smul.addr %s383, 8
        %s385 = scalar_lea.vmem %s6, %s384
      $region56: #{_lambda_.40} parent=51 // pred_fallthru
        _
    $region52: #{_lambda_.40} parent=5 // pred_fallthru
      _
  $region6: #{_lambda_.40} parent=0 // loop_footer
    %s16 = sadd.s32 1, %s12
  $region7: #{_lambda_.40} parent=0 // loop_footer_branch
    %11 = sbr.rel target = $region3
  $region8: #{_lambda_.40} parent=0 // loop_exit
    _

// kernel: _lambda_.41
$region0: #{_lambda_.41}
  #allocation0 [shape = 'u32[]', space=smem, size = 0x4, offset = 0x4, fixed_abs, tag = 'smem constant byte address 0x4 - core index']
  #allocation1 [shape = 'u32[144,128]{1,0:T(1,128)}', space=vmem, size = 0x12000, scoped, tag = 'internal scratch']
  %s0 = inlined_call_operand.vmem [shape: f32[16,32], index: 0, kind: input, shape index: {}]
  %s1 = inlined_call_operand.vmem [shape: bf16[32,32], index: 1, kind: input, shape index: {}]
  %s2 = inlined_call_operand.vmem [shape: f32[1,32], index: 2, kind: input, shape index: {}]
  %s3 = inlined_call_operand.vmem [shape: f32[16,32], index: 3, kind: output, shape index: {}]
  %s4 = sld [smem:[#allocation0]]
  $region45: #{_lambda_.41} parent=0
    _
  %s6 = ssub.s32 1, %s4
  %s7 = scalar_select 0, %s6, %s4
  loop: start=0, step=1, limit=4
  $region2: #{_lambda_.41} parent=0 // loop_pre_header
    _
  $region3: #{_lambda_.41} parent=0 // loop_header
    %s9 = sphi 0, %s13
    %p10 = scmp.ge.s32.totalorder %s9, 4
    %s19 = sphi 0, %s21
    %s22 = sphi 0, %s19
    %s23 = sphi 0, %s22
    %s39 = sphi 0, %s23
    %s43 = sphi 0, %s43
    %s45 = sphi 0, %s43
    %s46 = sphi 0, %s45
    %s60 = sphi 0, %s46
    %s64 = sphi 0, %s64
    %s66 = sphi 0, %s64
    %s67 = sphi 0, %s66
    %s81 = sphi 0, %s67
    %s87 = sphi 0, %s89
    %s90 = sphi 0, %s87
    %s91 = sphi 0, %s90
    %s107 = sphi 0, %s91
  $region4: #{_lambda_.41} parent=0 // loop_header_branch
    %12 = sbr.rel (%p10) target = $region8
  $region5: #{_lambda_.41} parent=0 // loop_body
    %s14 = ssub.s32 %s9, 1
    %s15 = ssub.s32 %s9, 2
    %s16 = sadd.s32 %s9, 1
    %s17 = ssub.s32 %s9, %s16
    %p18 = scmp.eq.s32.totalorder %s17, 0
    %s20 = sadd.s32 %s19, 1
    %s21 = scalar_select %p18, %s19, %s20
    %p24 = pneg %p18
    %p25 = scmp.eq.s32.totalorder %s9, 1
    %p26 = por %p24, %p25
    %p27 = scmp.ne.s32.totalorder %s19, %s22
    %p28 = scmp.eq.s32.totalorder %s9, 0
    %p29 = por %p27, %p28
    %p30 = scmp.ne.s32.totalorder %s19, %s22
    %p31 = scmp.eq.s32.totalorder %s14, 1
    %p32 = por %p30, %p31
    %p33 = scmp.ne.s32.totalorder %s22, %s23
    %p34 = scmp.eq.s32.totalorder %s14, 0
    %p35 = por %p33, %p34
    %p36 = scmp.ne.s32.totalorder %s22, %s23
    %p37 = scmp.eq.s32.totalorder %s15, 1
    %p38 = por %p36, %p37
    %p40 = scmp.ne.s32.totalorder %s23, %s39
    %p41 = scmp.eq.s32.totalorder %s15, 0
    %p42 = por %p40, %p41
    %s44 = sadd.s32 %s43, 1
    %p47 = scmp.eq.s32.totalorder %s9, 1
    %p48 = scmp.ne.s32.totalorder %s43, %s45
    %p49 = scmp.eq.s32.totalorder %s9, 0
    %p50 = por %p48, %p49
    %p51 = scmp.ne.s32.totalorder %s43, %s45
    %p52 = scmp.eq.s32.totalorder %s14, 1
    %p53 = por %p51, %p52
    %p54 = scmp.ne.s32.totalorder %s45, %s46
    %p55 = scmp.eq.s32.totalorder %s14, 0
    %p56 = por %p54, %p55
    %p57 = scmp.ne.s32.totalorder %s45, %s46
    %p58 = scmp.eq.s32.totalorder %s15, 1
    %p59 = por %p57, %p58
    %p61 = scmp.ne.s32.totalorder %s46, %s60
    %p62 = scmp.eq.s32.totalorder %s15, 0
    %p63 = por %p61, %p62
    %s65 = sadd.s32 %s64, 1
    %p68 = scmp.eq.s32.totalorder %s9, 1
    %p69 = scmp.ne.s32.totalorder %s64, %s66
    %p70 = scmp.eq.s32.totalorder %s9, 0
    %p71 = por %p69, %p70
    %p72 = scmp.ne.s32.totalorder %s64, %s66
    %p73 = scmp.eq.s32.totalorder %s14, 1
    %p74 = por %p72, %p73
    %p75 = scmp.ne.s32.totalorder %s66, %s67
    %p76 = scmp.eq.s32.totalorder %s14, 0
    %p77 = por %p75, %p76
    %p78 = scmp.ne.s32.totalorder %s66, %s67
    %p79 = scmp.eq.s32.totalorder %s15, 1
    %p80 = por %p78, %p79
    %p82 = scmp.ne.s32.totalorder %s67, %s81
    %p83 = scmp.eq.s32.totalorder %s15, 0
    %p84 = por %p82, %p83
    %s85 = ssub.s32 %s9, %s16
    %p86 = scmp.eq.s32.totalorder %s85, 0
    %s88 = sadd.s32 %s87, 1
    %s89 = scalar_select %p86, %s87, %s88
    %p92 = pneg %p86
    %p93 = scmp.eq.s32.totalorder %s9, 1
    %p94 = por %p92, %p93
    %p95 = scmp.ne.s32.totalorder %s87, %s90
    %p96 = scmp.eq.s32.totalorder %s9, 0
    %p97 = por %p95, %p96
    %p98 = scmp.ne.s32.totalorder %s87, %s90
    %p99 = scmp.eq.s32.totalorder %s14, 1
    %p100 = por %p98, %p99
    %p101 = scmp.ne.s32.totalorder %s90, %s91
    %p102 = scmp.eq.s32.totalorder %s14, 0
    %p103 = por %p101, %p102
    %p104 = scmp.ne.s32.totalorder %s90, %s91
    %p105 = scmp.eq.s32.totalorder %s15, 1
    %p106 = por %p104, %p105
    %p108 = scmp.ne.s32.totalorder %s91, %s107
    %p109 = scmp.eq.s32.totalorder %s15, 0
    %p110 = por %p108, %p109
    %p111 = scmp.le.s32.totalorder 1, %s9
    %p112 = scmp.lt.s32.totalorder %s9, 3
    %p113 = pnand %p111, %p112
    %p114 = pneg %p113
    // Predicated region
    $region9: #{_lambda_.41} parent=5 // pred_check
      _
    $region10: #{_lambda_.41} parent=5 // pred_check_branch
      %116 = sbr.rel (%p113) target = $region12
    $region11: #{_lambda_.41} parent=5 // pred_region
      %s117 = ssub.s32 %s9, 1
      // Predicated region
      $region13: #{_lambda_.41} parent=11 // pred_check
        %p118 = pneg %p56
      $region14: #{_lambda_.41} parent=11 // pred_check_branch
        %120 = sbr.rel (%p118) target = $region16
      $region15: #{_lambda_.41} parent=11 // pred_region
        _
      $region16: #{_lambda_.41} parent=11 // pred_fallthru
        _
      // Predicated region
      $region17: #{_lambda_.41} parent=11 // pred_check
        %p121 = pneg %p77
      $region18: #{_lambda_.41} parent=11 // pred_check_branch
        %123 = sbr.rel (%p121) target = $region20
      $region19: #{_lambda_.41} parent=11 // pred_region
        _
      $region20: #{_lambda_.41} parent=11 // pred_fallthru
        _
    $region12: #{_lambda_.41} parent=5 // pred_fallthru
      _
    %p124 = scmp.lt.s32.totalorder %s9, 2
    // Predicated region
    $region21: #{_lambda_.41} parent=5 // pred_check
      %p125 = pneg %p124
    $region22: #{_lambda_.41} parent=5 // pred_check_branch
      %127 = sbr.rel (%p125) target = $region24
    $region23: #{_lambda_.41} parent=5 // pred_region
      // Predicated region
      $region25: #{_lambda_.41} parent=23 // pred_check
        %p128 = pneg %p29
      $region26: #{_lambda_.41} parent=23 // pred_check_branch
        %130 = sbr.rel (%p128) target = $region28
      $region27: #{_lambda_.41} parent=23 // pred_region
        %p131 = scmp.lt.s32.totalorder %s9, 1
        %s132 = scalar_select %p131, %s9, 1
        %s133 = smul.addr %s132, 8
        %s134 = scalar_lea.vmem %s0, %s133
      $region28: #{_lambda_.41} parent=23 // pred_fallthru
        _
    $region24: #{_lambda_.41} parent=5 // pred_fallthru
      _
    %p135 = scmp.le.s32.totalorder 1, %s9
    %p136 = scmp.lt.s32.totalorder %s9, 3
    %p137 = pnand %p135, %p136
    %p138 = pneg %p137
    // Predicated region
    $region29: #{_lambda_.41} parent=5 // pred_check
      _
    $region30: #{_lambda_.41} parent=5 // pred_check_branch
      %140 = sbr.rel (%p137) target = $region32
    $region31: #{_lambda_.41} parent=5 // pred_region
      %s141 = ssub.s32 %s9, 1
      %p142 = scmp.lt.s32.totalorder %s14, 1
      %s143 = scalar_select %p142, %s14, 1
      %s144 = smul.addr %s143, 8
      %s145 = scalar_lea.vmem %s0, %s144
      %p146 = pneg %p35
      %p147 = pneg %p32
      %p148 = pneg %p56
      %p149 = pneg %p53
      %p150 = pneg %p77
      %p151 = pneg %p74
      %p152 = pneg %p103
      %p153 = pneg %p100
      %p154 = scmp.lt.s32.totalorder %s14, 1
      %s155 = scalar_select %p154, %s14, 1
      %s156 = smul.addr %s155, 8
      %s157 = scalar_lea.vmem %s3, %s156
      %p158 = scmp.lt.s32.totalorder %s14, 1
      %s159 = scalar_select %p158, %s14, 1
      %s160 = smul.addr %s159, 8
      %s161 = scalar_lea.vmem %s0, %s160
      %p162 = scmp.lt.s32.totalorder %s14, 1
      %s163 = scalar_select %p162, %s14, 1
      %s164 = smul.addr %s163, 8
      %s165 = scalar_lea.vmem %s3, %s164
      %v167 = vld [vmem:[%s161] sm:$0xff]
      %v168 = vpack.c.bf16 %v167, %v167
      %v169 = vld [vmem:[%s1] sm:$0xf]
      %v170 = vld [vmem:[%s1 + $0x4] sm:$0xf]
      %v171 = vld [vmem:[%s1 + $0x8] sm:$0xf]
      %v172 = vld [vmem:[%s1 + $0xc] sm:$0xf]
      %v173 = vld [vmem:[%s2] sm:$0x1]
      %v175 = vlaneseq
      %v176 = vshrl.u32 %v175, 7
      %v177 = vsub.s32 0, %v176
      %v178 = vrot.slane %v173, %v177
      %v184 = vunpack.c.l.b16 %v169
      %v185 = vunpack.c.l.b16 %v170
      %v186 = vunpack.c.l.b16 %v171
      %v187 = vunpack.c.l.b16 %v172
      %v188 = vpack.c.b16 %v185, %v184
      %v189 = vpack.c.b16 %v187, %v186
      %vm192 = vcmask 261120
      %v194 = vsel %vm192, %v168, 0
      %196 = vmatprep.subr.bf16.mxu0 0
      %197 = vmatpush1.bf16.msra.mxu0 0
      %198 = vmatprep.subr.bf16.mxu0 0
      %199 = vmatpush1.bf16.msra.mxu0 0
      %200 = vmatprep.subr.bf16.mxu0 0
      %201 = vmatpush1.bf16.msra.mxu0 0
      %202 = vmatprep.subr.bf16.mxu0 0
      %203 = vmatpush1.bf16.msra.mxu0 0
      %204 = vmatprep.subr.bf16.mxu0 0
      %205 = vmatpush1.bf16.msra.mxu0 0
      %206 = vmatprep.subr.bf16.mxu0 0
      %207 = vmatpush1.bf16.msra.mxu0 0
      %208 = vmatprep.subr.bf16.mxu0 0
      %209 = vmatpush1.bf16.msra.mxu0 %v189
      %210 = vmatprep.subr.bf16.mxu0 0
      %211 = vmatpush1.bf16.msra.mxu0 %v188
      %212 = vmatprep.subr.bf16.mxu0 0
      %213 = vmatpush2.bf16.msra.mxu0 0
      %214 = vmatprep.subr.bf16.mxu0 0
      %215 = vmatpush2.bf16.msra.mxu0 0
      %216 = vmatprep.subr.bf16.mxu0 0
      %217 = vmatpush2.bf16.msra.mxu0 0
      %218 = vmatprep.subr.bf16.mxu0 0
      %219 = vmatpush2.bf16.msra.mxu0 0
      %220 = vmatprep.subr.bf16.mxu0 0
      %221 = vmatpush2.bf16.msra.mxu0 0
      %222 = vmatprep.subr.bf16.mxu0 0
      %223 = vmatpush2.bf16.msra.mxu0 0
      %224 = vmatprep.subr.bf16.mxu0 0
      %225 = vmatpush2.bf16.msra.mxu0 0
      %226 = vmatprep.subr.bf16.mxu0 0
      %227 = vmatpush2.bf16.msra.mxu0 0
      %228 = vmatprep.mubr.bf16.mxu0 0
      %229 = vmatmul.mubr.bf16.gmra.mxu0 %v194
      %v230 = vpop.f32.mrf.mxu0
      %v231 = vadd.f32 %v178, %v230
      %v232 = vpop.f32.mrf.mxu0
      %v233 = vpop.f32.mrf.mxu0
      %v234 = vpop.f32.mrf.mxu0
      %235 = vdwg.mxu0
      %v236 = vmul.f32 %v231, 0.5
      %v237 = vmul.f32 %v231, 0.70710677
      %v238 = vand.u32 2147483647, %v237
      %v239 = vmul.f32 %v238, 0.3275911
      %v240 = vadd.f32 %v239, 1.0
      %v241 = vrcp.pop %v240
      %v242 = vmul.f32 1.0, %v241
      %v243 = vmul.f32 %v242, 1.0614054
      %v244 = vadd.f32 %v243, -1.4531521
      %v245 = vmul.f32 %v244, %v242
      %v246 = vadd.f32 %v245, 1.4214138
      %v247 = vmul.f32 %v246, %v242
      %v248 = vadd.f32 %v247, -0.28449672
      %v249 = vmul.f32 %v248, %v242
      %v250 = vadd.f32 %v249, 0.2548296
      %v251 = vmul.f32 %v250, %v242
      %v252 = vsub.f32 0.0, %v238
      %v253 = vmul.f32 %v252, %v238
      %v254 = vmul.f32 %v253, 1.442695
      %v255 = vpow.pop %v254
      %v256 = vmul.f32 %v251, %v255
      %v257 = vsub.f32 1.0, %v256
      %vm258 = vcmp.ge.f32.partialorder %v237, 0.0
      %v259 = vsub.f32 0.0, %v257
      %v260 = vsel %vm258, %v257, %v259
      %v261 = vadd.f32 %v260, 1.0
      %v262 = vmul.f32 %v236, %v261
      %263 = vst.msk [vmem:[%s165] sm:$0xff] %vm192, %v262
      %p264 = scmp.lt.s32.totalorder %s14, 1
      %s265 = scalar_select %p264, %s14, 1
      %s266 = smul.addr %s265, 8
      %s267 = scalar_lea.vmem %s3, %s266
      // Predicated region
      $region33: #{_lambda_.41} parent=31 // pred_check
        %p268 = pneg %p100
      $region34: #{_lambda_.41} parent=31 // pred_check_branch
        %270 = sbr.rel (%p268) target = $region36
      $region35: #{_lambda_.41} parent=31 // pred_region
        _
      $region36: #{_lambda_.41} parent=31 // pred_fallthru
        _
    $region32: #{_lambda_.41} parent=5 // pred_fallthru
      _
    %p271 = scmp.le.s32.totalorder 2, %s9
    // Predicated region
    $region37: #{_lambda_.41} parent=5 // pred_check
      %p272 = pneg %p271
    $region38: #{_lambda_.41} parent=5 // pred_check_branch
      %274 = sbr.rel (%p272) target = $region40
    $region39: #{_lambda_.41} parent=5 // pred_region
      %s275 = ssub.s32 %s9, 2
      // Predicated region
      $region41: #{_lambda_.41} parent=39 // pred_check
        %p276 = pneg %p106
      $region42: #{_lambda_.41} parent=39 // pred_check_branch
        %278 = sbr.rel (%p276) target = $region44
      $region43: #{_lambda_.41} parent=39 // pred_region
        %p279 = scmp.lt.s32.totalorder %s15, 1
        %s280 = scalar_select %p279, %s15, 1
        %s281 = smul.addr %s280, 8
        %s282 = scalar_lea.vmem %s3, %s281
      $region44: #{_lambda_.41} parent=39 // pred_fallthru
        _
    $region40: #{_lambda_.41} parent=5 // pred_fallthru
      _
  $region6: #{_lambda_.41} parent=0 // loop_footer
    %s13 = sadd.s32 1, %s9
  $region7: #{_lambda_.41} parent=0 // loop_footer_branch
    %8 = sbr.rel target = $region3
  $region8: #{_lambda_.41} parent=0 // loop_exit
    _

// kernel: _lambda_.44
$region0: #{_lambda_.44}
  #allocation0 [shape = 'u32[]', space=smem, size = 0x4, offset = 0x4, fixed_abs, tag = 'smem constant byte address 0x4 - core index']
  #allocation1 [shape = 'u32[144,128]{1,0:T(1,128)}', space=vmem, size = 0x12000, scoped, tag = 'internal scratch']
  %s0 = inlined_call_operand.vmem [shape: f32[8,32], index: 0, kind: input, shape index: {}]
  %s1 = inlined_call_operand.vmem [shape: bf16[32,32], index: 1, kind: input, shape index: {}]
  %s2 = inlined_call_operand.vmem [shape: f32[1,32], index: 2, kind: input, shape index: {}]
  %s3 = inlined_call_operand.vmem [shape: f32[8,32], index: 3, kind: output, shape index: {}]
  %s4 = sld [smem:[#allocation0]]
  $region22: #{_lambda_.44} parent=0
    _
  %s6 = ssub.s32 1, %s4
  %s7 = scalar_select 0, %s6, %s4
  // Predicated region
  $region2: #{_lambda_.44} parent=0 // pred_check
    _
  $region3: #{_lambda_.44} parent=0 // pred_check_branch
    %9 = sbr.rel (0) target = $region5
  $region4: #{_lambda_.44} parent=0 // pred_region
    _
  $region5: #{_lambda_.44} parent=0 // pred_fallthru
    _
  // Predicated region
  $region6: #{_lambda_.44} parent=0 // pred_check
    _
  $region7: #{_lambda_.44} parent=0 // pred_check_branch
    %11 = sbr.rel (0) target = $region9
  $region8: #{_lambda_.44} parent=0 // pred_region
    _
  $region9: #{_lambda_.44} parent=0 // pred_fallthru
    _
  // Predicated region
  $region10: #{_lambda_.44} parent=0 // pred_check
    _
  $region11: #{_lambda_.44} parent=0 // pred_check_branch
    %13 = sbr.rel (0) target = $region13
  $region12: #{_lambda_.44} parent=0 // pred_region
    _
  $region13: #{_lambda_.44} parent=0 // pred_fallthru
    _
  %v15 = vld [vmem:[%s0] sm:$0xff]
  %v16 = vpack.c.bf16 %v15, %v15
  %v17 = vld [vmem:[%s1] sm:$0xf]
  %v18 = vld [vmem:[%s1 + $0x4] sm:$0xf]
  %v19 = vld [vmem:[%s1 + $0x8] sm:$0xf]
  %v20 = vld [vmem:[%s1 + $0xc] sm:$0xf]
  %v21 = vld [vmem:[%s2] sm:$0x1]
  %v23 = vlaneseq
  %v24 = vshrl.u32 %v23, 7
  %v25 = vsub.s32 0, %v24
  %v26 = vrot.slane %v21, %v25
  %v32 = vunpack.c.l.b16 %v17
  %v33 = vunpack.c.l.b16 %v18
  %v34 = vunpack.c.l.b16 %v19
  %v35 = vunpack.c.l.b16 %v20
  %v36 = vpack.c.b16 %v33, %v32
  %v37 = vpack.c.b16 %v35, %v34
  %vm40 = vcmask 261120
  %v42 = vsel %vm40, %v16, 0
  %44 = vmatprep.subr.bf16.mxu0 0
  %45 = vmatpush1.bf16.msra.mxu0 0
  %46 = vmatprep.subr.bf16.mxu0 0
  %47 = vmatpush1.bf16.msra.mxu0 0
  %48 = vmatprep.subr.bf16.mxu0 0
  %49 = vmatpush1.bf16.msra.mxu0 0
  %50 = vmatprep.subr.bf16.mxu0 0
  %51 = vmatpush1.bf16.msra.mxu0 0
  %52 = vmatprep.subr.bf16.mxu0 0
  %53 = vmatpush1.bf16.msra.mxu0 0
  %54 = vmatprep.subr.bf16.mxu0 0
  %55 = vmatpush1.bf16.msra.mxu0 0
  %56 = vmatprep.subr.bf16.mxu0 0
  %57 = vmatpush1.bf16.msra.mxu0 %v37
  %58 = vmatprep.subr.bf16.mxu0 0
  %59 = vmatpush1.bf16.msra.mxu0 %v36
  %60 = vmatprep.subr.bf16.mxu0 0
  %61 = vmatpush2.bf16.msra.mxu0 0
  %62 = vmatprep.subr.bf16.mxu0 0
  %63 = vmatpush2.bf16.msra.mxu0 0
  %64 = vmatprep.subr.bf16.mxu0 0
  %65 = vmatpush2.bf16.msra.mxu0 0
  %66 = vmatprep.subr.bf16.mxu0 0
  %67 = vmatpush2.bf16.msra.mxu0 0
  %68 = vmatprep.subr.bf16.mxu0 0
  %69 = vmatpush2.bf16.msra.mxu0 0
  %70 = vmatprep.subr.bf16.mxu0 0
  %71 = vmatpush2.bf16.msra.mxu0 0
  %72 = vmatprep.subr.bf16.mxu0 0
  %73 = vmatpush2.bf16.msra.mxu0 0
  %74 = vmatprep.subr.bf16.mxu0 0
  %75 = vmatpush2.bf16.msra.mxu0 0
  %76 = vmatprep.mubr.bf16.mxu0 0
  %77 = vmatmul.mubr.bf16.gmra.mxu0 %v42
  %v78 = vpop.f32.mrf.mxu0
  %v79 = vadd.f32 %v26, %v78
  %v80 = vpop.f32.mrf.mxu0
  %v81 = vpop.f32.mrf.mxu0
  %v82 = vpop.f32.mrf.mxu0
  %83 = vdwg.mxu0
  %84 = vst.msk [vmem:[%s3] sm:$0xff] %vm40, %v79
  // Predicated region
  $region14: #{_lambda_.44} parent=0 // pred_check
    _
  $region15: #{_lambda_.44} parent=0 // pred_check_branch
    %86 = sbr.rel (0) target = $region17
  $region16: #{_lambda_.44} parent=0 // pred_region
    _
  $region17: #{_lambda_.44} parent=0 // pred_fallthru
    _
  // Predicated region
  $region18: #{_lambda_.44} parent=0 // pred_check
    _
  $region19: #{_lambda_.44} parent=0 // pred_check_branch
    %88 = sbr.rel (0) target = $region21
  $region20: #{_lambda_.44} parent=0 // pred_region
    _
  $region21: #{_lambda_.44} parent=0 // pred_fallthru
    _

// kernel: _lambda_.43
$region0: #{_lambda_.43}
  #allocation0 [shape = 'u32[]', space=smem, size = 0x4, offset = 0x4, fixed_abs, tag = 'smem constant byte address 0x4 - core index']
  #allocation1 [shape = 'u32[144,128]{1,0:T(1,128)}', space=vmem, size = 0x12000, scoped, tag = 'internal scratch']
  %s0 = inlined_call_operand.vmem [shape: f32[2,8,32], index: 0, kind: input, shape index: {}]
  %s1 = inlined_call_operand.vmem [shape: bf16[3,32,32], index: 1, kind: input, shape index: {}]
  %s2 = inlined_call_operand.vmem [shape: f32[1,32], index: 2, kind: input, shape index: {}]
  %s3 = inlined_call_operand.vmem [shape: f32[2,4,32], index: 3, kind: output, shape index: {}]
  %s4 = sld [smem:[#allocation0]]
  $region45: #{_lambda_.43} parent=0
    _
  %s6 = ssub.s32 1, %s4
  %s7 = scalar_select 0, %s6, %s4
  loop: start=0, step=1, limit=4
  $region2: #{_lambda_.43} parent=0 // loop_pre_header
    _
  $region3: #{_lambda_.43} parent=0 // loop_header
    %s9 = sphi 0, %s13
    %p10 = scmp.ge.s32.totalorder %s9, 4
    %s19 = sphi 0, %s21
    %s22 = sphi 0, %s19
    %s23 = sphi 0, %s22
    %s39 = sphi 0, %s23
    %s43 = sphi 0, %s43
    %s45 = sphi 0, %s43
    %s46 = sphi 0, %s45
    %s60 = sphi 0, %s46
    %s64 = sphi 0, %s64
    %s66 = sphi 0, %s64
    %s67 = sphi 0, %s66
    %s81 = sphi 0, %s67
    %s87 = sphi 0, %s89
    %s90 = sphi 0, %s87
    %s91 = sphi 0, %s90
    %s107 = sphi 0, %s91
  $region4: #{_lambda_.43} parent=0 // loop_header_branch
    %12 = sbr.rel (%p10) target = $region8
  $region5: #{_lambda_.43} parent=0 // loop_body
    %s14 = ssub.s32 %s9, 1
    %s15 = ssub.s32 %s9, 2
    %s16 = sadd.s32 %s9, 1
    %s17 = ssub.s32 %s9, %s16
    %p18 = scmp.eq.s32.totalorder %s17, 0
    %s20 = sadd.s32 %s19, 1
    %s21 = scalar_select %p18, %s19, %s20
    %p24 = pneg %p18
    %p25 = scmp.eq.s32.totalorder %s9, 1
    %p26 = por %p24, %p25
    %p27 = scmp.ne.s32.totalorder %s19, %s22
    %p28 = scmp.eq.s32.totalorder %s9, 0
    %p29 = por %p27, %p28
    %p30 = scmp.ne.s32.totalorder %s19, %s22
    %p31 = scmp.eq.s32.totalorder %s14, 1
    %p32 = por %p30, %p31
    %p33 = scmp.ne.s32.totalorder %s22, %s23
    %p34 = scmp.eq.s32.totalorder %s14, 0
    %p35 = por %p33, %p34
    %p36 = scmp.ne.s32.totalorder %s22, %s23
    %p37 = scmp.eq.s32.totalorder %s15, 1
    %p38 = por %p36, %p37
    %p40 = scmp.ne.s32.totalorder %s23, %s39
    %p41 = scmp.eq.s32.totalorder %s15, 0
    %p42 = por %p40, %p41
    %s44 = sadd.s32 %s43, 1
    %p47 = scmp.eq.s32.totalorder %s9, 1
    %p48 = scmp.ne.s32.totalorder %s43, %s45
    %p49 = scmp.eq.s32.totalorder %s9, 0
    %p50 = por %p48, %p49
    %p51 = scmp.ne.s32.totalorder %s43, %s45
    %p52 = scmp.eq.s32.totalorder %s14, 1
    %p53 = por %p51, %p52
    %p54 = scmp.ne.s32.totalorder %s45, %s46
    %p55 = scmp.eq.s32.totalorder %s14, 0
    %p56 = por %p54, %p55
    %p57 = scmp.ne.s32.totalorder %s45, %s46
    %p58 = scmp.eq.s32.totalorder %s15, 1
    %p59 = por %p57, %p58
    %p61 = scmp.ne.s32.totalorder %s46, %s60
    %p62 = scmp.eq.s32.totalorder %s15, 0
    %p63 = por %p61, %p62
    %s65 = sadd.s32 %s64, 1
    %p68 = scmp.eq.s32.totalorder %s9, 1
    %p69 = scmp.ne.s32.totalorder %s64, %s66
    %p70 = scmp.eq.s32.totalorder %s9, 0
    %p71 = por %p69, %p70
    %p72 = scmp.ne.s32.totalorder %s64, %s66
    %p73 = scmp.eq.s32.totalorder %s14, 1
    %p74 = por %p72, %p73
    %p75 = scmp.ne.s32.totalorder %s66, %s67
    %p76 = scmp.eq.s32.totalorder %s14, 0
    %p77 = por %p75, %p76
    %p78 = scmp.ne.s32.totalorder %s66, %s67
    %p79 = scmp.eq.s32.totalorder %s15, 1
    %p80 = por %p78, %p79
    %p82 = scmp.ne.s32.totalorder %s67, %s81
    %p83 = scmp.eq.s32.totalorder %s15, 0
    %p84 = por %p82, %p83
    %s85 = ssub.s32 %s9, %s16
    %p86 = scmp.eq.s32.totalorder %s85, 0
    %s88 = sadd.s32 %s87, 1
    %s89 = scalar_select %p86, %s87, %s88
    %p92 = pneg %p86
    %p93 = scmp.eq.s32.totalorder %s9, 1
    %p94 = por %p92, %p93
    %p95 = scmp.ne.s32.totalorder %s87, %s90
    %p96 = scmp.eq.s32.totalorder %s9, 0
    %p97 = por %p95, %p96
    %p98 = scmp.ne.s32.totalorder %s87, %s90
    %p99 = scmp.eq.s32.totalorder %s14, 1
    %p100 = por %p98, %p99
    %p101 = scmp.ne.s32.totalorder %s90, %s91
    %p102 = scmp.eq.s32.totalorder %s14, 0
    %p103 = por %p101, %p102
    %p104 = scmp.ne.s32.totalorder %s90, %s91
    %p105 = scmp.eq.s32.totalorder %s15, 1
    %p106 = por %p104, %p105
    %p108 = scmp.ne.s32.totalorder %s91, %s107
    %p109 = scmp.eq.s32.totalorder %s15, 0
    %p110 = por %p108, %p109
    %p111 = scmp.le.s32.totalorder 1, %s9
    %p112 = scmp.lt.s32.totalorder %s9, 3
    %p113 = pnand %p111, %p112
    %p114 = pneg %p113
    // Predicated region
    $region9: #{_lambda_.43} parent=5 // pred_check
      _
    $region10: #{_lambda_.43} parent=5 // pred_check_branch
      %116 = sbr.rel (%p113) target = $region12
    $region11: #{_lambda_.43} parent=5 // pred_region
      %s117 = ssub.s32 %s9, 1
      // Predicated region
      $region13: #{_lambda_.43} parent=11 // pred_check
        %p118 = pneg %p56
      $region14: #{_lambda_.43} parent=11 // pred_check_branch
        %120 = sbr.rel (%p118) target = $region16
      $region15: #{_lambda_.43} parent=11 // pred_region
        _
      $region16: #{_lambda_.43} parent=11 // pred_fallthru
        _
      // Predicated region
      $region17: #{_lambda_.43} parent=11 // pred_check
        %p121 = pneg %p77
      $region18: #{_lambda_.43} parent=11 // pred_check_branch
        %123 = sbr.rel (%p121) target = $region20
      $region19: #{_lambda_.43} parent=11 // pred_region
        _
      $region20: #{_lambda_.43} parent=11 // pred_fallthru
        _
    $region12: #{_lambda_.43} parent=5 // pred_fallthru
      _
    %p124 = scmp.lt.s32.totalorder %s9, 2
    // Predicated region
    $region21: #{_lambda_.43} parent=5 // pred_check
      %p125 = pneg %p124
    $region22: #{_lambda_.43} parent=5 // pred_check_branch
      %127 = sbr.rel (%p125) target = $region24
    $region23: #{_lambda_.43} parent=5 // pred_region
      // Predicated region
      $region25: #{_lambda_.43} parent=23 // pred_check
        %p128 = pneg %p29
      $region26: #{_lambda_.43} parent=23 // pred_check_branch
        %130 = sbr.rel (%p128) target = $region28
      $region27: #{_lambda_.43} parent=23 // pred_region
        %p131 = scmp.lt.s32.totalorder %s9, 1
        %s132 = scalar_select %p131, %s9, 1
        %s133 = smul.addr %s132, 8
        %s134 = scalar_lea.vmem %s0, %s133
      $region28: #{_lambda_.43} parent=23 // pred_fallthru
        _
    $region24: #{_lambda_.43} parent=5 // pred_fallthru
      _
    %p135 = scmp.le.s32.totalorder 1, %s9
    %p136 = scmp.lt.s32.totalorder %s9, 3
    %p137 = pnand %p135, %p136
    %p138 = pneg %p137
    // Predicated region
    $region29: #{_lambda_.43} parent=5 // pred_check
      _
    $region30: #{_lambda_.43} parent=5 // pred_check_branch
      %140 = sbr.rel (%p137) target = $region32
    $region31: #{_lambda_.43} parent=5 // pred_region
      %s141 = ssub.s32 %s9, 1
      %p142 = scmp.lt.s32.totalorder %s14, 1
      %s143 = scalar_select %p142, %s14, 1
      %s144 = smul.addr %s143, 8
      %s145 = scalar_lea.vmem %s0, %s144
      %p146 = pneg %p35
      %p147 = pneg %p32
      %p148 = pneg %p56
      %p149 = pneg %p53
      %p150 = pneg %p77
      %p151 = pneg %p74
      %p152 = pneg %p103
      %p153 = pneg %p100
      %p154 = scmp.lt.s32.totalorder %s14, 1
      %s155 = scalar_select %p154, %s14, 1
      %s156 = smul.addr %s155, 4
      %s157 = scalar_lea.vmem %s3, %s156
      %p158 = scmp.lt.s32.totalorder %s14, 1
      %s159 = scalar_select %p158, %s14, 1
      %s160 = smul.addr %s159, 8
      %s161 = scalar_lea.vmem %s0, %s160
      %p162 = scmp.lt.s32.totalorder %s14, 1
      %s163 = scalar_select %p162, %s14, 1
      %s164 = smul.addr %s163, 4
      %s165 = scalar_lea.vmem %s3, %s164
      %v167 = vld [vmem:[%s161] sm:$0xff]
      %v168 = vrot.slane %v167, 7
      %v169 = vpack.c.bf16 %v168, %v168
      %v170 = vpack.c.bf16 %v167, %v167
      %v171 = vrot.slane %v167, 1
      %v172 = vpack.c.bf16 %v171, %v171
      %v173 = vld [vmem:[%s1] sm:$0xf]
      %v174 = vld [vmem:[%s1 + $0x4] sm:$0xf]
      %v175 = vld [vmem:[%s1 + $0x8] sm:$0xf]
      %v176 = vld [vmem:[%s1 + $0xc] sm:$0xf]
      %s177 = scalar_lea.vmem %s1, 16
      %v178 = vld [vmem:[%s177] sm:$0xf]
      %v179 = vld [vmem:[%s177 + $0x4] sm:$0xf]
      %v180 = vld [vmem:[%s177 + $0x8] sm:$0xf]
      %v181 = vld [vmem:[%s177 + $0xc] sm:$0xf]
      %v186 = vunpack.c.l.b16 %v178
      %v187 = vunpack.c.l.b16 %v179
      %v188 = vunpack.c.l.b16 %v180
      %v189 = vunpack.c.l.b16 %v181
      %v190 = vpack.c.b16 %v187, %v186
      %v191 = vpack.c.b16 %v189, %v188
      %vm194 = vcmask 261120
      %v196 = vsel %vm194, %v170, 0
      %198 = vmatprep.subr.bf16.mxu0 0
      %199 = vmatpush1.bf16.msra.mxu0 0
      %200 = vmatprep.subr.bf16.mxu0 0
      %201 = vmatpush1.bf16.msra.mxu0 0
      %202 = vmatprep.subr.bf16.mxu0 0
      %203 = vmatpush1.bf16.msra.mxu0 0
      %204 = vmatprep.subr.bf16.mxu0 0
      %205 = vmatpush1.bf16.msra.mxu0 0
      %206 = vmatprep.subr.bf16.mxu0 0
      %207 = vmatpush1.bf16.msra.mxu0 0
      %208 = vmatprep.subr.bf16.mxu0 0
      %209 = vmatpush1.bf16.msra.mxu0 0
      %210 = vmatprep.subr.bf16.mxu0 0
      %211 = vmatpush1.bf16.msra.mxu0 %v191
      %212 = vmatprep.subr.bf16.mxu0 0
      %213 = vmatpush1.bf16.msra.mxu0 %v190
      %214 = vmatprep.subr.bf16.mxu0 0
      %215 = vmatpush2.bf16.msra.mxu0 0
      %216 = vmatprep.subr.bf16.mxu0 0
      %217 = vmatpush2.bf16.msra.mxu0 0
      %218 = vmatprep.subr.bf16.mxu0 0
      %219 = vmatpush2.bf16.msra.mxu0 0
      %220 = vmatprep.subr.bf16.mxu0 0
      %221 = vmatpush2.bf16.msra.mxu0 0
      %222 = vmatprep.subr.bf16.mxu0 0
      %223 = vmatpush2.bf16.msra.mxu0 0
      %224 = vmatprep.subr.bf16.mxu0 0
      %225 = vmatpush2.bf16.msra.mxu0 0
      %226 = vmatprep.subr.bf16.mxu0 0
      %227 = vmatpush2.bf16.msra.mxu0 0
      %228 = vmatprep.subr.bf16.mxu0 0
      %229 = vmatpush2.bf16.msra.mxu0 0
      %230 = vmatprep.mubr.bf16.mxu0 0
      %231 = vmatmul.mubr.bf16.gmra.mxu0 %v196
      %v232 = vpop.f32.mrf.mxu0
      %v233 = vadd.f32 0.0, %v232
      %v234 = vpop.f32.mrf.mxu0
      %v235 = vpop.f32.mrf.mxu0
      %v236 = vpop.f32.mrf.mxu0
      %237 = vdwg.mxu0
      %v242 = vunpack.c.l.b16 %v173
      %v243 = vunpack.c.l.b16 %v174
      %v244 = vunpack.c.l.b16 %v175
      %v245 = vunpack.c.l.b16 %v176
      %v246 = vpack.c.b16 %v243, %v242
      %v247 = vpack.c.b16 %v245, %v244
      %v251 = vsel %vm194, %v169, 0
      %253 = vmatprep.subr.bf16.mxu0 0
      %254 = vmatpush1.bf16.msra.mxu0 0
      %255 = vmatprep.subr.bf16.mxu0 0
      %256 = vmatpush1.bf16.msra.mxu0 0
      %257 = vmatprep.subr.bf16.mxu0 0
      %258 = vmatpush1.bf16.msra.mxu0 0
      %259 = vmatprep.subr.bf16.mxu0 0
      %260 = vmatpush1.bf16.msra.mxu0 0
      %261 = vmatprep.subr.bf16.mxu0 0
      %262 = vmatpush1.bf16.msra.mxu0 0
      %263 = vmatprep.subr.bf16.mxu0 0
      %264 = vmatpush1.bf16.msra.mxu0 0
      %265 = vmatprep.subr.bf16.mxu0 0
      %266 = vmatpush1.bf16.msra.mxu0 %v247
      %267 = vmatprep.subr.bf16.mxu0 0
      %268 = vmatpush1.bf16.msra.mxu0 %v246
      %269 = vmatprep.subr.bf16.mxu0 0
      %270 = vmatpush2.bf16.msra.mxu0 0
      %271 = vmatprep.subr.bf16.mxu0 0
      %272 = vmatpush2.bf16.msra.mxu0 0
      %273 = vmatprep.subr.bf16.mxu0 0
      %274 = vmatpush2.bf16.msra.mxu0 0
      %275 = vmatprep.subr.bf16.mxu0 0
      %276 = vmatpush2.bf16.msra.mxu0 0
      %277 = vmatprep.subr.bf16.mxu0 0
      %278 = vmatpush2.bf16.msra.mxu0 0
      %279 = vmatprep.subr.bf16.mxu0 0
      %280 = vmatpush2.bf16.msra.mxu0 0
      %281 = vmatprep.subr.bf16.mxu0 0
      %282 = vmatpush2.bf16.msra.mxu0 0
      %283 = vmatprep.subr.bf16.mxu0 0
      %284 = vmatpush2.bf16.msra.mxu0 0
      %285 = vmatprep.mubr.bf16.mxu0 0
      %286 = vmatmul.mubr.bf16.gmra.mxu0 %v251
      %v287 = vpop.f32.mrf.mxu0
      %v288 = vadd.f32 %v233, %v287
      %v289 = vpop.f32.mrf.mxu0
      %v290 = vpop.f32.mrf.mxu0
      %v291 = vpop.f32.mrf.mxu0
      %292 = vdwg.mxu0
      %s293 = scalar_lea.vmem %s1, 32
      %v294 = vld [vmem:[%s293] sm:$0xf]
      %v295 = vld [vmem:[%s293 + $0x4] sm:$0xf]
      %v296 = vld [vmem:[%s293 + $0x8] sm:$0xf]
      %v297 = vld [vmem:[%s293 + $0xc] sm:$0xf]
      %v302 = vunpack.c.l.b16 %v294
      %v303 = vunpack.c.l.b16 %v295
      %v304 = vunpack.c.l.b16 %v296
      %v305 = vunpack.c.l.b16 %v297
      %v306 = vpack.c.b16 %v303, %v302
      %v307 = vpack.c.b16 %v305, %v304
      %v311 = vsel %vm194, %v172, 0
      %313 = vmatprep.subr.bf16.mxu0 0
      %314 = vmatpush1.bf16.msra.mxu0 0
      %315 = vmatprep.subr.bf16.mxu0 0
      %316 = vmatpush1.bf16.msra.mxu0 0
      %317 = vmatprep.subr.bf16.mxu0 0
      %318 = vmatpush1.bf16.msra.mxu0 0
      %319 = vmatprep.subr.bf16.mxu0 0
      %320 = vmatpush1.bf16.msra.mxu0 0
      %321 = vmatprep.subr.bf16.mxu0 0
      %322 = vmatpush1.bf16.msra.mxu0 0
      %323 = vmatprep.subr.bf16.mxu0 0
      %324 = vmatpush1.bf16.msra.mxu0 0
      %325 = vmatprep.subr.bf16.mxu0 0
      %326 = vmatpush1.bf16.msra.mxu0 %v307
      %327 = vmatprep.subr.bf16.mxu0 0
      %328 = vmatpush1.bf16.msra.mxu0 %v306
      %329 = vmatprep.subr.bf16.mxu0 0
      %330 = vmatpush2.bf16.msra.mxu0 0
      %331 = vmatprep.subr.bf16.mxu0 0
      %332 = vmatpush2.bf16.msra.mxu0 0
      %333 = vmatprep.subr.bf16.mxu0 0
      %334 = vmatpush2.bf16.msra.mxu0 0
      %335 = vmatprep.subr.bf16.mxu0 0
      %336 = vmatpush2.bf16.msra.mxu0 0
      %337 = vmatprep.subr.bf16.mxu0 0
      %338 = vmatpush2.bf16.msra.mxu0 0
      %339 = vmatprep.subr.bf16.mxu0 0
      %340 = vmatpush2.bf16.msra.mxu0 0
      %341 = vmatprep.subr.bf16.mxu0 0
      %342 = vmatpush2.bf16.msra.mxu0 0
      %343 = vmatprep.subr.bf16.mxu0 0
      %344 = vmatpush2.bf16.msra.mxu0 0
      %345 = vmatprep.mubr.bf16.mxu0 0
      %346 = vmatmul.mubr.bf16.gmra.mxu0 %v311
      %v347 = vpop.f32.mrf.mxu0
      %v348 = vadd.f32 0.0, %v347
      %v349 = vpop.f32.mrf.mxu0
      %v350 = vpop.f32.mrf.mxu0
      %v351 = vpop.f32.mrf.mxu0
      %352 = vdwg.mxu0
      %v353 = vadd.f32 %v288, %v348
      %v354 = vld [vmem:[%s2] sm:$0x1]
      %v356 = vlaneseq
      %v357 = vshrl.u32 %v356, 7
      %v358 = vsub.s32 0, %v357
      %v359 = vrot.slane %v354, %v358
      %v361 = vadd.f32 %v353, %v359
      %vm362 = vcmp.gt.f32.partialorder %v361, 0.0
      %v363 = vmul.f32 %v361, 1.442695
      %v364 = vpow.pop %v363
      %v365 = vsub.f32 %v364, 1.0
      %v366 = vsel %vm362, %v361, %v365
      %v367 = vlaneseq
      %v368 = vshrl.u32 %v367, 7
      %vm369 = vcmp.eq.s32.totalorder %v368, 0
      %v370 = vrot.slane %v366, 7
      %v371 = vsel %vm369, 1, 0
      %vm372 = vcmp.eq.s32.totalorder %v371, 1
      %v373 = vsel %vm372, -3e+38, %v370
      %vm374 = vcmp.eq.s32.totalorder %v368, 7
      %v375 = vrot.slane %v366, 1
      %v376 = vsel %vm374, 1, 0
      %vm377 = vcmp.eq.s32.totalorder %v376, 1
      %v378 = vsel %vm377, -3e+38, %v375
      %v379 = vmax.f32 %v366, %v373
      %v380 = vmax.f32 %v379, %v378
      %v381 = vlaneseq
      %v382 = vand.u32 %v381, 127
      %v383 = vmul.u32 %v368, 2
      %vm384 = vcmp.eq.s32.totalorder %v382, %v383
      %v385 = vsel %vm384, 1, 0
      %v386 = vcvt.s32.f32 %v385
      %vm387 = vcmask 64512
      %v389 = vsel %vm387, %v386, 0
      %391 = vmatprep.subr.mxu0 0.0
      %392 = vmatpush1.msra.mxu0 0.0
      %393 = vmatprep.subr.mxu0 0.0
      %394 = vmatpush1.msra.mxu0 0.0
      %395 = vmatprep.subr.mxu0 0.0
      %396 = vmatpush1.msra.mxu0 0.0
      %397 = vmatprep.subr.mxu0 0.0
      %398 = vmatpush1.msra.mxu0 0.0
      %399 = vmatprep.subr.mxu0 0.0
      %400 = vmatpush1.msra.mxu0 0.0
      %401 = vmatprep.subr.mxu0 0.0
      %402 = vmatpush1.msra.mxu0 0.0
      %403 = vmatprep.subr.mxu0 0.0
      %404 = vmatpush1.msra.mxu0 0.0
      %405 = vmatprep.subr.mxu0 0.0
      %406 = vmatpush1.msra.mxu0 0.0
      %407 = vmatprep.subr.mxu0 0.0
      %408 = vmatpush1.msra.mxu0 0.0
      %409 = vmatprep.subr.mxu0 0.0
      %410 = vmatpush1.msra.mxu0 0.0
      %411 = vmatprep.subr.mxu0 0.0
      %412 = vmatpush1.msra.mxu0 0.0
      %413 = vmatprep.subr.mxu0 0.0
      %414 = vmatpush1.msra.mxu0 0.0
      %415 = vmatprep.subr.mxu0 0.0
      %416 = vmatpush1.msra.mxu0 0.0
      %417 = vmatprep.subr.mxu0 0.0
      %418 = vmatpush1.msra.mxu0 0.0
      %419 = vmatprep.subr.mxu0 0.0
      %420 = vmatpush1.msra.mxu0 0.0
      %421 = vmatprep.subr.mxu0 0.0
      %422 = vmatpush1.msra.mxu0 %v380
      %423 = vmatprep.subr.mxu0 0.0
      %424 = vmatpush2.msra.mxu0 0.0
      %425 = vmatprep.subr.mxu0 0.0
      %426 = vmatpush2.msra.mxu0 0.0
      %427 = vmatprep.subr.mxu0 0.0
      %428 = vmatpush2.msra.mxu0 0.0
      %429 = vmatprep.subr.mxu0 0.0
      %430 = vmatpush2.msra.mxu0 0.0
      %431 = vmatprep.subr.mxu0 0.0
      %432 = vmatpush2.msra.mxu0 0.0
      %433 = vmatprep.subr.mxu0 0.0
      %434 = vmatpush2.msra.mxu0 0.0
      %435 = vmatprep.subr.mxu0 0.0
      %436 = vmatpush2.msra.mxu0 0.0
      %437 = vmatprep.subr.mxu0 0.0
      %438 = vmatpush2.msra.mxu0 0.0
      %439 = vmatprep.subr.mxu0 0.0
      %440 = vmatpush2.msra.mxu0 0.0
      %441 = vmatprep.subr.mxu0 0.0
      %442 = vmatpush2.msra.mxu0 0.0
      %443 = vmatprep.subr.mxu0 0.0
      %444 = vmatpush2.msra.mxu0 0.0
      %445 = vmatprep.subr.mxu0 0.0
      %446 = vmatpush2.msra.mxu0 0.0
      %447 = vmatprep.subr.mxu0 0.0
      %448 = vmatpush2.msra.mxu0 0.0
      %449 = vmatprep.subr.mxu0 0.0
      %450 = vmatpush2.msra.mxu0 0.0
      %451 = vmatprep.subr.mxu0 0.0
      %452 = vmatpush2.msra.mxu0 0.0
      %453 = vmatprep.subr.mxu0 0.0
      %454 = vmatpush2.msra.mxu0 0.0
      %455 = vmatprep.mubr.f32.mxu0 0.0
      %456 = vmatmul.mubr.f32.gmra.mxu0 %v389
      %v457 = vpop.f32.mrf.mxu0
      %v458 = vadd.f32 0.0, %v457
      %v459 = vpop.f32.mrf.mxu0
      %460 = vdwg.mxu0
      %vm461 = vcmask 257024
      %462 = vst.msk [vmem:[%s165] sm:$0xf] %vm461, %v458
      %p463 = scmp.lt.s32.totalorder %s14, 1
      %s464 = scalar_select %p463, %s14, 1
      %s465 = smul.addr %s464, 4
      %s466 = scalar_lea.vmem %s3, %s465
      // Predicated region
      $region33: #{_lambda_.43} parent=31 // pred_check
        %p467 = pneg %p100
      $region34: #{_lambda_.43} parent=31 // pred_check_branch
        %469 = sbr.rel (%p467) target = $region36
      $region35: #{_lambda_.43} parent=31 // pred_region
        _
      $region36: #{_lambda_.43} parent=31 // pred_fallthru
        _
    $region32: #{_lambda_.43} parent=5 // pred_fallthru
      _
    %p470 = scmp.le.s32.totalorder 2, %s9
    // Predicated region
    $region37: #{_lambda_.43} parent=5 // pred_check
      %p471 = pneg %p470
    $region38: #{_lambda_.43} parent=5 // pred_check_branch
      %473 = sbr.rel (%p471) target = $region40
    $region39: #{_lambda_.43} parent=5 // pred_region
      %s474 = ssub.s32 %s9, 2
      // Predicated region
      $region41: #{_lambda_.43} parent=39 // pred_check
        %p475 = pneg %p106
      $region42: #{_lambda_.43} parent=39 // pred_check_branch
        %477 = sbr.rel (%p475) target = $region44
      $region43: #{_lambda_.43} parent=39 // pred_region
        %p478 = scmp.lt.s32.totalorder %s15, 1
        %s479 = scalar_select %p478, %s15, 1
        %s480 = smul.addr %s479, 4
        %s481 = scalar_lea.vmem %s3, %s480
      $region44: #{_lambda_.43} parent=39 // pred_fallthru
        _
    $region40: #{_lambda_.43} parent=5 // pred_fallthru
      _
  $region6: #{_lambda_.43} parent=0 // loop_footer
    %s13 = sadd.s32 1, %s9
  $region7: #{_lambda_.43} parent=0 // loop_footer_branch
    %8 = sbr.rel target = $region3
  $region8: #{_lambda_.43} parent=0 // loop_exit
    _

// kernel: _lambda_.47
$region0: #{_lambda_.47}
  #allocation0 [shape = 'u32[]', space=smem, size = 0x4, offset = 0x4, fixed_abs, tag = 'smem constant byte address 0x4 - core index']
  #allocation1 [shape = 'u32[144,128]{1,0:T(1,128)}', space=vmem, size = 0x12000, scoped, tag = 'internal scratch']
  #allocation2 [shape = 'f32[4,4,1]{2,1,0:T(4,128)}', space=vmem, size = 0x2000, scoped, tag = 'scratch operand']
  #allocation3 [shape = 'f32[4,4,1]{2,1,0:T(4,128)}', space=vmem, size = 0x2000, scoped, tag = 'scratch operand']
  %s0 = inlined_call_operand.vmem [shape: f32[8,4,8], index: 0, kind: input, shape index: {}]
  %s1 = inlined_call_operand.vmem [shape: f32[8,4,8], index: 1, kind: input, shape index: {}]
  %s2 = inlined_call_operand.vmem [shape: f32[8,4,1], index: 2, kind: output, shape index: {}]
  %s3 = sld [smem:[#allocation0]]
  $region49: #{_lambda_.47} parent=0
    _
  %s5 = ssub.s32 1, %s3
  %s6 = scalar_select 0, %s5, %s3
  loop: start=0, step=1, limit=4
  $region2: #{_lambda_.47} parent=0 // loop_pre_header
    _
  $region3: #{_lambda_.47} parent=0 // loop_header
    %s8 = sphi 0, %s12
    %p9 = scmp.ge.s32.totalorder %s8, 4
    %s15 = sphi 0, %s27
    %s16 = sphi 0, %s23
    %s17 = sphi 0, %s15
    %s18 = sphi 0, %s16
    %s19 = sphi 0, %s17
    %s20 = sphi 0, %s18
    %s30 = sphi 0, %s32
    %s33 = sphi 0, %s30
    %s34 = sphi 0, %s33
    %s50 = sphi 0, %s34
    %s58 = sphi 0, %s60
    %s61 = sphi 0, %s58
    %s62 = sphi 0, %s61
    %s78 = sphi 0, %s62
    %s84 = sphi 0, %s86
    %s87 = sphi 0, %s84
    %s88 = sphi 0, %s87
    %s104 = sphi 0, %s88
  $region4: #{_lambda_.47} parent=0 // loop_header_branch
    %11 = sbr.rel (%p9) target = $region8
  $region5: #{_lambda_.47} parent=0 // loop_body
    %s13 = ssub.s32 %s8, 1
    %s14 = ssub.s32 %s8, 2
    %s21 = sadd.s32 1, %s16
    %p22 = scmp.ge.s32.totalorder %s21, 1
    %s23 = scalar_select %p22, 0, %s21
    %s24 = sadd.s32 1, %s15
    %s25 = scalar_select %p22, %s24, %s15
    %p26 = scmp.ge.s32.totalorder %s25, 2
    %s27 = scalar_select %p26, 0, %s25
    %s28 = ssub.s32 %s15, %s27
    %p29 = scmp.eq.s32.totalorder %s28, 0
    %s31 = sadd.s32 %s30, 1
    %s32 = scalar_select %p29, %s30, %s31
    %p35 = pneg %p29
    %p36 = scmp.eq.s32.totalorder %s8, 1
    %p37 = por %p35, %p36
    %p38 = scmp.ne.s32.totalorder %s30, %s33
    %p39 = scmp.eq.s32.totalorder %s8, 0
    %p40 = por %p38, %p39
    %p41 = scmp.ne.s32.totalorder %s30, %s33
    %p42 = scmp.eq.s32.totalorder %s13, 1
    %p43 = por %p41, %p42
    %p44 = scmp.ne.s32.totalorder %s33, %s34
    %p45 = scmp.eq.s32.totalorder %s13, 0
    %p46 = por %p44, %p45
    %p47 = scmp.ne.s32.totalorder %s33, %s34
    %p48 = scmp.eq.s32.totalorder %s14, 1
    %p49 = por %p47, %p48
    %p51 = scmp.ne.s32.totalorder %s34, %s50
    %p52 = scmp.eq.s32.totalorder %s14, 0
    %p53 = por %p51, %p52
    %s54 = ssub.s32 %s15, %s27
    %s55 = ssub.s32 %s16, %s23
    %s56 = sor.u32 %s54, %s55
    %p57 = scmp.eq.s32.totalorder %s56, 0
    %s59 = sadd.s32 %s58, 1
    %s60 = scalar_select %p57, %s58, %s59
    %p63 = pneg %p57
    %p64 = scmp.eq.s32.totalorder %s8, 1
    %p65 = por %p63, %p64
    %p66 = scmp.ne.s32.totalorder %s58, %s61
    %p67 = scmp.eq.s32.totalorder %s8, 0
    %p68 = por %p66, %p67
    %p69 = scmp.ne.s32.totalorder %s58, %s61
    %p70 = scmp.eq.s32.totalorder %s13, 1
    %p71 = por %p69, %p70
    %p72 = scmp.ne.s32.totalorder %s61, %s62
    %p73 = scmp.eq.s32.totalorder %s13, 0
    %p74 = por %p72, %p73
    %p75 = scmp.ne.s32.totalorder %s61, %s62
    %p76 = scmp.eq.s32.totalorder %s14, 1
    %p77 = por %p75, %p76
    %p79 = scmp.ne.s32.totalorder %s62, %s78
    %p80 = scmp.eq.s32.totalorder %s14, 0
    %p81 = por %p79, %p80
    %s82 = ssub.s32 %s15, %s27
    %p83 = scmp.eq.s32.totalorder %s82, 0
    %s85 = sadd.s32 %s84, 1
    %s86 = scalar_select %p83, %s84, %s85
    %p89 = pneg %p83
    %p90 = scmp.eq.s32.totalorder %s8, 1
    %p91 = por %p89, %p90
    %p92 = scmp.ne.s32.totalorder %s84, %s87
    %p93 = scmp.eq.s32.totalorder %s8, 0
    %p94 = por %p92, %p93
    %p95 = scmp.ne.s32.totalorder %s84, %s87
    %p96 = scmp.eq.s32.totalorder %s13, 1
    %p97 = por %p95, %p96
    %p98 = scmp.ne.s32.totalorder %s87, %s88
    %p99 = scmp.eq.s32.totalorder %s13, 0
    %p100 = por %p98, %p99
    %p101 = scmp.ne.s32.totalorder %s87, %s88
    %p102 = scmp.eq.s32.totalorder %s14, 1
    %p103 = por %p101, %p102
    %p105 = scmp.ne.s32.totalorder %s88, %s104
    %p106 = scmp.eq.s32.totalorder %s14, 0
    %p107 = por %p105, %p106
    %p108 = scmp.le.s32.totalorder 1, %s8
    %p109 = scmp.lt.s32.totalorder %s8, 3
    %p110 = pnand %p108, %p109
    %p111 = pneg %p110
    // Predicated region
    $region9: #{_lambda_.47} parent=5 // pred_check
      _
    $region10: #{_lambda_.47} parent=5 // pred_check_branch
      %113 = sbr.rel (%p110) target = $region12
    $region11: #{_lambda_.47} parent=5 // pred_region
      %s114 = ssub.s32 %s8, 1
    $region12: #{_lambda_.47} parent=5 // pred_fallthru
      _
    %p115 = scmp.lt.s32.totalorder %s8, 2
    // Predicated region
    $region13: #{_lambda_.47} parent=5 // pred_check
      %p116 = pneg %p115
    $region14: #{_lambda_.47} parent=5 // pred_check_branch
      %118 = sbr.rel (%p116) target = $region16
    $region15: #{_lambda_.47} parent=5 // pred_region
      // Predicated region
      $region17: #{_lambda_.47} parent=15 // pred_check
        %p119 = pneg %p40
      $region18: #{_lambda_.47} parent=15 // pred_check_branch
        %121 = sbr.rel (%p119) target = $region20
      $region19: #{_lambda_.47} parent=15 // pred_region
        %s122 = smul.u32 4, %s15
        %p123 = scmp.lt.s32.totalorder %s122, 7
        %s124 = scalar_select %p123, %s122, 7
        %s125 = smul.addr %s124, 4
        %s126 = scalar_lea.vmem %s0, %s125
        %s127 = smul.u32 4, %s15
      $region20: #{_lambda_.47} parent=15 // pred_fallthru
        _
      // Predicated region
      $region21: #{_lambda_.47} parent=15 // pred_check
        %p128 = pneg %p68
      $region22: #{_lambda_.47} parent=15 // pred_check_branch
        %130 = sbr.rel (%p128) target = $region24
      $region23: #{_lambda_.47} parent=15 // pred_region
        %s131 = smul.u32 4, %s15
        %p132 = scmp.lt.s32.totalorder %s131, 7
        %s133 = scalar_select %p132, %s131, 7
        %p134 = scmp.lt.s32.totalorder %s16, 0
        %s135 = scalar_select %p134, %s16, 0
        %s136 = sadd.s32 %s135, %s133
        %s137 = smul.addr %s136, 4
        %s138 = scalar_lea.vmem %s1, %s137
        %s139 = smul.u32 4, %s15
      $region24: #{_lambda_.47} parent=15 // pred_fallthru
        _
    $region16: #{_lambda_.47} parent=5 // pred_fallthru
      _
    %p140 = scmp.le.s32.totalorder 1, %s8
    %p141 = scmp.lt.s32.totalorder %s8, 3
    %p142 = pnand %p140, %p141
    %p143 = pneg %p142
    // Predicated region
    $region25: #{_lambda_.47} parent=5 // pred_check
      _
    $region26: #{_lambda_.47} parent=5 // pred_check_branch
      %145 = sbr.rel (%p142) target = $region28
    $region27: #{_lambda_.47} parent=5 // pred_region
      %s146 = ssub.s32 %s8, 1
      %s147 = smul.u32 4, %s17
      %p148 = scmp.lt.s32.totalorder %s147, 7
      %s149 = scalar_select %p148, %s147, 7
      %s150 = smul.addr %s149, 4
      %s151 = scalar_lea.vmem %s0, %s150
      %p152 = pneg %p46
      %p153 = pneg %p43
      %s154 = smul.u32 4, %s17
      %p155 = scmp.lt.s32.totalorder %s154, 7
      %s156 = scalar_select %p155, %s154, 7
      %p157 = scmp.lt.s32.totalorder %s18, 0
      %s158 = scalar_select %p157, %s18, 0
      %s159 = sadd.s32 %s158, %s156
      %s160 = smul.addr %s159, 4
      %s161 = scalar_lea.vmem %s1, %s160
      %p162 = pneg %p74
      %p163 = pneg %p71
      %p164 = pneg %p100
      %p165 = pneg %p97
      %s166 = smul.u32 4, %s17
      %p167 = scmp.lt.s32.totalorder %s166, 7
      %s168 = scalar_select %p167, %s166, 7
      %s169 = smul.addr %s168, 4
      %s170 = scalar_lea.vmem %s2, %s169
      %s171 = smul.u32 4, %s17
      %p172 = scmp.lt.s32.totalorder %s171, 7
      %s173 = scalar_select %p172, %s171, 7
      %s174 = smul.addr %s173, 4
      %s175 = scalar_lea.vmem %s0, %s174
      %s176 = smul.u32 4, %s17
      %s177 = smul.u32 4, %s17
      %p178 = scmp.lt.s32.totalorder %s177, 7
      %s179 = scalar_select %p178, %s177, 7
      %p180 = scmp.lt.s32.totalorder %s18, 0
      %s181 = scalar_select %p180, %s18, 0
      %s182 = sadd.s32 %s181, %s179
      %s183 = smul.addr %s182, 4
      %s184 = scalar_lea.vmem %s1, %s183
      %s185 = smul.u32 4, %s17
      %s186 = smul.u32 4, %s17
      %p187 = scmp.lt.s32.totalorder %s186, 7
      %s188 = scalar_select %p187, %s186, 7
      %s189 = smul.addr %s188, 4
      %s190 = scalar_lea.vmem %s2, %s189
      %s191 = smul.u32 4, %s17
      %p193 = scmp.eq.s32.totalorder %s18, 0
      // Predicated region
      $region29: #{_lambda_.47} parent=27 // pred_check
        %p194 = pneg %p193
      $region30: #{_lambda_.47} parent=27 // pred_check_branch
        %196 = sbr.rel (%p194) target = $region32
      $region31: #{_lambda_.47} parent=27 // pred_region
        %vm197 = vcmask 3072
        %198 = vst.msk [vmem:[#allocation2] sm:$0xf] %vm197, -inf
        %199 = vst.msk [vmem:[#allocation2 + $0x4] sm:$0xf] %vm197, -inf
        %200 = vst.msk [vmem:[#allocation2 + $0x8] sm:$0xf] %vm197, -inf
        %201 = vst.msk [vmem:[#allocation2 + $0xc] sm:$0xf] %vm197, -inf
        %202 = vst.msk [vmem:[#allocation3] sm:$0xf] %vm197, 0.0
        %203 = vst.msk [vmem:[#allocation3 + $0x4] sm:$0xf] %vm197, 0.0
        %204 = vst.msk [vmem:[#allocation3 + $0x8] sm:$0xf] %vm197, 0.0
        %205 = vst.msk [vmem:[#allocation3 + $0xc] sm:$0xf] %vm197, 0.0
      $region32: #{_lambda_.47} parent=27 // pred_fallthru
        _
      %v206 = vld [vmem:[%s175] sm:$0xf]
      %v207 = vld [vmem:[%s175 + $0x4] sm:$0xf]
      %v208 = vld [vmem:[%s175 + $0x8] sm:$0xf]
      %v209 = vld [vmem:[%s175 + $0xc] sm:$0xf]
      %v210 = vpack.c.bf16 %v206, %v206
      %v211 = vpack.c.bf16 %v207, %v207
      %v212 = vpack.c.bf16 %v208, %v208
      %v213 = vpack.c.bf16 %v209, %v209
      %v214 = vld [vmem:[%s184] sm:$0xf]
      %v215 = vld [vmem:[%s184 + $0x4] sm:$0xf]
      %v216 = vld [vmem:[%s184 + $0x8] sm:$0xf]
      %v217 = vld [vmem:[%s184 + $0xc] sm:$0xf]
      %v218 = vpack.c.bf16 %v214, %v214
      %v219 = vpack.c.bf16 %v215, %v215
      %v220 = vpack.c.bf16 %v216, %v216
      %v221 = vpack.c.bf16 %v217, %v217
      %vm222 = vcmask 64512
      %v224 = vsel %vm222, %v210, 0
      %v227 = vsel %vm222, %v218, 0
      %229 = vmatprep.subr.bf16.mxu0 0
      %230 = vmatpush1.bf16.xpose.msra.mxu0 0
      %231 = vmatprep.subr.bf16.mxu0 0
      %232 = vmatpush1.bf16.xpose.msra.mxu0 0
      %233 = vmatprep.subr.bf16.mxu0 0
      %234 = vmatpush1.bf16.xpose.msra.mxu0 0
      %235 = vmatprep.subr.bf16.mxu0 0
      %236 = vmatpush1.bf16.xpose.msra.mxu0 0
      %237 = vmatprep.subr.bf16.mxu0 0
      %238 = vmatpush1.bf16.xpose.msra.mxu0 0
      %239 = vmatprep.subr.bf16.mxu0 0
      %240 = vmatpush1.bf16.xpose.msra.mxu0 0
      %241 = vmatprep.subr.bf16.mxu0 0
      %242 = vmatpush1.bf16.xpose.msra.mxu0 0
      %243 = vmatprep.subr.bf16.mxu0 0
      %244 = vmatpush1.bf16.xpose.msra.mxu0 %v227
      %245 = vmatprep.subr.bf16.mxu0 0
      %246 = vmatpush2.bf16.xpose.msra.mxu0 0
      %247 = vmatprep.subr.bf16.mxu0 0
      %248 = vmatpush2.bf16.xpose.msra.mxu0 0
      %249 = vmatprep.subr.bf16.mxu0 0
      %250 = vmatpush2.bf16.xpose.msra.mxu0 0
      %251 = vmatprep.subr.bf16.mxu0 0
      %252 = vmatpush2.bf16.xpose.msra.mxu0 0
      %253 = vmatprep.subr.bf16.mxu0 0
      %254 = vmatpush2.bf16.xpose.msra.mxu0 0
      %255 = vmatprep.subr.bf16.mxu0 0
      %256 = vmatpush2.bf16.xpose.msra.mxu0 0
      %257 = vmatprep.subr.bf16.mxu0 0
      %258 = vmatpush2.bf16.xpose.msra.mxu0 0
      %259 = vmatprep.subr.bf16.mxu0 0
      %260 = vmatpush2.bf16.xpose.msra.mxu0 0
      %261 = vmatprep.mubr.bf16.mxu0 0
      %262 = vmatmul.mubr.bf16.gmra.mxu0 %v224
      %v263 = vpop.f32.mrf.mxu0
      %v264 = vadd.f32 0.0, %v263
      %v265 = vpop.f32.mrf.mxu0
      %v266 = vpop.f32.mrf.mxu0
      %v267 = vpop.f32.mrf.mxu0
      %268 = vdwg.mxu0
      %v270 = vsel %vm222, %v211, 0
      %v273 = vsel %vm222, %v219, 0
      %275 = vmatprep.subr.bf16.mxu0 0
      %276 = vmatpush1.bf16.xpose.msra.mxu0 0
      %277 = vmatprep.subr.bf16.mxu0 0
      %278 = vmatpush1.bf16.xpose.msra.mxu0 0
      %279 = vmatprep.subr.bf16.mxu0 0
      %280 = vmatpush1.bf16.xpose.msra.mxu0 0
      %281 = vmatprep.subr.bf16.mxu0 0
      %282 = vmatpush1.bf16.xpose.msra.mxu0 0
      %283 = vmatprep.subr.bf16.mxu0 0
      %284 = vmatpush1.bf16.xpose.msra.mxu0 0
      %285 = vmatprep.subr.bf16.mxu0 0
      %286 = vmatpush1.bf16.xpose.msra.mxu0 0
      %287 = vmatprep.subr.bf16.mxu0 0
      %288 = vmatpush1.bf16.xpose.msra.mxu0 0
      %289 = vmatprep.subr.bf16.mxu0 0
      %290 = vmatpush1.bf16.xpose.msra.mxu0 %v273
      %291 = vmatprep.subr.bf16.mxu0 0
      %292 = vmatpush2.bf16.xpose.msra.mxu0 0
      %293 = vmatprep.subr.bf16.mxu0 0
      %294 = vmatpush2.bf16.xpose.msra.mxu0 0
      %295 = vmatprep.subr.bf16.mxu0 0
      %296 = vmatpush2.bf16.xpose.msra.mxu0 0
      %297 = vmatprep.subr.bf16.mxu0 0
      %298 = vmatpush2.bf16.xpose.msra.mxu0 0
      %299 = vmatprep.subr.bf16.mxu0 0
      %300 = vmatpush2.bf16.xpose.msra.mxu0 0
      %301 = vmatprep.subr.bf16.mxu0 0
      %302 = vmatpush2.bf16.xpose.msra.mxu0 0
      %303 = vmatprep.subr.bf16.mxu0 0
      %304 = vmatpush2.bf16.xpose.msra.mxu0 0
      %305 = vmatprep.subr.bf16.mxu0 0
      %306 = vmatpush2.bf16.xpose.msra.mxu0 0
      %307 = vmatprep.mubr.bf16.mxu0 0
      %308 = vmatmul.mubr.bf16.gmra.mxu0 %v270
      %v309 = vpop.f32.mrf.mxu0
      %v310 = vadd.f32 0.0, %v309
      %v311 = vpop.f32.mrf.mxu0
      %v312 = vpop.f32.mrf.mxu0
      %v313 = vpop.f32.mrf.mxu0
      %314 = vdwg.mxu0
      %v316 = vsel %vm222, %v212, 0
      %v319 = vsel %vm222, %v220, 0
      %321 = vmatprep.subr.bf16.mxu0 0
      %322 = vmatpush1.bf16.xpose.msra.mxu0 0
      %323 = vmatprep.subr.bf16.mxu0 0
      %324 = vmatpush1.bf16.xpose.msra.mxu0 0
      %325 = vmatprep.subr.bf16.mxu0 0
      %326 = vmatpush1.bf16.xpose.msra.mxu0 0
      %327 = vmatprep.subr.bf16.mxu0 0
      %328 = vmatpush1.bf16.xpose.msra.mxu0 0
      %329 = vmatprep.subr.bf16.mxu0 0
      %330 = vmatpush1.bf16.xpose.msra.mxu0 0
      %331 = vmatprep.subr.bf16.mxu0 0
      %332 = vmatpush1.bf16.xpose.msra.mxu0 0
      %333 = vmatprep.subr.bf16.mxu0 0
      %334 = vmatpush1.bf16.xpose.msra.mxu0 0
      %335 = vmatprep.subr.bf16.mxu0 0
      %336 = vmatpush1.bf16.xpose.msra.mxu0 %v319
      %337 = vmatprep.subr.bf16.mxu0 0
      %338 = vmatpush2.bf16.xpose.msra.mxu0 0
      %339 = vmatprep.subr.bf16.mxu0 0
      %340 = vmatpush2.bf16.xpose.msra.mxu0 0
      %341 = vmatprep.subr.bf16.mxu0 0
      %342 = vmatpush2.bf16.xpose.msra.mxu0 0
      %343 = vmatprep.subr.bf16.mxu0 0
      %344 = vmatpush2.bf16.xpose.msra.mxu0 0
      %345 = vmatprep.subr.bf16.mxu0 0
      %346 = vmatpush2.bf16.xpose.msra.mxu0 0
      %347 = vmatprep.subr.bf16.mxu0 0
      %348 = vmatpush2.bf16.xpose.msra.mxu0 0
      %349 = vmatprep.subr.bf16.mxu0 0
      %350 = vmatpush2.bf16.xpose.msra.mxu0 0
      %351 = vmatprep.subr.bf16.mxu0 0
      %352 = vmatpush2.bf16.xpose.msra.mxu0 0
      %353 = vmatprep.mubr.bf16.mxu0 0
      %354 = vmatmul.mubr.bf16.gmra.mxu0 %v316
      %v355 = vpop.f32.mrf.mxu0
      %v356 = vadd.f32 0.0, %v355
      %v357 = vpop.f32.mrf.mxu0
      %v358 = vpop.f32.mrf.mxu0
      %v359 = vpop.f32.mrf.mxu0
      %360 = vdwg.mxu0
      %v362 = vsel %vm222, %v213, 0
      %v365 = vsel %vm222, %v221, 0
      %367 = vmatprep.subr.bf16.mxu0 0
      %368 = vmatpush1.bf16.xpose.msra.mxu0 0
      %369 = vmatprep.subr.bf16.mxu0 0
      %370 = vmatpush1.bf16.xpose.msra.mxu0 0
      %371 = vmatprep.subr.bf16.mxu0 0
      %372 = vmatpush1.bf16.xpose.msra.mxu0 0
      %373 = vmatprep.subr.bf16.mxu0 0
      %374 = vmatpush1.bf16.xpose.msra.mxu0 0
      %375 = vmatprep.subr.bf16.mxu0 0
      %376 = vmatpush1.bf16.xpose.msra.mxu0 0
      %377 = vmatprep.subr.bf16.mxu0 0
      %378 = vmatpush1.bf16.xpose.msra.mxu0 0
      %379 = vmatprep.subr.bf16.mxu0 0
      %380 = vmatpush1.bf16.xpose.msra.mxu0 0
      %381 = vmatprep.subr.bf16.mxu0 0
      %382 = vmatpush1.bf16.xpose.msra.mxu0 %v365
      %383 = vmatprep.subr.bf16.mxu0 0
      %384 = vmatpush2.bf16.xpose.msra.mxu0 0
      %385 = vmatprep.subr.bf16.mxu0 0
      %386 = vmatpush2.bf16.xpose.msra.mxu0 0
      %387 = vmatprep.subr.bf16.mxu0 0
      %388 = vmatpush2.bf16.xpose.msra.mxu0 0
      %389 = vmatprep.subr.bf16.mxu0 0
      %390 = vmatpush2.bf16.xpose.msra.mxu0 0
      %391 = vmatprep.subr.bf16.mxu0 0
      %392 = vmatpush2.bf16.xpose.msra.mxu0 0
      %393 = vmatprep.subr.bf16.mxu0 0
      %394 = vmatpush2.bf16.xpose.msra.mxu0 0
      %395 = vmatprep.subr.bf16.mxu0 0
      %396 = vmatpush2.bf16.xpose.msra.mxu0 0
      %397 = vmatprep.subr.bf16.mxu0 0
      %398 = vmatpush2.bf16.xpose.msra.mxu0 0
      %399 = vmatprep.mubr.bf16.mxu0 0
      %400 = vmatmul.mubr.bf16.gmra.mxu0 %v362
      %v401 = vpop.f32.mrf.mxu0
      %v402 = vadd.f32 0.0, %v401
      %v403 = vpop.f32.mrf.mxu0
      %v404 = vpop.f32.mrf.mxu0
      %v405 = vpop.f32.mrf.mxu0
      %406 = vdwg.mxu0
      %v407 = vld [vmem:[#allocation2] sm:$0xf]
      %v408 = vld [vmem:[#allocation2 + $0x4] sm:$0xf]
      %v409 = vld [vmem:[#allocation2 + $0x8] sm:$0xf]
      %v410 = vld [vmem:[#allocation2 + $0xc] sm:$0xf]
      %vm411 = vcmask 27648
      %v412 = vsel %vm411, %v264, -inf
      %413 = vmax.xlane.f32.xlu0 %v412
      %v414 = vpop.xlane.xlu0 %413
      %v415 = vsel %vm411, %v310, -inf
      %416 = vmax.xlane.f32.xlu0 %v415
      %v417 = vpop.xlane.xlu0 %416
      %v418 = vsel %vm411, %v356, -inf
      %419 = vmax.xlane.f32.xlu0 %v418
      %v420 = vpop.xlane.xlu0 %419
      %v421 = vsel %vm411, %v402, -inf
      %422 = vmax.xlane.f32.xlu0 %v421
      %v423 = vpop.xlane.xlu0 %422
      %v424 = vmax.f32 %v407, %v414
      %v425 = vmax.f32 %v408, %v417
      %v426 = vmax.f32 %v409, %v420
      %v427 = vmax.f32 %v410, %v423
      %vm428 = vcmask 3072
      %429 = vst.msk [vmem:[#allocation2] sm:$0xf] %vm428, %v424
      %430 = vst.msk [vmem:[#allocation2 + $0x4] sm:$0xf] %vm428, %v425
      %431 = vst.msk [vmem:[#allocation2 + $0x8] sm:$0xf] %vm428, %v426
      %432 = vst.msk [vmem:[#allocation2 + $0xc] sm:$0xf] %vm428, %v427
      %v433 = vld [vmem:[#allocation3] sm:$0xf]
      %v434 = vld [vmem:[#allocation3 + $0x4] sm:$0xf]
      %v435 = vld [vmem:[#allocation3 + $0x8] sm:$0xf]
      %v436 = vld [vmem:[#allocation3 + $0xc] sm:$0xf]
      %v437 = vsel %vm411, %v264, 0.0
      %438 = vadd.xlane.f32.xlu0 %v437
      %v439 = vpop.xlane.xlu0 %438
      %v440 = vsel %vm411, %v310, 0.0
      %441 = vadd.xlane.f32.xlu0 %v440
      %v442 = vpop.xlane.xlu0 %441
      %v443 = vsel %vm411, %v356, 0.0
      %444 = vadd.xlane.f32.xlu0 %v443
      %v445 = vpop.xlane.xlu0 %444
      %v446 = vsel %vm411, %v402, 0.0
      %447 = vadd.xlane.f32.xlu0 %v446
      %v448 = vpop.xlane.xlu0 %447
      %v449 = vadd.f32 %v433, %v439
      %v450 = vadd.f32 %v434, %v442
      %v451 = vadd.f32 %v435, %v445
      %v452 = vadd.f32 %v436, %v448
      %453 = vst.msk [vmem:[#allocation3] sm:$0xf] %vm428, %v449
      %454 = vst.msk [vmem:[#allocation3 + $0x4] sm:$0xf] %vm428, %v450
      %455 = vst.msk [vmem:[#allocation3 + $0x8] sm:$0xf] %vm428, %v451
      %456 = vst.msk [vmem:[#allocation3 + $0xc] sm:$0xf] %vm428, %v452
      // Predicated region
      $region33: #{_lambda_.47} parent=27 // pred_check
        %p457 = pneg %p193
      $region34: #{_lambda_.47} parent=27 // pred_check_branch
        %459 = sbr.rel (%p457) target = $region36
      $region35: #{_lambda_.47} parent=27 // pred_region
        %v460 = vld [vmem:[#allocation2] sm:$0xf]
        %v461 = vld [vmem:[#allocation2 + $0x4] sm:$0xf]
        %v462 = vld [vmem:[#allocation2 + $0x8] sm:$0xf]
        %v463 = vld [vmem:[#allocation2 + $0xc] sm:$0xf]
        %v464 = vld [vmem:[#allocation3] sm:$0xf]
        %v465 = vld [vmem:[#allocation3 + $0x4] sm:$0xf]
        %v466 = vld [vmem:[#allocation3 + $0x8] sm:$0xf]
        %v467 = vld [vmem:[#allocation3 + $0xc] sm:$0xf]
        %v468 = vmul.f32 %v464, 0.25
        %v469 = vmul.f32 %v465, 0.25
        %v470 = vmul.f32 %v466, 0.25
        %v471 = vmul.f32 %v467, 0.25
        %v472 = vsub.f32 %v460, %v468
        %v473 = vsub.f32 %v461, %v469
        %v474 = vsub.f32 %v462, %v470
        %v475 = vsub.f32 %v463, %v471
        %476 = vst.msk [vmem:[%s190] sm:$0xf] %vm428, %v472
        %477 = vst.msk [vmem:[%s190 + $0x4] sm:$0xf] %vm428, %v473
        %478 = vst.msk [vmem:[%s190 + $0x8] sm:$0xf] %vm428, %v474
        %479 = vst.msk [vmem:[%s190 + $0xc] sm:$0xf] %vm428, %v475
      $region36: #{_lambda_.47} parent=27 // pred_fallthru
        _
      %s480 = smul.u32 4, %s17
      %p481 = scmp.lt.s32.totalorder %s480, 7
      %s482 = scalar_select %p481, %s480, 7
      %s483 = smul.addr %s482, 4
      %s484 = scalar_lea.vmem %s2, %s483
      // Predicated region
      $region37: #{_lambda_.47} parent=27 // pred_check
        %p485 = pneg %p97
      $region38: #{_lambda_.47} parent=27 // pred_check_branch
        %487 = sbr.rel (%p485) target = $region40
      $region39: #{_lambda_.47} parent=27 // pred_region
        %s488 = smul.u32 4, %s17
      $region40: #{_lambda_.47} parent=27 // pred_fallthru
        _
    $region28: #{_lambda_.47} parent=5 // pred_fallthru
      _
    %p489 = scmp.le.s32.totalorder 2, %s8
    // Predicated region
    $region41: #{_lambda_.47} parent=5 // pred_check
      %p490 = pneg %p489
    $region42: #{_lambda_.47} parent=5 // pred_check_branch
      %492 = sbr.rel (%p490) target = $region44
    $region43: #{_lambda_.47} parent=5 // pred_region
      %s493 = ssub.s32 %s8, 2
      // Predicated region
      $region45: #{_lambda_.47} parent=43 // pred_check
        %p494 = pneg %p103
      $region46: #{_lambda_.47} parent=43 // pred_check_branch
        %496 = sbr.rel (%p494) target = $region48
      $region47: #{_lambda_.47} parent=43 // pred_region
        %s497 = smul.u32 4, %s19
        %p498 = scmp.lt.s32.totalorder %s497, 7
        %s499 = scalar_select %p498, %s497, 7
        %s500 = smul.addr %s499, 4
        %s501 = scalar_lea.vmem %s2, %s500
      $region48: #{_lambda_.47} parent=43 // pred_fallthru
        _
    $region44: #{_lambda_.47} parent=5 // pred_fallthru
      _
  $region6: #{_lambda_.47} parent=0 // loop_footer
    %s12 = sadd.s32 1, %s8
  $region7: #{_lambda_.47} parent=0 // loop_footer_branch
    %7 = sbr.rel target = $region3
  $region8: #{_lambda_.47} parent=0 // loop_exit
    _

// kernel: _lambda_.48
$region0: #{_lambda_.48}
  #allocation0 [shape = 'u32[]', space=smem, size = 0x4, offset = 0x4, fixed_abs, tag = 'smem constant byte address 0x4 - core index']
  #allocation1 [shape = 'u32[144,128]{1,0:T(1,128)}', space=vmem, size = 0x12000, scoped, tag = 'internal scratch']
  #allocation2 [shape = 'f32[4,4,1]{2,1,0:T(4,128)}', space=vmem, size = 0x2000, scoped, tag = 'scratch operand']
  #allocation3 [shape = 'f32[4,4,1]{2,1,0:T(4,128)}', space=vmem, size = 0x2000, scoped, tag = 'scratch operand']
  #allocation4 [shape = 'f32[4,4,8]{2,1,0:T(4,128)}', space=vmem, size = 0x2000, scoped, tag = 'scratch operand']
  %s0 = inlined_call_operand.vmem [shape: f32[8,4,8], index: 0, kind: input, shape index: {}]
  %s1 = inlined_call_operand.vmem [shape: f32[8,4,8], index: 1, kind: input, shape index: {}]
  %s2 = inlined_call_operand.vmem [shape: f32[8,4,8], index: 2, kind: input, shape index: {}]
  %s3 = inlined_call_operand.vmem [shape: f32[8,4,8], index: 3, kind: output, shape index: {}]
  %s4 = sld [smem:[#allocation0]]
  $region53: #{_lambda_.48} parent=0
    _
  %s6 = ssub.s32 1, %s4
  %s7 = scalar_select 0, %s6, %s4
  loop: start=0, step=1, limit=4
  $region2: #{_lambda_.48} parent=0 // loop_pre_header
    _
  $region3: #{_lambda_.48} parent=0 // loop_header
    %s9 = sphi 0, %s13
    %p10 = scmp.ge.s32.totalorder %s9, 4
    %s16 = sphi 0, %s28
    %s17 = sphi 0, %s24
    %s18 = sphi 0, %s16
    %s19 = sphi 0, %s17
    %s20 = sphi 0, %s18
    %s21 = sphi 0, %s19
    %s31 = sphi 0, %s33
    %s34 = sphi 0, %s31
    %s35 = sphi 0, %s34
    %s51 = sphi 0, %s35
    %s59 = sphi 0, %s61
    %s62 = sphi 0, %s59
    %s63 = sphi 0, %s62
    %s79 = sphi 0, %s63
    %s87 = sphi 0, %s89
    %s90 = sphi 0, %s87
    %s91 = sphi 0, %s90
    %s107 = sphi 0, %s91
    %s113 = sphi 0, %s115
    %s116 = sphi 0, %s113
    %s117 = sphi 0, %s116
    %s133 = sphi 0, %s117
  $region4: #{_lambda_.48} parent=0 // loop_header_branch
    %12 = sbr.rel (%p10) target = $region8
  $region5: #{_lambda_.48} parent=0 // loop_body
    %s14 = ssub.s32 %s9, 1
    %s15 = ssub.s32 %s9, 2
    %s22 = sadd.s32 1, %s17
    %p23 = scmp.ge.s32.totalorder %s22, 1
    %s24 = scalar_select %p23, 0, %s22
    %s25 = sadd.s32 1, %s16
    %s26 = scalar_select %p23, %s25, %s16
    %p27 = scmp.ge.s32.totalorder %s26, 2
    %s28 = scalar_select %p27, 0, %s26
    %s29 = ssub.s32 %s16, %s28
    %p30 = scmp.eq.s32.totalorder %s29, 0
    %s32 = sadd.s32 %s31, 1
    %s33 = scalar_select %p30, %s31, %s32
    %p36 = pneg %p30
    %p37 = scmp.eq.s32.totalorder %s9, 1
    %p38 = por %p36, %p37
    %p39 = scmp.ne.s32.totalorder %s31, %s34
    %p40 = scmp.eq.s32.totalorder %s9, 0
    %p41 = por %p39, %p40
    %p42 = scmp.ne.s32.totalorder %s31, %s34
    %p43 = scmp.eq.s32.totalorder %s14, 1
    %p44 = por %p42, %p43
    %p45 = scmp.ne.s32.totalorder %s34, %s35
    %p46 = scmp.eq.s32.totalorder %s14, 0
    %p47 = por %p45, %p46
    %p48 = scmp.ne.s32.totalorder %s34, %s35
    %p49 = scmp.eq.s32.totalorder %s15, 1
    %p50 = por %p48, %p49
    %p52 = scmp.ne.s32.totalorder %s35, %s51
    %p53 = scmp.eq.s32.totalorder %s15, 0
    %p54 = por %p52, %p53
    %s55 = ssub.s32 %s16, %s28
    %s56 = ssub.s32 %s17, %s24
    %s57 = sor.u32 %s55, %s56
    %p58 = scmp.eq.s32.totalorder %s57, 0
    %s60 = sadd.s32 %s59, 1
    %s61 = scalar_select %p58, %s59, %s60
    %p64 = pneg %p58
    %p65 = scmp.eq.s32.totalorder %s9, 1
    %p66 = por %p64, %p65
    %p67 = scmp.ne.s32.totalorder %s59, %s62
    %p68 = scmp.eq.s32.totalorder %s9, 0
    %p69 = por %p67, %p68
    %p70 = scmp.ne.s32.totalorder %s59, %s62
    %p71 = scmp.eq.s32.totalorder %s14, 1
    %p72 = por %p70, %p71
    %p73 = scmp.ne.s32.totalorder %s62, %s63
    %p74 = scmp.eq.s32.totalorder %s14, 0
    %p75 = por %p73, %p74
    %p76 = scmp.ne.s32.totalorder %s62, %s63
    %p77 = scmp.eq.s32.totalorder %s15, 1
    %p78 = por %p76, %p77
    %p80 = scmp.ne.s32.totalorder %s63, %s79
    %p81 = scmp.eq.s32.totalorder %s15, 0
    %p82 = por %p80, %p81
    %s83 = ssub.s32 %s16, %s28
    %s84 = ssub.s32 %s17, %s24
    %s85 = sor.u32 %s83, %s84
    %p86 = scmp.eq.s32.totalorder %s85, 0
    %s88 = sadd.s32 %s87, 1
    %s89 = scalar_select %p86, %s87, %s88
    %p92 = pneg %p86
    %p93 = scmp.eq.s32.totalorder %s9, 1
    %p94 = por %p92, %p93
    %p95 = scmp.ne.s32.totalorder %s87, %s90
    %p96 = scmp.eq.s32.totalorder %s9, 0
    %p97 = por %p95, %p96
    %p98 = scmp.ne.s32.totalorder %s87, %s90
    %p99 = scmp.eq.s32.totalorder %s14, 1
    %p100 = por %p98, %p99
    %p101 = scmp.ne.s32.totalorder %s90, %s91
    %p102 = scmp.eq.s32.totalorder %s14, 0
    %p103 = por %p101, %p102
    %p104 = scmp.ne.s32.totalorder %s90, %s91
    %p105 = scmp.eq.s32.totalorder %s15, 1
    %p106 = por %p104, %p105
    %p108 = scmp.ne.s32.totalorder %s91, %s107
    %p109 = scmp.eq.s32.totalorder %s15, 0
    %p110 = por %p108, %p109
    %s111 = ssub.s32 %s16, %s28
    %p112 = scmp.eq.s32.totalorder %s111, 0
    %s114 = sadd.s32 %s113, 1
    %s115 = scalar_select %p112, %s113, %s114
    %p118 = pneg %p112
    %p119 = scmp.eq.s32.totalorder %s9, 1
    %p120 = por %p118, %p119
    %p121 = scmp.ne.s32.totalorder %s113, %s116
    %p122 = scmp.eq.s32.totalorder %s9, 0
    %p123 = por %p121, %p122
    %p124 = scmp.ne.s32.totalorder %s113, %s116
    %p125 = scmp.eq.s32.totalorder %s14, 1
    %p126 = por %p124, %p125
    %p127 = scmp.ne.s32.totalorder %s116, %s117
    %p128 = scmp.eq.s32.totalorder %s14, 0
    %p129 = por %p127, %p128
    %p130 = scmp.ne.s32.totalorder %s116, %s117
    %p131 = scmp.eq.s32.totalorder %s15, 1
    %p132 = por %p130, %p131
    %p134 = scmp.ne.s32.totalorder %s117, %s133
    %p135 = scmp.eq.s32.totalorder %s15, 0
    %p136 = por %p134, %p135
    %p137 = scmp.le.s32.totalorder 1, %s9
    %p138 = scmp.lt.s32.totalorder %s9, 3
    %p139 = pnand %p137, %p138
    %p140 = pneg %p139
    // Predicated region
    $region9: #{_lambda_.48} parent=5 // pred_check
      _
    $region10: #{_lambda_.48} parent=5 // pred_check_branch
      %142 = sbr.rel (%p139) target = $region12
    $region11: #{_lambda_.48} parent=5 // pred_region
      %s143 = ssub.s32 %s9, 1
    $region12: #{_lambda_.48} parent=5 // pred_fallthru
      _
    %p144 = scmp.lt.s32.totalorder %s9, 2
    // Predicated region
    $region13: #{_lambda_.48} parent=5 // pred_check
      %p145 = pneg %p144
    $region14: #{_lambda_.48} parent=5 // pred_check_branch
      %147 = sbr.rel (%p145) target = $region16
    $region15: #{_lambda_.48} parent=5 // pred_region
      // Predicated region
      $region17: #{_lambda_.48} parent=15 // pred_check
        %p148 = pneg %p41
      $region18: #{_lambda_.48} parent=15 // pred_check_branch
        %150 = sbr.rel (%p148) target = $region20
      $region19: #{_lambda_.48} parent=15 // pred_region
        %s151 = smul.u32 4, %s16
        %p152 = scmp.lt.s32.totalorder %s151, 7
        %s153 = scalar_select %p152, %s151, 7
        %s154 = smul.addr %s153, 4
        %s155 = scalar_lea.vmem %s0, %s154
        %s156 = smul.u32 4, %s16
      $region20: #{_lambda_.48} parent=15 // pred_fallthru
        _
      // Predicated region
      $region21: #{_lambda_.48} parent=15 // pred_check
        %p157 = pneg %p69
      $region22: #{_lambda_.48} parent=15 // pred_check_branch
        %159 = sbr.rel (%p157) target = $region24
      $region23: #{_lambda_.48} parent=15 // pred_region
        %s160 = smul.u32 4, %s16
        %p161 = scmp.lt.s32.totalorder %s160, 7
        %s162 = scalar_select %p161, %s160, 7
        %p163 = scmp.lt.s32.totalorder %s17, 0
        %s164 = scalar_select %p163, %s17, 0
        %s165 = sadd.s32 %s164, %s162
        %s166 = smul.addr %s165, 4
        %s167 = scalar_lea.vmem %s1, %s166
        %s168 = smul.u32 4, %s16
      $region24: #{_lambda_.48} parent=15 // pred_fallthru
        _
      // Predicated region
      $region25: #{_lambda_.48} parent=15 // pred_check
        %p169 = pneg %p97
      $region26: #{_lambda_.48} parent=15 // pred_check_branch
        %171 = sbr.rel (%p169) target = $region28
      $region27: #{_lambda_.48} parent=15 // pred_region
        %s172 = smul.u32 4, %s16
        %p173 = scmp.lt.s32.totalorder %s172, 7
        %s174 = scalar_select %p173, %s172, 7
        %p175 = scmp.lt.s32.totalorder %s17, 0
        %s176 = scalar_select %p175, %s17, 0
        %s177 = sadd.s32 %s176, %s174
        %s178 = smul.addr %s177, 4
        %s179 = scalar_lea.vmem %s2, %s178
        %s180 = smul.u32 4, %s16
      $region28: #{_lambda_.48} parent=15 // pred_fallthru
        _
    $region16: #{_lambda_.48} parent=5 // pred_fallthru
      _
    %p181 = scmp.le.s32.totalorder 1, %s9
    %p182 = scmp.lt.s32.totalorder %s9, 3
    %p183 = pnand %p181, %p182
    %p184 = pneg %p183
    // Predicated region
    $region29: #{_lambda_.48} parent=5 // pred_check
      _
    $region30: #{_lambda_.48} parent=5 // pred_check_branch
      %186 = sbr.rel (%p183) target = $region32
    $region31: #{_lambda_.48} parent=5 // pred_region
      %s187 = ssub.s32 %s9, 1
      %s188 = smul.u32 4, %s18
      %p189 = scmp.lt.s32.totalorder %s188, 7
      %s190 = scalar_select %p189, %s188, 7
      %s191 = smul.addr %s190, 4
      %s192 = scalar_lea.vmem %s0, %s191
      %p193 = pneg %p47
      %p194 = pneg %p44
      %s195 = smul.u32 4, %s18
      %p196 = scmp.lt.s32.totalorder %s195, 7
      %s197 = scalar_select %p196, %s195, 7
      %p198 = scmp.lt.s32.totalorder %s19, 0
      %s199 = scalar_select %p198, %s19, 0
      %s200 = sadd.s32 %s199, %s197
      %s201 = smul.addr %s200, 4
      %s202 = scalar_lea.vmem %s1, %s201
      %p203 = pneg %p75
      %p204 = pneg %p72
      %s205 = smul.u32 4, %s18
      %p206 = scmp.lt.s32.totalorder %s205, 7
      %s207 = scalar_select %p206, %s205, 7
      %p208 = scmp.lt.s32.totalorder %s19, 0
      %s209 = scalar_select %p208, %s19, 0
      %s210 = sadd.s32 %s209, %s207
      %s211 = smul.addr %s210, 4
      %s212 = scalar_lea.vmem %s2, %s211
      %p213 = pneg %p103
      %p214 = pneg %p100
      %p215 = pneg %p129
      %p216 = pneg %p126
      %s217 = smul.u32 4, %s18
      %p218 = scmp.lt.s32.totalorder %s217, 7
      %s219 = scalar_select %p218, %s217, 7
      %s220 = smul.addr %s219, 4
      %s221 = scalar_lea.vmem %s3, %s220
      %s222 = smul.u32 4, %s18
      %p223 = scmp.lt.s32.totalorder %s222, 7
      %s224 = scalar_select %p223, %s222, 7
      %s225 = smul.addr %s224, 4
      %s226 = scalar_lea.vmem %s0, %s225
      %s227 = smul.u32 4, %s18
      %s228 = smul.u32 4, %s18
      %p229 = scmp.lt.s32.totalorder %s228, 7
      %s230 = scalar_select %p229, %s228, 7
      %p231 = scmp.lt.s32.totalorder %s19, 0
      %s232 = scalar_select %p231, %s19, 0
      %s233 = sadd.s32 %s232, %s230
      %s234 = smul.addr %s233, 4
      %s235 = scalar_lea.vmem %s1, %s234
      %s236 = smul.u32 4, %s18
      %s237 = smul.u32 4, %s18
      %p238 = scmp.lt.s32.totalorder %s237, 7
      %s239 = scalar_select %p238, %s237, 7
      %p240 = scmp.lt.s32.totalorder %s19, 0
      %s241 = scalar_select %p240, %s19, 0
      %s242 = sadd.s32 %s241, %s239
      %s243 = smul.addr %s242, 4
      %s244 = scalar_lea.vmem %s2, %s243
      %s245 = smul.u32 4, %s18
      %s246 = smul.u32 4, %s18
      %p247 = scmp.lt.s32.totalorder %s246, 7
      %s248 = scalar_select %p247, %s246, 7
      %s249 = smul.addr %s248, 4
      %s250 = scalar_lea.vmem %s3, %s249
      %s251 = smul.u32 4, %s18
      %p253 = scmp.eq.s32.totalorder %s19, 0
      // Predicated region
      $region33: #{_lambda_.48} parent=31 // pred_check
        %p254 = pneg %p253
      $region34: #{_lambda_.48} parent=31 // pred_check_branch
        %256 = sbr.rel (%p254) target = $region36
      $region35: #{_lambda_.48} parent=31 // pred_region
        %vm257 = vcmask 3072
        %258 = vst.msk [vmem:[#allocation2] sm:$0xf] %vm257, -inf
        %259 = vst.msk [vmem:[#allocation2 + $0x4] sm:$0xf] %vm257, -inf
        %260 = vst.msk [vmem:[#allocation2 + $0x8] sm:$0xf] %vm257, -inf
        %261 = vst.msk [vmem:[#allocation2 + $0xc] sm:$0xf] %vm257, -inf
        %262 = vst.msk [vmem:[#allocation3] sm:$0xf] %vm257, 0.0
        %263 = vst.msk [vmem:[#allocation3 + $0x4] sm:$0xf] %vm257, 0.0
        %264 = vst.msk [vmem:[#allocation3 + $0x8] sm:$0xf] %vm257, 0.0
        %265 = vst.msk [vmem:[#allocation3 + $0xc] sm:$0xf] %vm257, 0.0
        %vm266 = vcmask 60416
        %267 = vst.msk [vmem:[#allocation4] sm:$0xf] %vm266, 0.0
        %268 = vst.msk [vmem:[#allocation4 + $0x4] sm:$0xf] %vm266, 0.0
        %269 = vst.msk [vmem:[#allocation4 + $0x8] sm:$0xf] %vm266, 0.0
        %270 = vst.msk [vmem:[#allocation4 + $0xc] sm:$0xf] %vm266, 0.0
      $region36: #{_lambda_.48} parent=31 // pred_fallthru
        _
      %v271 = vld [vmem:[%s226] sm:$0xf]
      %v272 = vld [vmem:[%s226 + $0x4] sm:$0xf]
      %v273 = vld [vmem:[%s226 + $0x8] sm:$0xf]
      %v274 = vld [vmem:[%s226 + $0xc] sm:$0xf]
      %v275 = vpack.c.bf16 %v271, %v271
      %v276 = vpack.c.bf16 %v272, %v272
      %v277 = vpack.c.bf16 %v273, %v273
      %v278 = vpack.c.bf16 %v274, %v274
      %v279 = vld [vmem:[%s235] sm:$0xf]
      %v280 = vld [vmem:[%s235 + $0x4] sm:$0xf]
      %v281 = vld [vmem:[%s235 + $0x8] sm:$0xf]
      %v282 = vld [vmem:[%s235 + $0xc] sm:$0xf]
      %v283 = vpack.c.bf16 %v279, %v279
      %v284 = vpack.c.bf16 %v280, %v280
      %v285 = vpack.c.bf16 %v281, %v281
      %v286 = vpack.c.bf16 %v282, %v282
      %v287 = vld [vmem:[%s244] sm:$0xf]
      %v288 = vld [vmem:[%s244 + $0x4] sm:$0xf]
      %v289 = vld [vmem:[%s244 + $0x8] sm:$0xf]
      %v290 = vld [vmem:[%s244 + $0xc] sm:$0xf]
      %v291 = vpack.c.bf16 %v287, %v287
      %v292 = vpack.c.bf16 %v288, %v288
      %v293 = vpack.c.bf16 %v289, %v289
      %v294 = vpack.c.bf16 %v290, %v290
      %vm295 = vcmask 64512
      %v297 = vsel %vm295, %v275, 0
      %v300 = vsel %vm295, %v283, 0
      %302 = vmatprep.subr.bf16.mxu0 0
      %303 = vmatpush1.bf16.xpose.msra.mxu0 0
      %304 = vmatprep.subr.bf16.mxu0 0
      %305 = vmatpush1.bf16.xpose.msra.mxu0 0
      %306 = vmatprep.subr.bf16.mxu0 0
      %307 = vmatpush1.bf16.xpose.msra.mxu0 0
      %308 = vmatprep.subr.bf16.mxu0 0
      %309 = vmatpush1.bf16.xpose.msra.mxu0 0
      %310 = vmatprep.subr.bf16.mxu0 0
      %311 = vmatpush1.bf16.xpose.msra.mxu0 0
      %312 = vmatprep.subr.bf16.mxu0 0
      %313 = vmatpush1.bf16.xpose.msra.mxu0 0
      %314 = vmatprep.subr.bf16.mxu0 0
      %315 = vmatpush1.bf16.xpose.msra.mxu0 0
      %316 = vmatprep.subr.bf16.mxu0 0
      %317 = vmatpush1.bf16.xpose.msra.mxu0 %v300
      %318 = vmatprep.subr.bf16.mxu0 0
      %319 = vmatpush2.bf16.xpose.msra.mxu0 0
      %320 = vmatprep.subr.bf16.mxu0 0
      %321 = vmatpush2.bf16.xpose.msra.mxu0 0
      %322 = vmatprep.subr.bf16.mxu0 0
      %323 = vmatpush2.bf16.xpose.msra.mxu0 0
      %324 = vmatprep.subr.bf16.mxu0 0
      %325 = vmatpush2.bf16.xpose.msra.mxu0 0
      %326 = vmatprep.subr.bf16.mxu0 0
      %327 = vmatpush2.bf16.xpose.msra.mxu0 0
      %328 = vmatprep.subr.bf16.mxu0 0
      %329 = vmatpush2.bf16.xpose.msra.mxu0 0
      %330 = vmatprep.subr.bf16.mxu0 0
      %331 = vmatpush2.bf16.xpose.msra.mxu0 0
      %332 = vmatprep.subr.bf16.mxu0 0
      %333 = vmatpush2.bf16.xpose.msra.mxu0 0
      %334 = vmatprep.mubr.bf16.mxu0 0
      %335 = vmatmul.mubr.bf16.gmra.mxu0 %v297
      %v336 = vpop.f32.mrf.mxu0
      %v337 = vadd.f32 0.0, %v336
      %v338 = vpop.f32.mrf.mxu0
      %v339 = vpop.f32.mrf.mxu0
      %v340 = vpop.f32.mrf.mxu0
      %341 = vdwg.mxu0
      %v343 = vsel %vm295, %v276, 0
      %v346 = vsel %vm295, %v284, 0
      %348 = vmatprep.subr.bf16.mxu0 0
      %349 = vmatpush1.bf16.xpose.msra.mxu0 0
      %350 = vmatprep.subr.bf16.mxu0 0
      %351 = vmatpush1.bf16.xpose.msra.mxu0 0
      %352 = vmatprep.subr.bf16.mxu0 0
      %353 = vmatpush1.bf16.xpose.msra.mxu0 0
      %354 = vmatprep.subr.bf16.mxu0 0
      %355 = vmatpush1.bf16.xpose.msra.mxu0 0
      %356 = vmatprep.subr.bf16.mxu0 0
      %357 = vmatpush1.bf16.xpose.msra.mxu0 0
      %358 = vmatprep.subr.bf16.mxu0 0
      %359 = vmatpush1.bf16.xpose.msra.mxu0 0
      %360 = vmatprep.subr.bf16.mxu0 0
      %361 = vmatpush1.bf16.xpose.msra.mxu0 0
      %362 = vmatprep.subr.bf16.mxu0 0
      %363 = vmatpush1.bf16.xpose.msra.mxu0 %v346
      %364 = vmatprep.subr.bf16.mxu0 0
      %365 = vmatpush2.bf16.xpose.msra.mxu0 0
      %366 = vmatprep.subr.bf16.mxu0 0
      %367 = vmatpush2.bf16.xpose.msra.mxu0 0
      %368 = vmatprep.subr.bf16.mxu0 0
      %369 = vmatpush2.bf16.xpose.msra.mxu0 0
      %370 = vmatprep.subr.bf16.mxu0 0
      %371 = vmatpush2.bf16.xpose.msra.mxu0 0
      %372 = vmatprep.subr.bf16.mxu0 0
      %373 = vmatpush2.bf16.xpose.msra.mxu0 0
      %374 = vmatprep.subr.bf16.mxu0 0
      %375 = vmatpush2.bf16.xpose.msra.mxu0 0
      %376 = vmatprep.subr.bf16.mxu0 0
      %377 = vmatpush2.bf16.xpose.msra.mxu0 0
      %378 = vmatprep.subr.bf16.mxu0 0
      %379 = vmatpush2.bf16.xpose.msra.mxu0 0
      %380 = vmatprep.mubr.bf16.mxu0 0
      %381 = vmatmul.mubr.bf16.gmra.mxu0 %v343
      %v382 = vpop.f32.mrf.mxu0
      %v383 = vadd.f32 0.0, %v382
      %v384 = vpop.f32.mrf.mxu0
      %v385 = vpop.f32.mrf.mxu0
      %v386 = vpop.f32.mrf.mxu0
      %387 = vdwg.mxu0
      %v389 = vsel %vm295, %v277, 0
      %v392 = vsel %vm295, %v285, 0
      %394 = vmatprep.subr.bf16.mxu0 0
      %395 = vmatpush1.bf16.xpose.msra.mxu0 0
      %396 = vmatprep.subr.bf16.mxu0 0
      %397 = vmatpush1.bf16.xpose.msra.mxu0 0
      %398 = vmatprep.subr.bf16.mxu0 0
      %399 = vmatpush1.bf16.xpose.msra.mxu0 0
      %400 = vmatprep.subr.bf16.mxu0 0
      %401 = vmatpush1.bf16.xpose.msra.mxu0 0
      %402 = vmatprep.subr.bf16.mxu0 0
      %403 = vmatpush1.bf16.xpose.msra.mxu0 0
      %404 = vmatprep.subr.bf16.mxu0 0
      %405 = vmatpush1.bf16.xpose.msra.mxu0 0
      %406 = vmatprep.subr.bf16.mxu0 0
      %407 = vmatpush1.bf16.xpose.msra.mxu0 0
      %408 = vmatprep.subr.bf16.mxu0 0
      %409 = vmatpush1.bf16.xpose.msra.mxu0 %v392
      %410 = vmatprep.subr.bf16.mxu0 0
      %411 = vmatpush2.bf16.xpose.msra.mxu0 0
      %412 = vmatprep.subr.bf16.mxu0 0
      %413 = vmatpush2.bf16.xpose.msra.mxu0 0
      %414 = vmatprep.subr.bf16.mxu0 0
      %415 = vmatpush2.bf16.xpose.msra.mxu0 0
      %416 = vmatprep.subr.bf16.mxu0 0
      %417 = vmatpush2.bf16.xpose.msra.mxu0 0
      %418 = vmatprep.subr.bf16.mxu0 0
      %419 = vmatpush2.bf16.xpose.msra.mxu0 0
      %420 = vmatprep.subr.bf16.mxu0 0
      %421 = vmatpush2.bf16.xpose.msra.mxu0 0
      %422 = vmatprep.subr.bf16.mxu0 0
      %423 = vmatpush2.bf16.xpose.msra.mxu0 0
      %424 = vmatprep.subr.bf16.mxu0 0
      %425 = vmatpush2.bf16.xpose.msra.mxu0 0
      %426 = vmatprep.mubr.bf16.mxu0 0
      %427 = vmatmul.mubr.bf16.gmra.mxu0 %v389
      %v428 = vpop.f32.mrf.mxu0
      %v429 = vadd.f32 0.0, %v428
      %v430 = vpop.f32.mrf.mxu0
      %v431 = vpop.f32.mrf.mxu0
      %v432 = vpop.f32.mrf.mxu0
      %433 = vdwg.mxu0
      %v435 = vsel %vm295, %v278, 0
      %v438 = vsel %vm295, %v286, 0
      %440 = vmatprep.subr.bf16.mxu0 0
      %441 = vmatpush1.bf16.xpose.msra.mxu0 0
      %442 = vmatprep.subr.bf16.mxu0 0
      %443 = vmatpush1.bf16.xpose.msra.mxu0 0
      %444 = vmatprep.subr.bf16.mxu0 0
      %445 = vmatpush1.bf16.xpose.msra.mxu0 0
      %446 = vmatprep.subr.bf16.mxu0 0
      %447 = vmatpush1.bf16.xpose.msra.mxu0 0
      %448 = vmatprep.subr.bf16.mxu0 0
      %449 = vmatpush1.bf16.xpose.msra.mxu0 0
      %450 = vmatprep.subr.bf16.mxu0 0
      %451 = vmatpush1.bf16.xpose.msra.mxu0 0
      %452 = vmatprep.subr.bf16.mxu0 0
      %453 = vmatpush1.bf16.xpose.msra.mxu0 0
      %454 = vmatprep.subr.bf16.mxu0 0
      %455 = vmatpush1.bf16.xpose.msra.mxu0 %v438
      %456 = vmatprep.subr.bf16.mxu0 0
      %457 = vmatpush2.bf16.xpose.msra.mxu0 0
      %458 = vmatprep.subr.bf16.mxu0 0
      %459 = vmatpush2.bf16.xpose.msra.mxu0 0
      %460 = vmatprep.subr.bf16.mxu0 0
      %461 = vmatpush2.bf16.xpose.msra.mxu0 0
      %462 = vmatprep.subr.bf16.mxu0 0
      %463 = vmatpush2.bf16.xpose.msra.mxu0 0
      %464 = vmatprep.subr.bf16.mxu0 0
      %465 = vmatpush2.bf16.xpose.msra.mxu0 0
      %466 = vmatprep.subr.bf16.mxu0 0
      %467 = vmatpush2.bf16.xpose.msra.mxu0 0
      %468 = vmatprep.subr.bf16.mxu0 0
      %469 = vmatpush2.bf16.xpose.msra.mxu0 0
      %470 = vmatprep.subr.bf16.mxu0 0
      %471 = vmatpush2.bf16.xpose.msra.mxu0 0
      %472 = vmatprep.mubr.bf16.mxu0 0
      %473 = vmatmul.mubr.bf16.gmra.mxu0 %v435
      %v474 = vpop.f32.mrf.mxu0
      %v475 = vadd.f32 0.0, %v474
      %v476 = vpop.f32.mrf.mxu0
      %v477 = vpop.f32.mrf.mxu0
      %v478 = vpop.f32.mrf.mxu0
      %479 = vdwg.mxu0
      %v480 = vmul.f32 %v337, 0.35355338
      %v481 = vmul.f32 %v383, 0.35355338
      %v482 = vmul.f32 %v429, 0.35355338
      %v483 = vmul.f32 %v475, 0.35355338
      %v484 = vld [vmem:[#allocation2] sm:$0xf]
      %v485 = vld [vmem:[#allocation2 + $0x4] sm:$0xf]
      %v486 = vld [vmem:[#allocation2 + $0x8] sm:$0xf]
      %v487 = vld [vmem:[#allocation2 + $0xc] sm:$0xf]
      %vm488 = vcmask 27648
      %v489 = vsel %vm488, %v480, -inf
      %490 = vmax.xlane.f32.xlu0 %v489
      %v491 = vpop.xlane.xlu0 %490
      %v492 = vsel %vm488, %v481, -inf
      %493 = vmax.xlane.f32.xlu0 %v492
      %v494 = vpop.xlane.xlu0 %493
      %v495 = vsel %vm488, %v482, -inf
      %496 = vmax.xlane.f32.xlu0 %v495
      %v497 = vpop.xlane.xlu0 %496
      %v498 = vsel %vm488, %v483, -inf
      %499 = vmax.xlane.f32.xlu0 %v498
      %v500 = vpop.xlane.xlu0 %499
      %v501 = vmax.f32 %v484, %v491
      %v502 = vmax.f32 %v485, %v494
      %v503 = vmax.f32 %v486, %v497
      %v504 = vmax.f32 %v487, %v500
      %v505 = vsub.f32 %v484, %v501
      %v506 = vsub.f32 %v485, %v502
      %v507 = vsub.f32 %v486, %v503
      %v508 = vsub.f32 %v487, %v504
      %v509 = vmul.f32 %v505, 1.442695
      %v510 = vpow.pop %v509
      %v511 = vmul.f32 %v506, 1.442695
      %v512 = vpow.pop %v511
      %v513 = vmul.f32 %v507, 1.442695
      %v514 = vpow.pop %v513
      %v515 = vmul.f32 %v508, 1.442695
      %v516 = vpow.pop %v515
      %518 = vset.pattern.permute.xlu0 0
      %519 = vperm.xlu0 %518, %v501
      %v520 = vpop.permute.xlu0 %519
      %523 = vset.pattern.permute.xlu0 0
      %524 = vperm.xlu0 %523, %v502
      %v525 = vpop.permute.xlu0 %524
      %528 = vset.pattern.permute.xlu0 0
      %529 = vperm.xlu0 %528, %v503
      %v530 = vpop.permute.xlu0 %529
      %533 = vset.pattern.permute.xlu0 0
      %534 = vperm.xlu0 %533, %v504
      %v535 = vpop.permute.xlu0 %534
      %v537 = vsub.f32 %v480, %v520
      %v538 = vsub.f32 %v481, %v525
      %v539 = vsub.f32 %v482, %v530
      %v540 = vsub.f32 %v483, %v535
      %v541 = vmul.f32 %v537, 1.442695
      %v542 = vpow.pop %v541
      %v543 = vmul.f32 %v538, 1.442695
      %v544 = vpow.pop %v543
      %v545 = vmul.f32 %v539, 1.442695
      %v546 = vpow.pop %v545
      %v547 = vmul.f32 %v540, 1.442695
      %v548 = vpow.pop %v547
      %v549 = vld [vmem:[#allocation3] sm:$0xf]
      %v550 = vld [vmem:[#allocation3 + $0x4] sm:$0xf]
      %v551 = vld [vmem:[#allocation3 + $0x8] sm:$0xf]
      %v552 = vld [vmem:[#allocation3 + $0xc] sm:$0xf]
      %v553 = vmul.f32 %v510, %v549
      %v554 = vmul.f32 %v512, %v550
      %v555 = vmul.f32 %v514, %v551
      %v556 = vmul.f32 %v516, %v552
      %v557 = vsel %vm488, %v542, 0.0
      %558 = vadd.xlane.f32.xlu0 %v557
      %v559 = vpop.xlane.xlu0 %558
      %v560 = vsel %vm488, %v544, 0.0
      %561 = vadd.xlane.f32.xlu0 %v560
      %v562 = vpop.xlane.xlu0 %561
      %v563 = vsel %vm488, %v546, 0.0
      %564 = vadd.xlane.f32.xlu0 %v563
      %v565 = vpop.xlane.xlu0 %564
      %v566 = vsel %vm488, %v548, 0.0
      %567 = vadd.xlane.f32.xlu0 %v566
      %v568 = vpop.xlane.xlu0 %567
      %v569 = vadd.f32 %v553, %v559
      %v570 = vadd.f32 %v554, %v562
      %v571 = vadd.f32 %v555, %v565
      %v572 = vadd.f32 %v556, %v568
      %vm573 = vcmask 3072
      %574 = vst.msk [vmem:[#allocation3] sm:$0xf] %vm573, %v569
      %575 = vst.msk [vmem:[#allocation3 + $0x4] sm:$0xf] %vm573, %v570
      %576 = vst.msk [vmem:[#allocation3 + $0x8] sm:$0xf] %vm573, %v571
      %577 = vst.msk [vmem:[#allocation3 + $0xc] sm:$0xf] %vm573, %v572
      %v578 = vld [vmem:[#allocation4] sm:$0xf]
      %v579 = vld [vmem:[#allocation4 + $0x4] sm:$0xf]
      %v580 = vld [vmem:[#allocation4 + $0x8] sm:$0xf]
      %v581 = vld [vmem:[#allocation4 + $0xc] sm:$0xf]
      %583 = vset.pattern.permute.xlu0 0
      %584 = vperm.xlu0 %583, %v510
      %v585 = vpop.permute.xlu0 %584
      %588 = vset.pattern.permute.xlu0 0
      %589 = vperm.xlu0 %588, %v512
      %v590 = vpop.permute.xlu0 %589
      %593 = vset.pattern.permute.xlu0 0
      %594 = vperm.xlu0 %593, %v514
      %v595 = vpop.permute.xlu0 %594
      %598 = vset.pattern.permute.xlu0 0
      %599 = vperm.xlu0 %598, %v516
      %v600 = vpop.permute.xlu0 %599
      %v602 = vmul.f32 %v585, %v578
      %v603 = vmul.f32 %v590, %v579
      %v604 = vmul.f32 %v595, %v580
      %v605 = vmul.f32 %v600, %v581
      %v606 = vpack.c.bf16 %v542, %v542
      %v607 = vpack.c.bf16 %v544, %v544
      %v608 = vpack.c.bf16 %v546, %v546
      %v609 = vpack.c.bf16 %v548, %v548
      %vm610 = vcmask 31744
      %v612 = vsel %vm610, %v606, 0
      %vm614 = vcmask 1041408
      %v616 = vsel %vm614, %v291, 0
      %618 = vmatprep.subr.bf16.mxu0 0
      %619 = vmatpush1.bf16.msra.mxu0 0
      %620 = vmatprep.subr.bf16.mxu0 0
      %621 = vmatpush1.bf16.msra.mxu0 0
      %622 = vmatprep.subr.bf16.mxu0 0
      %623 = vmatpush1.bf16.msra.mxu0 0
      %624 = vmatprep.subr.bf16.mxu0 0
      %625 = vmatpush1.bf16.msra.mxu0 0
      %626 = vmatprep.subr.bf16.mxu0 0
      %627 = vmatpush1.bf16.msra.mxu0 0
      %628 = vmatprep.subr.bf16.mxu0 0
      %629 = vmatpush1.bf16.msra.mxu0 0
      %630 = vmatprep.subr.bf16.mxu0 0
      %631 = vmatpush1.bf16.msra.mxu0 0
      %632 = vmatprep.subr.bf16.mxu0 0
      %633 = vmatpush1.bf16.msra.mxu0 %v616
      %634 = vmatprep.subr.bf16.mxu0 0
      %635 = vmatpush2.bf16.msra.mxu0 0
      %636 = vmatprep.subr.bf16.mxu0 0
      %637 = vmatpush2.bf16.msra.mxu0 0
      %638 = vmatprep.subr.bf16.mxu0 0
      %639 = vmatpush2.bf16.msra.mxu0 0
      %640 = vmatprep.subr.bf16.mxu0 0
      %641 = vmatpush2.bf16.msra.mxu0 0
      %642 = vmatprep.subr.bf16.mxu0 0
      %643 = vmatpush2.bf16.msra.mxu0 0
      %644 = vmatprep.subr.bf16.mxu0 0
      %645 = vmatpush2.bf16.msra.mxu0 0
      %646 = vmatprep.subr.bf16.mxu0 0
      %647 = vmatpush2.bf16.msra.mxu0 0
      %648 = vmatprep.subr.bf16.mxu0 0
      %649 = vmatpush2.bf16.msra.mxu0 0
      %650 = vmatprep.mubr.bf16.mxu0 0
      %651 = vmatmul.mubr.bf16.gmra.mxu0 %v612
      %v652 = vpop.f32.mrf.mxu0
      %v653 = vadd.f32 0.0, %v652
      %v654 = vpop.f32.mrf.mxu0
      %v655 = vpop.f32.mrf.mxu0
      %v656 = vpop.f32.mrf.mxu0
      %657 = vdwg.mxu0
      %v659 = vsel %vm610, %v607, 0
      %v662 = vsel %vm614, %v292, 0
      %664 = vmatprep.subr.bf16.mxu0 0
      %665 = vmatpush1.bf16.msra.mxu0 0
      %666 = vmatprep.subr.bf16.mxu0 0
      %667 = vmatpush1.bf16.msra.mxu0 0
      %668 = vmatprep.subr.bf16.mxu0 0
      %669 = vmatpush1.bf16.msra.mxu0 0
      %670 = vmatprep.subr.bf16.mxu0 0
      %671 = vmatpush1.bf16.msra.mxu0 0
      %672 = vmatprep.subr.bf16.mxu0 0
      %673 = vmatpush1.bf16.msra.mxu0 0
      %674 = vmatprep.subr.bf16.mxu0 0
      %675 = vmatpush1.bf16.msra.mxu0 0
      %676 = vmatprep.subr.bf16.mxu0 0
      %677 = vmatpush1.bf16.msra.mxu0 0
      %678 = vmatprep.subr.bf16.mxu0 0
      %679 = vmatpush1.bf16.msra.mxu0 %v662
      %680 = vmatprep.subr.bf16.mxu0 0
      %681 = vmatpush2.bf16.msra.mxu0 0
      %682 = vmatprep.subr.bf16.mxu0 0
      %683 = vmatpush2.bf16.msra.mxu0 0
      %684 = vmatprep.subr.bf16.mxu0 0
      %685 = vmatpush2.bf16.msra.mxu0 0
      %686 = vmatprep.subr.bf16.mxu0 0
      %687 = vmatpush2.bf16.msra.mxu0 0
      %688 = vmatprep.subr.bf16.mxu0 0
      %689 = vmatpush2.bf16.msra.mxu0 0
      %690 = vmatprep.subr.bf16.mxu0 0
      %691 = vmatpush2.bf16.msra.mxu0 0
      %692 = vmatprep.subr.bf16.mxu0 0
      %693 = vmatpush2.bf16.msra.mxu0 0
      %694 = vmatprep.subr.bf16.mxu0 0
      %695 = vmatpush2.bf16.msra.mxu0 0
      %696 = vmatprep.mubr.bf16.mxu0 0
      %697 = vmatmul.mubr.bf16.gmra.mxu0 %v659
      %v698 = vpop.f32.mrf.mxu0
      %v699 = vadd.f32 0.0, %v698
      %v700 = vpop.f32.mrf.mxu0
      %v701 = vpop.f32.mrf.mxu0
      %v702 = vpop.f32.mrf.mxu0
      %703 = vdwg.mxu0
      %v705 = vsel %vm610, %v608, 0
      %v708 = vsel %vm614, %v293, 0
      %710 = vmatprep.subr.bf16.mxu0 0
      %711 = vmatpush1.bf16.msra.mxu0 0
      %712 = vmatprep.subr.bf16.mxu0 0
      %713 = vmatpush1.bf16.msra.mxu0 0
      %714 = vmatprep.subr.bf16.mxu0 0
      %715 = vmatpush1.bf16.msra.mxu0 0
      %716 = vmatprep.subr.bf16.mxu0 0
      %717 = vmatpush1.bf16.msra.mxu0 0
      %718 = vmatprep.subr.bf16.mxu0 0
      %719 = vmatpush1.bf16.msra.mxu0 0
      %720 = vmatprep.subr.bf16.mxu0 0
      %721 = vmatpush1.bf16.msra.mxu0 0
      %722 = vmatprep.subr.bf16.mxu0 0
      %723 = vmatpush1.bf16.msra.mxu0 0
      %724 = vmatprep.subr.bf16.mxu0 0
      %725 = vmatpush1.bf16.msra.mxu0 %v708
      %726 = vmatprep.subr.bf16.mxu0 0
      %727 = vmatpush2.bf16.msra.mxu0 0
      %728 = vmatprep.subr.bf16.mxu0 0
      %729 = vmatpush2.bf16.msra.mxu0 0
      %730 = vmatprep.subr.bf16.mxu0 0
      %731 = vmatpush2.bf16.msra.mxu0 0
      %732 = vmatprep.subr.bf16.mxu0 0
      %733 = vmatpush2.bf16.msra.mxu0 0
      %734 = vmatprep.subr.bf16.mxu0 0
      %735 = vmatpush2.bf16.msra.mxu0 0
      %736 = vmatprep.subr.bf16.mxu0 0
      %737 = vmatpush2.bf16.msra.mxu0 0
      %738 = vmatprep.subr.bf16.mxu0 0
      %739 = vmatpush2.bf16.msra.mxu0 0
      %740 = vmatprep.subr.bf16.mxu0 0
      %741 = vmatpush2.bf16.msra.mxu0 0
      %742 = vmatprep.mubr.bf16.mxu0 0
      %743 = vmatmul.mubr.bf16.gmra.mxu0 %v705
      %v744 = vpop.f32.mrf.mxu0
      %v745 = vadd.f32 0.0, %v744
      %v746 = vpop.f32.mrf.mxu0
      %v747 = vpop.f32.mrf.mxu0
      %v748 = vpop.f32.mrf.mxu0
      %749 = vdwg.mxu0
      %v751 = vsel %vm610, %v609, 0
      %v754 = vsel %vm614, %v294, 0
      %756 = vmatprep.subr.bf16.mxu0 0
      %757 = vmatpush1.bf16.msra.mxu0 0
      %758 = vmatprep.subr.bf16.mxu0 0
      %759 = vmatpush1.bf16.msra.mxu0 0
      %760 = vmatprep.subr.bf16.mxu0 0
      %761 = vmatpush1.bf16.msra.mxu0 0
      %762 = vmatprep.subr.bf16.mxu0 0
      %763 = vmatpush1.bf16.msra.mxu0 0
      %764 = vmatprep.subr.bf16.mxu0 0
      %765 = vmatpush1.bf16.msra.mxu0 0
      %766 = vmatprep.subr.bf16.mxu0 0
      %767 = vmatpush1.bf16.msra.mxu0 0
      %768 = vmatprep.subr.bf16.mxu0 0
      %769 = vmatpush1.bf16.msra.mxu0 0
      %770 = vmatprep.subr.bf16.mxu0 0
      %771 = vmatpush1.bf16.msra.mxu0 %v754
      %772 = vmatprep.subr.bf16.mxu0 0
      %773 = vmatpush2.bf16.msra.mxu0 0
      %774 = vmatprep.subr.bf16.mxu0 0
      %775 = vmatpush2.bf16.msra.mxu0 0
      %776 = vmatprep.subr.bf16.mxu0 0
      %777 = vmatpush2.bf16.msra.mxu0 0
      %778 = vmatprep.subr.bf16.mxu0 0
      %779 = vmatpush2.bf16.msra.mxu0 0
      %780 = vmatprep.subr.bf16.mxu0 0
      %781 = vmatpush2.bf16.msra.mxu0 0
      %782 = vmatprep.subr.bf16.mxu0 0
      %783 = vmatpush2.bf16.msra.mxu0 0
      %784 = vmatprep.subr.bf16.mxu0 0
      %785 = vmatpush2.bf16.msra.mxu0 0
      %786 = vmatprep.subr.bf16.mxu0 0
      %787 = vmatpush2.bf16.msra.mxu0 0
      %788 = vmatprep.mubr.bf16.mxu0 0
      %789 = vmatmul.mubr.bf16.gmra.mxu0 %v751
      %v790 = vpop.f32.mrf.mxu0
      %v791 = vadd.f32 0.0, %v790
      %v792 = vpop.f32.mrf.mxu0
      %v793 = vpop.f32.mrf.mxu0
      %v794 = vpop.f32.mrf.mxu0
      %795 = vdwg.mxu0
      %v796 = vadd.f32 %v602, %v653
      %v797 = vadd.f32 %v603, %v699
      %v798 = vadd.f32 %v604, %v745
      %v799 = vadd.f32 %v605, %v791
      %vm800 = vcmask 60416
      %801 = vst.msk [vmem:[#allocation4] sm:$0xf] %vm800, %v796
      %802 = vst.msk [vmem:[#allocation4 + $0x4] sm:$0xf] %vm800, %v797
      %803 = vst.msk [vmem:[#allocation4 + $0x8] sm:$0xf] %vm800, %v798
      %804 = vst.msk [vmem:[#allocation4 + $0xc] sm:$0xf] %vm800, %v799
      %805 = vst.msk [vmem:[#allocation2] sm:$0xf] %vm573, %v501
      %806 = vst.msk [vmem:[#allocation2 + $0x4] sm:$0xf] %vm573, %v502
      %807 = vst.msk [vmem:[#allocation2 + $0x8] sm:$0xf] %vm573, %v503
      %808 = vst.msk [vmem:[#allocation2 + $0xc] sm:$0xf] %vm573, %v504
      // Predicated region
      $region37: #{_lambda_.48} parent=31 // pred_check
        %p809 = pneg %p253
      $region38: #{_lambda_.48} parent=31 // pred_check_branch
        %811 = sbr.rel (%p809) target = $region40
      $region39: #{_lambda_.48} parent=31 // pred_region
        %v812 = vld [vmem:[#allocation4] sm:$0xf]
        %v813 = vld [vmem:[#allocation4 + $0x4] sm:$0xf]
        %v814 = vld [vmem:[#allocation4 + $0x8] sm:$0xf]
        %v815 = vld [vmem:[#allocation4 + $0xc] sm:$0xf]
        %v816 = vld [vmem:[#allocation3] sm:$0xf]
        %v817 = vld [vmem:[#allocation3 + $0x4] sm:$0xf]
        %v818 = vld [vmem:[#allocation3 + $0x8] sm:$0xf]
        %v819 = vld [vmem:[#allocation3 + $0xc] sm:$0xf]
        %821 = vset.pattern.permute.xlu0 0
        %822 = vperm.xlu0 %821, %v816
        %v823 = vpop.permute.xlu0 %822
        %826 = vset.pattern.permute.xlu0 0
        %827 = vperm.xlu0 %826, %v817
        %v828 = vpop.permute.xlu0 %827
        %831 = vset.pattern.permute.xlu0 0
        %832 = vperm.xlu0 %831, %v818
        %v833 = vpop.permute.xlu0 %832
        %836 = vset.pattern.permute.xlu0 0
        %837 = vperm.xlu0 %836, %v819
        %v838 = vpop.permute.xlu0 %837
        %v840 = vrcp.pop %v823
        %v841 = vmul.f32 %v812, %v840
        %v842 = vrcp.pop %v828
        %v843 = vmul.f32 %v813, %v842
        %v844 = vrcp.pop %v833
        %v845 = vmul.f32 %v814, %v844
        %v846 = vrcp.pop %v838
        %v847 = vmul.f32 %v815, %v846
        %848 = vst.msk [vmem:[%s250] sm:$0xf] %vm800, %v841
        %849 = vst.msk [vmem:[%s250 + $0x4] sm:$0xf] %vm800, %v843
        %850 = vst.msk [vmem:[%s250 + $0x8] sm:$0xf] %vm800, %v845
        %851 = vst.msk [vmem:[%s250 + $0xc] sm:$0xf] %vm800, %v847
      $region40: #{_lambda_.48} parent=31 // pred_fallthru
        _
      %s852 = smul.u32 4, %s18
      %p853 = scmp.lt.s32.totalorder %s852, 7
      %s854 = scalar_select %p853, %s852, 7
      %s855 = smul.addr %s854, 4
      %s856 = scalar_lea.vmem %s3, %s855
      // Predicated region
      $region41: #{_lambda_.48} parent=31 // pred_check
        %p857 = pneg %p126
      $region42: #{_lambda_.48} parent=31 // pred_check_branch
        %859 = sbr.rel (%p857) target = $region44
      $region43: #{_lambda_.48} parent=31 // pred_region
        %s860 = smul.u32 4, %s18
      $region44: #{_lambda_.48} parent=31 // pred_fallthru
        _
    $region32: #{_lambda_.48} parent=5 // pred_fallthru
      _
    %p861 = scmp.le.s32.totalorder 2, %s9
    // Predicated region
    $region45: #{_lambda_.48} parent=5 // pred_check
      %p862 = pneg %p861
    $region46: #{_lambda_.48} parent=5 // pred_check_branch
      %864 = sbr.rel (%p862) target = $region48
    $region47: #{_lambda_.48} parent=5 // pred_region
      %s865 = ssub.s32 %s9, 2
      // Predicated region
      $region49: #{_lambda_.48} parent=47 // pred_check
        %p866 = pneg %p132
      $region50: #{_lambda_.48} parent=47 // pred_check_branch
        %868 = sbr.rel (%p866) target = $region52
      $region51: #{_lambda_.48} parent=47 // pred_region
        %s869 = smul.u32 4, %s20
        %p870 = scmp.lt.s32.totalorder %s869, 7
        %s871 = scalar_select %p870, %s869, 7
        %s872 = smul.addr %s871, 4
        %s873 = scalar_lea.vmem %s3, %s872
      $region52: #{_lambda_.48} parent=47 // pred_fallthru
        _
    $region48: #{_lambda_.48} parent=5 // pred_fallthru
      _
  $region6: #{_lambda_.48} parent=0 // loop_footer
    %s13 = sadd.s32 1, %s9
  $region7: #{_lambda_.48} parent=0 // loop_footer_branch
    %8 = sbr.rel target = $region3
  $region8: #{_lambda_.48} parent=0 // loop_exit
    _

// kernel: _lambda_.49
$region0: #{_lambda_.49}
  #allocation0 [shape = 'u32[]', space=smem, size = 0x4, offset = 0x4, fixed_abs, tag = 'smem constant byte address 0x4 - core index']
  #allocation1 [shape = 'u32[144,128]{1,0:T(1,128)}', space=vmem, size = 0x12000, scoped, tag = 'internal scratch']
  %s0 = inlined_call_operand.vmem [shape: f32[8,32], index: 0, kind: input, shape index: {}]
  %s1 = inlined_call_operand.vmem [shape: f32[8,32], index: 1, kind: input, shape index: {}]
  %s2 = inlined_call_operand.vmem [shape: bf16[32,32], index: 2, kind: input, shape index: {}]
  %s3 = inlined_call_operand.vmem [shape: f32[1,32], index: 3, kind: input, shape index: {}]
  %s4 = inlined_call_operand.vmem [shape: f32[1,32], index: 4, kind: input, shape index: {}]
  %s5 = inlined_call_operand.vmem [shape: f32[1,32], index: 5, kind: input, shape index: {}]
  %s6 = inlined_call_operand.vmem [shape: f32[8,32], index: 6, kind: output, shape index: {}]
  %s7 = sld [smem:[#allocation0]]
  $region34: #{_lambda_.49} parent=0
    _
  %s9 = ssub.s32 1, %s7
  %s10 = scalar_select 0, %s9, %s7
  // Predicated region
  $region2: #{_lambda_.49} parent=0 // pred_check
    _
  $region3: #{_lambda_.49} parent=0 // pred_check_branch
    %12 = sbr.rel (0) target = $region5
  $region4: #{_lambda_.49} parent=0 // pred_region
    _
  $region5: #{_lambda_.49} parent=0 // pred_fallthru
    _
  // Predicated region
  $region6: #{_lambda_.49} parent=0 // pred_check
    _
  $region7: #{_lambda_.49} parent=0 // pred_check_branch
    %14 = sbr.rel (0) target = $region9
  $region8: #{_lambda_.49} parent=0 // pred_region
    _
  $region9: #{_lambda_.49} parent=0 // pred_fallthru
    _
  // Predicated region
  $region10: #{_lambda_.49} parent=0 // pred_check
    _
  $region11: #{_lambda_.49} parent=0 // pred_check_branch
    %16 = sbr.rel (0) target = $region13
  $region12: #{_lambda_.49} parent=0 // pred_region
    _
  $region13: #{_lambda_.49} parent=0 // pred_fallthru
    _
  // Predicated region
  $region14: #{_lambda_.49} parent=0 // pred_check
    _
  $region15: #{_lambda_.49} parent=0 // pred_check_branch
    %18 = sbr.rel (0) target = $region17
  $region16: #{_lambda_.49} parent=0 // pred_region
    _
  $region17: #{_lambda_.49} parent=0 // pred_fallthru
    _
  // Predicated region
  $region18: #{_lambda_.49} parent=0 // pred_check
    _
  $region19: #{_lambda_.49} parent=0 // pred_check_branch
    %20 = sbr.rel (0) target = $region21
  $region20: #{_lambda_.49} parent=0 // pred_region
    _
  $region21: #{_lambda_.49} parent=0 // pred_fallthru
    _
  // Predicated region
  $region22: #{_lambda_.49} parent=0 // pred_check
    _
  $region23: #{_lambda_.49} parent=0 // pred_check_branch
    %22 = sbr.rel (0) target = $region25
  $region24: #{_lambda_.49} parent=0 // pred_region
    _
  $region25: #{_lambda_.49} parent=0 // pred_fallthru
    _
  %v24 = vld [vmem:[%s0] sm:$0xff]
  %v25 = vpack.c.bf16 %v24, %v24
  %v26 = vld [vmem:[%s2] sm:$0xf]
  %v27 = vld [vmem:[%s2 + $0x4] sm:$0xf]
  %v28 = vld [vmem:[%s2 + $0x8] sm:$0xf]
  %v29 = vld [vmem:[%s2 + $0xc] sm:$0xf]
  %v30 = vld [vmem:[%s3] sm:$0x1]
  %v32 = vlaneseq
  %v33 = vshrl.u32 %v32, 7
  %v34 = vsub.s32 0, %v33
  %v35 = vrot.slane %v30, %v34
  %v41 = vunpack.c.l.b16 %v26
  %v42 = vunpack.c.l.b16 %v27
  %v43 = vunpack.c.l.b16 %v28
  %v44 = vunpack.c.l.b16 %v29
  %v45 = vpack.c.b16 %v42, %v41
  %v46 = vpack.c.b16 %v44, %v43
  %vm49 = vcmask 261120
  %v51 = vsel %vm49, %v25, 0
  %53 = vmatprep.subr.bf16.mxu0 0
  %54 = vmatpush1.bf16.msra.mxu0 0
  %55 = vmatprep.subr.bf16.mxu0 0
  %56 = vmatpush1.bf16.msra.mxu0 0
  %57 = vmatprep.subr.bf16.mxu0 0
  %58 = vmatpush1.bf16.msra.mxu0 0
  %59 = vmatprep.subr.bf16.mxu0 0
  %60 = vmatpush1.bf16.msra.mxu0 0
  %61 = vmatprep.subr.bf16.mxu0 0
  %62 = vmatpush1.bf16.msra.mxu0 0
  %63 = vmatprep.subr.bf16.mxu0 0
  %64 = vmatpush1.bf16.msra.mxu0 0
  %65 = vmatprep.subr.bf16.mxu0 0
  %66 = vmatpush1.bf16.msra.mxu0 %v46
  %67 = vmatprep.subr.bf16.mxu0 0
  %68 = vmatpush1.bf16.msra.mxu0 %v45
  %69 = vmatprep.subr.bf16.mxu0 0
  %70 = vmatpush2.bf16.msra.mxu0 0
  %71 = vmatprep.subr.bf16.mxu0 0
  %72 = vmatpush2.bf16.msra.mxu0 0
  %73 = vmatprep.subr.bf16.mxu0 0
  %74 = vmatpush2.bf16.msra.mxu0 0
  %75 = vmatprep.subr.bf16.mxu0 0
  %76 = vmatpush2.bf16.msra.mxu0 0
  %77 = vmatprep.subr.bf16.mxu0 0
  %78 = vmatpush2.bf16.msra.mxu0 0
  %79 = vmatprep.subr.bf16.mxu0 0
  %80 = vmatpush2.bf16.msra.mxu0 0
  %81 = vmatprep.subr.bf16.mxu0 0
  %82 = vmatpush2.bf16.msra.mxu0 0
  %83 = vmatprep.subr.bf16.mxu0 0
  %84 = vmatpush2.bf16.msra.mxu0 0
  %85 = vmatprep.mubr.bf16.mxu0 0
  %86 = vmatmul.mubr.bf16.gmra.mxu0 %v51
  %v87 = vpop.f32.mrf.mxu0
  %v88 = vadd.f32 %v35, %v87
  %v89 = vpop.f32.mrf.mxu0
  %v90 = vpop.f32.mrf.mxu0
  %v91 = vpop.f32.mrf.mxu0
  %92 = vdwg.mxu0
  %v93 = vld [vmem:[%s1] sm:$0xff]
  %v94 = vadd.f32 %v88, %v93
  %v95 = vld [vmem:[%s4] sm:$0x1]
  %v96 = vld [vmem:[%s5] sm:$0x1]
  %v97 = vsel %vm49, %v94, 0.0
  %98 = vadd.xlane.f32.xlu0 %v97
  %v99 = vpop.xlane.xlu0 %98
  %v100 = vrcp.pop 32.0
  %v101 = vmul.f32 %v99, %v100
  %v102 = vsub.f32 %v94, %v101
  %v103 = vmul.f32 %v102, %v102
  %v104 = vsel %vm49, %v103, 0.0
  %105 = vadd.xlane.f32.xlu0 %v104
  %v106 = vpop.xlane.xlu0 %105
  %v107 = vmul.f32 %v106, %v100
  %v108 = vadd.f32 %v107, 1e-05
  %v109 = vrsqrt.pop %v108
  %v110 = vmul.f32 %v102, %v109
  %v112 = vlaneseq
  %v113 = vshrl.u32 %v112, 7
  %v114 = vsub.s32 0, %v113
  %v115 = vrot.slane %v95, %v114
  %v117 = vmul.f32 %v110, %v115
  %v119 = vlaneseq
  %v120 = vshrl.u32 %v119, 7
  %v121 = vsub.s32 0, %v120
  %v122 = vrot.slane %v96, %v121
  %v124 = vadd.f32 %v117, %v122
  %125 = vst.msk [vmem:[%s6] sm:$0xff] %vm49, %v124
  // Predicated region
  $region26: #{_lambda_.49} parent=0 // pred_check
    _
  $region27: #{_lambda_.49} parent=0 // pred_check_branch
    %127 = sbr.rel (0) target = $region29
  $region28: #{_lambda_.49} parent=0 // pred_region
    _
  $region29: #{_lambda_.49} parent=0 // pred_fallthru
    _
  // Predicated region
  $region30: #{_lambda_.49} parent=0 // pred_check
    _
  $region31: #{_lambda_.49} parent=0 // pred_check_branch
    %129 = sbr.rel (0) target = $region33
  $region32: #{_lambda_.49} parent=0 // pred_region
    _
  $region33: #{_lambda_.49} parent=0 // pred_fallthru
    _

// kernel: _lambda_.50
$region0: #{_lambda_.50}
  #allocation0 [shape = 'u32[]', space=smem, size = 0x4, offset = 0x4, fixed_abs, tag = 'smem constant byte address 0x4 - core index']
  #allocation1 [shape = 'u32[144,128]{1,0:T(1,128)}', space=vmem, size = 0x12000, scoped, tag = 'internal scratch']
  %s0 = inlined_call_operand.vmem [shape: f32[8,32], index: 0, kind: input, shape index: {}]
  %s1 = inlined_call_operand.vmem [shape: bf16[32,32], index: 1, kind: input, shape index: {}]
  %s2 = inlined_call_operand.vmem [shape: f32[1,32], index: 2, kind: input, shape index: {}]
  %s3 = inlined_call_operand.vmem [shape: f32[8,32], index: 3, kind: output, shape index: {}]
  %s4 = sld [smem:[#allocation0]]
  $region22: #{_lambda_.50} parent=0
    _
  %s6 = ssub.s32 1, %s4
  %s7 = scalar_select 0, %s6, %s4
  // Predicated region
  $region2: #{_lambda_.50} parent=0 // pred_check
    _
  $region3: #{_lambda_.50} parent=0 // pred_check_branch
    %9 = sbr.rel (0) target = $region5
  $region4: #{_lambda_.50} parent=0 // pred_region
    _
  $region5: #{_lambda_.50} parent=0 // pred_fallthru
    _
  // Predicated region
  $region6: #{_lambda_.50} parent=0 // pred_check
    _
  $region7: #{_lambda_.50} parent=0 // pred_check_branch
    %11 = sbr.rel (0) target = $region9
  $region8: #{_lambda_.50} parent=0 // pred_region
    _
  $region9: #{_lambda_.50} parent=0 // pred_fallthru
    _
  // Predicated region
  $region10: #{_lambda_.50} parent=0 // pred_check
    _
  $region11: #{_lambda_.50} parent=0 // pred_check_branch
    %13 = sbr.rel (0) target = $region13
  $region12: #{_lambda_.50} parent=0 // pred_region
    _
  $region13: #{_lambda_.50} parent=0 // pred_fallthru
    _
  %v15 = vld [vmem:[%s0] sm:$0xff]
  %v16 = vpack.c.bf16 %v15, %v15
  %v17 = vld [vmem:[%s1] sm:$0xf]
  %v18 = vld [vmem:[%s1 + $0x4] sm:$0xf]
  %v19 = vld [vmem:[%s1 + $0x8] sm:$0xf]
  %v20 = vld [vmem:[%s1 + $0xc] sm:$0xf]
  %v21 = vld [vmem:[%s2] sm:$0x1]
  %v23 = vlaneseq
  %v24 = vshrl.u32 %v23, 7
  %v25 = vsub.s32 0, %v24
  %v26 = vrot.slane %v21, %v25
  %v32 = vunpack.c.l.b16 %v17
  %v33 = vunpack.c.l.b16 %v18
  %v34 = vunpack.c.l.b16 %v19
  %v35 = vunpack.c.l.b16 %v20
  %v36 = vpack.c.b16 %v33, %v32
  %v37 = vpack.c.b16 %v35, %v34
  %vm40 = vcmask 261120
  %v42 = vsel %vm40, %v16, 0
  %44 = vmatprep.subr.bf16.mxu0 0
  %45 = vmatpush1.bf16.msra.mxu0 0
  %46 = vmatprep.subr.bf16.mxu0 0
  %47 = vmatpush1.bf16.msra.mxu0 0
  %48 = vmatprep.subr.bf16.mxu0 0
  %49 = vmatpush1.bf16.msra.mxu0 0
  %50 = vmatprep.subr.bf16.mxu0 0
  %51 = vmatpush1.bf16.msra.mxu0 0
  %52 = vmatprep.subr.bf16.mxu0 0
  %53 = vmatpush1.bf16.msra.mxu0 0
  %54 = vmatprep.subr.bf16.mxu0 0
  %55 = vmatpush1.bf16.msra.mxu0 0
  %56 = vmatprep.subr.bf16.mxu0 0
  %57 = vmatpush1.bf16.msra.mxu0 %v37
  %58 = vmatprep.subr.bf16.mxu0 0
  %59 = vmatpush1.bf16.msra.mxu0 %v36
  %60 = vmatprep.subr.bf16.mxu0 0
  %61 = vmatpush2.bf16.msra.mxu0 0
  %62 = vmatprep.subr.bf16.mxu0 0
  %63 = vmatpush2.bf16.msra.mxu0 0
  %64 = vmatprep.subr.bf16.mxu0 0
  %65 = vmatpush2.bf16.msra.mxu0 0
  %66 = vmatprep.subr.bf16.mxu0 0
  %67 = vmatpush2.bf16.msra.mxu0 0
  %68 = vmatprep.subr.bf16.mxu0 0
  %69 = vmatpush2.bf16.msra.mxu0 0
  %70 = vmatprep.subr.bf16.mxu0 0
  %71 = vmatpush2.bf16.msra.mxu0 0
  %72 = vmatprep.subr.bf16.mxu0 0
  %73 = vmatpush2.bf16.msra.mxu0 0
  %74 = vmatprep.subr.bf16.mxu0 0
  %75 = vmatpush2.bf16.msra.mxu0 0
  %76 = vmatprep.mubr.bf16.mxu0 0
  %77 = vmatmul.mubr.bf16.gmra.mxu0 %v42
  %v78 = vpop.f32.mrf.mxu0
  %v79 = vadd.f32 %v26, %v78
  %v80 = vpop.f32.mrf.mxu0
  %v81 = vpop.f32.mrf.mxu0
  %v82 = vpop.f32.mrf.mxu0
  %83 = vdwg.mxu0
  %v84 = vmul.f32 %v79, 0.5
  %v85 = vmul.f32 %v79, 0.70710677
  %v86 = vand.u32 2147483647, %v85
  %v87 = vmul.f32 %v86, 0.3275911
  %v88 = vadd.f32 %v87, 1.0
  %v89 = vrcp.pop %v88
  %v90 = vmul.f32 1.0, %v89
  %v91 = vmul.f32 %v90, 1.0614054
  %v92 = vadd.f32 %v91, -1.4531521
  %v93 = vmul.f32 %v92, %v90
  %v94 = vadd.f32 %v93, 1.4214138
  %v95 = vmul.f32 %v94, %v90
  %v96 = vadd.f32 %v95, -0.28449672
  %v97 = vmul.f32 %v96, %v90
  %v98 = vadd.f32 %v97, 0.2548296
  %v99 = vmul.f32 %v98, %v90
  %v100 = vsub.f32 0.0, %v86
  %v101 = vmul.f32 %v100, %v86
  %v102 = vmul.f32 %v101, 1.442695
  %v103 = vpow.pop %v102
  %v104 = vmul.f32 %v99, %v103
  %v105 = vsub.f32 1.0, %v104
  %vm106 = vcmp.ge.f32.partialorder %v85, 0.0
  %v107 = vsub.f32 0.0, %v105
  %v108 = vsel %vm106, %v105, %v107
  %v109 = vadd.f32 %v108, 1.0
  %v110 = vmul.f32 %v84, %v109
  %111 = vst.msk [vmem:[%s3] sm:$0xff] %vm40, %v110
  // Predicated region
  $region14: #{_lambda_.50} parent=0 // pred_check
    _
  $region15: #{_lambda_.50} parent=0 // pred_check_branch
    %113 = sbr.rel (0) target = $region17
  $region16: #{_lambda_.50} parent=0 // pred_region
    _
  $region17: #{_lambda_.50} parent=0 // pred_fallthru
    _
  // Predicated region
  $region18: #{_lambda_.50} parent=0 // pred_check
    _
  $region19: #{_lambda_.50} parent=0 // pred_check_branch
    %115 = sbr.rel (0) target = $region21
  $region20: #{_lambda_.50} parent=0 // pred_region
    _
  $region21: #{_lambda_.50} parent=0 // pred_fallthru
    _

// kernel: _lambda_.52
$region0: #{_lambda_.52}
  #allocation0 [shape = 'u32[]', space=smem, size = 0x4, offset = 0x4, fixed_abs, tag = 'smem constant byte address 0x4 - core index']
  #allocation1 [shape = 'u32[144,128]{1,0:T(1,128)}', space=vmem, size = 0x12000, scoped, tag = 'internal scratch']
  %s0 = inlined_call_operand.vmem [shape: f32[8,32], index: 0, kind: input, shape index: {}]
  %s1 = inlined_call_operand.vmem [shape: f32[1,32], index: 1, kind: input, shape index: {}]
  %s2 = inlined_call_operand.vmem [shape: f32[1,32], index: 2, kind: input, shape index: {}]
  %s3 = inlined_call_operand.vmem [shape: f32[8,32], index: 3, kind: output, shape index: {}]
  %s4 = sld [smem:[#allocation0]]
  $region22: #{_lambda_.52} parent=0
    _
  %s6 = ssub.s32 1, %s4
  %s7 = scalar_select 0, %s6, %s4
  // Predicated region
  $region2: #{_lambda_.52} parent=0 // pred_check
    _
  $region3: #{_lambda_.52} parent=0 // pred_check_branch
    %9 = sbr.rel (0) target = $region5
  $region4: #{_lambda_.52} parent=0 // pred_region
    _
  $region5: #{_lambda_.52} parent=0 // pred_fallthru
    _
  // Predicated region
  $region6: #{_lambda_.52} parent=0 // pred_check
    _
  $region7: #{_lambda_.52} parent=0 // pred_check_branch
    %11 = sbr.rel (0) target = $region9
  $region8: #{_lambda_.52} parent=0 // pred_region
    _
  $region9: #{_lambda_.52} parent=0 // pred_fallthru
    _
  // Predicated region
  $region10: #{_lambda_.52} parent=0 // pred_check
    _
  $region11: #{_lambda_.52} parent=0 // pred_check_branch
    %13 = sbr.rel (0) target = $region13
  $region12: #{_lambda_.52} parent=0 // pred_region
    _
  $region13: #{_lambda_.52} parent=0 // pred_fallthru
    _
  %v14 = vld [vmem:[%s0] sm:$0xff]
  %v15 = vld [vmem:[%s1] sm:$0x1]
  %v16 = vld [vmem:[%s2] sm:$0x1]
  %vm17 = vcmask 261120
  %v18 = vsel %vm17, %v14, 0.0
  %19 = vadd.xlane.f32.xlu0 %v18
  %v20 = vpop.xlane.xlu0 %19
  %v21 = vrcp.pop 32.0
  %v22 = vmul.f32 %v20, %v21
  %v23 = vsub.f32 %v14, %v22
  %v24 = vmul.f32 %v23, %v23
  %v25 = vsel %vm17, %v24, 0.0
  %26 = vadd.xlane.f32.xlu0 %v25
  %v27 = vpop.xlane.xlu0 %26
  %v28 = vmul.f32 %v27, %v21
  %v29 = vadd.f32 %v28, 1e-05
  %v30 = vrsqrt.pop %v29
  %v31 = vmul.f32 %v23, %v30
  %v33 = vlaneseq
  %v34 = vshrl.u32 %v33, 7
  %v35 = vsub.s32 0, %v34
  %v36 = vrot.slane %v15, %v35
  %v38 = vmul.f32 %v31, %v36
  %v40 = vlaneseq
  %v41 = vshrl.u32 %v40, 7
  %v42 = vsub.s32 0, %v41
  %v43 = vrot.slane %v16, %v42
  %v45 = vadd.f32 %v38, %v43
  %46 = vst.msk [vmem:[%s3] sm:$0xff] %vm17, %v45
  // Predicated region
  $region14: #{_lambda_.52} parent=0 // pred_check
    _
  $region15: #{_lambda_.52} parent=0 // pred_check_branch
    %48 = sbr.rel (0) target = $region17
  $region16: #{_lambda_.52} parent=0 // pred_region
    _
  $region17: #{_lambda_.52} parent=0 // pred_fallthru
    _
  // Predicated region
  $region18: #{_lambda_.52} parent=0 // pred_check
    _
  $region19: #{_lambda_.52} parent=0 // pred_check_branch
    %50 = sbr.rel (0) target = $region21
  $region20: #{_lambda_.52} parent=0 // pred_region
    _
  $region21: #{_lambda_.52} parent=0 // pred_fallthru
    _

// kernel: _lambda_.58
$region0: #{_lambda_.58}
  #allocation0 [shape = 'u32[]', space=smem, size = 0x4, offset = 0x4, fixed_abs, tag = 'smem constant byte address 0x4 - core index']
  #allocation1 [shape = 'u32[144,128]{1,0:T(1,128)}', space=vmem, size = 0x12000, scoped, tag = 'internal scratch']
  #allocation2 [shape = 'f32[4,8,1]{2,1,0:T(8,128)}', space=vmem, size = 0x4000, scoped, tag = 'scratch operand']
  #allocation3 [shape = 'f32[4,8,1]{2,1,0:T(8,128)}', space=vmem, size = 0x4000, scoped, tag = 'scratch operand']
  #allocation4 [shape = 'f32[4,8,8]{2,1,0:T(8,128)}', space=vmem, size = 0x4000, scoped, tag = 'scratch operand']
  %s0 = inlined_call_operand.vmem [shape: f32[8,8,8], index: 0, kind: input, shape index: {}]
  %s1 = inlined_call_operand.vmem [shape: f32[8,8,8], index: 1, kind: input, shape index: {}]
  %s2 = inlined_call_operand.vmem [shape: f32[8,8,8], index: 2, kind: input, shape index: {}]
  %s3 = inlined_call_operand.vmem [shape: s32[8,8,1], index: 3, kind: input, shape index: {}]
  %s4 = inlined_call_operand.vmem [shape: f32[8,8,8], index: 4, kind: output, shape index: {}]
  %s5 = sld [smem:[#allocation0]]
  $region57: #{_lambda_.58} parent=0
    _
  %s7 = ssub.s32 1, %s5
  %s8 = scalar_select 0, %s7, %s5
  loop: start=0, step=1, limit=4
  $region2: #{_lambda_.58} parent=0 // loop_pre_header
    _
  $region3: #{_lambda_.58} parent=0 // loop_header
    %s10 = sphi 0, %s14
    %p11 = scmp.ge.s32.totalorder %s10, 4
    %s17 = sphi 0, %s29
    %s18 = sphi 0, %s25
    %s19 = sphi 0, %s17
    %s20 = sphi 0, %s18
    %s21 = sphi 0, %s19
    %s22 = sphi 0, %s20
    %s32 = sphi 0, %s34
    %s35 = sphi 0, %s32
    %s36 = sphi 0, %s35
    %s52 = sphi 0, %s36
    %s60 = sphi 0, %s62
    %s63 = sphi 0, %s60
    %s64 = sphi 0, %s63
    %s80 = sphi 0, %s64
    %s88 = sphi 0, %s90
    %s91 = sphi 0, %s88
    %s92 = sphi 0, %s91
    %s108 = sphi 0, %s92
    %s114 = sphi 0, %s116
    %s117 = sphi 0, %s114
    %s118 = sphi 0, %s117
    %s134 = sphi 0, %s118
    %s140 = sphi 0, %s142
    %s143 = sphi 0, %s140
    %s144 = sphi 0, %s143
    %s160 = sphi 0, %s144
  $region4: #{_lambda_.58} parent=0 // loop_header_branch
    %13 = sbr.rel (%p11) target = $region8
  $region5: #{_lambda_.58} parent=0 // loop_body
    %s15 = ssub.s32 %s10, 1
    %s16 = ssub.s32 %s10, 2
    %s23 = sadd.s32 1, %s18
    %p24 = scmp.ge.s32.totalorder %s23, 1
    %s25 = scalar_select %p24, 0, %s23
    %s26 = sadd.s32 1, %s17
    %s27 = scalar_select %p24, %s26, %s17
    %p28 = scmp.ge.s32.totalorder %s27, 2
    %s29 = scalar_select %p28, 0, %s27
    %s30 = ssub.s32 %s17, %s29
    %p31 = scmp.eq.s32.totalorder %s30, 0
    %s33 = sadd.s32 %s32, 1
    %s34 = scalar_select %p31, %s32, %s33
    %p37 = pneg %p31
    %p38 = scmp.eq.s32.totalorder %s10, 1
    %p39 = por %p37, %p38
    %p40 = scmp.ne.s32.totalorder %s32, %s35
    %p41 = scmp.eq.s32.totalorder %s10, 0
    %p42 = por %p40, %p41
    %p43 = scmp.ne.s32.totalorder %s32, %s35
    %p44 = scmp.eq.s32.totalorder %s15, 1
    %p45 = por %p43, %p44
    %p46 = scmp.ne.s32.totalorder %s35, %s36
    %p47 = scmp.eq.s32.totalorder %s15, 0
    %p48 = por %p46, %p47
    %p49 = scmp.ne.s32.totalorder %s35, %s36
    %p50 = scmp.eq.s32.totalorder %s16, 1
    %p51 = por %p49, %p50
    %p53 = scmp.ne.s32.totalorder %s36, %s52
    %p54 = scmp.eq.s32.totalorder %s16, 0
    %p55 = por %p53, %p54
    %s56 = ssub.s32 %s17, %s29
    %s57 = ssub.s32 %s18, %s25
    %s58 = sor.u32 %s56, %s57
    %p59 = scmp.eq.s32.totalorder %s58, 0
    %s61 = sadd.s32 %s60, 1
    %s62 = scalar_select %p59, %s60, %s61
    %p65 = pneg %p59
    %p66 = scmp.eq.s32.totalorder %s10, 1
    %p67 = por %p65, %p66
    %p68 = scmp.ne.s32.totalorder %s60, %s63
    %p69 = scmp.eq.s32.totalorder %s10, 0
    %p70 = por %p68, %p69
    %p71 = scmp.ne.s32.totalorder %s60, %s63
    %p72 = scmp.eq.s32.totalorder %s15, 1
    %p73 = por %p71, %p72
    %p74 = scmp.ne.s32.totalorder %s63, %s64
    %p75 = scmp.eq.s32.totalorder %s15, 0
    %p76 = por %p74, %p75
    %p77 = scmp.ne.s32.totalorder %s63, %s64
    %p78 = scmp.eq.s32.totalorder %s16, 1
    %p79 = por %p77, %p78
    %p81 = scmp.ne.s32.totalorder %s64, %s80
    %p82 = scmp.eq.s32.totalorder %s16, 0
    %p83 = por %p81, %p82
    %s84 = ssub.s32 %s17, %s29
    %s85 = ssub.s32 %s18, %s25
    %s86 = sor.u32 %s84, %s85
    %p87 = scmp.eq.s32.totalorder %s86, 0
    %s89 = sadd.s32 %s88, 1
    %s90 = scalar_select %p87, %s88, %s89
    %p93 = pneg %p87
    %p94 = scmp.eq.s32.totalorder %s10, 1
    %p95 = por %p93, %p94
    %p96 = scmp.ne.s32.totalorder %s88, %s91
    %p97 = scmp.eq.s32.totalorder %s10, 0
    %p98 = por %p96, %p97
    %p99 = scmp.ne.s32.totalorder %s88, %s91
    %p100 = scmp.eq.s32.totalorder %s15, 1
    %p101 = por %p99, %p100
    %p102 = scmp.ne.s32.totalorder %s91, %s92
    %p103 = scmp.eq.s32.totalorder %s15, 0
    %p104 = por %p102, %p103
    %p105 = scmp.ne.s32.totalorder %s91, %s92
    %p106 = scmp.eq.s32.totalorder %s16, 1
    %p107 = por %p105, %p106
    %p109 = scmp.ne.s32.totalorder %s92, %s108
    %p110 = scmp.eq.s32.totalorder %s16, 0
    %p111 = por %p109, %p110
    %s112 = ssub.s32 %s17, %s29
    %p113 = scmp.eq.s32.totalorder %s112, 0
    %s115 = sadd.s32 %s114, 1
    %s116 = scalar_select %p113, %s114, %s115
    %p119 = pneg %p113
    %p120 = scmp.eq.s32.totalorder %s10, 1
    %p121 = por %p119, %p120
    %p122 = scmp.ne.s32.totalorder %s114, %s117
    %p123 = scmp.eq.s32.totalorder %s10, 0
    %p124 = por %p122, %p123
    %p125 = scmp.ne.s32.totalorder %s114, %s117
    %p126 = scmp.eq.s32.totalorder %s15, 1
    %p127 = por %p125, %p126
    %p128 = scmp.ne.s32.totalorder %s117, %s118
    %p129 = scmp.eq.s32.totalorder %s15, 0
    %p130 = por %p128, %p129
    %p131 = scmp.ne.s32.totalorder %s117, %s118
    %p132 = scmp.eq.s32.totalorder %s16, 1
    %p133 = por %p131, %p132
    %p135 = scmp.ne.s32.totalorder %s118, %s134
    %p136 = scmp.eq.s32.totalorder %s16, 0
    %p137 = por %p135, %p136
    %s138 = ssub.s32 %s17, %s29
    %p139 = scmp.eq.s32.totalorder %s138, 0
    %s141 = sadd.s32 %s140, 1
    %s142 = scalar_select %p139, %s140, %s141
    %p145 = pneg %p139
    %p146 = scmp.eq.s32.totalorder %s10, 1
    %p147 = por %p145, %p146
    %p148 = scmp.ne.s32.totalorder %s140, %s143
    %p149 = scmp.eq.s32.totalorder %s10, 0
    %p150 = por %p148, %p149
    %p151 = scmp.ne.s32.totalorder %s140, %s143
    %p152 = scmp.eq.s32.totalorder %s15, 1
    %p153 = por %p151, %p152
    %p154 = scmp.ne.s32.totalorder %s143, %s144
    %p155 = scmp.eq.s32.totalorder %s15, 0
    %p156 = por %p154, %p155
    %p157 = scmp.ne.s32.totalorder %s143, %s144
    %p158 = scmp.eq.s32.totalorder %s16, 1
    %p159 = por %p157, %p158
    %p161 = scmp.ne.s32.totalorder %s144, %s160
    %p162 = scmp.eq.s32.totalorder %s16, 0
    %p163 = por %p161, %p162
    %p164 = scmp.le.s32.totalorder 1, %s10
    %p165 = scmp.lt.s32.totalorder %s10, 3
    %p166 = pnand %p164, %p165
    %p167 = pneg %p166
    // Predicated region
    $region9: #{_lambda_.58} parent=5 // pred_check
      _
    $region10: #{_lambda_.58} parent=5 // pred_check_branch
      %169 = sbr.rel (%p166) target = $region12
    $region11: #{_lambda_.58} parent=5 // pred_region
      %s170 = ssub.s32 %s10, 1
    $region12: #{_lambda_.58} parent=5 // pred_fallthru
      _
    %p171 = scmp.lt.s32.totalorder %s10, 2
    // Predicated region
    $region13: #{_lambda_.58} parent=5 // pred_check
      %p172 = pneg %p171
    $region14: #{_lambda_.58} parent=5 // pred_check_branch
      %174 = sbr.rel (%p172) target = $region16
    $region15: #{_lambda_.58} parent=5 // pred_region
      // Predicated region
      $region17: #{_lambda_.58} parent=15 // pred_check
        %p175 = pneg %p42
      $region18: #{_lambda_.58} parent=15 // pred_check_branch
        %177 = sbr.rel (%p175) target = $region20
      $region19: #{_lambda_.58} parent=15 // pred_region
        %s178 = smul.u32 4, %s17
        %p179 = scmp.lt.s32.totalorder %s178, 7
        %s180 = scalar_select %p179, %s178, 7
        %s181 = smul.addr %s180, 8
        %s182 = scalar_lea.vmem %s0, %s181
        %s183 = smul.u32 4, %s17
      $region20: #{_lambda_.58} parent=15 // pred_fallthru
        _
      // Predicated region
      $region21: #{_lambda_.58} parent=15 // pred_check
        %p184 = pneg %p70
      $region22: #{_lambda_.58} parent=15 // pred_check_branch
        %186 = sbr.rel (%p184) target = $region24
      $region23: #{_lambda_.58} parent=15 // pred_region
        %s187 = smul.u32 4, %s17
        %p188 = scmp.lt.s32.totalorder %s187, 7
        %s189 = scalar_select %p188, %s187, 7
        %p190 = scmp.lt.s32.totalorder %s18, 0
        %s191 = scalar_select %p190, %s18, 0
        %s192 = sadd.s32 %s191, %s189
        %s193 = smul.addr %s192, 8
        %s194 = scalar_lea.vmem %s1, %s193
        %s195 = smul.u32 4, %s17
      $region24: #{_lambda_.58} parent=15 // pred_fallthru
        _
      // Predicated region
      $region25: #{_lambda_.58} parent=15 // pred_check
        %p196 = pneg %p98
      $region26: #{_lambda_.58} parent=15 // pred_check_branch
        %198 = sbr.rel (%p196) target = $region28
      $region27: #{_lambda_.58} parent=15 // pred_region
        %s199 = smul.u32 4, %s17
        %p200 = scmp.lt.s32.totalorder %s199, 7
        %s201 = scalar_select %p200, %s199, 7
        %p202 = scmp.lt.s32.totalorder %s18, 0
        %s203 = scalar_select %p202, %s18, 0
        %s204 = sadd.s32 %s203, %s201
        %s205 = smul.addr %s204, 8
        %s206 = scalar_lea.vmem %s2, %s205
        %s207 = smul.u32 4, %s17
      $region28: #{_lambda_.58} parent=15 // pred_fallthru
        _
      // Predicated region
      $region29: #{_lambda_.58} parent=15 // pred_check
        %p208 = pneg %p124
      $region30: #{_lambda_.58} parent=15 // pred_check_branch
        %210 = sbr.rel (%p208) target = $region32
      $region31: #{_lambda_.58} parent=15 // pred_region
        %s211 = smul.u32 4, %s17
        %p212 = scmp.lt.s32.totalorder %s211, 7
        %s213 = scalar_select %p212, %s211, 7
        %s214 = smul.addr %s213, 8
        %s215 = scalar_lea.vmem %s3, %s214
        %s216 = smul.u32 4, %s17
      $region32: #{_lambda_.58} parent=15 // pred_fallthru
        _
    $region16: #{_lambda_.58} parent=5 // pred_fallthru
      _
    %p217 = scmp.le.s32.totalorder 1, %s10
    %p218 = scmp.lt.s32.totalorder %s10, 3
    %p219 = pnand %p217, %p218
    %p220 = pneg %p219
    // Predicated region
    $region33: #{_lambda_.58} parent=5 // pred_check
      _
    $region34: #{_lambda_.58} parent=5 // pred_check_branch
      %222 = sbr.rel (%p219) target = $region36
    $region35: #{_lambda_.58} parent=5 // pred_region
      %s223 = ssub.s32 %s10, 1
      %s224 = smul.u32 4, %s19
      %p225 = scmp.lt.s32.totalorder %s224, 7
      %s226 = scalar_select %p225, %s224, 7
      %s227 = smul.addr %s226, 8
      %s228 = scalar_lea.vmem %s0, %s227
      %p229 = pneg %p48
      %p230 = pneg %p45
      %s231 = smul.u32 4, %s19
      %p232 = scmp.lt.s32.totalorder %s231, 7
      %s233 = scalar_select %p232, %s231, 7
      %p234 = scmp.lt.s32.totalorder %s20, 0
      %s235 = scalar_select %p234, %s20, 0
      %s236 = sadd.s32 %s235, %s233
      %s237 = smul.addr %s236, 8
      %s238 = scalar_lea.vmem %s1, %s237
      %p239 = pneg %p76
      %p240 = pneg %p73
      %s241 = smul.u32 4, %s19
      %p242 = scmp.lt.s32.totalorder %s241, 7
      %s243 = scalar_select %p242, %s241, 7
      %p244 = scmp.lt.s32.totalorder %s20, 0
      %s245 = scalar_select %p244, %s20, 0
      %s246 = sadd.s32 %s245, %s243
      %s247 = smul.addr %s246, 8
      %s248 = scalar_lea.vmem %s2, %s247
      %p249 = pneg %p104
      %p250 = pneg %p101
      %s251 = smul.u32 4, %s19
      %p252 = scmp.lt.s32.totalorder %s251, 7
      %s253 = scalar_select %p252, %s251, 7
      %s254 = smul.addr %s253, 8
      %s255 = scalar_lea.vmem %s3, %s254
      %p256 = pneg %p130
      %p257 = pneg %p127
      %p258 = pneg %p156
      %p259 = pneg %p153
      %s260 = smul.u32 4, %s19
      %p261 = scmp.lt.s32.totalorder %s260, 7
      %s262 = scalar_select %p261, %s260, 7
      %s263 = smul.addr %s262, 8
      %s264 = scalar_lea.vmem %s4, %s263
      %s265 = smul.u32 4, %s19
      %p266 = scmp.lt.s32.totalorder %s265, 7
      %s267 = scalar_select %p266, %s265, 7
      %s268 = smul.addr %s267, 8
      %s269 = scalar_lea.vmem %s0, %s268
      %s270 = smul.u32 4, %s19
      %s271 = smul.u32 4, %s19
      %p272 = scmp.lt.s32.totalorder %s271, 7
      %s273 = scalar_select %p272, %s271, 7
      %p274 = scmp.lt.s32.totalorder %s20, 0
      %s275 = scalar_select %p274, %s20, 0
      %s276 = sadd.s32 %s275, %s273
      %s277 = smul.addr %s276, 8
      %s278 = scalar_lea.vmem %s1, %s277
      %s279 = smul.u32 4, %s19
      %s280 = smul.u32 4, %s19
      %p281 = scmp.lt.s32.totalorder %s280, 7
      %s282 = scalar_select %p281, %s280, 7
      %p283 = scmp.lt.s32.totalorder %s20, 0
      %s284 = scalar_select %p283, %s20, 0
      %s285 = sadd.s32 %s284, %s282
      %s286 = smul.addr %s285, 8
      %s287 = scalar_lea.vmem %s2, %s286
      %s288 = smul.u32 4, %s19
      %s289 = smul.u32 4, %s19
      %p290 = scmp.lt.s32.totalorder %s289, 7
      %s291 = scalar_select %p290, %s289, 7
      %s292 = smul.addr %s291, 8
      %s293 = scalar_lea.vmem %s3, %s292
      %s294 = smul.u32 4, %s19
      %s295 = smul.u32 4, %s19
      %p296 = scmp.lt.s32.totalorder %s295, 7
      %s297 = scalar_select %p296, %s295, 7
      %s298 = smul.addr %s297, 8
      %s299 = scalar_lea.vmem %s4, %s298
      %s300 = smul.u32 4, %s19
      %p302 = scmp.eq.s32.totalorder %s20, 0
      // Predicated region
      $region37: #{_lambda_.58} parent=35 // pred_check
        %p303 = pneg %p302
      $region38: #{_lambda_.58} parent=35 // pred_check_branch
        %305 = sbr.rel (%p303) target = $region40
      $region39: #{_lambda_.58} parent=35 // pred_region
        %vm306 = vcmask 7168
        %307 = vst.msk [vmem:[#allocation2] sm:$0xff] %vm306, -inf
        %308 = vst.msk [vmem:[#allocation2 + $0x8] sm:$0xff] %vm306, -inf
        %309 = vst.msk [vmem:[#allocation2 + $0x10] sm:$0xff] %vm306, -inf
        %310 = vst.msk [vmem:[#allocation2 + $0x18] sm:$0xff] %vm306, -inf
        %311 = vst.msk [vmem:[#allocation3] sm:$0xff] %vm306, 0.0
        %312 = vst.msk [vmem:[#allocation3 + $0x8] sm:$0xff] %vm306, 0.0
        %313 = vst.msk [vmem:[#allocation3 + $0x10] sm:$0xff] %vm306, 0.0
        %314 = vst.msk [vmem:[#allocation3 + $0x18] sm:$0xff] %vm306, 0.0
        %vm315 = vcmask 64512
        %316 = vst.msk [vmem:[#allocation4] sm:$0xff] %vm315, 0.0
        %317 = vst.msk [vmem:[#allocation4 + $0x8] sm:$0xff] %vm315, 0.0
        %318 = vst.msk [vmem:[#allocation4 + $0x10] sm:$0xff] %vm315, 0.0
        %319 = vst.msk [vmem:[#allocation4 + $0x18] sm:$0xff] %vm315, 0.0
      $region40: #{_lambda_.58} parent=35 // pred_fallthru
        _
      %v320 = vld [vmem:[%s269] sm:$0xff]
      %v321 = vld [vmem:[%s269 + $0x8] sm:$0xff]
      %v322 = vld [vmem:[%s269 + $0x10] sm:$0xff]
      %v323 = vld [vmem:[%s269 + $0x18] sm:$0xff]
      %v324 = vpack.c.bf16 %v320, %v320
      %v325 = vpack.c.bf16 %v321, %v321
      %v326 = vpack.c.bf16 %v322, %v322
      %v327 = vpack.c.bf16 %v323, %v323
      %v328 = vld [vmem:[%s278] sm:$0xff]
      %v329 = vld [vmem:[%s278 + $0x8] sm:$0xff]
      %v330 = vld [vmem:[%s278 + $0x10] sm:$0xff]
      %v331 = vld [vmem:[%s278 + $0x18] sm:$0xff]
      %v332 = vpack.c.bf16 %v328, %v328
      %v333 = vpack.c.bf16 %v329, %v329
      %v334 = vpack.c.bf16 %v330, %v330
      %v335 = vpack.c.bf16 %v331, %v331
      %v336 = vld [vmem:[%s287] sm:$0xff]
      %v337 = vld [vmem:[%s287 + $0x8] sm:$0xff]
      %v338 = vld [vmem:[%s287 + $0x10] sm:$0xff]
      %v339 = vld [vmem:[%s287 + $0x18] sm:$0xff]
      %v340 = vpack.c.bf16 %v336, %v336
      %v341 = vpack.c.bf16 %v337, %v337
      %v342 = vpack.c.bf16 %v338, %v338
      %v343 = vpack.c.bf16 %v339, %v339
      %v344 = vlaneseq
      %v345 = vand.u32 %v344, 127
      %s346 = smul.u32 %s20, 8
      %v347 = vstv %s346
      %v348 = vadd.s32 %v345, %v347
      %v349 = vld [vmem:[%s293] sm:$0xff]
      %v350 = vld [vmem:[%s293 + $0x8] sm:$0xff]
      %v351 = vld [vmem:[%s293 + $0x10] sm:$0xff]
      %v352 = vld [vmem:[%s293 + $0x18] sm:$0xff]
      %353 = vset.pattern.permute.xlu0 0
      %354 = vperm.xlu0 %353, %v349
      %v355 = vpop.permute.xlu0 %354
      %356 = vset.pattern.permute.xlu0 0
      %357 = vperm.xlu0 %356, %v350
      %v358 = vpop.permute.xlu0 %357
      %359 = vset.pattern.permute.xlu0 0
      %360 = vperm.xlu0 %359, %v351
      %v361 = vpop.permute.xlu0 %360
      %362 = vset.pattern.permute.xlu0 0
      %363 = vperm.xlu0 %362, %v352
      %v364 = vpop.permute.xlu0 %363
      %vm365 = vcmp.le.s32.totalorder %v348, %v355
      %vm366 = vcmp.le.s32.totalorder %v348, %v358
      %vm367 = vcmp.le.s32.totalorder %v348, %v361
      %vm368 = vcmp.le.s32.totalorder %v348, %v364
      %vm369 = vcmask 64512
      %v371 = vsel %vm369, %v324, 0
      %v374 = vsel %vm369, %v332, 0
      %376 = vmatprep.subr.bf16.mxu0 0
      %377 = vmatpush1.bf16.xpose.msra.mxu0 0
      %378 = vmatprep.subr.bf16.mxu0 0
      %379 = vmatpush1.bf16.xpose.msra.mxu0 0
      %380 = vmatprep.subr.bf16.mxu0 0
      %381 = vmatpush1.bf16.xpose.msra.mxu0 0
      %382 = vmatprep.subr.bf16.mxu0 0
      %383 = vmatpush1.bf16.xpose.msra.mxu0 0
      %384 = vmatprep.subr.bf16.mxu0 0
      %385 = vmatpush1.bf16.xpose.msra.mxu0 0
      %386 = vmatprep.subr.bf16.mxu0 0
      %387 = vmatpush1.bf16.xpose.msra.mxu0 0
      %388 = vmatprep.subr.bf16.mxu0 0
      %389 = vmatpush1.bf16.xpose.msra.mxu0 0
      %390 = vmatprep.subr.bf16.mxu0 0
      %391 = vmatpush1.bf16.xpose.msra.mxu0 %v374
      %392 = vmatprep.subr.bf16.mxu0 0
      %393 = vmatpush2.bf16.xpose.msra.mxu0 0
      %394 = vmatprep.subr.bf16.mxu0 0
      %395 = vmatpush2.bf16.xpose.msra.mxu0 0
      %396 = vmatprep.subr.bf16.mxu0 0
      %397 = vmatpush2.bf16.xpose.msra.mxu0 0
      %398 = vmatprep.subr.bf16.mxu0 0
      %399 = vmatpush2.bf16.xpose.msra.mxu0 0
      %400 = vmatprep.subr.bf16.mxu0 0
      %401 = vmatpush2.bf16.xpose.msra.mxu0 0
      %402 = vmatprep.subr.bf16.mxu0 0
      %403 = vmatpush2.bf16.xpose.msra.mxu0 0
      %404 = vmatprep.subr.bf16.mxu0 0
      %405 = vmatpush2.bf16.xpose.msra.mxu0 0
      %406 = vmatprep.subr.bf16.mxu0 0
      %407 = vmatpush2.bf16.xpose.msra.mxu0 0
      %408 = vmatprep.mubr.bf16.mxu0 0
      %409 = vmatmul.mubr.bf16.gmra.mxu0 %v371
      %v410 = vpop.f32.mrf.mxu0
      %v411 = vadd.f32 0.0, %v410
      %v412 = vpop.f32.mrf.mxu0
      %v413 = vpop.f32.mrf.mxu0
      %v414 = vpop.f32.mrf.mxu0
      %415 = vdwg.mxu0
      %v417 = vsel %vm369, %v325, 0
      %v420 = vsel %vm369, %v333, 0
      %422 = vmatprep.subr.bf16.mxu0 0
      %423 = vmatpush1.bf16.xpose.msra.mxu0 0
      %424 = vmatprep.subr.bf16.mxu0 0
      %425 = vmatpush1.bf16.xpose.msra.mxu0 0
      %426 = vmatprep.subr.bf16.mxu0 0
      %427 = vmatpush1.bf16.xpose.msra.mxu0 0
      %428 = vmatprep.subr.bf16.mxu0 0
      %429 = vmatpush1.bf16.xpose.msra.mxu0 0
      %430 = vmatprep.subr.bf16.mxu0 0
      %431 = vmatpush1.bf16.xpose.msra.mxu0 0
      %432 = vmatprep.subr.bf16.mxu0 0
      %433 = vmatpush1.bf16.xpose.msra.mxu0 0
      %434 = vmatprep.subr.bf16.mxu0 0
      %435 = vmatpush1.bf16.xpose.msra.mxu0 0
      %436 = vmatprep.subr.bf16.mxu0 0
      %437 = vmatpush1.bf16.xpose.msra.mxu0 %v420
      %438 = vmatprep.subr.bf16.mxu0 0
      %439 = vmatpush2.bf16.xpose.msra.mxu0 0
      %440 = vmatprep.subr.bf16.mxu0 0
      %441 = vmatpush2.bf16.xpose.msra.mxu0 0
      %442 = vmatprep.subr.bf16.mxu0 0
      %443 = vmatpush2.bf16.xpose.msra.mxu0 0
      %444 = vmatprep.subr.bf16.mxu0 0
      %445 = vmatpush2.bf16.xpose.msra.mxu0 0
      %446 = vmatprep.subr.bf16.mxu0 0
      %447 = vmatpush2.bf16.xpose.msra.mxu0 0
      %448 = vmatprep.subr.bf16.mxu0 0
      %449 = vmatpush2.bf16.xpose.msra.mxu0 0
      %450 = vmatprep.subr.bf16.mxu0 0
      %451 = vmatpush2.bf16.xpose.msra.mxu0 0
      %452 = vmatprep.subr.bf16.mxu0 0
      %453 = vmatpush2.bf16.xpose.msra.mxu0 0
      %454 = vmatprep.mubr.bf16.mxu0 0
      %455 = vmatmul.mubr.bf16.gmra.mxu0 %v417
      %v456 = vpop.f32.mrf.mxu0
      %v457 = vadd.f32 0.0, %v456
      %v458 = vpop.f32.mrf.mxu0
      %v459 = vpop.f32.mrf.mxu0
      %v460 = vpop.f32.mrf.mxu0
      %461 = vdwg.mxu0
      %v463 = vsel %vm369, %v326, 0
      %v466 = vsel %vm369, %v334, 0
      %468 = vmatprep.subr.bf16.mxu0 0
      %469 = vmatpush1.bf16.xpose.msra.mxu0 0
      %470 = vmatprep.subr.bf16.mxu0 0
      %471 = vmatpush1.bf16.xpose.msra.mxu0 0
      %472 = vmatprep.subr.bf16.mxu0 0
      %473 = vmatpush1.bf16.xpose.msra.mxu0 0
      %474 = vmatprep.subr.bf16.mxu0 0
      %475 = vmatpush1.bf16.xpose.msra.mxu0 0
      %476 = vmatprep.subr.bf16.mxu0 0
      %477 = vmatpush1.bf16.xpose.msra.mxu0 0
      %478 = vmatprep.subr.bf16.mxu0 0
      %479 = vmatpush1.bf16.xpose.msra.mxu0 0
      %480 = vmatprep.subr.bf16.mxu0 0
      %481 = vmatpush1.bf16.xpose.msra.mxu0 0
      %482 = vmatprep.subr.bf16.mxu0 0
      %483 = vmatpush1.bf16.xpose.msra.mxu0 %v466
      %484 = vmatprep.subr.bf16.mxu0 0
      %485 = vmatpush2.bf16.xpose.msra.mxu0 0
      %486 = vmatprep.subr.bf16.mxu0 0
      %487 = vmatpush2.bf16.xpose.msra.mxu0 0
      %488 = vmatprep.subr.bf16.mxu0 0
      %489 = vmatpush2.bf16.xpose.msra.mxu0 0
      %490 = vmatprep.subr.bf16.mxu0 0
      %491 = vmatpush2.bf16.xpose.msra.mxu0 0
      %492 = vmatprep.subr.bf16.mxu0 0
      %493 = vmatpush2.bf16.xpose.msra.mxu0 0
      %494 = vmatprep.subr.bf16.mxu0 0
      %495 = vmatpush2.bf16.xpose.msra.mxu0 0
      %496 = vmatprep.subr.bf16.mxu0 0
      %497 = vmatpush2.bf16.xpose.msra.mxu0 0
      %498 = vmatprep.subr.bf16.mxu0 0
      %499 = vmatpush2.bf16.xpose.msra.mxu0 0
      %500 = vmatprep.mubr.bf16.mxu0 0
      %501 = vmatmul.mubr.bf16.gmra.mxu0 %v463
      %v502 = vpop.f32.mrf.mxu0
      %v503 = vadd.f32 0.0, %v502
      %v504 = vpop.f32.mrf.mxu0
      %v505 = vpop.f32.mrf.mxu0
      %v506 = vpop.f32.mrf.mxu0
      %507 = vdwg.mxu0
      %v509 = vsel %vm369, %v327, 0
      %v512 = vsel %vm369, %v335, 0
      %514 = vmatprep.subr.bf16.mxu0 0
      %515 = vmatpush1.bf16.xpose.msra.mxu0 0
      %516 = vmatprep.subr.bf16.mxu0 0
      %517 = vmatpush1.bf16.xpose.msra.mxu0 0
      %518 = vmatprep.subr.bf16.mxu0 0
      %519 = vmatpush1.bf16.xpose.msra.mxu0 0
      %520 = vmatprep.subr.bf16.mxu0 0
      %521 = vmatpush1.bf16.xpose.msra.mxu0 0
      %522 = vmatprep.subr.bf16.mxu0 0
      %523 = vmatpush1.bf16.xpose.msra.mxu0 0
      %524 = vmatprep.subr.bf16.mxu0 0
      %525 = vmatpush1.bf16.xpose.msra.mxu0 0
      %526 = vmatprep.subr.bf16.mxu0 0
      %527 = vmatpush1.bf16.xpose.msra.mxu0 0
      %528 = vmatprep.subr.bf16.mxu0 0
      %529 = vmatpush1.bf16.xpose.msra.mxu0 %v512
      %530 = vmatprep.subr.bf16.mxu0 0
      %531 = vmatpush2.bf16.xpose.msra.mxu0 0
      %532 = vmatprep.subr.bf16.mxu0 0
      %533 = vmatpush2.bf16.xpose.msra.mxu0 0
      %534 = vmatprep.subr.bf16.mxu0 0
      %535 = vmatpush2.bf16.xpose.msra.mxu0 0
      %536 = vmatprep.subr.bf16.mxu0 0
      %537 = vmatpush2.bf16.xpose.msra.mxu0 0
      %538 = vmatprep.subr.bf16.mxu0 0
      %539 = vmatpush2.bf16.xpose.msra.mxu0 0
      %540 = vmatprep.subr.bf16.mxu0 0
      %541 = vmatpush2.bf16.xpose.msra.mxu0 0
      %542 = vmatprep.subr.bf16.mxu0 0
      %543 = vmatpush2.bf16.xpose.msra.mxu0 0
      %544 = vmatprep.subr.bf16.mxu0 0
      %545 = vmatpush2.bf16.xpose.msra.mxu0 0
      %546 = vmatprep.mubr.bf16.mxu0 0
      %547 = vmatmul.mubr.bf16.gmra.mxu0 %v509
      %v548 = vpop.f32.mrf.mxu0
      %v549 = vadd.f32 0.0, %v548
      %v550 = vpop.f32.mrf.mxu0
      %v551 = vpop.f32.mrf.mxu0
      %v552 = vpop.f32.mrf.mxu0
      %553 = vdwg.mxu0
      %v554 = vmul.f32 %v411, 0.35355338
      %v555 = vmul.f32 %v457, 0.35355338
      %v556 = vmul.f32 %v503, 0.35355338
      %v557 = vmul.f32 %v549, 0.35355338
      %v558 = vsel %vm365, %v554, -1e+30
      %v559 = vsel %vm366, %v555, -1e+30
      %v560 = vsel %vm367, %v556, -1e+30
      %v561 = vsel %vm368, %v557, -1e+30
      %v562 = vld [vmem:[#allocation2] sm:$0xff]
      %v563 = vld [vmem:[#allocation2 + $0x8] sm:$0xff]
      %v564 = vld [vmem:[#allocation2 + $0x10] sm:$0xff]
      %v565 = vld [vmem:[#allocation2 + $0x18] sm:$0xff]
      %v566 = vsel %vm369, %v558, -inf
      %567 = vmax.xlane.f32.xlu0 %v566
      %v568 = vpop.xlane.xlu0 %567
      %v569 = vsel %vm369, %v559, -inf
      %570 = vmax.xlane.f32.xlu0 %v569
      %v571 = vpop.xlane.xlu0 %570
      %v572 = vsel %vm369, %v560, -inf
      %573 = vmax.xlane.f32.xlu0 %v572
      %v574 = vpop.xlane.xlu0 %573
      %v575 = vsel %vm369, %v561, -inf
      %576 = vmax.xlane.f32.xlu0 %v575
      %v577 = vpop.xlane.xlu0 %576
      %v578 = vmax.f32 %v562, %v568
      %v579 = vmax.f32 %v563, %v571
      %v580 = vmax.f32 %v564, %v574
      %v581 = vmax.f32 %v565, %v577
      %v582 = vsub.f32 %v562, %v578
      %v583 = vsub.f32 %v563, %v579
      %v584 = vsub.f32 %v564, %v580
      %v585 = vsub.f32 %v565, %v581
      %v586 = vmul.f32 %v582, 1.442695
      %v587 = vpow.pop %v586
      %v588 = vmul.f32 %v583, 1.442695
      %v589 = vpow.pop %v588
      %v590 = vmul.f32 %v584, 1.442695
      %v591 = vpow.pop %v590
      %v592 = vmul.f32 %v585, 1.442695
      %v593 = vpow.pop %v592
      %595 = vset.pattern.permute.xlu0 0
      %596 = vperm.xlu0 %595, %v578
      %v597 = vpop.permute.xlu0 %596
      %600 = vset.pattern.permute.xlu0 0
      %601 = vperm.xlu0 %600, %v579
      %v602 = vpop.permute.xlu0 %601
      %605 = vset.pattern.permute.xlu0 0
      %606 = vperm.xlu0 %605, %v580
      %v607 = vpop.permute.xlu0 %606
      %610 = vset.pattern.permute.xlu0 0
      %611 = vperm.xlu0 %610, %v581
      %v612 = vpop.permute.xlu0 %611
      %v614 = vsub.f32 %v558, %v597
      %v615 = vsub.f32 %v559, %v602
      %v616 = vsub.f32 %v560, %v607
      %v617 = vsub.f32 %v561, %v612
      %v618 = vmul.f32 %v614, 1.442695
      %v619 = vpow.pop %v618
      %v620 = vmul.f32 %v615, 1.442695
      %v621 = vpow.pop %v620
      %v622 = vmul.f32 %v616, 1.442695
      %v623 = vpow.pop %v622
      %v624 = vmul.f32 %v617, 1.442695
      %v625 = vpow.pop %v624
      %v626 = vsel %vm365, %v619, 0.0
      %v627 = vsel %vm366, %v621, 0.0
      %v628 = vsel %vm367, %v623, 0.0
      %v629 = vsel %vm368, %v625, 0.0
      %v630 = vld [vmem:[#allocation3] sm:$0xff]
      %v631 = vld [vmem:[#allocation3 + $0x8] sm:$0xff]
      %v632 = vld [vmem:[#allocation3 + $0x10] sm:$0xff]
      %v633 = vld [vmem:[#allocation3 + $0x18] sm:$0xff]
      %v634 = vmul.f32 %v587, %v630
      %v635 = vmul.f32 %v589, %v631
      %v636 = vmul.f32 %v591, %v632
      %v637 = vmul.f32 %v593, %v633
      %v638 = vsel %vm369, %v626, 0.0
      %639 = vadd.xlane.f32.xlu0 %v638
      %v640 = vpop.xlane.xlu0 %639
      %v641 = vsel %vm369, %v627, 0.0
      %642 = vadd.xlane.f32.xlu0 %v641
      %v643 = vpop.xlane.xlu0 %642
      %v644 = vsel %vm369, %v628, 0.0
      %645 = vadd.xlane.f32.xlu0 %v644
      %v646 = vpop.xlane.xlu0 %645
      %v647 = vsel %vm369, %v629, 0.0
      %648 = vadd.xlane.f32.xlu0 %v647
      %v649 = vpop.xlane.xlu0 %648
      %v650 = vadd.f32 %v634, %v640
      %v651 = vadd.f32 %v635, %v643
      %v652 = vadd.f32 %v636, %v646
      %v653 = vadd.f32 %v637, %v649
      %vm654 = vcmask 7168
      %655 = vst.msk [vmem:[#allocation3] sm:$0xff] %vm654, %v650
      %656 = vst.msk [vmem:[#allocation3 + $0x8] sm:$0xff] %vm654, %v651
      %657 = vst.msk [vmem:[#allocation3 + $0x10] sm:$0xff] %vm654, %v652
      %658 = vst.msk [vmem:[#allocation3 + $0x18] sm:$0xff] %vm654, %v653
      %v659 = vld [vmem:[#allocation4] sm:$0xff]
      %v660 = vld [vmem:[#allocation4 + $0x8] sm:$0xff]
      %v661 = vld [vmem:[#allocation4 + $0x10] sm:$0xff]
      %v662 = vld [vmem:[#allocation4 + $0x18] sm:$0xff]
      %664 = vset.pattern.permute.xlu0 0
      %665 = vperm.xlu0 %664, %v587
      %v666 = vpop.permute.xlu0 %665
      %669 = vset.pattern.permute.xlu0 0
      %670 = vperm.xlu0 %669, %v589
      %v671 = vpop.permute.xlu0 %670
      %674 = vset.pattern.permute.xlu0 0
      %675 = vperm.xlu0 %674, %v591
      %v676 = vpop.permute.xlu0 %675
      %679 = vset.pattern.permute.xlu0 0
      %680 = vperm.xlu0 %679, %v593
      %v681 = vpop.permute.xlu0 %680
      %v683 = vmul.f32 %v666, %v659
      %v684 = vmul.f32 %v671, %v660
      %v685 = vmul.f32 %v676, %v661
      %v686 = vmul.f32 %v681, %v662
      %v687 = vpack.c.bf16 %v626, %v626
      %v688 = vpack.c.bf16 %v627, %v627
      %v689 = vpack.c.bf16 %v628, %v628
      %v690 = vpack.c.bf16 %v629, %v629
      %v692 = vsel %vm369, %v687, 0
      %vm694 = vcmask 1043456
      %v696 = vsel %vm694, %v340, 0
      %698 = vmatprep.subr.bf16.mxu0 0
      %699 = vmatpush1.bf16.msra.mxu0 0
      %700 = vmatprep.subr.bf16.mxu0 0
      %701 = vmatpush1.bf16.msra.mxu0 0
      %702 = vmatprep.subr.bf16.mxu0 0
      %703 = vmatpush1.bf16.msra.mxu0 0
      %704 = vmatprep.subr.bf16.mxu0 0
      %705 = vmatpush1.bf16.msra.mxu0 0
      %706 = vmatprep.subr.bf16.mxu0 0
      %707 = vmatpush1.bf16.msra.mxu0 0
      %708 = vmatprep.subr.bf16.mxu0 0
      %709 = vmatpush1.bf16.msra.mxu0 0
      %710 = vmatprep.subr.bf16.mxu0 0
      %711 = vmatpush1.bf16.msra.mxu0 0
      %712 = vmatprep.subr.bf16.mxu0 0
      %713 = vmatpush1.bf16.msra.mxu0 %v696
      %714 = vmatprep.subr.bf16.mxu0 0
      %715 = vmatpush2.bf16.msra.mxu0 0
      %716 = vmatprep.subr.bf16.mxu0 0
      %717 = vmatpush2.bf16.msra.mxu0 0
      %718 = vmatprep.subr.bf16.mxu0 0
      %719 = vmatpush2.bf16.msra.mxu0 0
      %720 = vmatprep.subr.bf16.mxu0 0
      %721 = vmatpush2.bf16.msra.mxu0 0
      %722 = vmatprep.subr.bf16.mxu0 0
      %723 = vmatpush2.bf16.msra.mxu0 0
      %724 = vmatprep.subr.bf16.mxu0 0
      %725 = vmatpush2.bf16.msra.mxu0 0
      %726 = vmatprep.subr.bf16.mxu0 0
      %727 = vmatpush2.bf16.msra.mxu0 0
      %728 = vmatprep.subr.bf16.mxu0 0
      %729 = vmatpush2.bf16.msra.mxu0 0
      %730 = vmatprep.mubr.bf16.mxu0 0
      %731 = vmatmul.mubr.bf16.gmra.mxu0 %v692
      %v732 = vpop.f32.mrf.mxu0
      %v733 = vadd.f32 0.0, %v732
      %v734 = vpop.f32.mrf.mxu0
      %v735 = vpop.f32.mrf.mxu0
      %v736 = vpop.f32.mrf.mxu0
      %737 = vdwg.mxu0
      %v739 = vsel %vm369, %v688, 0
      %v742 = vsel %vm694, %v341, 0
      %744 = vmatprep.subr.bf16.mxu0 0
      %745 = vmatpush1.bf16.msra.mxu0 0
      %746 = vmatprep.subr.bf16.mxu0 0
      %747 = vmatpush1.bf16.msra.mxu0 0
      %748 = vmatprep.subr.bf16.mxu0 0
      %749 = vmatpush1.bf16.msra.mxu0 0
      %750 = vmatprep.subr.bf16.mxu0 0
      %751 = vmatpush1.bf16.msra.mxu0 0
      %752 = vmatprep.subr.bf16.mxu0 0
      %753 = vmatpush1.bf16.msra.mxu0 0
      %754 = vmatprep.subr.bf16.mxu0 0
      %755 = vmatpush1.bf16.msra.mxu0 0
      %756 = vmatprep.subr.bf16.mxu0 0
      %757 = vmatpush1.bf16.msra.mxu0 0
      %758 = vmatprep.subr.bf16.mxu0 0
      %759 = vmatpush1.bf16.msra.mxu0 %v742
      %760 = vmatprep.subr.bf16.mxu0 0
      %761 = vmatpush2.bf16.msra.mxu0 0
      %762 = vmatprep.subr.bf16.mxu0 0
      %763 = vmatpush2.bf16.msra.mxu0 0
      %764 = vmatprep.subr.bf16.mxu0 0
      %765 = vmatpush2.bf16.msra.mxu0 0
      %766 = vmatprep.subr.bf16.mxu0 0
      %767 = vmatpush2.bf16.msra.mxu0 0
      %768 = vmatprep.subr.bf16.mxu0 0
      %769 = vmatpush2.bf16.msra.mxu0 0
      %770 = vmatprep.subr.bf16.mxu0 0
      %771 = vmatpush2.bf16.msra.mxu0 0
      %772 = vmatprep.subr.bf16.mxu0 0
      %773 = vmatpush2.bf16.msra.mxu0 0
      %774 = vmatprep.subr.bf16.mxu0 0
      %775 = vmatpush2.bf16.msra.mxu0 0
      %776 = vmatprep.mubr.bf16.mxu0 0
      %777 = vmatmul.mubr.bf16.gmra.mxu0 %v739
      %v778 = vpop.f32.mrf.mxu0
      %v779 = vadd.f32 0.0, %v778
      %v780 = vpop.f32.mrf.mxu0
      %v781 = vpop.f32.mrf.mxu0
      %v782 = vpop.f32.mrf.mxu0
      %783 = vdwg.mxu0
      %v785 = vsel %vm369, %v689, 0
      %v788 = vsel %vm694, %v342, 0
      %790 = vmatprep.subr.bf16.mxu0 0
      %791 = vmatpush1.bf16.msra.mxu0 0
      %792 = vmatprep.subr.bf16.mxu0 0
      %793 = vmatpush1.bf16.msra.mxu0 0
      %794 = vmatprep.subr.bf16.mxu0 0
      %795 = vmatpush1.bf16.msra.mxu0 0
      %796 = vmatprep.subr.bf16.mxu0 0
      %797 = vmatpush1.bf16.msra.mxu0 0
      %798 = vmatprep.subr.bf16.mxu0 0
      %799 = vmatpush1.bf16.msra.mxu0 0
      %800 = vmatprep.subr.bf16.mxu0 0
      %801 = vmatpush1.bf16.msra.mxu0 0
      %802 = vmatprep.subr.bf16.mxu0 0
      %803 = vmatpush1.bf16.msra.mxu0 0
      %804 = vmatprep.subr.bf16.mxu0 0
      %805 = vmatpush1.bf16.msra.mxu0 %v788
      %806 = vmatprep.subr.bf16.mxu0 0
      %807 = vmatpush2.bf16.msra.mxu0 0
      %808 = vmatprep.subr.bf16.mxu0 0
      %809 = vmatpush2.bf16.msra.mxu0 0
      %810 = vmatprep.subr.bf16.mxu0 0
      %811 = vmatpush2.bf16.msra.mxu0 0
      %812 = vmatprep.subr.bf16.mxu0 0
      %813 = vmatpush2.bf16.msra.mxu0 0
      %814 = vmatprep.subr.bf16.mxu0 0
      %815 = vmatpush2.bf16.msra.mxu0 0
      %816 = vmatprep.subr.bf16.mxu0 0
      %817 = vmatpush2.bf16.msra.mxu0 0
      %818 = vmatprep.subr.bf16.mxu0 0
      %819 = vmatpush2.bf16.msra.mxu0 0
      %820 = vmatprep.subr.bf16.mxu0 0
      %821 = vmatpush2.bf16.msra.mxu0 0
      %822 = vmatprep.mubr.bf16.mxu0 0
      %823 = vmatmul.mubr.bf16.gmra.mxu0 %v785
      %v824 = vpop.f32.mrf.mxu0
      %v825 = vadd.f32 0.0, %v824
      %v826 = vpop.f32.mrf.mxu0
      %v827 = vpop.f32.mrf.mxu0
      %v828 = vpop.f32.mrf.mxu0
      %829 = vdwg.mxu0
      %v831 = vsel %vm369, %v690, 0
      %v834 = vsel %vm694, %v343, 0
      %836 = vmatprep.subr.bf16.mxu0 0
      %837 = vmatpush1.bf16.msra.mxu0 0
      %838 = vmatprep.subr.bf16.mxu0 0
      %839 = vmatpush1.bf16.msra.mxu0 0
      %840 = vmatprep.subr.bf16.mxu0 0
      %841 = vmatpush1.bf16.msra.mxu0 0
      %842 = vmatprep.subr.bf16.mxu0 0
      %843 = vmatpush1.bf16.msra.mxu0 0
      %844 = vmatprep.subr.bf16.mxu0 0
      %845 = vmatpush1.bf16.msra.mxu0 0
      %846 = vmatprep.subr.bf16.mxu0 0
      %847 = vmatpush1.bf16.msra.mxu0 0
      %848 = vmatprep.subr.bf16.mxu0 0
      %849 = vmatpush1.bf16.msra.mxu0 0
      %850 = vmatprep.subr.bf16.mxu0 0
      %851 = vmatpush1.bf16.msra.mxu0 %v834
      %852 = vmatprep.subr.bf16.mxu0 0
      %853 = vmatpush2.bf16.msra.mxu0 0
      %854 = vmatprep.subr.bf16.mxu0 0
      %855 = vmatpush2.bf16.msra.mxu0 0
      %856 = vmatprep.subr.bf16.mxu0 0
      %857 = vmatpush2.bf16.msra.mxu0 0
      %858 = vmatprep.subr.bf16.mxu0 0
      %859 = vmatpush2.bf16.msra.mxu0 0
      %860 = vmatprep.subr.bf16.mxu0 0
      %861 = vmatpush2.bf16.msra.mxu0 0
      %862 = vmatprep.subr.bf16.mxu0 0
      %863 = vmatpush2.bf16.msra.mxu0 0
      %864 = vmatprep.subr.bf16.mxu0 0
      %865 = vmatpush2.bf16.msra.mxu0 0
      %866 = vmatprep.subr.bf16.mxu0 0
      %867 = vmatpush2.bf16.msra.mxu0 0
      %868 = vmatprep.mubr.bf16.mxu0 0
      %869 = vmatmul.mubr.bf16.gmra.mxu0 %v831
      %v870 = vpop.f32.mrf.mxu0
      %v871 = vadd.f32 0.0, %v870
      %v872 = vpop.f32.mrf.mxu0
      %v873 = vpop.f32.mrf.mxu0
      %v874 = vpop.f32.mrf.mxu0
      %875 = vdwg.mxu0
      %v876 = vadd.f32 %v683, %v733
      %v877 = vadd.f32 %v684, %v779
      %v878 = vadd.f32 %v685, %v825
      %v879 = vadd.f32 %v686, %v871
      %880 = vst.msk [vmem:[#allocation4] sm:$0xff] %vm369, %v876
      %881 = vst.msk [vmem:[#allocation4 + $0x8] sm:$0xff] %vm369, %v877
      %882 = vst.msk [vmem:[#allocation4 + $0x10] sm:$0xff] %vm369, %v878
      %883 = vst.msk [vmem:[#allocation4 + $0x18] sm:$0xff] %vm369, %v879
      %884 = vst.msk [vmem:[#allocation2] sm:$0xff] %vm654, %v578
      %885 = vst.msk [vmem:[#allocation2 + $0x8] sm:$0xff] %vm654, %v579
      %886 = vst.msk [vmem:[#allocation2 + $0x10] sm:$0xff] %vm654, %v580
      %887 = vst.msk [vmem:[#allocation2 + $0x18] sm:$0xff] %vm654, %v581
      // Predicated region
      $region41: #{_lambda_.58} parent=35 // pred_check
        %p888 = pneg %p302
      $region42: #{_lambda_.58} parent=35 // pred_check_branch
        %890 = sbr.rel (%p888) target = $region44
      $region43: #{_lambda_.58} parent=35 // pred_region
        %v891 = vld [vmem:[#allocation4] sm:$0xff]
        %v892 = vld [vmem:[#allocation4 + $0x8] sm:$0xff]
        %v893 = vld [vmem:[#allocation4 + $0x10] sm:$0xff]
        %v894 = vld [vmem:[#allocation4 + $0x18] sm:$0xff]
        %v895 = vld [vmem:[#allocation3] sm:$0xff]
        %v896 = vld [vmem:[#allocation3 + $0x8] sm:$0xff]
        %v897 = vld [vmem:[#allocation3 + $0x10] sm:$0xff]
        %v898 = vld [vmem:[#allocation3 + $0x18] sm:$0xff]
        %900 = vset.pattern.permute.xlu0 0
        %901 = vperm.xlu0 %900, %v895
        %v902 = vpop.permute.xlu0 %901
        %905 = vset.pattern.permute.xlu0 0
        %906 = vperm.xlu0 %905, %v896
        %v907 = vpop.permute.xlu0 %906
        %910 = vset.pattern.permute.xlu0 0
        %911 = vperm.xlu0 %910, %v897
        %v912 = vpop.permute.xlu0 %911
        %915 = vset.pattern.permute.xlu0 0
        %916 = vperm.xlu0 %915, %v898
        %v917 = vpop.permute.xlu0 %916
        %v919 = vrcp.pop %v902
        %v920 = vmul.f32 %v891, %v919
        %v921 = vrcp.pop %v907
        %v922 = vmul.f32 %v892, %v921
        %v923 = vrcp.pop %v912
        %v924 = vmul.f32 %v893, %v923
        %v925 = vrcp.pop %v917
        %v926 = vmul.f32 %v894, %v925
        %927 = vst.msk [vmem:[%s299] sm:$0xff] %vm369, %v920
        %928 = vst.msk [vmem:[%s299 + $0x8] sm:$0xff] %vm369, %v922
        %929 = vst.msk [vmem:[%s299 + $0x10] sm:$0xff] %vm369, %v924
        %930 = vst.msk [vmem:[%s299 + $0x18] sm:$0xff] %vm369, %v926
      $region44: #{_lambda_.58} parent=35 // pred_fallthru
        _
      %s931 = smul.u32 4, %s19
      %p932 = scmp.lt.s32.totalorder %s931, 7
      %s933 = scalar_select %p932, %s931, 7
      %s934 = smul.addr %s933, 8
      %s935 = scalar_lea.vmem %s4, %s934
      // Predicated region
      $region45: #{_lambda_.58} parent=35 // pred_check
        %p936 = pneg %p153
      $region46: #{_lambda_.58} parent=35 // pred_check_branch
        %938 = sbr.rel (%p936) target = $region48
      $region47: #{_lambda_.58} parent=35 // pred_region
        %s939 = smul.u32 4, %s19
      $region48: #{_lambda_.58} parent=35 // pred_fallthru
        _
    $region36: #{_lambda_.58} parent=5 // pred_fallthru
      _
    %p940 = scmp.le.s32.totalorder 2, %s10
    // Predicated region
    $region49: #{_lambda_.58} parent=5 // pred_check
      %p941 = pneg %p940
    $region50: #{_lambda_.58} parent=5 // pred_check_branch
      %943 = sbr.rel (%p941) target = $region52
    $region51: #{_lambda_.58} parent=5 // pred_region
      %s944 = ssub.s32 %s10, 2
      // Predicated region
      $region53: #{_lambda_.58} parent=51 // pred_check
        %p945 = pneg %p159
      $region54: #{_lambda_.58} parent=51 // pred_check_branch
        %947 = sbr.rel (%p945) target = $region56
      $region55: #{_lambda_.58} parent=51 // pred_region
        %s948 = smul.u32 4, %s21
        %p949 = scmp.lt.s32.totalorder %s948, 7
        %s950 = scalar_select %p949, %s948, 7
        %s951 = smul.addr %s950, 8
        %s952 = scalar_lea.vmem %s4, %s951
      $region56: #{_lambda_.58} parent=51 // pred_fallthru
        _
    $region52: #{_lambda_.58} parent=5 // pred_fallthru
      _
  $region6: #{_lambda_.58} parent=0 // loop_footer
    %s14 = sadd.s32 1, %s10
  $region7: #{_lambda_.58} parent=0 // loop_footer_branch
    %9 = sbr.rel target = $region3
  $region8: #{_lambda_.58} parent=0 // loop_exit
    _

// kernel: _lambda_.67
$region0: #{_lambda_.67}
  #allocation0 [shape = 'u32[]', space=smem, size = 0x4, offset = 0x4, fixed_abs, tag = 'smem constant byte address 0x4 - core index']
  #allocation1 [shape = 'u32[144,128]{1,0:T(1,128)}', space=vmem, size = 0x12000, scoped, tag = 'internal scratch']
  %s0 = inlined_call_operand.vmem [shape: f32[16,32], index: 0, kind: input, shape index: {}]
  %s1 = inlined_call_operand.vmem [shape: f32[1,32], index: 1, kind: input, shape index: {}]
  %s2 = inlined_call_operand.vmem [shape: f32[1,32], index: 2, kind: input, shape index: {}]
  %s3 = inlined_call_operand.vmem [shape: bf16[32,4], index: 3, kind: input, shape index: {}]
  %s4 = inlined_call_operand.vmem [shape: f32[1,4], index: 4, kind: input, shape index: {}]
  %s5 = inlined_call_operand.vmem [shape: f32[16,4], index: 5, kind: output, shape index: {}]
  %s6 = sld [smem:[#allocation0]]
  $region53: #{_lambda_.67} parent=0
    _
  %s8 = ssub.s32 1, %s6
  %s9 = scalar_select 0, %s8, %s6
  loop: start=0, step=1, limit=4
  $region2: #{_lambda_.67} parent=0 // loop_pre_header
    _
  $region3: #{_lambda_.67} parent=0 // loop_header
    %s11 = sphi 0, %s15
    %p12 = scmp.ge.s32.totalorder %s11, 4
    %s21 = sphi 0, %s23
    %s24 = sphi 0, %s21
    %s25 = sphi 0, %s24
    %s41 = sphi 0, %s25
    %s45 = sphi 0, %s45
    %s47 = sphi 0, %s45
    %s48 = sphi 0, %s47
    %s62 = sphi 0, %s48
    %s66 = sphi 0, %s66
    %s68 = sphi 0, %s66
    %s69 = sphi 0, %s68
    %s83 = sphi 0, %s69
    %s87 = sphi 0, %s87
    %s89 = sphi 0, %s87
    %s90 = sphi 0, %s89
    %s104 = sphi 0, %s90
    %s108 = sphi 0, %s108
    %s110 = sphi 0, %s108
    %s111 = sphi 0, %s110
    %s125 = sphi 0, %s111
    %s131 = sphi 0, %s133
    %s134 = sphi 0, %s131
    %s135 = sphi 0, %s134
    %s151 = sphi 0, %s135
  $region4: #{_lambda_.67} parent=0 // loop_header_branch
    %14 = sbr.rel (%p12) target = $region8
  $region5: #{_lambda_.67} parent=0 // loop_body
    %s16 = ssub.s32 %s11, 1
    %s17 = ssub.s32 %s11, 2
    %s18 = sadd.s32 %s11, 1
    %s19 = ssub.s32 %s11, %s18
    %p20 = scmp.eq.s32.totalorder %s19, 0
    %s22 = sadd.s32 %s21, 1
    %s23 = scalar_select %p20, %s21, %s22
    %p26 = pneg %p20
    %p27 = scmp.eq.s32.totalorder %s11, 1
    %p28 = por %p26, %p27
    %p29 = scmp.ne.s32.totalorder %s21, %s24
    %p30 = scmp.eq.s32.totalorder %s11, 0
    %p31 = por %p29, %p30
    %p32 = scmp.ne.s32.totalorder %s21, %s24
    %p33 = scmp.eq.s32.totalorder %s16, 1
    %p34 = por %p32, %p33
    %p35 = scmp.ne.s32.totalorder %s24, %s25
    %p36 = scmp.eq.s32.totalorder %s16, 0
    %p37 = por %p35, %p36
    %p38 = scmp.ne.s32.totalorder %s24, %s25
    %p39 = scmp.eq.s32.totalorder %s17, 1
    %p40 = por %p38, %p39
    %p42 = scmp.ne.s32.totalorder %s25, %s41
    %p43 = scmp.eq.s32.totalorder %s17, 0
    %p44 = por %p42, %p43
    %s46 = sadd.s32 %s45, 1
    %p49 = scmp.eq.s32.totalorder %s11, 1
    %p50 = scmp.ne.s32.totalorder %s45, %s47
    %p51 = scmp.eq.s32.totalorder %s11, 0
    %p52 = por %p50, %p51
    %p53 = scmp.ne.s32.totalorder %s45, %s47
    %p54 = scmp.eq.s32.totalorder %s16, 1
    %p55 = por %p53, %p54
    %p56 = scmp.ne.s32.totalorder %s47, %s48
    %p57 = scmp.eq.s32.totalorder %s16, 0
    %p58 = por %p56, %p57
    %p59 = scmp.ne.s32.totalorder %s47, %s48
    %p60 = scmp.eq.s32.totalorder %s17, 1
    %p61 = por %p59, %p60
    %p63 = scmp.ne.s32.totalorder %s48, %s62
    %p64 = scmp.eq.s32.totalorder %s17, 0
    %p65 = por %p63, %p64
    %s67 = sadd.s32 %s66, 1
    %p70 = scmp.eq.s32.totalorder %s11, 1
    %p71 = scmp.ne.s32.totalorder %s66, %s68
    %p72 = scmp.eq.s32.totalorder %s11, 0
    %p73 = por %p71, %p72
    %p74 = scmp.ne.s32.totalorder %s66, %s68
    %p75 = scmp.eq.s32.totalorder %s16, 1
    %p76 = por %p74, %p75
    %p77 = scmp.ne.s32.totalorder %s68, %s69
    %p78 = scmp.eq.s32.totalorder %s16, 0
    %p79 = por %p77, %p78
    %p80 = scmp.ne.s32.totalorder %s68, %s69
    %p81 = scmp.eq.s32.totalorder %s17, 1
    %p82 = por %p80, %p81
    %p84 = scmp.ne.s32.totalorder %s69, %s83
    %p85 = scmp.eq.s32.totalorder %s17, 0
    %p86 = por %p84, %p85
    %s88 = sadd.s32 %s87, 1
    %p91 = scmp.eq.s32.totalorder %s11, 1
    %p92 = scmp.ne.s32.totalorder %s87, %s89
    %p93 = scmp.eq.s32.totalorder %s11, 0
    %p94 = por %p92, %p93
    %p95 = scmp.ne.s32.totalorder %s87, %s89
    %p96 = scmp.eq.s32.totalorder %s16, 1
    %p97 = por %p95, %p96
    %p98 = scmp.ne.s32.totalorder %s89, %s90
    %p99 = scmp.eq.s32.totalorder %s16, 0
    %p100 = por %p98, %p99
    %p101 = scmp.ne.s32.totalorder %s89, %s90
    %p102 = scmp.eq.s32.totalorder %s17, 1
    %p103 = por %p101, %p102
    %p105 = scmp.ne.s32.totalorder %s90, %s104
    %p106 = scmp.eq.s32.totalorder %s17, 0
    %p107 = por %p105, %p106
    %s109 = sadd.s32 %s108, 1
    %p112 = scmp.eq.s32.totalorder %s11, 1
    %p113 = scmp.ne.s32.totalorder %s108, %s110
    %p114 = scmp.eq.s32.totalorder %s11, 0
    %p115 = por %p113, %p114
    %p116 = scmp.ne.s32.totalorder %s108, %s110
    %p117 = scmp.eq.s32.totalorder %s16, 1
    %p118 = por %p116, %p117
    %p119 = scmp.ne.s32.totalorder %s110, %s111
    %p120 = scmp.eq.s32.totalorder %s16, 0
    %p121 = por %p119, %p120
    %p122 = scmp.ne.s32.totalorder %s110, %s111
    %p123 = scmp.eq.s32.totalorder %s17, 1
    %p124 = por %p122, %p123
    %p126 = scmp.ne.s32.totalorder %s111, %s125
    %p127 = scmp.eq.s32.totalorder %s17, 0
    %p128 = por %p126, %p127
    %s129 = ssub.s32 %s11, %s18
    %p130 = scmp.eq.s32.totalorder %s129, 0
    %s132 = sadd.s32 %s131, 1
    %s133 = scalar_select %p130, %s131, %s132
    %p136 = pneg %p130
    %p137 = scmp.eq.s32.totalorder %s11, 1
    %p138 = por %p136, %p137
    %p139 = scmp.ne.s32.totalorder %s131, %s134
    %p140 = scmp.eq.s32.totalorder %s11, 0
    %p141 = por %p139, %p140
    %p142 = scmp.ne.s32.totalorder %s131, %s134
    %p143 = scmp.eq.s32.totalorder %s16, 1
    %p144 = por %p142, %p143
    %p145 = scmp.ne.s32.totalorder %s134, %s135
    %p146 = scmp.eq.s32.totalorder %s16, 0
    %p147 = por %p145, %p146
    %p148 = scmp.ne.s32.totalorder %s134, %s135
    %p149 = scmp.eq.s32.totalorder %s17, 1
    %p150 = por %p148, %p149
    %p152 = scmp.ne.s32.totalorder %s135, %s151
    %p153 = scmp.eq.s32.totalorder %s17, 0
    %p154 = por %p152, %p153
    %p155 = scmp.le.s32.totalorder 1, %s11
    %p156 = scmp.lt.s32.totalorder %s11, 3
    %p157 = pnand %p155, %p156
    %p158 = pneg %p157
    // Predicated region
    $region9: #{_lambda_.67} parent=5 // pred_check
      _
    $region10: #{_lambda_.67} parent=5 // pred_check_branch
      %160 = sbr.rel (%p157) target = $region12
    $region11: #{_lambda_.67} parent=5 // pred_region
      %s161 = ssub.s32 %s11, 1
      // Predicated region
      $region13: #{_lambda_.67} parent=11 // pred_check
        %p162 = pneg %p58
      $region14: #{_lambda_.67} parent=11 // pred_check_branch
        %164 = sbr.rel (%p162) target = $region16
      $region15: #{_lambda_.67} parent=11 // pred_region
        _
      $region16: #{_lambda_.67} parent=11 // pred_fallthru
        _
      // Predicated region
      $region17: #{_lambda_.67} parent=11 // pred_check
        %p165 = pneg %p79
      $region18: #{_lambda_.67} parent=11 // pred_check_branch
        %167 = sbr.rel (%p165) target = $region20
      $region19: #{_lambda_.67} parent=11 // pred_region
        _
      $region20: #{_lambda_.67} parent=11 // pred_fallthru
        _
      // Predicated region
      $region21: #{_lambda_.67} parent=11 // pred_check
        %p168 = pneg %p100
      $region22: #{_lambda_.67} parent=11 // pred_check_branch
        %170 = sbr.rel (%p168) target = $region24
      $region23: #{_lambda_.67} parent=11 // pred_region
        _
      $region24: #{_lambda_.67} parent=11 // pred_fallthru
        _
      // Predicated region
      $region25: #{_lambda_.67} parent=11 // pred_check
        %p171 = pneg %p121
      $region26: #{_lambda_.67} parent=11 // pred_check_branch
        %173 = sbr.rel (%p171) target = $region28
      $region27: #{_lambda_.67} parent=11 // pred_region
        _
      $region28: #{_lambda_.67} parent=11 // pred_fallthru
        _
    $region12: #{_lambda_.67} parent=5 // pred_fallthru
      _
    %p174 = scmp.lt.s32.totalorder %s11, 2
    // Predicated region
    $region29: #{_lambda_.67} parent=5 // pred_check
      %p175 = pneg %p174
    $region30: #{_lambda_.67} parent=5 // pred_check_branch
      %177 = sbr.rel (%p175) target = $region32
    $region31: #{_lambda_.67} parent=5 // pred_region
      // Predicated region
      $region33: #{_lambda_.67} parent=31 // pred_check
        %p178 = pneg %p31
      $region34: #{_lambda_.67} parent=31 // pred_check_branch
        %180 = sbr.rel (%p178) target = $region36
      $region35: #{_lambda_.67} parent=31 // pred_region
        %p181 = scmp.lt.s32.totalorder %s11, 1
        %s182 = scalar_select %p181, %s11, 1
        %s183 = smul.addr %s182, 8
        %s184 = scalar_lea.vmem %s0, %s183
      $region36: #{_lambda_.67} parent=31 // pred_fallthru
        _
    $region32: #{_lambda_.67} parent=5 // pred_fallthru
      _
    %p185 = scmp.le.s32.totalorder 1, %s11
    %p186 = scmp.lt.s32.totalorder %s11, 3
    %p187 = pnand %p185, %p186
    %p188 = pneg %p187
    // Predicated region
    $region37: #{_lambda_.67} parent=5 // pred_check
      _
    $region38: #{_lambda_.67} parent=5 // pred_check_branch
      %190 = sbr.rel (%p187) target = $region40
    $region39: #{_lambda_.67} parent=5 // pred_region
      %s191 = ssub.s32 %s11, 1
      %p192 = scmp.lt.s32.totalorder %s16, 1
      %s193 = scalar_select %p192, %s16, 1
      %s194 = smul.addr %s193, 8
      %s195 = scalar_lea.vmem %s0, %s194
      %p196 = pneg %p37
      %p197 = pneg %p34
      %p198 = pneg %p58
      %p199 = pneg %p55
      %p200 = pneg %p79
      %p201 = pneg %p76
      %p202 = pneg %p100
      %p203 = pneg %p97
      %p204 = pneg %p121
      %p205 = pneg %p118
      %p206 = pneg %p147
      %p207 = pneg %p144
      %p208 = scmp.lt.s32.totalorder %s16, 1
      %s209 = scalar_select %p208, %s16, 1
      %s210 = smul.addr %s209, 8
      %s211 = scalar_lea.vmem %s5, %s210
      %p212 = scmp.lt.s32.totalorder %s16, 1
      %s213 = scalar_select %p212, %s16, 1
      %s214 = smul.addr %s213, 8
      %s215 = scalar_lea.vmem %s0, %s214
      %p216 = scmp.lt.s32.totalorder %s16, 1
      %s217 = scalar_select %p216, %s16, 1
      %s218 = smul.addr %s217, 8
      %s219 = scalar_lea.vmem %s5, %s218
      %v221 = vld [vmem:[%s215] sm:$0xff]
      %v222 = vld [vmem:[%s1] sm:$0x1]
      %v223 = vld [vmem:[%s2] sm:$0x1]
      %vm224 = vcmask 261120
      %v225 = vsel %vm224, %v221, 0.0
      %226 = vadd.xlane.f32.xlu0 %v225
      %v227 = vpop.xlane.xlu0 %226
      %v228 = vrcp.pop 32.0
      %v229 = vmul.f32 %v227, %v228
      %v230 = vsub.f32 %v221, %v229
      %v231 = vmul.f32 %v230, %v230
      %v232 = vsel %vm224, %v231, 0.0
      %233 = vadd.xlane.f32.xlu0 %v232
      %v234 = vpop.xlane.xlu0 %233
      %v235 = vmul.f32 %v234, %v228
      %v236 = vadd.f32 %v235, 1e-05
      %v237 = vrsqrt.pop %v236
      %v238 = vmul.f32 %v230, %v237
      %v240 = vlaneseq
      %v241 = vshrl.u32 %v240, 7
      %v242 = vsub.s32 0, %v241
      %v243 = vrot.slane %v222, %v242
      %v245 = vmul.f32 %v238, %v243
      %v247 = vlaneseq
      %v248 = vshrl.u32 %v247, 7
      %v249 = vsub.s32 0, %v248
      %v250 = vrot.slane %v223, %v249
      %v252 = vadd.f32 %v245, %v250
      %v253 = vpack.c.bf16 %v252, %v252
      %v254 = vld [vmem:[%s3] sm:$0xf]
      %v255 = vld [vmem:[%s3 + $0x4] sm:$0xf]
      %v256 = vld [vmem:[%s3 + $0x8] sm:$0xf]
      %v257 = vld [vmem:[%s3 + $0xc] sm:$0xf]
      %v258 = vld [vmem:[%s4] sm:$0x1]
      %v260 = vlaneseq
      %v261 = vshrl.u32 %v260, 7
      %v262 = vsub.s32 0, %v261
      %v263 = vrot.slane %v258, %v262
      %v269 = vunpack.c.l.b16 %v254
      %v270 = vunpack.c.l.b16 %v255
      %v271 = vunpack.c.l.b16 %v256
      %v272 = vunpack.c.l.b16 %v257
      %v273 = vpack.c.b16 %v270, %v269
      %v274 = vpack.c.b16 %v272, %v271
      %v278 = vsel %vm224, %v253, 0
      %280 = vmatprep.subr.bf16.mxu0 0
      %281 = vmatpush1.bf16.msra.mxu0 0
      %282 = vmatprep.subr.bf16.mxu0 0
      %283 = vmatpush1.bf16.msra.mxu0 0
      %284 = vmatprep.subr.bf16.mxu0 0
      %285 = vmatpush1.bf16.msra.mxu0 0
      %286 = vmatprep.subr.bf16.mxu0 0
      %287 = vmatpush1.bf16.msra.mxu0 0
      %288 = vmatprep.subr.bf16.mxu0 0
      %289 = vmatpush1.bf16.msra.mxu0 0
      %290 = vmatprep.subr.bf16.mxu0 0
      %291 = vmatpush1.bf16.msra.mxu0 0
      %292 = vmatprep.subr.bf16.mxu0 0
      %293 = vmatpush1.bf16.msra.mxu0 %v274
      %294 = vmatprep.subr.bf16.mxu0 0
      %295 = vmatpush1.bf16.msra.mxu0 %v273
      %296 = vmatprep.subr.bf16.mxu0 0
      %297 = vmatpush2.bf16.msra.mxu0 0
      %298 = vmatprep.subr.bf16.mxu0 0
      %299 = vmatpush2.bf16.msra.mxu0 0
      %300 = vmatprep.subr.bf16.mxu0 0
      %301 = vmatpush2.bf16.msra.mxu0 0
      %302 = vmatprep.subr.bf16.mxu0 0
      %303 = vmatpush2.bf16.msra.mxu0 0
      %304 = vmatprep.subr.bf16.mxu0 0
      %305 = vmatpush2.bf16.msra.mxu0 0
      %306 = vmatprep.subr.bf16.mxu0 0
      %307 = vmatpush2.bf16.msra.mxu0 0
      %308 = vmatprep.subr.bf16.mxu0 0
      %309 = vmatpush2.bf16.msra.mxu0 0
      %310 = vmatprep.subr.bf16.mxu0 0
      %311 = vmatpush2.bf16.msra.mxu0 0
      %312 = vmatprep.mubr.bf16.mxu0 0
      %313 = vmatmul.mubr.bf16.gmra.mxu0 %v278
      %v314 = vpop.f32.mrf.mxu0
      %v315 = vadd.f32 %v263, %v314
      %v316 = vpop.f32.mrf.mxu0
      %v317 = vpop.f32.mrf.mxu0
      %v318 = vpop.f32.mrf.mxu0
      %319 = vdwg.mxu0
      %vm320 = vcmask 31744
      %321 = vst.msk [vmem:[%s219] sm:$0xff] %vm320, %v315
      %p322 = scmp.lt.s32.totalorder %s16, 1
      %s323 = scalar_select %p322, %s16, 1
      %s324 = smul.addr %s323, 8
      %s325 = scalar_lea.vmem %s5, %s324
      // Predicated region
      $region41: #{_lambda_.67} parent=39 // pred_check
        %p326 = pneg %p144
      $region42: #{_lambda_.67} parent=39 // pred_check_branch
        %328 = sbr.rel (%p326) target = $region44
      $region43: #{_lambda_.67} parent=39 // pred_region
        _
      $region44: #{_lambda_.67} parent=39 // pred_fallthru
        _
    $region40: #{_lambda_.67} parent=5 // pred_fallthru
      _
    %p329 = scmp.le.s32.totalorder 2, %s11
    // Predicated region
    $region45: #{_lambda_.67} parent=5 // pred_check
      %p330 = pneg %p329
    $region46: #{_lambda_.67} parent=5 // pred_check_branch
      %332 = sbr.rel (%p330) target = $region48
    $region47: #{_lambda_.67} parent=5 // pred_region
      %s333 = ssub.s32 %s11, 2
      // Predicated region
      $region49: #{_lambda_.67} parent=47 // pred_check
        %p334 = pneg %p150
      $region50: #{_lambda_.67} parent=47 // pred_check_branch
        %336 = sbr.rel (%p334) target = $region52
      $region51: #{_lambda_.67} parent=47 // pred_region
        %p337 = scmp.lt.s32.totalorder %s17, 1
        %s338 = scalar_select %p337, %s17, 1
        %s339 = smul.addr %s338, 8
        %s340 = scalar_lea.vmem %s5, %s339
      $region52: #{_lambda_.67} parent=47 // pred_fallthru
        _
    $region48: #{_lambda_.67} parent=5 // pred_fallthru
      _
  $region6: #{_lambda_.67} parent=0 // loop_footer
    %s15 = sadd.s32 1, %s11
  $region7: #{_lambda_.67} parent=0 // loop_footer_branch
    %10 = sbr.rel target = $region3
  $region8: #{_lambda_.67} parent=0 // loop_exit
    _

// kernel: _lambda_.63
$region0: #{_lambda_.63}
  #allocation0 [shape = 'u32[]', space=smem, size = 0x4, offset = 0x4, fixed_abs, tag = 'smem constant byte address 0x4 - core index']
  #allocation1 [shape = 'u32[144,128]{1,0:T(1,128)}', space=vmem, size = 0x12000, scoped, tag = 'internal scratch']
  #allocation2 [shape = 'f32[4,8,1]{2,1,0:T(8,128)}', space=vmem, size = 0x4000, scoped, tag = 'scratch operand']
  #allocation3 [shape = 'f32[4,8,1]{2,1,0:T(8,128)}', space=vmem, size = 0x4000, scoped, tag = 'scratch operand']
  #allocation4 [shape = 'f32[4,8,8]{2,1,0:T(8,128)}', space=vmem, size = 0x4000, scoped, tag = 'scratch operand']
  %s0 = inlined_call_operand.vmem [shape: f32[8,8,8], index: 0, kind: input, shape index: {}]
  %s1 = inlined_call_operand.vmem [shape: f32[8,4,8], index: 1, kind: input, shape index: {}]
  %s2 = inlined_call_operand.vmem [shape: f32[8,4,8], index: 2, kind: input, shape index: {}]
  %s3 = inlined_call_operand.vmem [shape: f32[8,8,8], index: 3, kind: output, shape index: {}]
  %s4 = sld [smem:[#allocation0]]
  $region53: #{_lambda_.63} parent=0
    _
  %s6 = ssub.s32 1, %s4
  %s7 = scalar_select 0, %s6, %s4
  loop: start=0, step=1, limit=4
  $region2: #{_lambda_.63} parent=0 // loop_pre_header
    _
  $region3: #{_lambda_.63} parent=0 // loop_header
    %s9 = sphi 0, %s13
    %p10 = scmp.ge.s32.totalorder %s9, 4
    %s16 = sphi 0, %s28
    %s17 = sphi 0, %s24
    %s18 = sphi 0, %s16
    %s19 = sphi 0, %s17
    %s20 = sphi 0, %s18
    %s21 = sphi 0, %s19
    %s31 = sphi 0, %s33
    %s34 = sphi 0, %s31
    %s35 = sphi 0, %s34
    %s51 = sphi 0, %s35
    %s59 = sphi 0, %s61
    %s62 = sphi 0, %s59
    %s63 = sphi 0, %s62
    %s79 = sphi 0, %s63
    %s87 = sphi 0, %s89
    %s90 = sphi 0, %s87
    %s91 = sphi 0, %s90
    %s107 = sphi 0, %s91
    %s113 = sphi 0, %s115
    %s116 = sphi 0, %s113
    %s117 = sphi 0, %s116
    %s133 = sphi 0, %s117
  $region4: #{_lambda_.63} parent=0 // loop_header_branch
    %12 = sbr.rel (%p10) target = $region8
  $region5: #{_lambda_.63} parent=0 // loop_body
    %s14 = ssub.s32 %s9, 1
    %s15 = ssub.s32 %s9, 2
    %s22 = sadd.s32 1, %s17
    %p23 = scmp.ge.s32.totalorder %s22, 1
    %s24 = scalar_select %p23, 0, %s22
    %s25 = sadd.s32 1, %s16
    %s26 = scalar_select %p23, %s25, %s16
    %p27 = scmp.ge.s32.totalorder %s26, 2
    %s28 = scalar_select %p27, 0, %s26
    %s29 = ssub.s32 %s16, %s28
    %p30 = scmp.eq.s32.totalorder %s29, 0
    %s32 = sadd.s32 %s31, 1
    %s33 = scalar_select %p30, %s31, %s32
    %p36 = pneg %p30
    %p37 = scmp.eq.s32.totalorder %s9, 1
    %p38 = por %p36, %p37
    %p39 = scmp.ne.s32.totalorder %s31, %s34
    %p40 = scmp.eq.s32.totalorder %s9, 0
    %p41 = por %p39, %p40
    %p42 = scmp.ne.s32.totalorder %s31, %s34
    %p43 = scmp.eq.s32.totalorder %s14, 1
    %p44 = por %p42, %p43
    %p45 = scmp.ne.s32.totalorder %s34, %s35
    %p46 = scmp.eq.s32.totalorder %s14, 0
    %p47 = por %p45, %p46
    %p48 = scmp.ne.s32.totalorder %s34, %s35
    %p49 = scmp.eq.s32.totalorder %s15, 1
    %p50 = por %p48, %p49
    %p52 = scmp.ne.s32.totalorder %s35, %s51
    %p53 = scmp.eq.s32.totalorder %s15, 0
    %p54 = por %p52, %p53
    %s55 = ssub.s32 %s16, %s28
    %s56 = ssub.s32 %s17, %s24
    %s57 = sor.u32 %s55, %s56
    %p58 = scmp.eq.s32.totalorder %s57, 0
    %s60 = sadd.s32 %s59, 1
    %s61 = scalar_select %p58, %s59, %s60
    %p64 = pneg %p58
    %p65 = scmp.eq.s32.totalorder %s9, 1
    %p66 = por %p64, %p65
    %p67 = scmp.ne.s32.totalorder %s59, %s62
    %p68 = scmp.eq.s32.totalorder %s9, 0
    %p69 = por %p67, %p68
    %p70 = scmp.ne.s32.totalorder %s59, %s62
    %p71 = scmp.eq.s32.totalorder %s14, 1
    %p72 = por %p70, %p71
    %p73 = scmp.ne.s32.totalorder %s62, %s63
    %p74 = scmp.eq.s32.totalorder %s14, 0
    %p75 = por %p73, %p74
    %p76 = scmp.ne.s32.totalorder %s62, %s63
    %p77 = scmp.eq.s32.totalorder %s15, 1
    %p78 = por %p76, %p77
    %p80 = scmp.ne.s32.totalorder %s63, %s79
    %p81 = scmp.eq.s32.totalorder %s15, 0
    %p82 = por %p80, %p81
    %s83 = ssub.s32 %s16, %s28
    %s84 = ssub.s32 %s17, %s24
    %s85 = sor.u32 %s83, %s84
    %p86 = scmp.eq.s32.totalorder %s85, 0
    %s88 = sadd.s32 %s87, 1
    %s89 = scalar_select %p86, %s87, %s88
    %p92 = pneg %p86
    %p93 = scmp.eq.s32.totalorder %s9, 1
    %p94 = por %p92, %p93
    %p95 = scmp.ne.s32.totalorder %s87, %s90
    %p96 = scmp.eq.s32.totalorder %s9, 0
    %p97 = por %p95, %p96
    %p98 = scmp.ne.s32.totalorder %s87, %s90
    %p99 = scmp.eq.s32.totalorder %s14, 1
    %p100 = por %p98, %p99
    %p101 = scmp.ne.s32.totalorder %s90, %s91
    %p102 = scmp.eq.s32.totalorder %s14, 0
    %p103 = por %p101, %p102
    %p104 = scmp.ne.s32.totalorder %s90, %s91
    %p105 = scmp.eq.s32.totalorder %s15, 1
    %p106 = por %p104, %p105
    %p108 = scmp.ne.s32.totalorder %s91, %s107
    %p109 = scmp.eq.s32.totalorder %s15, 0
    %p110 = por %p108, %p109
    %s111 = ssub.s32 %s16, %s28
    %p112 = scmp.eq.s32.totalorder %s111, 0
    %s114 = sadd.s32 %s113, 1
    %s115 = scalar_select %p112, %s113, %s114
    %p118 = pneg %p112
    %p119 = scmp.eq.s32.totalorder %s9, 1
    %p120 = por %p118, %p119
    %p121 = scmp.ne.s32.totalorder %s113, %s116
    %p122 = scmp.eq.s32.totalorder %s9, 0
    %p123 = por %p121, %p122
    %p124 = scmp.ne.s32.totalorder %s113, %s116
    %p125 = scmp.eq.s32.totalorder %s14, 1
    %p126 = por %p124, %p125
    %p127 = scmp.ne.s32.totalorder %s116, %s117
    %p128 = scmp.eq.s32.totalorder %s14, 0
    %p129 = por %p127, %p128
    %p130 = scmp.ne.s32.totalorder %s116, %s117
    %p131 = scmp.eq.s32.totalorder %s15, 1
    %p132 = por %p130, %p131
    %p134 = scmp.ne.s32.totalorder %s117, %s133
    %p135 = scmp.eq.s32.totalorder %s15, 0
    %p136 = por %p134, %p135
    %p137 = scmp.le.s32.totalorder 1, %s9
    %p138 = scmp.lt.s32.totalorder %s9, 3
    %p139 = pnand %p137, %p138
    %p140 = pneg %p139
    // Predicated region
    $region9: #{_lambda_.63} parent=5 // pred_check
      _
    $region10: #{_lambda_.63} parent=5 // pred_check_branch
      %142 = sbr.rel (%p139) target = $region12
    $region11: #{_lambda_.63} parent=5 // pred_region
      %s143 = ssub.s32 %s9, 1
    $region12: #{_lambda_.63} parent=5 // pred_fallthru
      _
    %p144 = scmp.lt.s32.totalorder %s9, 2
    // Predicated region
    $region13: #{_lambda_.63} parent=5 // pred_check
      %p145 = pneg %p144
    $region14: #{_lambda_.63} parent=5 // pred_check_branch
      %147 = sbr.rel (%p145) target = $region16
    $region15: #{_lambda_.63} parent=5 // pred_region
      // Predicated region
      $region17: #{_lambda_.63} parent=15 // pred_check
        %p148 = pneg %p41
      $region18: #{_lambda_.63} parent=15 // pred_check_branch
        %150 = sbr.rel (%p148) target = $region20
      $region19: #{_lambda_.63} parent=15 // pred_region
        %s151 = smul.u32 4, %s16
        %p152 = scmp.lt.s32.totalorder %s151, 7
        %s153 = scalar_select %p152, %s151, 7
        %s154 = smul.addr %s153, 8
        %s155 = scalar_lea.vmem %s0, %s154
        %s156 = smul.u32 4, %s16
      $region20: #{_lambda_.63} parent=15 // pred_fallthru
        _
      // Predicated region
      $region21: #{_lambda_.63} parent=15 // pred_check
        %p157 = pneg %p69
      $region22: #{_lambda_.63} parent=15 // pred_check_branch
        %159 = sbr.rel (%p157) target = $region24
      $region23: #{_lambda_.63} parent=15 // pred_region
        %s160 = smul.u32 4, %s16
        %p161 = scmp.lt.s32.totalorder %s160, 7
        %s162 = scalar_select %p161, %s160, 7
        %p163 = scmp.lt.s32.totalorder %s17, 0
        %s164 = scalar_select %p163, %s17, 0
        %s165 = sadd.s32 %s164, %s162
        %s166 = smul.addr %s165, 4
        %s167 = scalar_lea.vmem %s1, %s166
        %s168 = smul.u32 4, %s16
      $region24: #{_lambda_.63} parent=15 // pred_fallthru
        _
      // Predicated region
      $region25: #{_lambda_.63} parent=15 // pred_check
        %p169 = pneg %p97
      $region26: #{_lambda_.63} parent=15 // pred_check_branch
        %171 = sbr.rel (%p169) target = $region28
      $region27: #{_lambda_.63} parent=15 // pred_region
        %s172 = smul.u32 4, %s16
        %p173 = scmp.lt.s32.totalorder %s172, 7
        %s174 = scalar_select %p173, %s172, 7
        %p175 = scmp.lt.s32.totalorder %s17, 0
        %s176 = scalar_select %p175, %s17, 0
        %s177 = sadd.s32 %s176, %s174
        %s178 = smul.addr %s177, 4
        %s179 = scalar_lea.vmem %s2, %s178
        %s180 = smul.u32 4, %s16
      $region28: #{_lambda_.63} parent=15 // pred_fallthru
        _
    $region16: #{_lambda_.63} parent=5 // pred_fallthru
      _
    %p181 = scmp.le.s32.totalorder 1, %s9
    %p182 = scmp.lt.s32.totalorder %s9, 3
    %p183 = pnand %p181, %p182
    %p184 = pneg %p183
    // Predicated region
    $region29: #{_lambda_.63} parent=5 // pred_check
      _
    $region30: #{_lambda_.63} parent=5 // pred_check_branch
      %186 = sbr.rel (%p183) target = $region32
    $region31: #{_lambda_.63} parent=5 // pred_region
      %s187 = ssub.s32 %s9, 1
      %s188 = smul.u32 4, %s18
      %p189 = scmp.lt.s32.totalorder %s188, 7
      %s190 = scalar_select %p189, %s188, 7
      %s191 = smul.addr %s190, 8
      %s192 = scalar_lea.vmem %s0, %s191
      %p193 = pneg %p47
      %p194 = pneg %p44
      %s195 = smul.u32 4, %s18
      %p196 = scmp.lt.s32.totalorder %s195, 7
      %s197 = scalar_select %p196, %s195, 7
      %p198 = scmp.lt.s32.totalorder %s19, 0
      %s199 = scalar_select %p198, %s19, 0
      %s200 = sadd.s32 %s199, %s197
      %s201 = smul.addr %s200, 4
      %s202 = scalar_lea.vmem %s1, %s201
      %p203 = pneg %p75
      %p204 = pneg %p72
      %s205 = smul.u32 4, %s18
      %p206 = scmp.lt.s32.totalorder %s205, 7
      %s207 = scalar_select %p206, %s205, 7
      %p208 = scmp.lt.s32.totalorder %s19, 0
      %s209 = scalar_select %p208, %s19, 0
      %s210 = sadd.s32 %s209, %s207
      %s211 = smul.addr %s210, 4
      %s212 = scalar_lea.vmem %s2, %s211
      %p213 = pneg %p103
      %p214 = pneg %p100
      %p215 = pneg %p129
      %p216 = pneg %p126
      %s217 = smul.u32 4, %s18
      %p218 = scmp.lt.s32.totalorder %s217, 7
      %s219 = scalar_select %p218, %s217, 7
      %s220 = smul.addr %s219, 8
      %s221 = scalar_lea.vmem %s3, %s220
      %s222 = smul.u32 4, %s18
      %p223 = scmp.lt.s32.totalorder %s222, 7
      %s224 = scalar_select %p223, %s222, 7
      %s225 = smul.addr %s224, 8
      %s226 = scalar_lea.vmem %s0, %s225
      %s227 = smul.u32 4, %s18
      %s228 = smul.u32 4, %s18
      %p229 = scmp.lt.s32.totalorder %s228, 7
      %s230 = scalar_select %p229, %s228, 7
      %p231 = scmp.lt.s32.totalorder %s19, 0
      %s232 = scalar_select %p231, %s19, 0
      %s233 = sadd.s32 %s232, %s230
      %s234 = smul.addr %s233, 4
      %s235 = scalar_lea.vmem %s1, %s234
      %s236 = smul.u32 4, %s18
      %s237 = smul.u32 4, %s18
      %p238 = scmp.lt.s32.totalorder %s237, 7
      %s239 = scalar_select %p238, %s237, 7
      %p240 = scmp.lt.s32.totalorder %s19, 0
      %s241 = scalar_select %p240, %s19, 0
      %s242 = sadd.s32 %s241, %s239
      %s243 = smul.addr %s242, 4
      %s244 = scalar_lea.vmem %s2, %s243
      %s245 = smul.u32 4, %s18
      %s246 = smul.u32 4, %s18
      %p247 = scmp.lt.s32.totalorder %s246, 7
      %s248 = scalar_select %p247, %s246, 7
      %s249 = smul.addr %s248, 8
      %s250 = scalar_lea.vmem %s3, %s249
      %s251 = smul.u32 4, %s18
      %p253 = scmp.eq.s32.totalorder %s19, 0
      // Predicated region
      $region33: #{_lambda_.63} parent=31 // pred_check
        %p254 = pneg %p253
      $region34: #{_lambda_.63} parent=31 // pred_check_branch
        %256 = sbr.rel (%p254) target = $region36
      $region35: #{_lambda_.63} parent=31 // pred_region
        %vm257 = vcmask 7168
        %258 = vst.msk [vmem:[#allocation2] sm:$0xff] %vm257, -inf
        %259 = vst.msk [vmem:[#allocation2 + $0x8] sm:$0xff] %vm257, -inf
        %260 = vst.msk [vmem:[#allocation2 + $0x10] sm:$0xff] %vm257, -inf
        %261 = vst.msk [vmem:[#allocation2 + $0x18] sm:$0xff] %vm257, -inf
        %262 = vst.msk [vmem:[#allocation3] sm:$0xff] %vm257, 0.0
        %263 = vst.msk [vmem:[#allocation3 + $0x8] sm:$0xff] %vm257, 0.0
        %264 = vst.msk [vmem:[#allocation3 + $0x10] sm:$0xff] %vm257, 0.0
        %265 = vst.msk [vmem:[#allocation3 + $0x18] sm:$0xff] %vm257, 0.0
        %vm266 = vcmask 64512
        %267 = vst.msk [vmem:[#allocation4] sm:$0xff] %vm266, 0.0
        %268 = vst.msk [vmem:[#allocation4 + $0x8] sm:$0xff] %vm266, 0.0
        %269 = vst.msk [vmem:[#allocation4 + $0x10] sm:$0xff] %vm266, 0.0
        %270 = vst.msk [vmem:[#allocation4 + $0x18] sm:$0xff] %vm266, 0.0
      $region36: #{_lambda_.63} parent=31 // pred_fallthru
        _
      %v271 = vld [vmem:[%s226] sm:$0xff]
      %v272 = vld [vmem:[%s226 + $0x8] sm:$0xff]
      %v273 = vld [vmem:[%s226 + $0x10] sm:$0xff]
      %v274 = vld [vmem:[%s226 + $0x18] sm:$0xff]
      %v275 = vpack.c.bf16 %v271, %v271
      %v276 = vpack.c.bf16 %v272, %v272
      %v277 = vpack.c.bf16 %v273, %v273
      %v278 = vpack.c.bf16 %v274, %v274
      %v279 = vld [vmem:[%s235] sm:$0xf]
      %v280 = vld [vmem:[%s235 + $0x4] sm:$0xf]
      %v281 = vld [vmem:[%s235 + $0x8] sm:$0xf]
      %v282 = vld [vmem:[%s235 + $0xc] sm:$0xf]
      %v283 = vpack.c.bf16 %v279, %v279
      %v284 = vpack.c.bf16 %v280, %v280
      %v285 = vpack.c.bf16 %v281, %v281
      %v286 = vpack.c.bf16 %v282, %v282
      %v287 = vld [vmem:[%s244] sm:$0xf]
      %v288 = vld [vmem:[%s244 + $0x4] sm:$0xf]
      %v289 = vld [vmem:[%s244 + $0x8] sm:$0xf]
      %v290 = vld [vmem:[%s244 + $0xc] sm:$0xf]
      %v291 = vpack.c.bf16 %v287, %v287
      %v292 = vpack.c.bf16 %v288, %v288
      %v293 = vpack.c.bf16 %v289, %v289
      %v294 = vpack.c.bf16 %v290, %v290
      %vm295 = vcmask 64512
      %v297 = vsel %vm295, %v275, 0
      %v300 = vsel %vm295, %v283, 0
      %302 = vmatprep.subr.bf16.mxu0 0
      %303 = vmatpush1.bf16.xpose.msra.mxu0 0
      %304 = vmatprep.subr.bf16.mxu0 0
      %305 = vmatpush1.bf16.xpose.msra.mxu0 0
      %306 = vmatprep.subr.bf16.mxu0 0
      %307 = vmatpush1.bf16.xpose.msra.mxu0 0
      %308 = vmatprep.subr.bf16.mxu0 0
      %309 = vmatpush1.bf16.xpose.msra.mxu0 0
      %310 = vmatprep.subr.bf16.mxu0 0
      %311 = vmatpush1.bf16.xpose.msra.mxu0 0
      %312 = vmatprep.subr.bf16.mxu0 0
      %313 = vmatpush1.bf16.xpose.msra.mxu0 0
      %314 = vmatprep.subr.bf16.mxu0 0
      %315 = vmatpush1.bf16.xpose.msra.mxu0 0
      %316 = vmatprep.subr.bf16.mxu0 0
      %317 = vmatpush1.bf16.xpose.msra.mxu0 %v300
      %318 = vmatprep.subr.bf16.mxu0 0
      %319 = vmatpush2.bf16.xpose.msra.mxu0 0
      %320 = vmatprep.subr.bf16.mxu0 0
      %321 = vmatpush2.bf16.xpose.msra.mxu0 0
      %322 = vmatprep.subr.bf16.mxu0 0
      %323 = vmatpush2.bf16.xpose.msra.mxu0 0
      %324 = vmatprep.subr.bf16.mxu0 0
      %325 = vmatpush2.bf16.xpose.msra.mxu0 0
      %326 = vmatprep.subr.bf16.mxu0 0
      %327 = vmatpush2.bf16.xpose.msra.mxu0 0
      %328 = vmatprep.subr.bf16.mxu0 0
      %329 = vmatpush2.bf16.xpose.msra.mxu0 0
      %330 = vmatprep.subr.bf16.mxu0 0
      %331 = vmatpush2.bf16.xpose.msra.mxu0 0
      %332 = vmatprep.subr.bf16.mxu0 0
      %333 = vmatpush2.bf16.xpose.msra.mxu0 0
      %334 = vmatprep.mubr.bf16.mxu0 0
      %335 = vmatmul.mubr.bf16.gmra.mxu0 %v297
      %v336 = vpop.f32.mrf.mxu0
      %v337 = vadd.f32 0.0, %v336
      %v338 = vpop.f32.mrf.mxu0
      %v339 = vpop.f32.mrf.mxu0
      %v340 = vpop.f32.mrf.mxu0
      %341 = vdwg.mxu0
      %v343 = vsel %vm295, %v276, 0
      %v346 = vsel %vm295, %v284, 0
      %348 = vmatprep.subr.bf16.mxu0 0
      %349 = vmatpush1.bf16.xpose.msra.mxu0 0
      %350 = vmatprep.subr.bf16.mxu0 0
      %351 = vmatpush1.bf16.xpose.msra.mxu0 0
      %352 = vmatprep.subr.bf16.mxu0 0
      %353 = vmatpush1.bf16.xpose.msra.mxu0 0
      %354 = vmatprep.subr.bf16.mxu0 0
      %355 = vmatpush1.bf16.xpose.msra.mxu0 0
      %356 = vmatprep.subr.bf16.mxu0 0
      %357 = vmatpush1.bf16.xpose.msra.mxu0 0
      %358 = vmatprep.subr.bf16.mxu0 0
      %359 = vmatpush1.bf16.xpose.msra.mxu0 0
      %360 = vmatprep.subr.bf16.mxu0 0
      %361 = vmatpush1.bf16.xpose.msra.mxu0 0
      %362 = vmatprep.subr.bf16.mxu0 0
      %363 = vmatpush1.bf16.xpose.msra.mxu0 %v346
      %364 = vmatprep.subr.bf16.mxu0 0
      %365 = vmatpush2.bf16.xpose.msra.mxu0 0
      %366 = vmatprep.subr.bf16.mxu0 0
      %367 = vmatpush2.bf16.xpose.msra.mxu0 0
      %368 = vmatprep.subr.bf16.mxu0 0
      %369 = vmatpush2.bf16.xpose.msra.mxu0 0
      %370 = vmatprep.subr.bf16.mxu0 0
      %371 = vmatpush2.bf16.xpose.msra.mxu0 0
      %372 = vmatprep.subr.bf16.mxu0 0
      %373 = vmatpush2.bf16.xpose.msra.mxu0 0
      %374 = vmatprep.subr.bf16.mxu0 0
      %375 = vmatpush2.bf16.xpose.msra.mxu0 0
      %376 = vmatprep.subr.bf16.mxu0 0
      %377 = vmatpush2.bf16.xpose.msra.mxu0 0
      %378 = vmatprep.subr.bf16.mxu0 0
      %379 = vmatpush2.bf16.xpose.msra.mxu0 0
      %380 = vmatprep.mubr.bf16.mxu0 0
      %381 = vmatmul.mubr.bf16.gmra.mxu0 %v343
      %v382 = vpop.f32.mrf.mxu0
      %v383 = vadd.f32 0.0, %v382
      %v384 = vpop.f32.mrf.mxu0
      %v385 = vpop.f32.mrf.mxu0
      %v386 = vpop.f32.mrf.mxu0
      %387 = vdwg.mxu0
      %v389 = vsel %vm295, %v277, 0
      %v392 = vsel %vm295, %v285, 0
      %394 = vmatprep.subr.bf16.mxu0 0
      %395 = vmatpush1.bf16.xpose.msra.mxu0 0
      %396 = vmatprep.subr.bf16.mxu0 0
      %397 = vmatpush1.bf16.xpose.msra.mxu0 0
      %398 = vmatprep.subr.bf16.mxu0 0
      %399 = vmatpush1.bf16.xpose.msra.mxu0 0
      %400 = vmatprep.subr.bf16.mxu0 0
      %401 = vmatpush1.bf16.xpose.msra.mxu0 0
      %402 = vmatprep.subr.bf16.mxu0 0
      %403 = vmatpush1.bf16.xpose.msra.mxu0 0
      %404 = vmatprep.subr.bf16.mxu0 0
      %405 = vmatpush1.bf16.xpose.msra.mxu0 0
      %406 = vmatprep.subr.bf16.mxu0 0
      %407 = vmatpush1.bf16.xpose.msra.mxu0 0
      %408 = vmatprep.subr.bf16.mxu0 0
      %409 = vmatpush1.bf16.xpose.msra.mxu0 %v392
      %410 = vmatprep.subr.bf16.mxu0 0
      %411 = vmatpush2.bf16.xpose.msra.mxu0 0
      %412 = vmatprep.subr.bf16.mxu0 0
      %413 = vmatpush2.bf16.xpose.msra.mxu0 0
      %414 = vmatprep.subr.bf16.mxu0 0
      %415 = vmatpush2.bf16.xpose.msra.mxu0 0
      %416 = vmatprep.subr.bf16.mxu0 0
      %417 = vmatpush2.bf16.xpose.msra.mxu0 0
      %418 = vmatprep.subr.bf16.mxu0 0
      %419 = vmatpush2.bf16.xpose.msra.mxu0 0
      %420 = vmatprep.subr.bf16.mxu0 0
      %421 = vmatpush2.bf16.xpose.msra.mxu0 0
      %422 = vmatprep.subr.bf16.mxu0 0
      %423 = vmatpush2.bf16.xpose.msra.mxu0 0
      %424 = vmatprep.subr.bf16.mxu0 0
      %425 = vmatpush2.bf16.xpose.msra.mxu0 0
      %426 = vmatprep.mubr.bf16.mxu0 0
      %427 = vmatmul.mubr.bf16.gmra.mxu0 %v389
      %v428 = vpop.f32.mrf.mxu0
      %v429 = vadd.f32 0.0, %v428
      %v430 = vpop.f32.mrf.mxu0
      %v431 = vpop.f32.mrf.mxu0
      %v432 = vpop.f32.mrf.mxu0
      %433 = vdwg.mxu0
      %v435 = vsel %vm295, %v278, 0
      %v438 = vsel %vm295, %v286, 0
      %440 = vmatprep.subr.bf16.mxu0 0
      %441 = vmatpush1.bf16.xpose.msra.mxu0 0
      %442 = vmatprep.subr.bf16.mxu0 0
      %443 = vmatpush1.bf16.xpose.msra.mxu0 0
      %444 = vmatprep.subr.bf16.mxu0 0
      %445 = vmatpush1.bf16.xpose.msra.mxu0 0
      %446 = vmatprep.subr.bf16.mxu0 0
      %447 = vmatpush1.bf16.xpose.msra.mxu0 0
      %448 = vmatprep.subr.bf16.mxu0 0
      %449 = vmatpush1.bf16.xpose.msra.mxu0 0
      %450 = vmatprep.subr.bf16.mxu0 0
      %451 = vmatpush1.bf16.xpose.msra.mxu0 0
      %452 = vmatprep.subr.bf16.mxu0 0
      %453 = vmatpush1.bf16.xpose.msra.mxu0 0
      %454 = vmatprep.subr.bf16.mxu0 0
      %455 = vmatpush1.bf16.xpose.msra.mxu0 %v438
      %456 = vmatprep.subr.bf16.mxu0 0
      %457 = vmatpush2.bf16.xpose.msra.mxu0 0
      %458 = vmatprep.subr.bf16.mxu0 0
      %459 = vmatpush2.bf16.xpose.msra.mxu0 0
      %460 = vmatprep.subr.bf16.mxu0 0
      %461 = vmatpush2.bf16.xpose.msra.mxu0 0
      %462 = vmatprep.subr.bf16.mxu0 0
      %463 = vmatpush2.bf16.xpose.msra.mxu0 0
      %464 = vmatprep.subr.bf16.mxu0 0
      %465 = vmatpush2.bf16.xpose.msra.mxu0 0
      %466 = vmatprep.subr.bf16.mxu0 0
      %467 = vmatpush2.bf16.xpose.msra.mxu0 0
      %468 = vmatprep.subr.bf16.mxu0 0
      %469 = vmatpush2.bf16.xpose.msra.mxu0 0
      %470 = vmatprep.subr.bf16.mxu0 0
      %471 = vmatpush2.bf16.xpose.msra.mxu0 0
      %472 = vmatprep.mubr.bf16.mxu0 0
      %473 = vmatmul.mubr.bf16.gmra.mxu0 %v435
      %v474 = vpop.f32.mrf.mxu0
      %v475 = vadd.f32 0.0, %v474
      %v476 = vpop.f32.mrf.mxu0
      %v477 = vpop.f32.mrf.mxu0
      %v478 = vpop.f32.mrf.mxu0
      %479 = vdwg.mxu0
      %v480 = vmul.f32 %v337, 0.35355338
      %v481 = vmul.f32 %v383, 0.35355338
      %v482 = vmul.f32 %v429, 0.35355338
      %v483 = vmul.f32 %v475, 0.35355338
      %v484 = vld [vmem:[#allocation2] sm:$0xff]
      %v485 = vld [vmem:[#allocation2 + $0x8] sm:$0xff]
      %v486 = vld [vmem:[#allocation2 + $0x10] sm:$0xff]
      %v487 = vld [vmem:[#allocation2 + $0x18] sm:$0xff]
      %vm488 = vcmask 31744
      %v489 = vsel %vm488, %v480, -inf
      %490 = vmax.xlane.f32.xlu0 %v489
      %v491 = vpop.xlane.xlu0 %490
      %v492 = vsel %vm488, %v481, -inf
      %493 = vmax.xlane.f32.xlu0 %v492
      %v494 = vpop.xlane.xlu0 %493
      %v495 = vsel %vm488, %v482, -inf
      %496 = vmax.xlane.f32.xlu0 %v495
      %v497 = vpop.xlane.xlu0 %496
      %v498 = vsel %vm488, %v483, -inf
      %499 = vmax.xlane.f32.xlu0 %v498
      %v500 = vpop.xlane.xlu0 %499
      %v501 = vmax.f32 %v484, %v491
      %v502 = vmax.f32 %v485, %v494
      %v503 = vmax.f32 %v486, %v497
      %v504 = vmax.f32 %v487, %v500
      %v505 = vsub.f32 %v484, %v501
      %v506 = vsub.f32 %v485, %v502
      %v507 = vsub.f32 %v486, %v503
      %v508 = vsub.f32 %v487, %v504
      %v509 = vmul.f32 %v505, 1.442695
      %v510 = vpow.pop %v509
      %v511 = vmul.f32 %v506, 1.442695
      %v512 = vpow.pop %v511
      %v513 = vmul.f32 %v507, 1.442695
      %v514 = vpow.pop %v513
      %v515 = vmul.f32 %v508, 1.442695
      %v516 = vpow.pop %v515
      %518 = vset.pattern.permute.xlu0 0
      %519 = vperm.xlu0 %518, %v501
      %v520 = vpop.permute.xlu0 %519
      %523 = vset.pattern.permute.xlu0 0
      %524 = vperm.xlu0 %523, %v502
      %v525 = vpop.permute.xlu0 %524
      %528 = vset.pattern.permute.xlu0 0
      %529 = vperm.xlu0 %528, %v503
      %v530 = vpop.permute.xlu0 %529
      %533 = vset.pattern.permute.xlu0 0
      %534 = vperm.xlu0 %533, %v504
      %v535 = vpop.permute.xlu0 %534
      %v537 = vsub.f32 %v480, %v520
      %v538 = vsub.f32 %v481, %v525
      %v539 = vsub.f32 %v482, %v530
      %v540 = vsub.f32 %v483, %v535
      %v541 = vmul.f32 %v537, 1.442695
      %v542 = vpow.pop %v541
      %v543 = vmul.f32 %v538, 1.442695
      %v544 = vpow.pop %v543
      %v545 = vmul.f32 %v539, 1.442695
      %v546 = vpow.pop %v545
      %v547 = vmul.f32 %v540, 1.442695
      %v548 = vpow.pop %v547
      %v549 = vld [vmem:[#allocation3] sm:$0xff]
      %v550 = vld [vmem:[#allocation3 + $0x8] sm:$0xff]
      %v551 = vld [vmem:[#allocation3 + $0x10] sm:$0xff]
      %v552 = vld [vmem:[#allocation3 + $0x18] sm:$0xff]
      %v553 = vmul.f32 %v510, %v549
      %v554 = vmul.f32 %v512, %v550
      %v555 = vmul.f32 %v514, %v551
      %v556 = vmul.f32 %v516, %v552
      %v557 = vsel %vm488, %v542, 0.0
      %558 = vadd.xlane.f32.xlu0 %v557
      %v559 = vpop.xlane.xlu0 %558
      %v560 = vsel %vm488, %v544, 0.0
      %561 = vadd.xlane.f32.xlu0 %v560
      %v562 = vpop.xlane.xlu0 %561
      %v563 = vsel %vm488, %v546, 0.0
      %564 = vadd.xlane.f32.xlu0 %v563
      %v565 = vpop.xlane.xlu0 %564
      %v566 = vsel %vm488, %v548, 0.0
      %567 = vadd.xlane.f32.xlu0 %v566
      %v568 = vpop.xlane.xlu0 %567
      %v569 = vadd.f32 %v553, %v559
      %v570 = vadd.f32 %v554, %v562
      %v571 = vadd.f32 %v555, %v565
      %v572 = vadd.f32 %v556, %v568
      %vm573 = vcmask 7168
      %574 = vst.msk [vmem:[#allocation3] sm:$0xff] %vm573, %v569
      %575 = vst.msk [vmem:[#allocation3 + $0x8] sm:$0xff] %vm573, %v570
      %576 = vst.msk [vmem:[#allocation3 + $0x10] sm:$0xff] %vm573, %v571
      %577 = vst.msk [vmem:[#allocation3 + $0x18] sm:$0xff] %vm573, %v572
      %v578 = vld [vmem:[#allocation4] sm:$0xff]
      %v579 = vld [vmem:[#allocation4 + $0x8] sm:$0xff]
      %v580 = vld [vmem:[#allocation4 + $0x10] sm:$0xff]
      %v581 = vld [vmem:[#allocation4 + $0x18] sm:$0xff]
      %583 = vset.pattern.permute.xlu0 0
      %584 = vperm.xlu0 %583, %v510
      %v585 = vpop.permute.xlu0 %584
      %588 = vset.pattern.permute.xlu0 0
      %589 = vperm.xlu0 %588, %v512
      %v590 = vpop.permute.xlu0 %589
      %593 = vset.pattern.permute.xlu0 0
      %594 = vperm.xlu0 %593, %v514
      %v595 = vpop.permute.xlu0 %594
      %598 = vset.pattern.permute.xlu0 0
      %599 = vperm.xlu0 %598, %v516
      %v600 = vpop.permute.xlu0 %599
      %v602 = vmul.f32 %v585, %v578
      %v603 = vmul.f32 %v590, %v579
      %v604 = vmul.f32 %v595, %v580
      %v605 = vmul.f32 %v600, %v581
      %v606 = vpack.c.bf16 %v542, %v542
      %v607 = vpack.c.bf16 %v544, %v544
      %v608 = vpack.c.bf16 %v546, %v546
      %v609 = vpack.c.bf16 %v548, %v548
      %v611 = vsel %vm488, %v606, 0
      %vm613 = vcmask 1041408
      %v615 = vsel %vm613, %v291, 0
      %617 = vmatprep.subr.bf16.mxu0 0
      %618 = vmatpush1.bf16.msra.mxu0 0
      %619 = vmatprep.subr.bf16.mxu0 0
      %620 = vmatpush1.bf16.msra.mxu0 0
      %621 = vmatprep.subr.bf16.mxu0 0
      %622 = vmatpush1.bf16.msra.mxu0 0
      %623 = vmatprep.subr.bf16.mxu0 0
      %624 = vmatpush1.bf16.msra.mxu0 0
      %625 = vmatprep.subr.bf16.mxu0 0
      %626 = vmatpush1.bf16.msra.mxu0 0
      %627 = vmatprep.subr.bf16.mxu0 0
      %628 = vmatpush1.bf16.msra.mxu0 0
      %629 = vmatprep.subr.bf16.mxu0 0
      %630 = vmatpush1.bf16.msra.mxu0 0
      %631 = vmatprep.subr.bf16.mxu0 0
      %632 = vmatpush1.bf16.msra.mxu0 %v615
      %633 = vmatprep.subr.bf16.mxu0 0
      %634 = vmatpush2.bf16.msra.mxu0 0
      %635 = vmatprep.subr.bf16.mxu0 0
      %636 = vmatpush2.bf16.msra.mxu0 0
      %637 = vmatprep.subr.bf16.mxu0 0
      %638 = vmatpush2.bf16.msra.mxu0 0
      %639 = vmatprep.subr.bf16.mxu0 0
      %640 = vmatpush2.bf16.msra.mxu0 0
      %641 = vmatprep.subr.bf16.mxu0 0
      %642 = vmatpush2.bf16.msra.mxu0 0
      %643 = vmatprep.subr.bf16.mxu0 0
      %644 = vmatpush2.bf16.msra.mxu0 0
      %645 = vmatprep.subr.bf16.mxu0 0
      %646 = vmatpush2.bf16.msra.mxu0 0
      %647 = vmatprep.subr.bf16.mxu0 0
      %648 = vmatpush2.bf16.msra.mxu0 0
      %649 = vmatprep.mubr.bf16.mxu0 0
      %650 = vmatmul.mubr.bf16.gmra.mxu0 %v611
      %v651 = vpop.f32.mrf.mxu0
      %v652 = vadd.f32 0.0, %v651
      %v653 = vpop.f32.mrf.mxu0
      %v654 = vpop.f32.mrf.mxu0
      %v655 = vpop.f32.mrf.mxu0
      %656 = vdwg.mxu0
      %v658 = vsel %vm488, %v607, 0
      %v661 = vsel %vm613, %v292, 0
      %663 = vmatprep.subr.bf16.mxu0 0
      %664 = vmatpush1.bf16.msra.mxu0 0
      %665 = vmatprep.subr.bf16.mxu0 0
      %666 = vmatpush1.bf16.msra.mxu0 0
      %667 = vmatprep.subr.bf16.mxu0 0
      %668 = vmatpush1.bf16.msra.mxu0 0
      %669 = vmatprep.subr.bf16.mxu0 0
      %670 = vmatpush1.bf16.msra.mxu0 0
      %671 = vmatprep.subr.bf16.mxu0 0
      %672 = vmatpush1.bf16.msra.mxu0 0
      %673 = vmatprep.subr.bf16.mxu0 0
      %674 = vmatpush1.bf16.msra.mxu0 0
      %675 = vmatprep.subr.bf16.mxu0 0
      %676 = vmatpush1.bf16.msra.mxu0 0
      %677 = vmatprep.subr.bf16.mxu0 0
      %678 = vmatpush1.bf16.msra.mxu0 %v661
      %679 = vmatprep.subr.bf16.mxu0 0
      %680 = vmatpush2.bf16.msra.mxu0 0
      %681 = vmatprep.subr.bf16.mxu0 0
      %682 = vmatpush2.bf16.msra.mxu0 0
      %683 = vmatprep.subr.bf16.mxu0 0
      %684 = vmatpush2.bf16.msra.mxu0 0
      %685 = vmatprep.subr.bf16.mxu0 0
      %686 = vmatpush2.bf16.msra.mxu0 0
      %687 = vmatprep.subr.bf16.mxu0 0
      %688 = vmatpush2.bf16.msra.mxu0 0
      %689 = vmatprep.subr.bf16.mxu0 0
      %690 = vmatpush2.bf16.msra.mxu0 0
      %691 = vmatprep.subr.bf16.mxu0 0
      %692 = vmatpush2.bf16.msra.mxu0 0
      %693 = vmatprep.subr.bf16.mxu0 0
      %694 = vmatpush2.bf16.msra.mxu0 0
      %695 = vmatprep.mubr.bf16.mxu0 0
      %696 = vmatmul.mubr.bf16.gmra.mxu0 %v658
      %v697 = vpop.f32.mrf.mxu0
      %v698 = vadd.f32 0.0, %v697
      %v699 = vpop.f32.mrf.mxu0
      %v700 = vpop.f32.mrf.mxu0
      %v701 = vpop.f32.mrf.mxu0
      %702 = vdwg.mxu0
      %v704 = vsel %vm488, %v608, 0
      %v707 = vsel %vm613, %v293, 0
      %709 = vmatprep.subr.bf16.mxu0 0
      %710 = vmatpush1.bf16.msra.mxu0 0
      %711 = vmatprep.subr.bf16.mxu0 0
      %712 = vmatpush1.bf16.msra.mxu0 0
      %713 = vmatprep.subr.bf16.mxu0 0
      %714 = vmatpush1.bf16.msra.mxu0 0
      %715 = vmatprep.subr.bf16.mxu0 0
      %716 = vmatpush1.bf16.msra.mxu0 0
      %717 = vmatprep.subr.bf16.mxu0 0
      %718 = vmatpush1.bf16.msra.mxu0 0
      %719 = vmatprep.subr.bf16.mxu0 0
      %720 = vmatpush1.bf16.msra.mxu0 0
      %721 = vmatprep.subr.bf16.mxu0 0
      %722 = vmatpush1.bf16.msra.mxu0 0
      %723 = vmatprep.subr.bf16.mxu0 0
      %724 = vmatpush1.bf16.msra.mxu0 %v707
      %725 = vmatprep.subr.bf16.mxu0 0
      %726 = vmatpush2.bf16.msra.mxu0 0
      %727 = vmatprep.subr.bf16.mxu0 0
      %728 = vmatpush2.bf16.msra.mxu0 0
      %729 = vmatprep.subr.bf16.mxu0 0
      %730 = vmatpush2.bf16.msra.mxu0 0
      %731 = vmatprep.subr.bf16.mxu0 0
      %732 = vmatpush2.bf16.msra.mxu0 0
      %733 = vmatprep.subr.bf16.mxu0 0
      %734 = vmatpush2.bf16.msra.mxu0 0
      %735 = vmatprep.subr.bf16.mxu0 0
      %736 = vmatpush2.bf16.msra.mxu0 0
      %737 = vmatprep.subr.bf16.mxu0 0
      %738 = vmatpush2.bf16.msra.mxu0 0
      %739 = vmatprep.subr.bf16.mxu0 0
      %740 = vmatpush2.bf16.msra.mxu0 0
      %741 = vmatprep.mubr.bf16.mxu0 0
      %742 = vmatmul.mubr.bf16.gmra.mxu0 %v704
      %v743 = vpop.f32.mrf.mxu0
      %v744 = vadd.f32 0.0, %v743
      %v745 = vpop.f32.mrf.mxu0
      %v746 = vpop.f32.mrf.mxu0
      %v747 = vpop.f32.mrf.mxu0
      %748 = vdwg.mxu0
      %v750 = vsel %vm488, %v609, 0
      %v753 = vsel %vm613, %v294, 0
      %755 = vmatprep.subr.bf16.mxu0 0
      %756 = vmatpush1.bf16.msra.mxu0 0
      %757 = vmatprep.subr.bf16.mxu0 0
      %758 = vmatpush1.bf16.msra.mxu0 0
      %759 = vmatprep.subr.bf16.mxu0 0
      %760 = vmatpush1.bf16.msra.mxu0 0
      %761 = vmatprep.subr.bf16.mxu0 0
      %762 = vmatpush1.bf16.msra.mxu0 0
      %763 = vmatprep.subr.bf16.mxu0 0
      %764 = vmatpush1.bf16.msra.mxu0 0
      %765 = vmatprep.subr.bf16.mxu0 0
      %766 = vmatpush1.bf16.msra.mxu0 0
      %767 = vmatprep.subr.bf16.mxu0 0
      %768 = vmatpush1.bf16.msra.mxu0 0
      %769 = vmatprep.subr.bf16.mxu0 0
      %770 = vmatpush1.bf16.msra.mxu0 %v753
      %771 = vmatprep.subr.bf16.mxu0 0
      %772 = vmatpush2.bf16.msra.mxu0 0
      %773 = vmatprep.subr.bf16.mxu0 0
      %774 = vmatpush2.bf16.msra.mxu0 0
      %775 = vmatprep.subr.bf16.mxu0 0
      %776 = vmatpush2.bf16.msra.mxu0 0
      %777 = vmatprep.subr.bf16.mxu0 0
      %778 = vmatpush2.bf16.msra.mxu0 0
      %779 = vmatprep.subr.bf16.mxu0 0
      %780 = vmatpush2.bf16.msra.mxu0 0
      %781 = vmatprep.subr.bf16.mxu0 0
      %782 = vmatpush2.bf16.msra.mxu0 0
      %783 = vmatprep.subr.bf16.mxu0 0
      %784 = vmatpush2.bf16.msra.mxu0 0
      %785 = vmatprep.subr.bf16.mxu0 0
      %786 = vmatpush2.bf16.msra.mxu0 0
      %787 = vmatprep.mubr.bf16.mxu0 0
      %788 = vmatmul.mubr.bf16.gmra.mxu0 %v750
      %v789 = vpop.f32.mrf.mxu0
      %v790 = vadd.f32 0.0, %v789
      %v791 = vpop.f32.mrf.mxu0
      %v792 = vpop.f32.mrf.mxu0
      %v793 = vpop.f32.mrf.mxu0
      %794 = vdwg.mxu0
      %v795 = vadd.f32 %v602, %v652
      %v796 = vadd.f32 %v603, %v698
      %v797 = vadd.f32 %v604, %v744
      %v798 = vadd.f32 %v605, %v790
      %799 = vst.msk [vmem:[#allocation4] sm:$0xff] %vm295, %v795
      %800 = vst.msk [vmem:[#allocation4 + $0x8] sm:$0xff] %vm295, %v796
      %801 = vst.msk [vmem:[#allocation4 + $0x10] sm:$0xff] %vm295, %v797
      %802 = vst.msk [vmem:[#allocation4 + $0x18] sm:$0xff] %vm295, %v798
      %803 = vst.msk [vmem:[#allocation2] sm:$0xff] %vm573, %v501
      %804 = vst.msk [vmem:[#allocation2 + $0x8] sm:$0xff] %vm573, %v502
      %805 = vst.msk [vmem:[#allocation2 + $0x10] sm:$0xff] %vm573, %v503
      %806 = vst.msk [vmem:[#allocation2 + $0x18] sm:$0xff] %vm573, %v504
      // Predicated region
      $region37: #{_lambda_.63} parent=31 // pred_check
        %p807 = pneg %p253
      $region38: #{_lambda_.63} parent=31 // pred_check_branch
        %809 = sbr.rel (%p807) target = $region40
      $region39: #{_lambda_.63} parent=31 // pred_region
        %v810 = vld [vmem:[#allocation4] sm:$0xff]
        %v811 = vld [vmem:[#allocation4 + $0x8] sm:$0xff]
        %v812 = vld [vmem:[#allocation4 + $0x10] sm:$0xff]
        %v813 = vld [vmem:[#allocation4 + $0x18] sm:$0xff]
        %v814 = vld [vmem:[#allocation3] sm:$0xff]
        %v815 = vld [vmem:[#allocation3 + $0x8] sm:$0xff]
        %v816 = vld [vmem:[#allocation3 + $0x10] sm:$0xff]
        %v817 = vld [vmem:[#allocation3 + $0x18] sm:$0xff]
        %819 = vset.pattern.permute.xlu0 0
        %820 = vperm.xlu0 %819, %v814
        %v821 = vpop.permute.xlu0 %820
        %824 = vset.pattern.permute.xlu0 0
        %825 = vperm.xlu0 %824, %v815
        %v826 = vpop.permute.xlu0 %825
        %829 = vset.pattern.permute.xlu0 0
        %830 = vperm.xlu0 %829, %v816
        %v831 = vpop.permute.xlu0 %830
        %834 = vset.pattern.permute.xlu0 0
        %835 = vperm.xlu0 %834, %v817
        %v836 = vpop.permute.xlu0 %835
        %v838 = vrcp.pop %v821
        %v839 = vmul.f32 %v810, %v838
        %v840 = vrcp.pop %v826
        %v841 = vmul.f32 %v811, %v840
        %v842 = vrcp.pop %v831
        %v843 = vmul.f32 %v812, %v842
        %v844 = vrcp.pop %v836
        %v845 = vmul.f32 %v813, %v844
        %846 = vst.msk [vmem:[%s250] sm:$0xff] %vm295, %v839
        %847 = vst.msk [vmem:[%s250 + $0x8] sm:$0xff] %vm295, %v841
        %848 = vst.msk [vmem:[%s250 + $0x10] sm:$0xff] %vm295, %v843
        %849 = vst.msk [vmem:[%s250 + $0x18] sm:$0xff] %vm295, %v845
      $region40: #{_lambda_.63} parent=31 // pred_fallthru
        _
      %s850 = smul.u32 4, %s18
      %p851 = scmp.lt.s32.totalorder %s850, 7
      %s852 = scalar_select %p851, %s850, 7
      %s853 = smul.addr %s852, 8
      %s854 = scalar_lea.vmem %s3, %s853
      // Predicated region
      $region41: #{_lambda_.63} parent=31 // pred_check
        %p855 = pneg %p126
      $region42: #{_lambda_.63} parent=31 // pred_check_branch
        %857 = sbr.rel (%p855) target = $region44
      $region43: #{_lambda_.63} parent=31 // pred_region
        %s858 = smul.u32 4, %s18
      $region44: #{_lambda_.63} parent=31 // pred_fallthru
        _
    $region32: #{_lambda_.63} parent=5 // pred_fallthru
      _
    %p859 = scmp.le.s32.totalorder 2, %s9
    // Predicated region
    $region45: #{_lambda_.63} parent=5 // pred_check
      %p860 = pneg %p859
    $region46: #{_lambda_.63} parent=5 // pred_check_branch
      %862 = sbr.rel (%p860) target = $region48
    $region47: #{_lambda_.63} parent=5 // pred_region
      %s863 = ssub.s32 %s9, 2
      // Predicated region
      $region49: #{_lambda_.63} parent=47 // pred_check
        %p864 = pneg %p132
      $region50: #{_lambda_.63} parent=47 // pred_check_branch
        %866 = sbr.rel (%p864) target = $region52
      $region51: #{_lambda_.63} parent=47 // pred_region
        %s867 = smul.u32 4, %s20
        %p868 = scmp.lt.s32.totalorder %s867, 7
        %s869 = scalar_select %p868, %s867, 7
        %s870 = smul.addr %s869, 8
        %s871 = scalar_lea.vmem %s3, %s870
      $region52: #{_lambda_.63} parent=47 // pred_fallthru
        _
    $region48: #{_lambda_.63} parent=5 // pred_fallthru
      _
  $region6: #{_lambda_.63} parent=0 // loop_footer
    %s13 = sadd.s32 1, %s9
  $region7: #{_lambda_.63} parent=0 // loop_footer_branch
    %8 = sbr.rel target = $region3
  $region8: #{_lambda_.63} parent=0 // loop_exit
    _

</llo_original>
